<compile_context>
chip_gen: v7x
topology: tpu7x:2x2x1
jax: 0.10.0
libtpu: 0.0.40
codegen_flags: <defaults>
</compile_context>

<pallas_src>
from functools import partial

import jax
import jax.numpy as jnp
from jax.experimental import pallas as pl
from jax.experimental.pallas import tpu as pltpu


# ---------------------------------------------------------------------------
# Conv3d (3x3x3, stride 1, padding 1) via im2col, one (sample, D-slice) per grid
# step.  Also emits per-(n,d) channel sum / sum-of-squares for the BN statistics.
# ---------------------------------------------------------------------------
def conv3d_kernel(x_ref, w_ref, b_ref, o_ref, ssum_ref, ssq_ref, patch_ref,
                  *, H, W, Cin, Cout):
    # x_ref:     (1, D+2, H+2, W+2, Cin)  padded sample (fetched once per n)
    # w_ref:     (27*Cin, Cout) bf16      flattened weights, K order (kd,kh,kw,cin)
    # b_ref:     (1, Cout) f32
    # o_ref:     (1, 1, H, W, Cout) f32   one output D-slice
    # ssum/ssq:  (1, 1, 1, Cout) f32      per-block channel sums for BN stats
    # patch_ref: (H*W, 27*Cin) bf16       im2col scratch slab
    od = pl.program_id(1)

    # Build the im2col slab: column block k holds tap (kd, kh, kw).
    for kd in range(3):
        plane = x_ref[0, od + kd]                       # (H+2, W+2, Cin)
        for kh in range(3):
            for kw in range(3):
                k = (kd * 3 + kh) * 3 + kw
                tap = plane[kh:kh + H, kw:kw + W, :]    # (H, W, Cin)
                patch_ref[:, k * Cin:(k + 1) * Cin] = (
                    tap.reshape(H * W, Cin).astype(jnp.bfloat16))

    # Single MXU matmul with K = 27*Cin, f32 accumulation.
    acc = jnp.dot(patch_ref[...], w_ref[...],
                  preferred_element_type=jnp.float32)   # (H*W, Cout)
    acc = acc + b_ref[0, :]

    o_ref[0, 0] = acc.reshape(H, W, Cout)
    ssum_ref[0, 0, 0, :] = jnp.sum(acc, axis=0)
    ssq_ref[0, 0, 0, :] = jnp.sum(acc * acc, axis=0)


def conv3d(xp, wflat, b):
    # xp: (N, D+2, H+2, W+2, Cin) f32 (already zero-padded)
    # wflat: (27*Cin, Cout) bf16; b: (1, Cout) f32
    N, Dp2, Hp2, Wp2, Cin = xp.shape
    D, H, W = Dp2 - 2, Hp2 - 2, Wp2 - 2
    KK, Cout = wflat.shape
    kernel = partial(conv3d_kernel, H=H, W=W, Cin=Cin, Cout=Cout)
    return pl.pallas_call(
        kernel,
        out_shape=(
            jax.ShapeDtypeStruct((N, D, H, W, Cout), jnp.float32),
            jax.ShapeDtypeStruct((N, D, 1, Cout), jnp.float32),
            jax.ShapeDtypeStruct((N, D, 1, Cout), jnp.float32),
        ),
        grid=(N, D),
        in_specs=[
            # whole padded sample; block index ignores d -> DMA'd once per sample
            pl.BlockSpec((1, Dp2, Hp2, Wp2, Cin), lambda n, d: (n, 0, 0, 0, 0)),
            pl.BlockSpec((KK, Cout), lambda n, d: (0, 0)),
            pl.BlockSpec((1, Cout), lambda n, d: (0, 0)),
        ],
        out_specs=(
            pl.BlockSpec((1, 1, H, W, Cout), lambda n, d: (n, d, 0, 0, 0)),
            pl.BlockSpec((1, 1, 1, Cout), lambda n, d: (n, d, 0, 0)),
            pl.BlockSpec((1, 1, 1, Cout), lambda n, d: (n, d, 0, 0)),
        ),
        scratch_shapes=[pltpu.VMEM((H * W, KK), jnp.bfloat16)],
        compiler_params=pltpu.CompilerParams(
            dimension_semantics=("parallel", "parallel")),
    )(xp, wflat, b)


# ---------------------------------------------------------------------------
# Fused BatchNorm-apply + ReLU + zero padding for the next conv's input.
# Output is the (D+2, H+2, W+2) padded activation; halo slices are written as
# zeros (padding must be applied AFTER BN+ReLU to match PyTorch).
# ---------------------------------------------------------------------------
def bn_relu_pad_kernel(x_ref, scale_ref, shift_ref, o_ref, *, D, H, W):
    d = pl.program_id(1)                     # 0 .. D+1 (padded D index)
    o_ref[...] = jnp.zeros_like(o_ref)       # zero the whole padded slice

    @pl.when(jnp.logical_and(d >= 1, d <= D))
    def _():
        y = jnp.maximum(x_ref[0, 0] * scale_ref[0, :] + shift_ref[0, :], 0.0)
        o_ref[0, 0, 1:1 + H, 1:1 + W, :] = y


def bn_relu_pad(x, scale, shift):
    # x: (N, D, H, W, C) f32; scale/shift: (1, C) f32
    N, D, H, W, C = x.shape
    kernel = partial(bn_relu_pad_kernel, D=D, H=H, W=W)
    return pl.pallas_call(
        kernel,
        out_shape=jax.ShapeDtypeStruct((N, D + 2, H + 2, W + 2, C), jnp.float32),
        grid=(N, D + 2),
        in_specs=[
            pl.BlockSpec((1, 1, H, W, C),
                         lambda n, d: (n, jnp.clip(d - 1, 0, D - 1), 0, 0, 0)),
            pl.BlockSpec((1, C), lambda n, d: (0, 0)),
            pl.BlockSpec((1, C), lambda n, d: (0, 0)),
        ],
        out_specs=pl.BlockSpec((1, 1, H + 2, W + 2, C),
                               lambda n, d: (n, d, 0, 0, 0)),
        compiler_params=pltpu.CompilerParams(
            dimension_semantics=("parallel", "parallel")),
    )(x, scale, shift)


# ---------------------------------------------------------------------------
# Final fully-connected layer with layer-3 BN+ReLU fused into its prologue.
# Tiled over the F (reduction) axis, f32 accumulator, lane-dense (128) output.
# ---------------------------------------------------------------------------
def linear_bnrelu_kernel(x_ref, sc_ref, sh_ref, w_ref, b_ref, o_ref, acc_ref):
    k = pl.program_id(0)

    @pl.when(k == 0)
    def _():
        acc_ref[...] = jnp.zeros_like(acc_ref)

    xb = jnp.maximum(x_ref[...] * sc_ref[...] + sh_ref[...], 0.0)  # BN + ReLU
    acc_ref[...] += jnp.dot(xb.astype(jnp.bfloat16), w_ref[...],
                            preferred_element_type=jnp.float32)

    @pl.when(k == pl.num_programs(0) - 1)
    def _():
        o_ref[...] = acc_ref[...] + b_ref[...]


def linear_bnrelu(x, sc_cols, sh_cols, w_pad, b_pad, *, tk=2048):
    # x: (N, F) f32; sc/sh: (1, F) f32; w_pad: (F, 128) bf16; b_pad: (1, 128) f32
    N, F = x.shape
    lanes = w_pad.shape[1]
    tk = min(tk, F)
    if F % tk != 0:
        tk = F
    kt = F // tk
    return pl.pallas_call(
        linear_bnrelu_kernel,
        out_shape=jax.ShapeDtypeStruct((N, lanes), jnp.float32),
        grid=(kt,),
        in_specs=[
            pl.BlockSpec((N, tk), lambda k: (0, k)),
            pl.BlockSpec((1, tk), lambda k: (0, k)),
            pl.BlockSpec((1, tk), lambda k: (0, k)),
            pl.BlockSpec((tk, lanes), lambda k: (k, 0)),
            pl.BlockSpec((1, lanes), lambda k: (0, 0)),
        ],
        out_specs=pl.BlockSpec((N, lanes), lambda k: (0, 0)),
        scratch_shapes=[pltpu.VMEM((N, lanes), jnp.float32)],
        compiler_params=pltpu.CompilerParams(dimension_semantics=("arbitrary",)),
    )(x, sc_cols, sh_cols, w_pad, b_pad)


# ---------------------------------------------------------------------------
# Parameter preparation (one-time, outside the forward pass).
# ---------------------------------------------------------------------------
def prepare_params(raw, *, D, H, W, num_classes, lanes=128):
    p = {}
    for i in (1, 2, 3):
        w = raw[f"w{i}"]                                 # (3,3,3,Cin,Cout)
        cin, cout = w.shape[3], w.shape[4]
        p[f"w{i}"] = w.reshape(27 * cin, cout).astype(jnp.bfloat16)
        p[f"b{i}"] = raw[f"b{i}"].reshape(1, cout).astype(jnp.float32)
        p[f"g{i}"] = raw[f"g{i}"].astype(jnp.float32)
        p[f"be{i}"] = raw[f"be{i}"].astype(jnp.float32)
    C = raw["w3"].shape[4]
    F = C * D * H * W
    # fc weight given with rows in torch's CDHW flatten order -> permute once to
    # DHWC order so the forward pass needs no activation transpose; pad columns to
    # a lane-dense 128 and slice back to num_classes after the kernel.
    wf = raw["wf"].reshape(C, D, H, W, num_classes)
    wf = wf.transpose(1, 2, 3, 0, 4).reshape(F, num_classes)
    p["wf"] = jnp.pad(wf, ((0, 0), (0, lanes - num_classes))).astype(jnp.bfloat16)
    p["bf"] = jnp.pad(raw["bf"], (0, lanes - num_classes)
                      ).reshape(1, lanes).astype(jnp.float32)
    return p


def _bn_scale_shift(ssum, ssq, gamma, beta, count, eps=1e-5):
    # Tiny (N*D, C) reduction in plain JAX; matches PyTorch training-mode BN
    # (biased variance for normalization).
    mean = jnp.sum(ssum, axis=(0, 1, 2)) / count
    var = jnp.maximum(jnp.sum(ssq, axis=(0, 1, 2)) / count - mean * mean, 0.0)
    scale = gamma * jax.lax.rsqrt(var + eps)
    shift = beta - mean * scale
    C = scale.shape[0]
    return scale.reshape(1, C), shift.reshape(1, C)


# ---------------------------------------------------------------------------
# Full forward pass.
# ---------------------------------------------------------------------------
def transformer3d_forward(x_ncdhw, params, *, num_classes):
    N, _, D, H, W = x_ncdhw.shape
    count = N * D * H * W

    # NCDHW -> NDHWC (channels-last); pad the tiny Cin=1 input for conv1.
    x = jnp.transpose(x_ncdhw, (0, 2, 3, 4, 1)).astype(jnp.float32)
    xp = jnp.pad(x, ((0, 0), (1, 1), (1, 1), (1, 1), (0, 0)))

    # conv1 + bn1 + relu (+ pad for conv2)
    y1, s1, q1 = conv3d(xp, params["w1"], params["b1"])
    sc1, sh1 = _bn_scale_shift(s1, q1, params["g1"], params["be1"], count)
    a1p = bn_relu_pad(y1, sc1, sh1)

    # conv2 + bn2 + relu (+ pad for conv3)
    y2, s2, q2 = conv3d(a1p, params["w2"], params["b2"])
    sc2, sh2 = _bn_scale_shift(s2, q2, params["g2"], params["be2"], count)
    a2p = bn_relu_pad(y2, sc2, sh2)

    # conv3; bn3 + relu are fused into the fc kernel below.
    y3, s3, q3 = conv3d(a2p, params["w3"], params["b3"])
    sc3, sh3 = _bn_scale_shift(s3, q3, params["g3"], params["be3"], count)

    C = y3.shape[-1]
    F = C * D * H * W
    flat = y3.reshape(N, F)                               # DHWC flatten (free reshape)
    sc_cols = jnp.tile(sc3[0], D * H * W).reshape(1, F)   # per-column BN scale/shift
    sh_cols = jnp.tile(sh3[0], D * H * W).reshape(1, F)

    logits = linear_bnrelu(flat, sc_cols, sh_cols, params["wf"], params["bf"])
    return logits[:, :num_classes]


if __name__ == "__main__":
    N, D, H, W = 2, 4, 8, 8
    num_classes = 10

    key = jax.random.PRNGKey(0)
    keys = jax.random.split(key, 16)

    def init(k, shape, scale=0.05):
        return (scale * jax.random.normal(k, shape)).astype(jnp.float32)

    raw = {
        # conv1: Conv3d(1 -> 32, k=3, p=1)
        "w1": init(keys[0], (3, 3, 3, 1, 32)),
        "b1": init(keys[1], (32,)),
        "g1": 1.0 + init(keys[2], (32,)),
        "be1": init(keys[3], (32,)),
        # conv2: Conv3d(32 -> 64, k=3, p=1)
        "w2": init(keys[4], (3, 3, 3, 32, 64)),
        "b2": init(keys[5], (64,)),
        "g2": 1.0 + init(keys[6], (64,)),
        "be2": init(keys[7], (64,)),
        # conv3: Conv3d(64 -> 128, k=3, p=1)
        "w3": init(keys[8], (3, 3, 3, 64, 128)),
        "b3": init(keys[9], (128,)),
        "g3": 1.0 + init(keys[10], (128,)),
        "be3": init(keys[11], (128,)),
        # fc: Linear(128*D*H*W -> num_classes), weight rows in torch CDHW order
        "wf": init(keys[12], (128 * D * H * W, num_classes)),
        "bf": init(keys[13], (num_classes,)),
    }
    params = prepare_params(raw, D=D, H=H, W=W, num_classes=num_classes)

    # PyTorch-style input: (N, C=1, D, H, W)
    x = jax.random.normal(keys[14], (N, 1, D, H, W), dtype=jnp.float32)

    fwd = jax.jit(partial(transformer3d_forward, num_classes=num_classes))
    out = fwd(x, params)
    jax.block_until_ready(out)
    assert out.shape == (N, num_classes), out.shape
    assert bool(jnp.all(jnp.isfinite(out)))
    print("KERNEL_OK")
</pallas_src>

<mosaic_0001>
module attributes {stable_mosaic.version = 11 : i64} {
  func.func @conv3d_kernel(%arg0: i32, %arg1: i32, %arg2: memref<1x6x10x10x1xf32, #tpu.memory_space<vmem>>, %arg3: memref<27x32xbf16, #tpu.memory_space<vmem>>, %arg4: memref<1x32xf32, #tpu.memory_space<vmem>>, %arg5: memref<1x1x8x8x32xf32, #tpu.memory_space<vmem>>, %arg6: memref<1x1x1x32xf32, #tpu.memory_space<vmem>>, %arg7: memref<1x1x1x32xf32, #tpu.memory_space<vmem>>, %arg8: memref<64x27xbf16, #tpu.memory_space<vmem>>) attributes {dimension_semantics = [#tpu.dimension_semantics<parallel>, #tpu.dimension_semantics<parallel>], iteration_bounds = array<i64: 2, 4>, scalar_prefetch = 0 : i64, scratch_operands = 1 : i64, tpu.core_type = #tpu.core_type<tc>, window_params = [{transform_indices = @transform_0, window_bounds = array<i64: 1, 6, 10, 10, 1>}, {pipeline_mode = #tpu.pipeline_mode<synchronous>, transform_indices = @transform_1, window_bounds = array<i64: 27, 32>}, {pipeline_mode = #tpu.pipeline_mode<synchronous>, transform_indices = @transform_2, window_bounds = array<i64: 1, 32>}, {transform_indices = @transform_3, window_bounds = array<i64: 1, 1, 8, 8, 32>}, {transform_indices = @transform_4, window_bounds = array<i64: 1, 1, 1, 32>}, {transform_indices = @transform_5, window_bounds = array<i64: 1, 1, 1, 32>}]} {
    %c0_i32 = arith.constant 0 : i32
    %0 = arith.addi %arg1, %c0_i32 : i32
    %c0 = arith.constant 0 : index
    %1 = arith.index_cast %0 : i32 to index
    %c0_0 = arith.constant 0 : index
    %c0_1 = arith.constant 0 : index
    %c0_2 = arith.constant 0 : index
    %2 = vector.load %arg2[%c0, %1, %c0_0, %c0_1, %c0_2] : memref<1x6x10x10x1xf32, #tpu.memory_space<vmem>>, vector<1x1x10x10x1xf32>
    %3 = vector.shape_cast %2 : vector<1x1x10x10x1xf32> to vector<10x10x1xf32>
    %4 = vector.extract_strided_slice %3 {offsets = [0, 0, 0], sizes = [8, 8, 1], strides = [1, 1, 1]} : vector<10x10x1xf32> to vector<8x8x1xf32>
    %5 = vector.shape_cast %4 : vector<8x8x1xf32> to vector<64x1xf32>
    %6 = arith.truncf %5 : vector<64x1xf32> to vector<64x1xbf16>
    %c0_3 = arith.constant 0 : index
    %c0_4 = arith.constant 0 : index
    %7 = vector.load %arg8[%c0_3, %c0_4] : memref<64x27xbf16, #tpu.memory_space<vmem>>, vector<64x1xbf16>
    tpu.vector_store %arg8[%c0_3, %c0_4], %6 {strides = array<i32>} : memref<64x27xbf16, #tpu.memory_space<vmem>>, vector<64x1xbf16>,
    %8 = vector.extract_strided_slice %3 {offsets = [0, 1, 0], sizes = [8, 8, 1], strides = [1, 1, 1]} : vector<10x10x1xf32> to vector<8x8x1xf32>
    %9 = vector.shape_cast %8 : vector<8x8x1xf32> to vector<64x1xf32>
    %10 = arith.truncf %9 : vector<64x1xf32> to vector<64x1xbf16>
    %c0_5 = arith.constant 0 : index
    %c1 = arith.constant 1 : index
    %11 = vector.load %arg8[%c0_5, %c1] : memref<64x27xbf16, #tpu.memory_space<vmem>>, vector<64x1xbf16>
    tpu.vector_store %arg8[%c0_5, %c1], %10 {strides = array<i32>} : memref<64x27xbf16, #tpu.memory_space<vmem>>, vector<64x1xbf16>,
    %12 = vector.extract_strided_slice %3 {offsets = [0, 2, 0], sizes = [8, 8, 1], strides = [1, 1, 1]} : vector<10x10x1xf32> to vector<8x8x1xf32>
    %13 = vector.shape_cast %12 : vector<8x8x1xf32> to vector<64x1xf32>
    %14 = arith.truncf %13 : vector<64x1xf32> to vector<64x1xbf16>
    %c0_6 = arith.constant 0 : index
    %c2 = arith.constant 2 : index
    %15 = vector.load %arg8[%c0_6, %c2] : memref<64x27xbf16, #tpu.memory_space<vmem>>, vector<64x1xbf16>
    tpu.vector_store %arg8[%c0_6, %c2], %14 {strides = array<i32>} : memref<64x27xbf16, #tpu.memory_space<vmem>>, vector<64x1xbf16>,
    %16 = vector.extract_strided_slice %3 {offsets = [1, 0, 0], sizes = [8, 8, 1], strides = [1, 1, 1]} : vector<10x10x1xf32> to vector<8x8x1xf32>
    %17 = vector.shape_cast %16 : vector<8x8x1xf32> to vector<64x1xf32>
    %18 = arith.truncf %17 : vector<64x1xf32> to vector<64x1xbf16>
    %c0_7 = arith.constant 0 : index
    %c3 = arith.constant 3 : index
    %19 = vector.load %arg8[%c0_7, %c3] : memref<64x27xbf16, #tpu.memory_space<vmem>>, vector<64x1xbf16>
    tpu.vector_store %arg8[%c0_7, %c3], %18 {strides = array<i32>} : memref<64x27xbf16, #tpu.memory_space<vmem>>, vector<64x1xbf16>,
    %20 = vector.extract_strided_slice %3 {offsets = [1, 1, 0], sizes = [8, 8, 1], strides = [1, 1, 1]} : vector<10x10x1xf32> to vector<8x8x1xf32>
    %21 = vector.shape_cast %20 : vector<8x8x1xf32> to vector<64x1xf32>
    %22 = arith.truncf %21 : vector<64x1xf32> to vector<64x1xbf16>
    %c0_8 = arith.constant 0 : index
    %c4 = arith.constant 4 : index
    %23 = vector.load %arg8[%c0_8, %c4] : memref<64x27xbf16, #tpu.memory_space<vmem>>, vector<64x1xbf16>
    tpu.vector_store %arg8[%c0_8, %c4], %22 {strides = array<i32>} : memref<64x27xbf16, #tpu.memory_space<vmem>>, vector<64x1xbf16>,
    %24 = vector.extract_strided_slice %3 {offsets = [1, 2, 0], sizes = [8, 8, 1], strides = [1, 1, 1]} : vector<10x10x1xf32> to vector<8x8x1xf32>
    %25 = vector.shape_cast %24 : vector<8x8x1xf32> to vector<64x1xf32>
    %26 = arith.truncf %25 : vector<64x1xf32> to vector<64x1xbf16>
    %c0_9 = arith.constant 0 : index
    %c5 = arith.constant 5 : index
    %27 = vector.load %arg8[%c0_9, %c5] : memref<64x27xbf16, #tpu.memory_space<vmem>>, vector<64x1xbf16>
    tpu.vector_store %arg8[%c0_9, %c5], %26 {strides = array<i32>} : memref<64x27xbf16, #tpu.memory_space<vmem>>, vector<64x1xbf16>,
    %28 = vector.extract_strided_slice %3 {offsets = [2, 0, 0], sizes = [8, 8, 1], strides = [1, 1, 1]} : vector<10x10x1xf32> to vector<8x8x1xf32>
    %29 = vector.shape_cast %28 : vector<8x8x1xf32> to vector<64x1xf32>
    %30 = arith.truncf %29 : vector<64x1xf32> to vector<64x1xbf16>
    %c0_10 = arith.constant 0 : index
    %c6 = arith.constant 6 : index
    %31 = vector.load %arg8[%c0_10, %c6] : memref<64x27xbf16, #tpu.memory_space<vmem>>, vector<64x1xbf16>
    tpu.vector_store %arg8[%c0_10, %c6], %30 {strides = array<i32>} : memref<64x27xbf16, #tpu.memory_space<vmem>>, vector<64x1xbf16>,
    %32 = vector.extract_strided_slice %3 {offsets = [2, 1, 0], sizes = [8, 8, 1], strides = [1, 1, 1]} : vector<10x10x1xf32> to vector<8x8x1xf32>
    %33 = vector.shape_cast %32 : vector<8x8x1xf32> to vector<64x1xf32>
    %34 = arith.truncf %33 : vector<64x1xf32> to vector<64x1xbf16>
    %c0_11 = arith.constant 0 : index
    %c7 = arith.constant 7 : index
    %35 = vector.load %arg8[%c0_11, %c7] : memref<64x27xbf16, #tpu.memory_space<vmem>>, vector<64x1xbf16>
    tpu.vector_store %arg8[%c0_11, %c7], %34 {strides = array<i32>} : memref<64x27xbf16, #tpu.memory_space<vmem>>, vector<64x1xbf16>,
    %36 = vector.extract_strided_slice %3 {offsets = [2, 2, 0], sizes = [8, 8, 1], strides = [1, 1, 1]} : vector<10x10x1xf32> to vector<8x8x1xf32>
    %37 = vector.shape_cast %36 : vector<8x8x1xf32> to vector<64x1xf32>
    %38 = arith.truncf %37 : vector<64x1xf32> to vector<64x1xbf16>
    %c0_12 = arith.constant 0 : index
    %c8 = arith.constant 8 : index
    %39 = vector.load %arg8[%c0_12, %c8] : memref<64x27xbf16, #tpu.memory_space<vmem>>, vector<64x1xbf16>
    tpu.vector_store %arg8[%c0_12, %c8], %38 {strides = array<i32>} : memref<64x27xbf16, #tpu.memory_space<vmem>>, vector<64x1xbf16>,
    %c1_i32 = arith.constant 1 : i32
    %40 = arith.addi %arg1, %c1_i32 : i32
    %c0_13 = arith.constant 0 : index
    %41 = arith.index_cast %40 : i32 to index
    %c0_14 = arith.constant 0 : index
    %c0_15 = arith.constant 0 : index
    %c0_16 = arith.constant 0 : index
    %42 = vector.load %arg2[%c0_13, %41, %c0_14, %c0_15, %c0_16] : memref<1x6x10x10x1xf32, #tpu.memory_space<vmem>>, vector<1x1x10x10x1xf32>
    %43 = vector.shape_cast %42 : vector<1x1x10x10x1xf32> to vector<10x10x1xf32>
    %44 = vector.extract_strided_slice %43 {offsets = [0, 0, 0], sizes = [8, 8, 1], strides = [1, 1, 1]} : vector<10x10x1xf32> to vector<8x8x1xf32>
    %45 = vector.shape_cast %44 : vector<8x8x1xf32> to vector<64x1xf32>
    %46 = arith.truncf %45 : vector<64x1xf32> to vector<64x1xbf16>
    %c0_17 = arith.constant 0 : index
    %c9 = arith.constant 9 : index
    %47 = vector.load %arg8[%c0_17, %c9] : memref<64x27xbf16, #tpu.memory_space<vmem>>, vector<64x1xbf16>
    tpu.vector_store %arg8[%c0_17, %c9], %46 {strides = array<i32>} : memref<64x27xbf16, #tpu.memory_space<vmem>>, vector<64x1xbf16>,
    %48 = vector.extract_strided_slice %43 {offsets = [0, 1, 0], sizes = [8, 8, 1], strides = [1, 1, 1]} : vector<10x10x1xf32> to vector<8x8x1xf32>
    %49 = vector.shape_cast %48 : vector<8x8x1xf32> to vector<64x1xf32>
    %50 = arith.truncf %49 : vector<64x1xf32> to vector<64x1xbf16>
    %c0_18 = arith.constant 0 : index
    %c10 = arith.constant 10 : index
    %51 = vector.load %arg8[%c0_18, %c10] : memref<64x27xbf16, #tpu.memory_space<vmem>>, vector<64x1xbf16>
    tpu.vector_store %arg8[%c0_18, %c10], %50 {strides = array<i32>} : memref<64x27xbf16, #tpu.memory_space<vmem>>, vector<64x1xbf16>,
    %52 = vector.extract_strided_slice %43 {offsets = [0, 2, 0], sizes = [8, 8, 1], strides = [1, 1, 1]} : vector<10x10x1xf32> to vector<8x8x1xf32>
    %53 = vector.shape_cast %52 : vector<8x8x1xf32> to vector<64x1xf32>
    %54 = arith.truncf %53 : vector<64x1xf32> to vector<64x1xbf16>
    %c0_19 = arith.constant 0 : index
    %c11 = arith.constant 11 : index
    %55 = vector.load %arg8[%c0_19, %c11] : memref<64x27xbf16, #tpu.memory_space<vmem>>, vector<64x1xbf16>
    tpu.vector_store %arg8[%c0_19, %c11], %54 {strides = array<i32>} : memref<64x27xbf16, #tpu.memory_space<vmem>>, vector<64x1xbf16>,
    %56 = vector.extract_strided_slice %43 {offsets = [1, 0, 0], sizes = [8, 8, 1], strides = [1, 1, 1]} : vector<10x10x1xf32> to vector<8x8x1xf32>
    %57 = vector.shape_cast %56 : vector<8x8x1xf32> to vector<64x1xf32>
    %58 = arith.truncf %57 : vector<64x1xf32> to vector<64x1xbf16>
    %c0_20 = arith.constant 0 : index
    %c12 = arith.constant 12 : index
    %59 = vector.load %arg8[%c0_20, %c12] : memref<64x27xbf16, #tpu.memory_space<vmem>>, vector<64x1xbf16>
    tpu.vector_store %arg8[%c0_20, %c12], %58 {strides = array<i32>} : memref<64x27xbf16, #tpu.memory_space<vmem>>, vector<64x1xbf16>,
    %60 = vector.extract_strided_slice %43 {offsets = [1, 1, 0], sizes = [8, 8, 1], strides = [1, 1, 1]} : vector<10x10x1xf32> to vector<8x8x1xf32>
    %61 = vector.shape_cast %60 : vector<8x8x1xf32> to vector<64x1xf32>
    %62 = arith.truncf %61 : vector<64x1xf32> to vector<64x1xbf16>
    %c0_21 = arith.constant 0 : index
    %c13 = arith.constant 13 : index
    %63 = vector.load %arg8[%c0_21, %c13] : memref<64x27xbf16, #tpu.memory_space<vmem>>, vector<64x1xbf16>
    tpu.vector_store %arg8[%c0_21, %c13], %62 {strides = array<i32>} : memref<64x27xbf16, #tpu.memory_space<vmem>>, vector<64x1xbf16>,
    %64 = vector.extract_strided_slice %43 {offsets = [1, 2, 0], sizes = [8, 8, 1], strides = [1, 1, 1]} : vector<10x10x1xf32> to vector<8x8x1xf32>
    %65 = vector.shape_cast %64 : vector<8x8x1xf32> to vector<64x1xf32>
    %66 = arith.truncf %65 : vector<64x1xf32> to vector<64x1xbf16>
    %c0_22 = arith.constant 0 : index
    %c14 = arith.constant 14 : index
    %67 = vector.load %arg8[%c0_22, %c14] : memref<64x27xbf16, #tpu.memory_space<vmem>>, vector<64x1xbf16>
    tpu.vector_store %arg8[%c0_22, %c14], %66 {strides = array<i32>} : memref<64x27xbf16, #tpu.memory_space<vmem>>, vector<64x1xbf16>,
    %68 = vector.extract_strided_slice %43 {offsets = [2, 0, 0], sizes = [8, 8, 1], strides = [1, 1, 1]} : vector<10x10x1xf32> to vector<8x8x1xf32>
    %69 = vector.shape_cast %68 : vector<8x8x1xf32> to vector<64x1xf32>
    %70 = arith.truncf %69 : vector<64x1xf32> to vector<64x1xbf16>
    %c0_23 = arith.constant 0 : index
    %c15 = arith.constant 15 : index
    %71 = vector.load %arg8[%c0_23, %c15] : memref<64x27xbf16, #tpu.memory_space<vmem>>, vector<64x1xbf16>
    tpu.vector_store %arg8[%c0_23, %c15], %70 {strides = array<i32>} : memref<64x27xbf16, #tpu.memory_space<vmem>>, vector<64x1xbf16>,
    %72 = vector.extract_strided_slice %43 {offsets = [2, 1, 0], sizes = [8, 8, 1], strides = [1, 1, 1]} : vector<10x10x1xf32> to vector<8x8x1xf32>
    %73 = vector.shape_cast %72 : vector<8x8x1xf32> to vector<64x1xf32>
    %74 = arith.truncf %73 : vector<64x1xf32> to vector<64x1xbf16>
    %c0_24 = arith.constant 0 : index
    %c16 = arith.constant 16 : index
    %75 = vector.load %arg8[%c0_24, %c16] : memref<64x27xbf16, #tpu.memory_space<vmem>>, vector<64x1xbf16>
    tpu.vector_store %arg8[%c0_24, %c16], %74 {strides = array<i32>} : memref<64x27xbf16, #tpu.memory_space<vmem>>, vector<64x1xbf16>,
    %76 = vector.extract_strided_slice %43 {offsets = [2, 2, 0], sizes = [8, 8, 1], strides = [1, 1, 1]} : vector<10x10x1xf32> to vector<8x8x1xf32>
    %77 = vector.shape_cast %76 : vector<8x8x1xf32> to vector<64x1xf32>
    %78 = arith.truncf %77 : vector<64x1xf32> to vector<64x1xbf16>
    %c0_25 = arith.constant 0 : index
    %c17 = arith.constant 17 : index
    %79 = vector.load %arg8[%c0_25, %c17] : memref<64x27xbf16, #tpu.memory_space<vmem>>, vector<64x1xbf16>
    tpu.vector_store %arg8[%c0_25, %c17], %78 {strides = array<i32>} : memref<64x27xbf16, #tpu.memory_space<vmem>>, vector<64x1xbf16>,
    %c2_i32 = arith.constant 2 : i32
    %80 = arith.addi %arg1, %c2_i32 : i32
    %c0_26 = arith.constant 0 : index
    %81 = arith.index_cast %80 : i32 to index
    %c0_27 = arith.constant 0 : index
    %c0_28 = arith.constant 0 : index
    %c0_29 = arith.constant 0 : index
    %82 = vector.load %arg2[%c0_26, %81, %c0_27, %c0_28, %c0_29] : memref<1x6x10x10x1xf32, #tpu.memory_space<vmem>>, vector<1x1x10x10x1xf32>
    %83 = vector.shape_cast %82 : vector<1x1x10x10x1xf32> to vector<10x10x1xf32>
    %84 = vector.extract_strided_slice %83 {offsets = [0, 0, 0], sizes = [8, 8, 1], strides = [1, 1, 1]} : vector<10x10x1xf32> to vector<8x8x1xf32>
    %85 = vector.shape_cast %84 : vector<8x8x1xf32> to vector<64x1xf32>
    %86 = arith.truncf %85 : vector<64x1xf32> to vector<64x1xbf16>
    %c0_30 = arith.constant 0 : index
    %c18 = arith.constant 18 : index
    %87 = vector.load %arg8[%c0_30, %c18] : memref<64x27xbf16, #tpu.memory_space<vmem>>, vector<64x1xbf16>
    tpu.vector_store %arg8[%c0_30, %c18], %86 {strides = array<i32>} : memref<64x27xbf16, #tpu.memory_space<vmem>>, vector<64x1xbf16>,
    %88 = vector.extract_strided_slice %83 {offsets = [0, 1, 0], sizes = [8, 8, 1], strides = [1, 1, 1]} : vector<10x10x1xf32> to vector<8x8x1xf32>
    %89 = vector.shape_cast %88 : vector<8x8x1xf32> to vector<64x1xf32>
    %90 = arith.truncf %89 : vector<64x1xf32> to vector<64x1xbf16>
    %c0_31 = arith.constant 0 : index
    %c19 = arith.constant 19 : index
    %91 = vector.load %arg8[%c0_31, %c19] : memref<64x27xbf16, #tpu.memory_space<vmem>>, vector<64x1xbf16>
    tpu.vector_store %arg8[%c0_31, %c19], %90 {strides = array<i32>} : memref<64x27xbf16, #tpu.memory_space<vmem>>, vector<64x1xbf16>,
    %92 = vector.extract_strided_slice %83 {offsets = [0, 2, 0], sizes = [8, 8, 1], strides = [1, 1, 1]} : vector<10x10x1xf32> to vector<8x8x1xf32>
    %93 = vector.shape_cast %92 : vector<8x8x1xf32> to vector<64x1xf32>
    %94 = arith.truncf %93 : vector<64x1xf32> to vector<64x1xbf16>
    %c0_32 = arith.constant 0 : index
    %c20 = arith.constant 20 : index
    %95 = vector.load %arg8[%c0_32, %c20] : memref<64x27xbf16, #tpu.memory_space<vmem>>, vector<64x1xbf16>
    tpu.vector_store %arg8[%c0_32, %c20], %94 {strides = array<i32>} : memref<64x27xbf16, #tpu.memory_space<vmem>>, vector<64x1xbf16>,
    %96 = vector.extract_strided_slice %83 {offsets = [1, 0, 0], sizes = [8, 8, 1], strides = [1, 1, 1]} : vector<10x10x1xf32> to vector<8x8x1xf32>
    %97 = vector.shape_cast %96 : vector<8x8x1xf32> to vector<64x1xf32>
    %98 = arith.truncf %97 : vector<64x1xf32> to vector<64x1xbf16>
    %c0_33 = arith.constant 0 : index
    %c21 = arith.constant 21 : index
    %99 = vector.load %arg8[%c0_33, %c21] : memref<64x27xbf16, #tpu.memory_space<vmem>>, vector<64x1xbf16>
    tpu.vector_store %arg8[%c0_33, %c21], %98 {strides = array<i32>} : memref<64x27xbf16, #tpu.memory_space<vmem>>, vector<64x1xbf16>,
    %100 = vector.extract_strided_slice %83 {offsets = [1, 1, 0], sizes = [8, 8, 1], strides = [1, 1, 1]} : vector<10x10x1xf32> to vector<8x8x1xf32>
    %101 = vector.shape_cast %100 : vector<8x8x1xf32> to vector<64x1xf32>
    %102 = arith.truncf %101 : vector<64x1xf32> to vector<64x1xbf16>
    %c0_34 = arith.constant 0 : index
    %c22 = arith.constant 22 : index
    %103 = vector.load %arg8[%c0_34, %c22] : memref<64x27xbf16, #tpu.memory_space<vmem>>, vector<64x1xbf16>
    tpu.vector_store %arg8[%c0_34, %c22], %102 {strides = array<i32>} : memref<64x27xbf16, #tpu.memory_space<vmem>>, vector<64x1xbf16>,
    %104 = vector.extract_strided_slice %83 {offsets = [1, 2, 0], sizes = [8, 8, 1], strides = [1, 1, 1]} : vector<10x10x1xf32> to vector<8x8x1xf32>
    %105 = vector.shape_cast %104 : vector<8x8x1xf32> to vector<64x1xf32>
    %106 = arith.truncf %105 : vector<64x1xf32> to vector<64x1xbf16>
    %c0_35 = arith.constant 0 : index
    %c23 = arith.constant 23 : index
    %107 = vector.load %arg8[%c0_35, %c23] : memref<64x27xbf16, #tpu.memory_space<vmem>>, vector<64x1xbf16>
    tpu.vector_store %arg8[%c0_35, %c23], %106 {strides = array<i32>} : memref<64x27xbf16, #tpu.memory_space<vmem>>, vector<64x1xbf16>,
    %108 = vector.extract_strided_slice %83 {offsets = [2, 0, 0], sizes = [8, 8, 1], strides = [1, 1, 1]} : vector<10x10x1xf32> to vector<8x8x1xf32>
    %109 = vector.shape_cast %108 : vector<8x8x1xf32> to vector<64x1xf32>
    %110 = arith.truncf %109 : vector<64x1xf32> to vector<64x1xbf16>
    %c0_36 = arith.constant 0 : index
    %c24 = arith.constant 24 : index
    %111 = vector.load %arg8[%c0_36, %c24] : memref<64x27xbf16, #tpu.memory_space<vmem>>, vector<64x1xbf16>
    tpu.vector_store %arg8[%c0_36, %c24], %110 {strides = array<i32>} : memref<64x27xbf16, #tpu.memory_space<vmem>>, vector<64x1xbf16>,
    %112 = vector.extract_strided_slice %83 {offsets = [2, 1, 0], sizes = [8, 8, 1], strides = [1, 1, 1]} : vector<10x10x1xf32> to vector<8x8x1xf32>
    %113 = vector.shape_cast %112 : vector<8x8x1xf32> to vector<64x1xf32>
    %114 = arith.truncf %113 : vector<64x1xf32> to vector<64x1xbf16>
    %c0_37 = arith.constant 0 : index
    %c25 = arith.constant 25 : index
    %115 = vector.load %arg8[%c0_37, %c25] : memref<64x27xbf16, #tpu.memory_space<vmem>>, vector<64x1xbf16>
    tpu.vector_store %arg8[%c0_37, %c25], %114 {strides = array<i32>} : memref<64x27xbf16, #tpu.memory_space<vmem>>, vector<64x1xbf16>,
    %116 = vector.extract_strided_slice %83 {offsets = [2, 2, 0], sizes = [8, 8, 1], strides = [1, 1, 1]} : vector<10x10x1xf32> to vector<8x8x1xf32>
    %117 = vector.shape_cast %116 : vector<8x8x1xf32> to vector<64x1xf32>
    %118 = arith.truncf %117 : vector<64x1xf32> to vector<64x1xbf16>
    %c0_38 = arith.constant 0 : index
    %c26 = arith.constant 26 : index
    %119 = vector.load %arg8[%c0_38, %c26] : memref<64x27xbf16, #tpu.memory_space<vmem>>, vector<64x1xbf16>
    tpu.vector_store %arg8[%c0_38, %c26], %118 {strides = array<i32>} : memref<64x27xbf16, #tpu.memory_space<vmem>>, vector<64x1xbf16>,
    %c0_39 = arith.constant 0 : index
    %c0_40 = arith.constant 0 : index
    %120 = vector.load %arg8[%c0_39, %c0_40] : memref<64x27xbf16, #tpu.memory_space<vmem>>, vector<64x27xbf16>
    %c0_41 = arith.constant 0 : index
    %c0_42 = arith.constant 0 : index
    %121 = vector.load %arg3[%c0_41, %c0_42] : memref<27x32xbf16, #tpu.memory_space<vmem>>, vector<27x32xbf16>
    %cst = arith.constant dense<0.000000e+00> : vector<64x32xf32>
    %122 = tpu.matmul %120, %121, %cst {dimension_numbers = #tpu.dot_dimension_numbers<[1], [0], [0], [1], [0, 0, 1, 1], [], []>} : vector<64x27xbf16>, vector<27x32xbf16>, vector<64x32xf32> -> vector<64x32xf32>
    %c0_43 = arith.constant 0 : index
    %c0_44 = arith.constant 0 : index
    %123 = vector.load %arg4[%c0_43, %c0_44] : memref<1x32xf32, #tpu.memory_space<vmem>>, vector<1x32xf32>
    %124 = vector.shape_cast %123 : vector<1x32xf32> to vector<32xf32>
    %125 = vector.shape_cast %124 : vector<32xf32> to vector<1x32xf32>
    %126 = vector.broadcast %125 : vector<1x32xf32> to vector<64x32xf32>
    %127 = arith.addf %122, %126 : vector<64x32xf32>
    %128 = vector.shape_cast %127 : vector<64x32xf32> to vector<8x8x32xf32>
    %c0_45 = arith.constant 0 : index
    %c0_46 = arith.constant 0 : index
    %c0_47 = arith.constant 0 : index
    %c0_48 = arith.constant 0 : index
    %c0_49 = arith.constant 0 : index
    %129 = vector.load %arg5[%c0_45, %c0_46, %c0_47, %c0_48, %c0_49] : memref<1x1x8x8x32xf32, #tpu.memory_space<vmem>>, vector<1x1x8x8x32xf32>
    %130 = vector.shape_cast %129 : vector<1x1x8x8x32xf32> to vector<8x8x32xf32>
    %131 = vector.shape_cast %128 : vector<8x8x32xf32> to vector<1x1x8x8x32xf32>
    tpu.vector_store %arg5[%c0_45, %c0_46, %c0_47, %c0_48, %c0_49], %131 {strides = array<i32>} : memref<1x1x8x8x32xf32, #tpu.memory_space<vmem>>, vector<1x1x8x8x32xf32>,
    %cst_50 = arith.constant dense<0.000000e+00> : vector<32xf32>
    %132 = vector.multi_reduction <add>, %127, %cst_50 [0] : vector<64x32xf32> to vector<32xf32>
    %c0_51 = arith.constant 0 : index
    %c0_52 = arith.constant 0 : index
    %c0_53 = arith.constant 0 : index
    %c0_54 = arith.constant 0 : index
    %133 = vector.load %arg6[%c0_51, %c0_52, %c0_53, %c0_54] : memref<1x1x1x32xf32, #tpu.memory_space<vmem>>, vector<1x1x1x32xf32>
    %134 = vector.shape_cast %133 : vector<1x1x1x32xf32> to vector<32xf32>
    %135 = vector.shape_cast %132 : vector<32xf32> to vector<1x1x1x32xf32>
    tpu.vector_store %arg6[%c0_51, %c0_52, %c0_53, %c0_54], %135 {strides = array<i32>} : memref<1x1x1x32xf32, #tpu.memory_space<vmem>>, vector<1x1x1x32xf32>,
    %136 = arith.mulf %127, %127 : vector<64x32xf32>
    %cst_55 = arith.constant dense<0.000000e+00> : vector<32xf32>
    %137 = vector.multi_reduction <add>, %136, %cst_55 [0] : vector<64x32xf32> to vector<32xf32>
    %c0_56 = arith.constant 0 : index
    %c0_57 = arith.constant 0 : index
    %c0_58 = arith.constant 0 : index
    %c0_59 = arith.constant 0 : index
    %138 = vector.load %arg7[%c0_56, %c0_57, %c0_58, %c0_59] : memref<1x1x1x32xf32, #tpu.memory_space<vmem>>, vector<1x1x1x32xf32>
    %139 = vector.shape_cast %138 : vector<1x1x1x32xf32> to vector<32xf32>
    %140 = vector.shape_cast %137 : vector<32xf32> to vector<1x1x1x32xf32>
    tpu.vector_store %arg7[%c0_56, %c0_57, %c0_58, %c0_59], %140 {strides = array<i32>} : memref<1x1x1x32xf32, #tpu.memory_space<vmem>>, vector<1x1x1x32xf32>,
    return
  }
  func.func @transform_0(%arg0: i32, %arg1: i32) -> (i32, i32, i32, i32, i32) {
    %c0_i32 = arith.constant 0 : i32
    %c0_i32_0 = arith.constant 0 : i32
    %c0_i32_1 = arith.constant 0 : i32
    %c0_i32_2 = arith.constant 0 : i32
    %c0_i32_3 = arith.constant 0 : i32
    return %arg0, %c0_i32, %c0_i32_0, %c0_i32_1, %c0_i32_2 : i32, i32, i32, i32, i32
  }
  func.func @transform_1(%arg0: i32, %arg1: i32) -> (i32, i32) {
    %c0_i32 = arith.constant 0 : i32
    %c0_i32_0 = arith.constant 0 : i32
    %c0_i32_1 = arith.constant 0 : i32
    return %c0_i32, %c0_i32_0 : i32, i32
  }
  func.func @transform_2(%arg0: i32, %arg1: i32) -> (i32, i32) {
    %c0_i32 = arith.constant 0 : i32
    %c0_i32_0 = arith.constant 0 : i32
    %c0_i32_1 = arith.constant 0 : i32
    return %c0_i32, %c0_i32_0 : i32, i32
  }
  func.func @transform_3(%arg0: i32, %arg1: i32) -> (i32, i32, i32, i32, i32) {
    %c0_i32 = arith.constant 0 : i32
    %c0_i32_0 = arith.constant 0 : i32
    %c0_i32_1 = arith.constant 0 : i32
    %c0_i32_2 = arith.constant 0 : i32
    return %arg0, %arg1, %c0_i32, %c0_i32_0, %c0_i32_1 : i32, i32, i32, i32, i32
  }
  func.func @transform_4(%arg0: i32, %arg1: i32) -> (i32, i32, i32, i32) {
    %c0_i32 = arith.constant 0 : i32
    %c0_i32_0 = arith.constant 0 : i32
    %c0_i32_1 = arith.constant 0 : i32
    return %arg0, %arg1, %c0_i32, %c0_i32_0 : i32, i32, i32, i32
  }
  func.func @transform_5(%arg0: i32, %arg1: i32) -> (i32, i32, i32, i32) {
    %c0_i32 = arith.constant 0 : i32
    %c0_i32_0 = arith.constant 0 : i32
    %c0_i32_1 = arith.constant 0 : i32
    return %arg0, %arg1, %c0_i32, %c0_i32_0 : i32, i32, i32, i32
  }
}

module attributes {stable_mosaic.version = 11 : i64} {
  func.func @bn_relu_pad_kernel(%arg0: i32, %arg1: i32, %arg2: memref<1x1x8x8x32xf32, #tpu.memory_space<vmem>>, %arg3: memref<1x32xf32, #tpu.memory_space<vmem>>, %arg4: memref<1x32xf32, #tpu.memory_space<vmem>>, %arg5: memref<1x1x10x10x32xf32, #tpu.memory_space<vmem>>) attributes {dimension_semantics = [#tpu.dimension_semantics<parallel>, #tpu.dimension_semantics<parallel>], iteration_bounds = array<i64: 2, 6>, scalar_prefetch = 0 : i64, scratch_operands = 0 : i64, tpu.core_type = #tpu.core_type<tc>, window_params = [{transform_indices = @transform_0, window_bounds = array<i64: 1, 1, 8, 8, 32>}, {pipeline_mode = #tpu.pipeline_mode<synchronous>, transform_indices = @transform_1, window_bounds = array<i64: 1, 32>}, {pipeline_mode = #tpu.pipeline_mode<synchronous>, transform_indices = @transform_2, window_bounds = array<i64: 1, 32>}, {transform_indices = @transform_3, window_bounds = array<i64: 1, 1, 10, 10, 32>}]} {
    %cst = arith.constant 0.000000e+00 : f32
    %0 = vector.broadcast %cst : f32 to vector<1x1x10x10x32xf32>
    %c0 = arith.constant 0 : index
    %c0_0 = arith.constant 0 : index
    %c0_1 = arith.constant 0 : index
    %c0_2 = arith.constant 0 : index
    %c0_3 = arith.constant 0 : index
    %1 = vector.load %arg5[%c0, %c0_0, %c0_1, %c0_2, %c0_3] : memref<1x1x10x10x32xf32, #tpu.memory_space<vmem>>, vector<1x1x10x10x32xf32>
    tpu.vector_store %arg5[%c0, %c0_0, %c0_1, %c0_2, %c0_3], %0 {strides = array<i32>} : memref<1x1x10x10x32xf32, #tpu.memory_space<vmem>>, vector<1x1x10x10x32xf32>,
    %c1_i32 = arith.constant 1 : i32
    %2 = arith.cmpi sge, %arg1, %c1_i32 : i32
    %c4_i32 = arith.constant 4 : i32
    %3 = arith.cmpi sle, %arg1, %c4_i32 : i32
    %4 = arith.andi %2, %3 : i1
    %5 = arith.extui %4 : i1 to i32
    %c0_i32 = arith.constant 0 : i32
    %6 = arith.cmpi ne, %5, %c0_i32 : i32
    scf.if %6 {
      %c0_4 = arith.constant 0 : index
      %c0_5 = arith.constant 0 : index
      %c0_6 = arith.constant 0 : index
      %c0_7 = arith.constant 0 : index
      %c0_8 = arith.constant 0 : index
      %7 = vector.load %arg2[%c0_4, %c0_5, %c0_6, %c0_7, %c0_8] : memref<1x1x8x8x32xf32, #tpu.memory_space<vmem>>, vector<1x1x8x8x32xf32>
      %8 = vector.shape_cast %7 : vector<1x1x8x8x32xf32> to vector<8x8x32xf32>
      %c0_9 = arith.constant 0 : index
      %c0_10 = arith.constant 0 : index
      %9 = vector.load %arg3[%c0_9, %c0_10] : memref<1x32xf32, #tpu.memory_space<vmem>>, vector<1x32xf32>
      %10 = vector.shape_cast %9 : vector<1x32xf32> to vector<32xf32>
      %11 = vector.shape_cast %10 : vector<32xf32> to vector<1x1x32xf32>
      %12 = vector.broadcast %11 : vector<1x1x32xf32> to vector<8x8x32xf32>
      %13 = arith.mulf %8, %12 : vector<8x8x32xf32>
      %c0_11 = arith.constant 0 : index
      %c0_12 = arith.constant 0 : index
      %14 = vector.load %arg4[%c0_11, %c0_12] : memref<1x32xf32, #tpu.memory_space<vmem>>, vector<1x32xf32>
      %15 = vector.shape_cast %14 : vector<1x32xf32> to vector<32xf32>
      %16 = vector.shape_cast %15 : vector<32xf32> to vector<1x1x32xf32>
      %17 = vector.broadcast %16 : vector<1x1x32xf32> to vector<8x8x32xf32>
      %18 = arith.addf %13, %17 : vector<8x8x32xf32>
      %cst_13 = arith.constant 0.000000e+00 : f32
      %19 = vector.broadcast %cst_13 : f32 to vector<8x8x32xf32>
      %20 = arith.maximumf %18, %19 : vector<8x8x32xf32>
      %c0_14 = arith.constant 0 : index
      %c0_15 = arith.constant 0 : index
      %c1 = arith.constant 1 : index
      %c1_16 = arith.constant 1 : index
      %c0_17 = arith.constant 0 : index
      %21 = vector.load %arg5[%c0_14, %c0_15, %c1, %c1_16, %c0_17] : memref<1x1x10x10x32xf32, #tpu.memory_space<vmem>>, vector<1x1x8x8x32xf32>
      %22 = vector.shape_cast %21 : vector<1x1x8x8x32xf32> to vector<8x8x32xf32>
      %23 = vector.shape_cast %20 : vector<8x8x32xf32> to vector<1x1x8x8x32xf32>
      tpu.vector_store %arg5[%c0_14, %c0_15, %c1, %c1_16, %c0_17], %23 {strides = array<i32>} : memref<1x1x10x10x32xf32, #tpu.memory_space<vmem>>, vector<1x1x8x8x32xf32>,
    } else {
    }
    return
  }
  func.func @transform_0(%arg0: i32, %arg1: i32) -> (i32, i32, i32, i32, i32) {
    %c1_i32 = arith.constant 1 : i32
    %0 = arith.subi %arg1, %c1_i32 : i32
    %c0_i32 = arith.constant 0 : i32
    %c3_i32 = arith.constant 3 : i32
    %1 = arith.maxsi %c0_i32, %0 : i32
    %2 = arith.minsi %c3_i32, %1 : i32
    %c0_i32_0 = arith.constant 0 : i32
    %c0_i32_1 = arith.constant 0 : i32
    %c0_i32_2 = arith.constant 0 : i32
    %c0_i32_3 = arith.constant 0 : i32
    return %arg0, %2, %c0_i32_0, %c0_i32_1, %c0_i32_2 : i32, i32, i32, i32, i32
  }
  func.func @transform_1(%arg0: i32, %arg1: i32) -> (i32, i32) {
    %c0_i32 = arith.constant 0 : i32
    %c0_i32_0 = arith.constant 0 : i32
    %c0_i32_1 = arith.constant 0 : i32
    return %c0_i32, %c0_i32_0 : i32, i32
  }
  func.func @transform_2(%arg0: i32, %arg1: i32) -> (i32, i32) {
    %c0_i32 = arith.constant 0 : i32
    %c0_i32_0 = arith.constant 0 : i32
    %c0_i32_1 = arith.constant 0 : i32
    return %c0_i32, %c0_i32_0 : i32, i32
  }
  func.func @transform_3(%arg0: i32, %arg1: i32) -> (i32, i32, i32, i32, i32) {
    %c0_i32 = arith.constant 0 : i32
    %c0_i32_0 = arith.constant 0 : i32
    %c0_i32_1 = arith.constant 0 : i32
    %c0_i32_2 = arith.constant 0 : i32
    return %arg0, %arg1, %c0_i32, %c0_i32_0, %c0_i32_1 : i32, i32, i32, i32, i32
  }
}

module attributes {stable_mosaic.version = 11 : i64} {
  func.func @conv3d_kernel(%arg0: i32, %arg1: i32, %arg2: memref<1x6x10x10x32xf32, #tpu.memory_space<vmem>>, %arg3: memref<864x64xbf16, #tpu.memory_space<vmem>>, %arg4: memref<1x64xf32, #tpu.memory_space<vmem>>, %arg5: memref<1x1x8x8x64xf32, #tpu.memory_space<vmem>>, %arg6: memref<1x1x1x64xf32, #tpu.memory_space<vmem>>, %arg7: memref<1x1x1x64xf32, #tpu.memory_space<vmem>>, %arg8: memref<64x864xbf16, #tpu.memory_space<vmem>>) attributes {dimension_semantics = [#tpu.dimension_semantics<parallel>, #tpu.dimension_semantics<parallel>], iteration_bounds = array<i64: 2, 4>, scalar_prefetch = 0 : i64, scratch_operands = 1 : i64, tpu.core_type = #tpu.core_type<tc>, window_params = [{transform_indices = @transform_0, window_bounds = array<i64: 1, 6, 10, 10, 32>}, {pipeline_mode = #tpu.pipeline_mode<synchronous>, transform_indices = @transform_1, window_bounds = array<i64: 864, 64>}, {pipeline_mode = #tpu.pipeline_mode<synchronous>, transform_indices = @transform_2, window_bounds = array<i64: 1, 64>}, {transform_indices = @transform_3, window_bounds = array<i64: 1, 1, 8, 8, 64>}, {transform_indices = @transform_4, window_bounds = array<i64: 1, 1, 1, 64>}, {transform_indices = @transform_5, window_bounds = array<i64: 1, 1, 1, 64>}]} {
    %c0_i32 = arith.constant 0 : i32
    %0 = arith.addi %arg1, %c0_i32 : i32
    %c0 = arith.constant 0 : index
    %1 = arith.index_cast %0 : i32 to index
    %c0_0 = arith.constant 0 : index
    %c0_1 = arith.constant 0 : index
    %c0_2 = arith.constant 0 : index
    %2 = vector.load %arg2[%c0, %1, %c0_0, %c0_1, %c0_2] : memref<1x6x10x10x32xf32, #tpu.memory_space<vmem>>, vector<1x1x10x10x32xf32>
    %3 = vector.shape_cast %2 : vector<1x1x10x10x32xf32> to vector<10x10x32xf32>
    %4 = vector.extract_strided_slice %3 {offsets = [0, 0, 0], sizes = [8, 8, 32], strides = [1, 1, 1]} : vector<10x10x32xf32> to vector<8x8x32xf32>
    %5 = vector.shape_cast %4 : vector<8x8x32xf32> to vector<64x32xf32>
    %6 = arith.truncf %5 : vector<64x32xf32> to vector<64x32xbf16>
    %c0_3 = arith.constant 0 : index
    %c0_4 = arith.constant 0 : index
    %7 = vector.load %arg8[%c0_3, %c0_4] : memref<64x864xbf16, #tpu.memory_space<vmem>>, vector<64x32xbf16>
    tpu.vector_store %arg8[%c0_3, %c0_4], %6 {strides = array<i32>} : memref<64x864xbf16, #tpu.memory_space<vmem>>, vector<64x32xbf16>,
    %8 = vector.extract_strided_slice %3 {offsets = [0, 1, 0], sizes = [8, 8, 32], strides = [1, 1, 1]} : vector<10x10x32xf32> to vector<8x8x32xf32>
    %9 = vector.shape_cast %8 : vector<8x8x32xf32> to vector<64x32xf32>
    %10 = arith.truncf %9 : vector<64x32xf32> to vector<64x32xbf16>
    %c0_5 = arith.constant 0 : index
    %c32 = arith.constant 32 : index
    %11 = vector.load %arg8[%c0_5, %c32] : memref<64x864xbf16, #tpu.memory_space<vmem>>, vector<64x32xbf16>
    tpu.vector_store %arg8[%c0_5, %c32], %10 {strides = array<i32>} : memref<64x864xbf16, #tpu.memory_space<vmem>>, vector<64x32xbf16>,
    %12 = vector.extract_strided_slice %3 {offsets = [0, 2, 0], sizes = [8, 8, 32], strides = [1, 1, 1]} : vector<10x10x32xf32> to vector<8x8x32xf32>
    %13 = vector.shape_cast %12 : vector<8x8x32xf32> to vector<64x32xf32>
    %14 = arith.truncf %13 : vector<64x32xf32> to vector<64x32xbf16>
    %c0_6 = arith.constant 0 : index
    %c64 = arith.constant 64 : index
    %15 = vector.load %arg8[%c0_6, %c64] : memref<64x864xbf16, #tpu.memory_space<vmem>>, vector<64x32xbf16>
    tpu.vector_store %arg8[%c0_6, %c64], %14 {strides = array<i32>} : memref<64x864xbf16, #tpu.memory_space<vmem>>, vector<64x32xbf16>,
    %16 = vector.extract_strided_slice %3 {offsets = [1, 0, 0], sizes = [8, 8, 32], strides = [1, 1, 1]} : vector<10x10x32xf32> to vector<8x8x32xf32>
    %17 = vector.shape_cast %16 : vector<8x8x32xf32> to vector<64x32xf32>
    %18 = arith.truncf %17 : vector<64x32xf32> to vector<64x32xbf16>
    %c0_7 = arith.constant 0 : index
    %c96 = arith.constant 96 : index
    %19 = vector.load %arg8[%c0_7, %c96] : memref<64x864xbf16, #tpu.memory_space<vmem>>, vector<64x32xbf16>
    tpu.vector_store %arg8[%c0_7, %c96], %18 {strides = array<i32>} : memref<64x864xbf16, #tpu.memory_space<vmem>>, vector<64x32xbf16>,
    %20 = vector.extract_strided_slice %3 {offsets = [1, 1, 0], sizes = [8, 8, 32], strides = [1, 1, 1]} : vector<10x10x32xf32> to vector<8x8x32xf32>
    %21 = vector.shape_cast %20 : vector<8x8x32xf32> to vector<64x32xf32>
    %22 = arith.truncf %21 : vector<64x32xf32> to vector<64x32xbf16>
    %c0_8 = arith.constant 0 : index
    %c128 = arith.constant 128 : index
    %23 = vector.load %arg8[%c0_8, %c128] : memref<64x864xbf16, #tpu.memory_space<vmem>>, vector<64x32xbf16>
    tpu.vector_store %arg8[%c0_8, %c128], %22 {strides = array<i32>} : memref<64x864xbf16, #tpu.memory_space<vmem>>, vector<64x32xbf16>,
    %24 = vector.extract_strided_slice %3 {offsets = [1, 2, 0], sizes = [8, 8, 32], strides = [1, 1, 1]} : vector<10x10x32xf32> to vector<8x8x32xf32>
    %25 = vector.shape_cast %24 : vector<8x8x32xf32> to vector<64x32xf32>
    %26 = arith.truncf %25 : vector<64x32xf32> to vector<64x32xbf16>
    %c0_9 = arith.constant 0 : index
    %c160 = arith.constant 160 : index
    %27 = vector.load %arg8[%c0_9, %c160] : memref<64x864xbf16, #tpu.memory_space<vmem>>, vector<64x32xbf16>
    tpu.vector_store %arg8[%c0_9, %c160], %26 {strides = array<i32>} : memref<64x864xbf16, #tpu.memory_space<vmem>>, vector<64x32xbf16>,
    %28 = vector.extract_strided_slice %3 {offsets = [2, 0, 0], sizes = [8, 8, 32], strides = [1, 1, 1]} : vector<10x10x32xf32> to vector<8x8x32xf32>
    %29 = vector.shape_cast %28 : vector<8x8x32xf32> to vector<64x32xf32>
    %30 = arith.truncf %29 : vector<64x32xf32> to vector<64x32xbf16>
    %c0_10 = arith.constant 0 : index
    %c192 = arith.constant 192 : index
    %31 = vector.load %arg8[%c0_10, %c192] : memref<64x864xbf16, #tpu.memory_space<vmem>>, vector<64x32xbf16>
    tpu.vector_store %arg8[%c0_10, %c192], %30 {strides = array<i32>} : memref<64x864xbf16, #tpu.memory_space<vmem>>, vector<64x32xbf16>,
    %32 = vector.extract_strided_slice %3 {offsets = [2, 1, 0], sizes = [8, 8, 32], strides = [1, 1, 1]} : vector<10x10x32xf32> to vector<8x8x32xf32>
    %33 = vector.shape_cast %32 : vector<8x8x32xf32> to vector<64x32xf32>
    %34 = arith.truncf %33 : vector<64x32xf32> to vector<64x32xbf16>
    %c0_11 = arith.constant 0 : index
    %c224 = arith.constant 224 : index
    %35 = vector.load %arg8[%c0_11, %c224] : memref<64x864xbf16, #tpu.memory_space<vmem>>, vector<64x32xbf16>
    tpu.vector_store %arg8[%c0_11, %c224], %34 {strides = array<i32>} : memref<64x864xbf16, #tpu.memory_space<vmem>>, vector<64x32xbf16>,
    %36 = vector.extract_strided_slice %3 {offsets = [2, 2, 0], sizes = [8, 8, 32], strides = [1, 1, 1]} : vector<10x10x32xf32> to vector<8x8x32xf32>
    %37 = vector.shape_cast %36 : vector<8x8x32xf32> to vector<64x32xf32>
    %38 = arith.truncf %37 : vector<64x32xf32> to vector<64x32xbf16>
    %c0_12 = arith.constant 0 : index
    %c256 = arith.constant 256 : index
    %39 = vector.load %arg8[%c0_12, %c256] : memref<64x864xbf16, #tpu.memory_space<vmem>>, vector<64x32xbf16>
    tpu.vector_store %arg8[%c0_12, %c256], %38 {strides = array<i32>} : memref<64x864xbf16, #tpu.memory_space<vmem>>, vector<64x32xbf16>,
    %c1_i32 = arith.constant 1 : i32
    %40 = arith.addi %arg1, %c1_i32 : i32
    %c0_13 = arith.constant 0 : index
    %41 = arith.index_cast %40 : i32 to index
    %c0_14 = arith.constant 0 : index
    %c0_15 = arith.constant 0 : index
    %c0_16 = arith.constant 0 : index
    %42 = vector.load %arg2[%c0_13, %41, %c0_14, %c0_15, %c0_16] : memref<1x6x10x10x32xf32, #tpu.memory_space<vmem>>, vector<1x1x10x10x32xf32>
    %43 = vector.shape_cast %42 : vector<1x1x10x10x32xf32> to vector<10x10x32xf32>
    %44 = vector.extract_strided_slice %43 {offsets = [0, 0, 0], sizes = [8, 8, 32], strides = [1, 1, 1]} : vector<10x10x32xf32> to vector<8x8x32xf32>
    %45 = vector.shape_cast %44 : vector<8x8x32xf32> to vector<64x32xf32>
    %46 = arith.truncf %45 : vector<64x32xf32> to vector<64x32xbf16>
    %c0_17 = arith.constant 0 : index
    %c288 = arith.constant 288 : index
    %47 = vector.load %arg8[%c0_17, %c288] : memref<64x864xbf16, #tpu.memory_space<vmem>>, vector<64x32xbf16>
    tpu.vector_store %arg8[%c0_17, %c288], %46 {strides = array<i32>} : memref<64x864xbf16, #tpu.memory_space<vmem>>, vector<64x32xbf16>,
    %48 = vector.extract_strided_slice %43 {offsets = [0, 1, 0], sizes = [8, 8, 32], strides = [1, 1, 1]} : vector<10x10x32xf32> to vector<8x8x32xf32>
    %49 = vector.shape_cast %48 : vector<8x8x32xf32> to vector<64x32xf32>
    %50 = arith.truncf %49 : vector<64x32xf32> to vector<64x32xbf16>
    %c0_18 = arith.constant 0 : index
    %c320 = arith.constant 320 : index
    %51 = vector.load %arg8[%c0_18, %c320] : memref<64x864xbf16, #tpu.memory_space<vmem>>, vector<64x32xbf16>
    tpu.vector_store %arg8[%c0_18, %c320], %50 {strides = array<i32>} : memref<64x864xbf16, #tpu.memory_space<vmem>>, vector<64x32xbf16>,
    %52 = vector.extract_strided_slice %43 {offsets = [0, 2, 0], sizes = [8, 8, 32], strides = [1, 1, 1]} : vector<10x10x32xf32> to vector<8x8x32xf32>
    %53 = vector.shape_cast %52 : vector<8x8x32xf32> to vector<64x32xf32>
    %54 = arith.truncf %53 : vector<64x32xf32> to vector<64x32xbf16>
    %c0_19 = arith.constant 0 : index
    %c352 = arith.constant 352 : index
    %55 = vector.load %arg8[%c0_19, %c352] : memref<64x864xbf16, #tpu.memory_space<vmem>>, vector<64x32xbf16>
    tpu.vector_store %arg8[%c0_19, %c352], %54 {strides = array<i32>} : memref<64x864xbf16, #tpu.memory_space<vmem>>, vector<64x32xbf16>,
    %56 = vector.extract_strided_slice %43 {offsets = [1, 0, 0], sizes = [8, 8, 32], strides = [1, 1, 1]} : vector<10x10x32xf32> to vector<8x8x32xf32>
    %57 = vector.shape_cast %56 : vector<8x8x32xf32> to vector<64x32xf32>
    %58 = arith.truncf %57 : vector<64x32xf32> to vector<64x32xbf16>
    %c0_20 = arith.constant 0 : index
    %c384 = arith.constant 384 : index
    %59 = vector.load %arg8[%c0_20, %c384] : memref<64x864xbf16, #tpu.memory_space<vmem>>, vector<64x32xbf16>
    tpu.vector_store %arg8[%c0_20, %c384], %58 {strides = array<i32>} : memref<64x864xbf16, #tpu.memory_space<vmem>>, vector<64x32xbf16>,
    %60 = vector.extract_strided_slice %43 {offsets = [1, 1, 0], sizes = [8, 8, 32], strides = [1, 1, 1]} : vector<10x10x32xf32> to vector<8x8x32xf32>
    %61 = vector.shape_cast %60 : vector<8x8x32xf32> to vector<64x32xf32>
    %62 = arith.truncf %61 : vector<64x32xf32> to vector<64x32xbf16>
    %c0_21 = arith.constant 0 : index
    %c416 = arith.constant 416 : index
    %63 = vector.load %arg8[%c0_21, %c416] : memref<64x864xbf16, #tpu.memory_space<vmem>>, vector<64x32xbf16>
    tpu.vector_store %arg8[%c0_21, %c416], %62 {strides = array<i32>} : memref<64x864xbf16, #tpu.memory_space<vmem>>, vector<64x32xbf16>,
    %64 = vector.extract_strided_slice %43 {offsets = [1, 2, 0], sizes = [8, 8, 32], strides = [1, 1, 1]} : vector<10x10x32xf32> to vector<8x8x32xf32>
    %65 = vector.shape_cast %64 : vector<8x8x32xf32> to vector<64x32xf32>
    %66 = arith.truncf %65 : vector<64x32xf32> to vector<64x32xbf16>
    %c0_22 = arith.constant 0 : index
    %c448 = arith.constant 448 : index
    %67 = vector.load %arg8[%c0_22, %c448] : memref<64x864xbf16, #tpu.memory_space<vmem>>, vector<64x32xbf16>
    tpu.vector_store %arg8[%c0_22, %c448], %66 {strides = array<i32>} : memref<64x864xbf16, #tpu.memory_space<vmem>>, vector<64x32xbf16>,
    %68 = vector.extract_strided_slice %43 {offsets = [2, 0, 0], sizes = [8, 8, 32], strides = [1, 1, 1]} : vector<10x10x32xf32> to vector<8x8x32xf32>
    %69 = vector.shape_cast %68 : vector<8x8x32xf32> to vector<64x32xf32>
    %70 = arith.truncf %69 : vector<64x32xf32> to vector<64x32xbf16>
    %c0_23 = arith.constant 0 : index
    %c480 = arith.constant 480 : index
    %71 = vector.load %arg8[%c0_23, %c480] : memref<64x864xbf16, #tpu.memory_space<vmem>>, vector<64x32xbf16>
    tpu.vector_store %arg8[%c0_23, %c480], %70 {strides = array<i32>} : memref<64x864xbf16, #tpu.memory_space<vmem>>, vector<64x32xbf16>,
    %72 = vector.extract_strided_slice %43 {offsets = [2, 1, 0], sizes = [8, 8, 32], strides = [1, 1, 1]} : vector<10x10x32xf32> to vector<8x8x32xf32>
    %73 = vector.shape_cast %72 : vector<8x8x32xf32> to vector<64x32xf32>
    %74 = arith.truncf %73 : vector<64x32xf32> to vector<64x32xbf16>
    %c0_24 = arith.constant 0 : index
    %c512 = arith.constant 512 : index
    %75 = vector.load %arg8[%c0_24, %c512] : memref<64x864xbf16, #tpu.memory_space<vmem>>, vector<64x32xbf16>
    tpu.vector_store %arg8[%c0_24, %c512], %74 {strides = array<i32>} : memref<64x864xbf16, #tpu.memory_space<vmem>>, vector<64x32xbf16>,
    %76 = vector.extract_strided_slice %43 {offsets = [2, 2, 0], sizes = [8, 8, 32], strides = [1, 1, 1]} : vector<10x10x32xf32> to vector<8x8x32xf32>
    %77 = vector.shape_cast %76 : vector<8x8x32xf32> to vector<64x32xf32>
    %78 = arith.truncf %77 : vector<64x32xf32> to vector<64x32xbf16>
    %c0_25 = arith.constant 0 : index
    %c544 = arith.constant 544 : index
    %79 = vector.load %arg8[%c0_25, %c544] : memref<64x864xbf16, #tpu.memory_space<vmem>>, vector<64x32xbf16>
    tpu.vector_store %arg8[%c0_25, %c544], %78 {strides = array<i32>} : memref<64x864xbf16, #tpu.memory_space<vmem>>, vector<64x32xbf16>,
    %c2_i32 = arith.constant 2 : i32
    %80 = arith.addi %arg1, %c2_i32 : i32
    %c0_26 = arith.constant 0 : index
    %81 = arith.index_cast %80 : i32 to index
    %c0_27 = arith.constant 0 : index
    %c0_28 = arith.constant 0 : index
    %c0_29 = arith.constant 0 : index
    %82 = vector.load %arg2[%c0_26, %81, %c0_27, %c0_28, %c0_29] : memref<1x6x10x10x32xf32, #tpu.memory_space<vmem>>, vector<1x1x10x10x32xf32>
    %83 = vector.shape_cast %82 : vector<1x1x10x10x32xf32> to vector<10x10x32xf32>
    %84 = vector.extract_strided_slice %83 {offsets = [0, 0, 0], sizes = [8, 8, 32], strides = [1, 1, 1]} : vector<10x10x32xf32> to vector<8x8x32xf32>
    %85 = vector.shape_cast %84 : vector<8x8x32xf32> to vector<64x32xf32>
    %86 = arith.truncf %85 : vector<64x32xf32> to vector<64x32xbf16>
    %c0_30 = arith.constant 0 : index
    %c576 = arith.constant 576 : index
    %87 = vector.load %arg8[%c0_30, %c576] : memref<64x864xbf16, #tpu.memory_space<vmem>>, vector<64x32xbf16>
    tpu.vector_store %arg8[%c0_30, %c576], %86 {strides = array<i32>} : memref<64x864xbf16, #tpu.memory_space<vmem>>, vector<64x32xbf16>,
    %88 = vector.extract_strided_slice %83 {offsets = [0, 1, 0], sizes = [8, 8, 32], strides = [1, 1, 1]} : vector<10x10x32xf32> to vector<8x8x32xf32>
    %89 = vector.shape_cast %88 : vector<8x8x32xf32> to vector<64x32xf32>
    %90 = arith.truncf %89 : vector<64x32xf32> to vector<64x32xbf16>
    %c0_31 = arith.constant 0 : index
    %c608 = arith.constant 608 : index
    %91 = vector.load %arg8[%c0_31, %c608] : memref<64x864xbf16, #tpu.memory_space<vmem>>, vector<64x32xbf16>
    tpu.vector_store %arg8[%c0_31, %c608], %90 {strides = array<i32>} : memref<64x864xbf16, #tpu.memory_space<vmem>>, vector<64x32xbf16>,
    %92 = vector.extract_strided_slice %83 {offsets = [0, 2, 0], sizes = [8, 8, 32], strides = [1, 1, 1]} : vector<10x10x32xf32> to vector<8x8x32xf32>
    %93 = vector.shape_cast %92 : vector<8x8x32xf32> to vector<64x32xf32>
    %94 = arith.truncf %93 : vector<64x32xf32> to vector<64x32xbf16>
    %c0_32 = arith.constant 0 : index
    %c640 = arith.constant 640 : index
    %95 = vector.load %arg8[%c0_32, %c640] : memref<64x864xbf16, #tpu.memory_space<vmem>>, vector<64x32xbf16>
    tpu.vector_store %arg8[%c0_32, %c640], %94 {strides = array<i32>} : memref<64x864xbf16, #tpu.memory_space<vmem>>, vector<64x32xbf16>,
    %96 = vector.extract_strided_slice %83 {offsets = [1, 0, 0], sizes = [8, 8, 32], strides = [1, 1, 1]} : vector<10x10x32xf32> to vector<8x8x32xf32>
    %97 = vector.shape_cast %96 : vector<8x8x32xf32> to vector<64x32xf32>
    %98 = arith.truncf %97 : vector<64x32xf32> to vector<64x32xbf16>
    %c0_33 = arith.constant 0 : index
    %c672 = arith.constant 672 : index
    %99 = vector.load %arg8[%c0_33, %c672] : memref<64x864xbf16, #tpu.memory_space<vmem>>, vector<64x32xbf16>
    tpu.vector_store %arg8[%c0_33, %c672], %98 {strides = array<i32>} : memref<64x864xbf16, #tpu.memory_space<vmem>>, vector<64x32xbf16>,
    %100 = vector.extract_strided_slice %83 {offsets = [1, 1, 0], sizes = [8, 8, 32], strides = [1, 1, 1]} : vector<10x10x32xf32> to vector<8x8x32xf32>
    %101 = vector.shape_cast %100 : vector<8x8x32xf32> to vector<64x32xf32>
    %102 = arith.truncf %101 : vector<64x32xf32> to vector<64x32xbf16>
    %c0_34 = arith.constant 0 : index
    %c704 = arith.constant 704 : index
    %103 = vector.load %arg8[%c0_34, %c704] : memref<64x864xbf16, #tpu.memory_space<vmem>>, vector<64x32xbf16>
    tpu.vector_store %arg8[%c0_34, %c704], %102 {strides = array<i32>} : memref<64x864xbf16, #tpu.memory_space<vmem>>, vector<64x32xbf16>,
    %104 = vector.extract_strided_slice %83 {offsets = [1, 2, 0], sizes = [8, 8, 32], strides = [1, 1, 1]} : vector<10x10x32xf32> to vector<8x8x32xf32>
    %105 = vector.shape_cast %104 : vector<8x8x32xf32> to vector<64x32xf32>
    %106 = arith.truncf %105 : vector<64x32xf32> to vector<64x32xbf16>
    %c0_35 = arith.constant 0 : index
    %c736 = arith.constant 736 : index
    %107 = vector.load %arg8[%c0_35, %c736] : memref<64x864xbf16, #tpu.memory_space<vmem>>, vector<64x32xbf16>
    tpu.vector_store %arg8[%c0_35, %c736], %106 {strides = array<i32>} : memref<64x864xbf16, #tpu.memory_space<vmem>>, vector<64x32xbf16>,
    %108 = vector.extract_strided_slice %83 {offsets = [2, 0, 0], sizes = [8, 8, 32], strides = [1, 1, 1]} : vector<10x10x32xf32> to vector<8x8x32xf32>
    %109 = vector.shape_cast %108 : vector<8x8x32xf32> to vector<64x32xf32>
    %110 = arith.truncf %109 : vector<64x32xf32> to vector<64x32xbf16>
    %c0_36 = arith.constant 0 : index
    %c768 = arith.constant 768 : index
    %111 = vector.load %arg8[%c0_36, %c768] : memref<64x864xbf16, #tpu.memory_space<vmem>>, vector<64x32xbf16>
    tpu.vector_store %arg8[%c0_36, %c768], %110 {strides = array<i32>} : memref<64x864xbf16, #tpu.memory_space<vmem>>, vector<64x32xbf16>,
    %112 = vector.extract_strided_slice %83 {offsets = [2, 1, 0], sizes = [8, 8, 32], strides = [1, 1, 1]} : vector<10x10x32xf32> to vector<8x8x32xf32>
    %113 = vector.shape_cast %112 : vector<8x8x32xf32> to vector<64x32xf32>
    %114 = arith.truncf %113 : vector<64x32xf32> to vector<64x32xbf16>
    %c0_37 = arith.constant 0 : index
    %c800 = arith.constant 800 : index
    %115 = vector.load %arg8[%c0_37, %c800] : memref<64x864xbf16, #tpu.memory_space<vmem>>, vector<64x32xbf16>
    tpu.vector_store %arg8[%c0_37, %c800], %114 {strides = array<i32>} : memref<64x864xbf16, #tpu.memory_space<vmem>>, vector<64x32xbf16>,
    %116 = vector.extract_strided_slice %83 {offsets = [2, 2, 0], sizes = [8, 8, 32], strides = [1, 1, 1]} : vector<10x10x32xf32> to vector<8x8x32xf32>
    %117 = vector.shape_cast %116 : vector<8x8x32xf32> to vector<64x32xf32>
    %118 = arith.truncf %117 : vector<64x32xf32> to vector<64x32xbf16>
    %c0_38 = arith.constant 0 : index
    %c832 = arith.constant 832 : index
    %119 = vector.load %arg8[%c0_38, %c832] : memref<64x864xbf16, #tpu.memory_space<vmem>>, vector<64x32xbf16>
    tpu.vector_store %arg8[%c0_38, %c832], %118 {strides = array<i32>} : memref<64x864xbf16, #tpu.memory_space<vmem>>, vector<64x32xbf16>,
    %c0_39 = arith.constant 0 : index
    %c0_40 = arith.constant 0 : index
    %120 = vector.load %arg8[%c0_39, %c0_40] : memref<64x864xbf16, #tpu.memory_space<vmem>>, vector<64x864xbf16>
    %c0_41 = arith.constant 0 : index
    %c0_42 = arith.constant 0 : index
    %121 = vector.load %arg3[%c0_41, %c0_42] : memref<864x64xbf16, #tpu.memory_space<vmem>>, vector<864x64xbf16>
    %cst = arith.constant dense<0.000000e+00> : vector<64x64xf32>
    %122 = tpu.matmul %120, %121, %cst {dimension_numbers = #tpu.dot_dimension_numbers<[1], [0], [0], [1], [0, 0, 1, 1], [], []>} : vector<64x864xbf16>, vector<864x64xbf16>, vector<64x64xf32> -> vector<64x64xf32>
    %c0_43 = arith.constant 0 : index
    %c0_44 = arith.constant 0 : index
    %123 = vector.load %arg4[%c0_43, %c0_44] : memref<1x64xf32, #tpu.memory_space<vmem>>, vector<1x64xf32>
    %124 = vector.shape_cast %123 : vector<1x64xf32> to vector<64xf32>
    %125 = vector.shape_cast %124 : vector<64xf32> to vector<1x64xf32>
    %126 = vector.broadcast %125 : vector<1x64xf32> to vector<64x64xf32>
    %127 = arith.addf %122, %126 : vector<64x64xf32>
    %128 = vector.shape_cast %127 : vector<64x64xf32> to vector<8x8x64xf32>
    %c0_45 = arith.constant 0 : index
    %c0_46 = arith.constant 0 : index
    %c0_47 = arith.constant 0 : index
    %c0_48 = arith.constant 0 : index
    %c0_49 = arith.constant 0 : index
    %129 = vector.load %arg5[%c0_45, %c0_46, %c0_47, %c0_48, %c0_49] : memref<1x1x8x8x64xf32, #tpu.memory_space<vmem>>, vector<1x1x8x8x64xf32>
    %130 = vector.shape_cast %129 : vector<1x1x8x8x64xf32> to vector<8x8x64xf32>
    %131 = vector.shape_cast %128 : vector<8x8x64xf32> to vector<1x1x8x8x64xf32>
    tpu.vector_store %arg5[%c0_45, %c0_46, %c0_47, %c0_48, %c0_49], %131 {strides = array<i32>} : memref<1x1x8x8x64xf32, #tpu.memory_space<vmem>>, vector<1x1x8x8x64xf32>,
    %cst_50 = arith.constant dense<0.000000e+00> : vector<64xf32>
    %132 = vector.multi_reduction <add>, %127, %cst_50 [0] : vector<64x64xf32> to vector<64xf32>
    %c0_51 = arith.constant 0 : index
    %c0_52 = arith.constant 0 : index
    %c0_53 = arith.constant 0 : index
    %c0_54 = arith.constant 0 : index
    %133 = vector.load %arg6[%c0_51, %c0_52, %c0_53, %c0_54] : memref<1x1x1x64xf32, #tpu.memory_space<vmem>>, vector<1x1x1x64xf32>
    %134 = vector.shape_cast %133 : vector<1x1x1x64xf32> to vector<64xf32>
    %135 = vector.shape_cast %132 : vector<64xf32> to vector<1x1x1x64xf32>
    tpu.vector_store %arg6[%c0_51, %c0_52, %c0_53, %c0_54], %135 {strides = array<i32>} : memref<1x1x1x64xf32, #tpu.memory_space<vmem>>, vector<1x1x1x64xf32>,
    %136 = arith.mulf %127, %127 : vector<64x64xf32>
    %cst_55 = arith.constant dense<0.000000e+00> : vector<64xf32>
    %137 = vector.multi_reduction <add>, %136, %cst_55 [0] : vector<64x64xf32> to vector<64xf32>
    %c0_56 = arith.constant 0 : index
    %c0_57 = arith.constant 0 : index
    %c0_58 = arith.constant 0 : index
    %c0_59 = arith.constant 0 : index
    %138 = vector.load %arg7[%c0_56, %c0_57, %c0_58, %c0_59] : memref<1x1x1x64xf32, #tpu.memory_space<vmem>>, vector<1x1x1x64xf32>
    %139 = vector.shape_cast %138 : vector<1x1x1x64xf32> to vector<64xf32>
    %140 = vector.shape_cast %137 : vector<64xf32> to vector<1x1x1x64xf32>
    tpu.vector_store %arg7[%c0_56, %c0_57, %c0_58, %c0_59], %140 {strides = array<i32>} : memref<1x1x1x64xf32, #tpu.memory_space<vmem>>, vector<1x1x1x64xf32>,
    return
  }
  func.func @transform_0(%arg0: i32, %arg1: i32) -> (i32, i32, i32, i32, i32) {
    %c0_i32 = arith.constant 0 : i32
    %c0_i32_0 = arith.constant 0 : i32
    %c0_i32_1 = arith.constant 0 : i32
    %c0_i32_2 = arith.constant 0 : i32
    %c0_i32_3 = arith.constant 0 : i32
    return %arg0, %c0_i32, %c0_i32_0, %c0_i32_1, %c0_i32_2 : i32, i32, i32, i32, i32
  }
  func.func @transform_1(%arg0: i32, %arg1: i32) -> (i32, i32) {
    %c0_i32 = arith.constant 0 : i32
    %c0_i32_0 = arith.constant 0 : i32
    %c0_i32_1 = arith.constant 0 : i32
    return %c0_i32, %c0_i32_0 : i32, i32
  }
  func.func @transform_2(%arg0: i32, %arg1: i32) -> (i32, i32) {
    %c0_i32 = arith.constant 0 : i32
    %c0_i32_0 = arith.constant 0 : i32
    %c0_i32_1 = arith.constant 0 : i32
    return %c0_i32, %c0_i32_0 : i32, i32
  }
  func.func @transform_3(%arg0: i32, %arg1: i32) -> (i32, i32, i32, i32, i32) {
    %c0_i32 = arith.constant 0 : i32
    %c0_i32_0 = arith.constant 0 : i32
    %c0_i32_1 = arith.constant 0 : i32
    %c0_i32_2 = arith.constant 0 : i32
    return %arg0, %arg1, %c0_i32, %c0_i32_0, %c0_i32_1 : i32, i32, i32, i32, i32
  }
  func.func @transform_4(%arg0: i32, %arg1: i32) -> (i32, i32, i32, i32) {
    %c0_i32 = arith.constant 0 : i32
    %c0_i32_0 = arith.constant 0 : i32
    %c0_i32_1 = arith.constant 0 : i32
    return %arg0, %arg1, %c0_i32, %c0_i32_0 : i32, i32, i32, i32
  }
  func.func @transform_5(%arg0: i32, %arg1: i32) -> (i32, i32, i32, i32) {
    %c0_i32 = arith.constant 0 : i32
    %c0_i32_0 = arith.constant 0 : i32
    %c0_i32_1 = arith.constant 0 : i32
    return %arg0, %arg1, %c0_i32, %c0_i32_0 : i32, i32, i32, i32
  }
}

module attributes {stable_mosaic.version = 11 : i64} {
  func.func @bn_relu_pad_kernel(%arg0: i32, %arg1: i32, %arg2: memref<1x1x8x8x64xf32, #tpu.memory_space<vmem>>, %arg3: memref<1x64xf32, #tpu.memory_space<vmem>>, %arg4: memref<1x64xf32, #tpu.memory_space<vmem>>, %arg5: memref<1x1x10x10x64xf32, #tpu.memory_space<vmem>>) attributes {dimension_semantics = [#tpu.dimension_semantics<parallel>, #tpu.dimension_semantics<parallel>], iteration_bounds = array<i64: 2, 6>, scalar_prefetch = 0 : i64, scratch_operands = 0 : i64, tpu.core_type = #tpu.core_type<tc>, window_params = [{transform_indices = @transform_0, window_bounds = array<i64: 1, 1, 8, 8, 64>}, {pipeline_mode = #tpu.pipeline_mode<synchronous>, transform_indices = @transform_1, window_bounds = array<i64: 1, 64>}, {pipeline_mode = #tpu.pipeline_mode<synchronous>, transform_indices = @transform_2, window_bounds = array<i64: 1, 64>}, {transform_indices = @transform_3, window_bounds = array<i64: 1, 1, 10, 10, 64>}]} {
    %cst = arith.constant 0.000000e+00 : f32
    %0 = vector.broadcast %cst : f32 to vector<1x1x10x10x64xf32>
    %c0 = arith.constant 0 : index
    %c0_0 = arith.constant 0 : index
    %c0_1 = arith.constant 0 : index
    %c0_2 = arith.constant 0 : index
    %c0_3 = arith.constant 0 : index
    %1 = vector.load %arg5[%c0, %c0_0, %c0_1, %c0_2, %c0_3] : memref<1x1x10x10x64xf32, #tpu.memory_space<vmem>>, vector<1x1x10x10x64xf32>
    tpu.vector_store %arg5[%c0, %c0_0, %c0_1, %c0_2, %c0_3], %0 {strides = array<i32>} : memref<1x1x10x10x64xf32, #tpu.memory_space<vmem>>, vector<1x1x10x10x64xf32>,
    %c1_i32 = arith.constant 1 : i32
    %2 = arith.cmpi sge, %arg1, %c1_i32 : i32
    %c4_i32 = arith.constant 4 : i32
    %3 = arith.cmpi sle, %arg1, %c4_i32 : i32
    %4 = arith.andi %2, %3 : i1
    %5 = arith.extui %4 : i1 to i32
    %c0_i32 = arith.constant 0 : i32
    %6 = arith.cmpi ne, %5, %c0_i32 : i32
    scf.if %6 {
      %c0_4 = arith.constant 0 : index
      %c0_5 = arith.constant 0 : index
      %c0_6 = arith.constant 0 : index
      %c0_7 = arith.constant 0 : index
      %c0_8 = arith.constant 0 : index
      %7 = vector.load %arg2[%c0_4, %c0_5, %c0_6, %c0_7, %c0_8] : memref<1x1x8x8x64xf32, #tpu.memory_space<vmem>>, vector<1x1x8x8x64xf32>
      %8 = vector.shape_cast %7 : vector<1x1x8x8x64xf32> to vector<8x8x64xf32>
      %c0_9 = arith.constant 0 : index
      %c0_10 = arith.constant 0 : index
      %9 = vector.load %arg3[%c0_9, %c0_10] : memref<1x64xf32, #tpu.memory_space<vmem>>, vector<1x64xf32>
      %10 = vector.shape_cast %9 : vector<1x64xf32> to vector<64xf32>
      %11 = vector.shape_cast %10 : vector<64xf32> to vector<1x1x64xf32>
      %12 = vector.broadcast %11 : vector<1x1x64xf32> to vector<8x8x64xf32>
      %13 = arith.mulf %8, %12 : vector<8x8x64xf32>
      %c0_11 = arith.constant 0 : index
      %c0_12 = arith.constant 0 : index
      %14 = vector.load %arg4[%c0_11, %c0_12] : memref<1x64xf32, #tpu.memory_space<vmem>>, vector<1x64xf32>
      %15 = vector.shape_cast %14 : vector<1x64xf32> to vector<64xf32>
      %16 = vector.shape_cast %15 : vector<64xf32> to vector<1x1x64xf32>
      %17 = vector.broadcast %16 : vector<1x1x64xf32> to vector<8x8x64xf32>
      %18 = arith.addf %13, %17 : vector<8x8x64xf32>
      %cst_13 = arith.constant 0.000000e+00 : f32
      %19 = vector.broadcast %cst_13 : f32 to vector<8x8x64xf32>
      %20 = arith.maximumf %18, %19 : vector<8x8x64xf32>
      %c0_14 = arith.constant 0 : index
      %c0_15 = arith.constant 0 : index
      %c1 = arith.constant 1 : index
      %c1_16 = arith.constant 1 : index
      %c0_17 = arith.constant 0 : index
      %21 = vector.load %arg5[%c0_14, %c0_15, %c1, %c1_16, %c0_17] : memref<1x1x10x10x64xf32, #tpu.memory_space<vmem>>, vector<1x1x8x8x64xf32>
      %22 = vector.shape_cast %21 : vector<1x1x8x8x64xf32> to vector<8x8x64xf32>
      %23 = vector.shape_cast %20 : vector<8x8x64xf32> to vector<1x1x8x8x64xf32>
      tpu.vector_store %arg5[%c0_14, %c0_15, %c1, %c1_16, %c0_17], %23 {strides = array<i32>} : memref<1x1x10x10x64xf32, #tpu.memory_space<vmem>>, vector<1x1x8x8x64xf32>,
    } else {
    }
    return
  }
  func.func @transform_0(%arg0: i32, %arg1: i32) -> (i32, i32, i32, i32, i32) {
    %c1_i32 = arith.constant 1 : i32
    %0 = arith.subi %arg1, %c1_i32 : i32
    %c0_i32 = arith.constant 0 : i32
    %c3_i32 = arith.constant 3 : i32
    %1 = arith.maxsi %c0_i32, %0 : i32
    %2 = arith.minsi %c3_i32, %1 : i32
    %c0_i32_0 = arith.constant 0 : i32
    %c0_i32_1 = arith.constant 0 : i32
    %c0_i32_2 = arith.constant 0 : i32
    %c0_i32_3 = arith.constant 0 : i32
    return %arg0, %2, %c0_i32_0, %c0_i32_1, %c0_i32_2 : i32, i32, i32, i32, i32
  }
  func.func @transform_1(%arg0: i32, %arg1: i32) -> (i32, i32) {
    %c0_i32 = arith.constant 0 : i32
    %c0_i32_0 = arith.constant 0 : i32
    %c0_i32_1 = arith.constant 0 : i32
    return %c0_i32, %c0_i32_0 : i32, i32
  }
  func.func @transform_2(%arg0: i32, %arg1: i32) -> (i32, i32) {
    %c0_i32 = arith.constant 0 : i32
    %c0_i32_0 = arith.constant 0 : i32
    %c0_i32_1 = arith.constant 0 : i32
    return %c0_i32, %c0_i32_0 : i32, i32
  }
  func.func @transform_3(%arg0: i32, %arg1: i32) -> (i32, i32, i32, i32, i32) {
    %c0_i32 = arith.constant 0 : i32
    %c0_i32_0 = arith.constant 0 : i32
    %c0_i32_1 = arith.constant 0 : i32
    %c0_i32_2 = arith.constant 0 : i32
    return %arg0, %arg1, %c0_i32, %c0_i32_0, %c0_i32_1 : i32, i32, i32, i32, i32
  }
}

module attributes {stable_mosaic.version = 11 : i64} {
  func.func @conv3d_kernel(%arg0: i32, %arg1: i32, %arg2: memref<1x6x10x10x64xf32, #tpu.memory_space<vmem>>, %arg3: memref<1728x128xbf16, #tpu.memory_space<vmem>>, %arg4: memref<1x128xf32, #tpu.memory_space<vmem>>, %arg5: memref<1x1x8x8x128xf32, #tpu.memory_space<vmem>>, %arg6: memref<1x1x1x128xf32, #tpu.memory_space<vmem>>, %arg7: memref<1x1x1x128xf32, #tpu.memory_space<vmem>>, %arg8: memref<64x1728xbf16, #tpu.memory_space<vmem>>) attributes {dimension_semantics = [#tpu.dimension_semantics<parallel>, #tpu.dimension_semantics<parallel>], iteration_bounds = array<i64: 2, 4>, scalar_prefetch = 0 : i64, scratch_operands = 1 : i64, tpu.core_type = #tpu.core_type<tc>, window_params = [{transform_indices = @transform_0, window_bounds = array<i64: 1, 6, 10, 10, 64>}, {pipeline_mode = #tpu.pipeline_mode<synchronous>, transform_indices = @transform_1, window_bounds = array<i64: 1728, 128>}, {pipeline_mode = #tpu.pipeline_mode<synchronous>, transform_indices = @transform_2, window_bounds = array<i64: 1, 128>}, {transform_indices = @transform_3, window_bounds = array<i64: 1, 1, 8, 8, 128>}, {transform_indices = @transform_4, window_bounds = array<i64: 1, 1, 1, 128>}, {transform_indices = @transform_5, window_bounds = array<i64: 1, 1, 1, 128>}]} {
    %c0_i32 = arith.constant 0 : i32
    %0 = arith.addi %arg1, %c0_i32 : i32
    %c0 = arith.constant 0 : index
    %1 = arith.index_cast %0 : i32 to index
    %c0_0 = arith.constant 0 : index
    %c0_1 = arith.constant 0 : index
    %c0_2 = arith.constant 0 : index
    %2 = vector.load %arg2[%c0, %1, %c0_0, %c0_1, %c0_2] : memref<1x6x10x10x64xf32, #tpu.memory_space<vmem>>, vector<1x1x10x10x64xf32>
    %3 = vector.shape_cast %2 : vector<1x1x10x10x64xf32> to vector<10x10x64xf32>
    %4 = vector.extract_strided_slice %3 {offsets = [0, 0, 0], sizes = [8, 8, 64], strides = [1, 1, 1]} : vector<10x10x64xf32> to vector<8x8x64xf32>
    %5 = vector.shape_cast %4 : vector<8x8x64xf32> to vector<64x64xf32>
    %6 = arith.truncf %5 : vector<64x64xf32> to vector<64x64xbf16>
    %c0_3 = arith.constant 0 : index
    %c0_4 = arith.constant 0 : index
    %7 = vector.load %arg8[%c0_3, %c0_4] : memref<64x1728xbf16, #tpu.memory_space<vmem>>, vector<64x64xbf16>
    tpu.vector_store %arg8[%c0_3, %c0_4], %6 {strides = array<i32>} : memref<64x1728xbf16, #tpu.memory_space<vmem>>, vector<64x64xbf16>,
    %8 = vector.extract_strided_slice %3 {offsets = [0, 1, 0], sizes = [8, 8, 64], strides = [1, 1, 1]} : vector<10x10x64xf32> to vector<8x8x64xf32>
    %9 = vector.shape_cast %8 : vector<8x8x64xf32> to vector<64x64xf32>
    %10 = arith.truncf %9 : vector<64x64xf32> to vector<64x64xbf16>
    %c0_5 = arith.constant 0 : index
    %c64 = arith.constant 64 : index
    %11 = vector.load %arg8[%c0_5, %c64] : memref<64x1728xbf16, #tpu.memory_space<vmem>>, vector<64x64xbf16>
    tpu.vector_store %arg8[%c0_5, %c64], %10 {strides = array<i32>} : memref<64x1728xbf16, #tpu.memory_space<vmem>>, vector<64x64xbf16>,
    %12 = vector.extract_strided_slice %3 {offsets = [0, 2, 0], sizes = [8, 8, 64], strides = [1, 1, 1]} : vector<10x10x64xf32> to vector<8x8x64xf32>
    %13 = vector.shape_cast %12 : vector<8x8x64xf32> to vector<64x64xf32>
    %14 = arith.truncf %13 : vector<64x64xf32> to vector<64x64xbf16>
    %c0_6 = arith.constant 0 : index
    %c128 = arith.constant 128 : index
    %15 = vector.load %arg8[%c0_6, %c128] : memref<64x1728xbf16, #tpu.memory_space<vmem>>, vector<64x64xbf16>
    tpu.vector_store %arg8[%c0_6, %c128], %14 {strides = array<i32>} : memref<64x1728xbf16, #tpu.memory_space<vmem>>, vector<64x64xbf16>,
    %16 = vector.extract_strided_slice %3 {offsets = [1, 0, 0], sizes = [8, 8, 64], strides = [1, 1, 1]} : vector<10x10x64xf32> to vector<8x8x64xf32>
    %17 = vector.shape_cast %16 : vector<8x8x64xf32> to vector<64x64xf32>
    %18 = arith.truncf %17 : vector<64x64xf32> to vector<64x64xbf16>
    %c0_7 = arith.constant 0 : index
    %c192 = arith.constant 192 : index
    %19 = vector.load %arg8[%c0_7, %c192] : memref<64x1728xbf16, #tpu.memory_space<vmem>>, vector<64x64xbf16>
    tpu.vector_store %arg8[%c0_7, %c192], %18 {strides = array<i32>} : memref<64x1728xbf16, #tpu.memory_space<vmem>>, vector<64x64xbf16>,
    %20 = vector.extract_strided_slice %3 {offsets = [1, 1, 0], sizes = [8, 8, 64], strides = [1, 1, 1]} : vector<10x10x64xf32> to vector<8x8x64xf32>
    %21 = vector.shape_cast %20 : vector<8x8x64xf32> to vector<64x64xf32>
    %22 = arith.truncf %21 : vector<64x64xf32> to vector<64x64xbf16>
    %c0_8 = arith.constant 0 : index
    %c256 = arith.constant 256 : index
    %23 = vector.load %arg8[%c0_8, %c256] : memref<64x1728xbf16, #tpu.memory_space<vmem>>, vector<64x64xbf16>
    tpu.vector_store %arg8[%c0_8, %c256], %22 {strides = array<i32>} : memref<64x1728xbf16, #tpu.memory_space<vmem>>, vector<64x64xbf16>,
    %24 = vector.extract_strided_slice %3 {offsets = [1, 2, 0], sizes = [8, 8, 64], strides = [1, 1, 1]} : vector<10x10x64xf32> to vector<8x8x64xf32>
    %25 = vector.shape_cast %24 : vector<8x8x64xf32> to vector<64x64xf32>
    %26 = arith.truncf %25 : vector<64x64xf32> to vector<64x64xbf16>
    %c0_9 = arith.constant 0 : index
    %c320 = arith.constant 320 : index
    %27 = vector.load %arg8[%c0_9, %c320] : memref<64x1728xbf16, #tpu.memory_space<vmem>>, vector<64x64xbf16>
    tpu.vector_store %arg8[%c0_9, %c320], %26 {strides = array<i32>} : memref<64x1728xbf16, #tpu.memory_space<vmem>>, vector<64x64xbf16>,
    %28 = vector.extract_strided_slice %3 {offsets = [2, 0, 0], sizes = [8, 8, 64], strides = [1, 1, 1]} : vector<10x10x64xf32> to vector<8x8x64xf32>
    %29 = vector.shape_cast %28 : vector<8x8x64xf32> to vector<64x64xf32>
    %30 = arith.truncf %29 : vector<64x64xf32> to vector<64x64xbf16>
    %c0_10 = arith.constant 0 : index
    %c384 = arith.constant 384 : index
    %31 = vector.load %arg8[%c0_10, %c384] : memref<64x1728xbf16, #tpu.memory_space<vmem>>, vector<64x64xbf16>
    tpu.vector_store %arg8[%c0_10, %c384], %30 {strides = array<i32>} : memref<64x1728xbf16, #tpu.memory_space<vmem>>, vector<64x64xbf16>,
    %32 = vector.extract_strided_slice %3 {offsets = [2, 1, 0], sizes = [8, 8, 64], strides = [1, 1, 1]} : vector<10x10x64xf32> to vector<8x8x64xf32>
    %33 = vector.shape_cast %32 : vector<8x8x64xf32> to vector<64x64xf32>
    %34 = arith.truncf %33 : vector<64x64xf32> to vector<64x64xbf16>
    %c0_11 = arith.constant 0 : index
    %c448 = arith.constant 448 : index
    %35 = vector.load %arg8[%c0_11, %c448] : memref<64x1728xbf16, #tpu.memory_space<vmem>>, vector<64x64xbf16>
    tpu.vector_store %arg8[%c0_11, %c448], %34 {strides = array<i32>} : memref<64x1728xbf16, #tpu.memory_space<vmem>>, vector<64x64xbf16>,
    %36 = vector.extract_strided_slice %3 {offsets = [2, 2, 0], sizes = [8, 8, 64], strides = [1, 1, 1]} : vector<10x10x64xf32> to vector<8x8x64xf32>
    %37 = vector.shape_cast %36 : vector<8x8x64xf32> to vector<64x64xf32>
    %38 = arith.truncf %37 : vector<64x64xf32> to vector<64x64xbf16>
    %c0_12 = arith.constant 0 : index
    %c512 = arith.constant 512 : index
    %39 = vector.load %arg8[%c0_12, %c512] : memref<64x1728xbf16, #tpu.memory_space<vmem>>, vector<64x64xbf16>
    tpu.vector_store %arg8[%c0_12, %c512], %38 {strides = array<i32>} : memref<64x1728xbf16, #tpu.memory_space<vmem>>, vector<64x64xbf16>,
    %c1_i32 = arith.constant 1 : i32
    %40 = arith.addi %arg1, %c1_i32 : i32
    %c0_13 = arith.constant 0 : index
    %41 = arith.index_cast %40 : i32 to index
    %c0_14 = arith.constant 0 : index
    %c0_15 = arith.constant 0 : index
    %c0_16 = arith.constant 0 : index
    %42 = vector.load %arg2[%c0_13, %41, %c0_14, %c0_15, %c0_16] : memref<1x6x10x10x64xf32, #tpu.memory_space<vmem>>, vector<1x1x10x10x64xf32>
    %43 = vector.shape_cast %42 : vector<1x1x10x10x64xf32> to vector<10x10x64xf32>
    %44 = vector.extract_strided_slice %43 {offsets = [0, 0, 0], sizes = [8, 8, 64], strides = [1, 1, 1]} : vector<10x10x64xf32> to vector<8x8x64xf32>
    %45 = vector.shape_cast %44 : vector<8x8x64xf32> to vector<64x64xf32>
    %46 = arith.truncf %45 : vector<64x64xf32> to vector<64x64xbf16>
    %c0_17 = arith.constant 0 : index
    %c576 = arith.constant 576 : index
    %47 = vector.load %arg8[%c0_17, %c576] : memref<64x1728xbf16, #tpu.memory_space<vmem>>, vector<64x64xbf16>
    tpu.vector_store %arg8[%c0_17, %c576], %46 {strides = array<i32>} : memref<64x1728xbf16, #tpu.memory_space<vmem>>, vector<64x64xbf16>,
    %48 = vector.extract_strided_slice %43 {offsets = [0, 1, 0], sizes = [8, 8, 64], strides = [1, 1, 1]} : vector<10x10x64xf32> to vector<8x8x64xf32>
    %49 = vector.shape_cast %48 : vector<8x8x64xf32> to vector<64x64xf32>
    %50 = arith.truncf %49 : vector<64x64xf32> to vector<64x64xbf16>
    %c0_18 = arith.constant 0 : index
    %c640 = arith.constant 640 : index
    %51 = vector.load %arg8[%c0_18, %c640] : memref<64x1728xbf16, #tpu.memory_space<vmem>>, vector<64x64xbf16>
    tpu.vector_store %arg8[%c0_18, %c640], %50 {strides = array<i32>} : memref<64x1728xbf16, #tpu.memory_space<vmem>>, vector<64x64xbf16>,
    %52 = vector.extract_strided_slice %43 {offsets = [0, 2, 0], sizes = [8, 8, 64], strides = [1, 1, 1]} : vector<10x10x64xf32> to vector<8x8x64xf32>
    %53 = vector.shape_cast %52 : vector<8x8x64xf32> to vector<64x64xf32>
    %54 = arith.truncf %53 : vector<64x64xf32> to vector<64x64xbf16>
    %c0_19 = arith.constant 0 : index
    %c704 = arith.constant 704 : index
    %55 = vector.load %arg8[%c0_19, %c704] : memref<64x1728xbf16, #tpu.memory_space<vmem>>, vector<64x64xbf16>
    tpu.vector_store %arg8[%c0_19, %c704], %54 {strides = array<i32>} : memref<64x1728xbf16, #tpu.memory_space<vmem>>, vector<64x64xbf16>,
    %56 = vector.extract_strided_slice %43 {offsets = [1, 0, 0], sizes = [8, 8, 64], strides = [1, 1, 1]} : vector<10x10x64xf32> to vector<8x8x64xf32>
    %57 = vector.shape_cast %56 : vector<8x8x64xf32> to vector<64x64xf32>
    %58 = arith.truncf %57 : vector<64x64xf32> to vector<64x64xbf16>
    %c0_20 = arith.constant 0 : index
    %c768 = arith.constant 768 : index
    %59 = vector.load %arg8[%c0_20, %c768] : memref<64x1728xbf16, #tpu.memory_space<vmem>>, vector<64x64xbf16>
    tpu.vector_store %arg8[%c0_20, %c768], %58 {strides = array<i32>} : memref<64x1728xbf16, #tpu.memory_space<vmem>>, vector<64x64xbf16>,
    %60 = vector.extract_strided_slice %43 {offsets = [1, 1, 0], sizes = [8, 8, 64], strides = [1, 1, 1]} : vector<10x10x64xf32> to vector<8x8x64xf32>
    %61 = vector.shape_cast %60 : vector<8x8x64xf32> to vector<64x64xf32>
    %62 = arith.truncf %61 : vector<64x64xf32> to vector<64x64xbf16>
    %c0_21 = arith.constant 0 : index
    %c832 = arith.constant 832 : index
    %63 = vector.load %arg8[%c0_21, %c832] : memref<64x1728xbf16, #tpu.memory_space<vmem>>, vector<64x64xbf16>
    tpu.vector_store %arg8[%c0_21, %c832], %62 {strides = array<i32>} : memref<64x1728xbf16, #tpu.memory_space<vmem>>, vector<64x64xbf16>,
    %64 = vector.extract_strided_slice %43 {offsets = [1, 2, 0], sizes = [8, 8, 64], strides = [1, 1, 1]} : vector<10x10x64xf32> to vector<8x8x64xf32>
    %65 = vector.shape_cast %64 : vector<8x8x64xf32> to vector<64x64xf32>
    %66 = arith.truncf %65 : vector<64x64xf32> to vector<64x64xbf16>
    %c0_22 = arith.constant 0 : index
    %c896 = arith.constant 896 : index
    %67 = vector.load %arg8[%c0_22, %c896] : memref<64x1728xbf16, #tpu.memory_space<vmem>>, vector<64x64xbf16>
    tpu.vector_store %arg8[%c0_22, %c896], %66 {strides = array<i32>} : memref<64x1728xbf16, #tpu.memory_space<vmem>>, vector<64x64xbf16>,
    %68 = vector.extract_strided_slice %43 {offsets = [2, 0, 0], sizes = [8, 8, 64], strides = [1, 1, 1]} : vector<10x10x64xf32> to vector<8x8x64xf32>
    %69 = vector.shape_cast %68 : vector<8x8x64xf32> to vector<64x64xf32>
    %70 = arith.truncf %69 : vector<64x64xf32> to vector<64x64xbf16>
    %c0_23 = arith.constant 0 : index
    %c960 = arith.constant 960 : index
    %71 = vector.load %arg8[%c0_23, %c960] : memref<64x1728xbf16, #tpu.memory_space<vmem>>, vector<64x64xbf16>
    tpu.vector_store %arg8[%c0_23, %c960], %70 {strides = array<i32>} : memref<64x1728xbf16, #tpu.memory_space<vmem>>, vector<64x64xbf16>,
    %72 = vector.extract_strided_slice %43 {offsets = [2, 1, 0], sizes = [8, 8, 64], strides = [1, 1, 1]} : vector<10x10x64xf32> to vector<8x8x64xf32>
    %73 = vector.shape_cast %72 : vector<8x8x64xf32> to vector<64x64xf32>
    %74 = arith.truncf %73 : vector<64x64xf32> to vector<64x64xbf16>
    %c0_24 = arith.constant 0 : index
    %c1024 = arith.constant 1024 : index
    %75 = vector.load %arg8[%c0_24, %c1024] : memref<64x1728xbf16, #tpu.memory_space<vmem>>, vector<64x64xbf16>
    tpu.vector_store %arg8[%c0_24, %c1024], %74 {strides = array<i32>} : memref<64x1728xbf16, #tpu.memory_space<vmem>>, vector<64x64xbf16>,
    %76 = vector.extract_strided_slice %43 {offsets = [2, 2, 0], sizes = [8, 8, 64], strides = [1, 1, 1]} : vector<10x10x64xf32> to vector<8x8x64xf32>
    %77 = vector.shape_cast %76 : vector<8x8x64xf32> to vector<64x64xf32>
    %78 = arith.truncf %77 : vector<64x64xf32> to vector<64x64xbf16>
    %c0_25 = arith.constant 0 : index
    %c1088 = arith.constant 1088 : index
    %79 = vector.load %arg8[%c0_25, %c1088] : memref<64x1728xbf16, #tpu.memory_space<vmem>>, vector<64x64xbf16>
    tpu.vector_store %arg8[%c0_25, %c1088], %78 {strides = array<i32>} : memref<64x1728xbf16, #tpu.memory_space<vmem>>, vector<64x64xbf16>,
    %c2_i32 = arith.constant 2 : i32
    %80 = arith.addi %arg1, %c2_i32 : i32
    %c0_26 = arith.constant 0 : index
    %81 = arith.index_cast %80 : i32 to index
    %c0_27 = arith.constant 0 : index
    %c0_28 = arith.constant 0 : index
    %c0_29 = arith.constant 0 : index
    %82 = vector.load %arg2[%c0_26, %81, %c0_27, %c0_28, %c0_29] : memref<1x6x10x10x64xf32, #tpu.memory_space<vmem>>, vector<1x1x10x10x64xf32>
    %83 = vector.shape_cast %82 : vector<1x1x10x10x64xf32> to vector<10x10x64xf32>
    %84 = vector.extract_strided_slice %83 {offsets = [0, 0, 0], sizes = [8, 8, 64], strides = [1, 1, 1]} : vector<10x10x64xf32> to vector<8x8x64xf32>
    %85 = vector.shape_cast %84 : vector<8x8x64xf32> to vector<64x64xf32>
    %86 = arith.truncf %85 : vector<64x64xf32> to vector<64x64xbf16>
    %c0_30 = arith.constant 0 : index
    %c1152 = arith.constant 1152 : index
    %87 = vector.load %arg8[%c0_30, %c1152] : memref<64x1728xbf16, #tpu.memory_space<vmem>>, vector<64x64xbf16>
    tpu.vector_store %arg8[%c0_30, %c1152], %86 {strides = array<i32>} : memref<64x1728xbf16, #tpu.memory_space<vmem>>, vector<64x64xbf16>,
    %88 = vector.extract_strided_slice %83 {offsets = [0, 1, 0], sizes = [8, 8, 64], strides = [1, 1, 1]} : vector<10x10x64xf32> to vector<8x8x64xf32>
    %89 = vector.shape_cast %88 : vector<8x8x64xf32> to vector<64x64xf32>
    %90 = arith.truncf %89 : vector<64x64xf32> to vector<64x64xbf16>
    %c0_31 = arith.constant 0 : index
    %c1216 = arith.constant 1216 : index
    %91 = vector.load %arg8[%c0_31, %c1216] : memref<64x1728xbf16, #tpu.memory_space<vmem>>, vector<64x64xbf16>
    tpu.vector_store %arg8[%c0_31, %c1216], %90 {strides = array<i32>} : memref<64x1728xbf16, #tpu.memory_space<vmem>>, vector<64x64xbf16>,
    %92 = vector.extract_strided_slice %83 {offsets = [0, 2, 0], sizes = [8, 8, 64], strides = [1, 1, 1]} : vector<10x10x64xf32> to vector<8x8x64xf32>
    %93 = vector.shape_cast %92 : vector<8x8x64xf32> to vector<64x64xf32>
    %94 = arith.truncf %93 : vector<64x64xf32> to vector<64x64xbf16>
    %c0_32 = arith.constant 0 : index
    %c1280 = arith.constant 1280 : index
    %95 = vector.load %arg8[%c0_32, %c1280] : memref<64x1728xbf16, #tpu.memory_space<vmem>>, vector<64x64xbf16>
    tpu.vector_store %arg8[%c0_32, %c1280], %94 {strides = array<i32>} : memref<64x1728xbf16, #tpu.memory_space<vmem>>, vector<64x64xbf16>,
    %96 = vector.extract_strided_slice %83 {offsets = [1, 0, 0], sizes = [8, 8, 64], strides = [1, 1, 1]} : vector<10x10x64xf32> to vector<8x8x64xf32>
    %97 = vector.shape_cast %96 : vector<8x8x64xf32> to vector<64x64xf32>
    %98 = arith.truncf %97 : vector<64x64xf32> to vector<64x64xbf16>
    %c0_33 = arith.constant 0 : index
    %c1344 = arith.constant 1344 : index
    %99 = vector.load %arg8[%c0_33, %c1344] : memref<64x1728xbf16, #tpu.memory_space<vmem>>, vector<64x64xbf16>
    tpu.vector_store %arg8[%c0_33, %c1344], %98 {strides = array<i32>} : memref<64x1728xbf16, #tpu.memory_space<vmem>>, vector<64x64xbf16>,
    %100 = vector.extract_strided_slice %83 {offsets = [1, 1, 0], sizes = [8, 8, 64], strides = [1, 1, 1]} : vector<10x10x64xf32> to vector<8x8x64xf32>
    %101 = vector.shape_cast %100 : vector<8x8x64xf32> to vector<64x64xf32>
    %102 = arith.truncf %101 : vector<64x64xf32> to vector<64x64xbf16>
    %c0_34 = arith.constant 0 : index
    %c1408 = arith.constant 1408 : index
    %103 = vector.load %arg8[%c0_34, %c1408] : memref<64x1728xbf16, #tpu.memory_space<vmem>>, vector<64x64xbf16>
    tpu.vector_store %arg8[%c0_34, %c1408], %102 {strides = array<i32>} : memref<64x1728xbf16, #tpu.memory_space<vmem>>, vector<64x64xbf16>,
    %104 = vector.extract_strided_slice %83 {offsets = [1, 2, 0], sizes = [8, 8, 64], strides = [1, 1, 1]} : vector<10x10x64xf32> to vector<8x8x64xf32>
    %105 = vector.shape_cast %104 : vector<8x8x64xf32> to vector<64x64xf32>
    %106 = arith.truncf %105 : vector<64x64xf32> to vector<64x64xbf16>
    %c0_35 = arith.constant 0 : index
    %c1472 = arith.constant 1472 : index
    %107 = vector.load %arg8[%c0_35, %c1472] : memref<64x1728xbf16, #tpu.memory_space<vmem>>, vector<64x64xbf16>
    tpu.vector_store %arg8[%c0_35, %c1472], %106 {strides = array<i32>} : memref<64x1728xbf16, #tpu.memory_space<vmem>>, vector<64x64xbf16>,
    %108 = vector.extract_strided_slice %83 {offsets = [2, 0, 0], sizes = [8, 8, 64], strides = [1, 1, 1]} : vector<10x10x64xf32> to vector<8x8x64xf32>
    %109 = vector.shape_cast %108 : vector<8x8x64xf32> to vector<64x64xf32>
    %110 = arith.truncf %109 : vector<64x64xf32> to vector<64x64xbf16>
    %c0_36 = arith.constant 0 : index
    %c1536 = arith.constant 1536 : index
    %111 = vector.load %arg8[%c0_36, %c1536] : memref<64x1728xbf16, #tpu.memory_space<vmem>>, vector<64x64xbf16>
    tpu.vector_store %arg8[%c0_36, %c1536], %110 {strides = array<i32>} : memref<64x1728xbf16, #tpu.memory_space<vmem>>, vector<64x64xbf16>,
    %112 = vector.extract_strided_slice %83 {offsets = [2, 1, 0], sizes = [8, 8, 64], strides = [1, 1, 1]} : vector<10x10x64xf32> to vector<8x8x64xf32>
    %113 = vector.shape_cast %112 : vector<8x8x64xf32> to vector<64x64xf32>
    %114 = arith.truncf %113 : vector<64x64xf32> to vector<64x64xbf16>
    %c0_37 = arith.constant 0 : index
    %c1600 = arith.constant 1600 : index
    %115 = vector.load %arg8[%c0_37, %c1600] : memref<64x1728xbf16, #tpu.memory_space<vmem>>, vector<64x64xbf16>
    tpu.vector_store %arg8[%c0_37, %c1600], %114 {strides = array<i32>} : memref<64x1728xbf16, #tpu.memory_space<vmem>>, vector<64x64xbf16>,
    %116 = vector.extract_strided_slice %83 {offsets = [2, 2, 0], sizes = [8, 8, 64], strides = [1, 1, 1]} : vector<10x10x64xf32> to vector<8x8x64xf32>
    %117 = vector.shape_cast %116 : vector<8x8x64xf32> to vector<64x64xf32>
    %118 = arith.truncf %117 : vector<64x64xf32> to vector<64x64xbf16>
    %c0_38 = arith.constant 0 : index
    %c1664 = arith.constant 1664 : index
    %119 = vector.load %arg8[%c0_38, %c1664] : memref<64x1728xbf16, #tpu.memory_space<vmem>>, vector<64x64xbf16>
    tpu.vector_store %arg8[%c0_38, %c1664], %118 {strides = array<i32>} : memref<64x1728xbf16, #tpu.memory_space<vmem>>, vector<64x64xbf16>,
    %c0_39 = arith.constant 0 : index
    %c0_40 = arith.constant 0 : index
    %120 = vector.load %arg8[%c0_39, %c0_40] : memref<64x1728xbf16, #tpu.memory_space<vmem>>, vector<64x1728xbf16>
    %c0_41 = arith.constant 0 : index
    %c0_42 = arith.constant 0 : index
    %121 = vector.load %arg3[%c0_41, %c0_42] : memref<1728x128xbf16, #tpu.memory_space<vmem>>, vector<1728x128xbf16>
    %cst = arith.constant dense<0.000000e+00> : vector<64x128xf32>
    %122 = tpu.matmul %120, %121, %cst {dimension_numbers = #tpu.dot_dimension_numbers<[1], [0], [0], [1], [0, 0, 1, 1], [], []>} : vector<64x1728xbf16>, vector<1728x128xbf16>, vector<64x128xf32> -> vector<64x128xf32>
    %c0_43 = arith.constant 0 : index
    %c0_44 = arith.constant 0 : index
    %123 = vector.load %arg4[%c0_43, %c0_44] : memref<1x128xf32, #tpu.memory_space<vmem>>, vector<1x128xf32>
    %124 = vector.shape_cast %123 : vector<1x128xf32> to vector<128xf32>
    %125 = vector.shape_cast %124 : vector<128xf32> to vector<1x128xf32>
    %126 = vector.broadcast %125 : vector<1x128xf32> to vector<64x128xf32>
    %127 = arith.addf %122, %126 : vector<64x128xf32>
    %128 = vector.shape_cast %127 : vector<64x128xf32> to vector<8x8x128xf32>
    %c0_45 = arith.constant 0 : index
    %c0_46 = arith.constant 0 : index
    %c0_47 = arith.constant 0 : index
    %c0_48 = arith.constant 0 : index
    %c0_49 = arith.constant 0 : index
    %129 = vector.load %arg5[%c0_45, %c0_46, %c0_47, %c0_48, %c0_49] : memref<1x1x8x8x128xf32, #tpu.memory_space<vmem>>, vector<1x1x8x8x128xf32>
    %130 = vector.shape_cast %129 : vector<1x1x8x8x128xf32> to vector<8x8x128xf32>
    %131 = vector.shape_cast %128 : vector<8x8x128xf32> to vector<1x1x8x8x128xf32>
    tpu.vector_store %arg5[%c0_45, %c0_46, %c0_47, %c0_48, %c0_49], %131 {strides = array<i32>} : memref<1x1x8x8x128xf32, #tpu.memory_space<vmem>>, vector<1x1x8x8x128xf32>,
    %cst_50 = arith.constant dense<0.000000e+00> : vector<128xf32>
    %132 = vector.multi_reduction <add>, %127, %cst_50 [0] : vector<64x128xf32> to vector<128xf32>
    %c0_51 = arith.constant 0 : index
    %c0_52 = arith.constant 0 : index
    %c0_53 = arith.constant 0 : index
    %c0_54 = arith.constant 0 : index
    %133 = vector.load %arg6[%c0_51, %c0_52, %c0_53, %c0_54] : memref<1x1x1x128xf32, #tpu.memory_space<vmem>>, vector<1x1x1x128xf32>
    %134 = vector.shape_cast %133 : vector<1x1x1x128xf32> to vector<128xf32>
    %135 = vector.shape_cast %132 : vector<128xf32> to vector<1x1x1x128xf32>
    tpu.vector_store %arg6[%c0_51, %c0_52, %c0_53, %c0_54], %135 {strides = array<i32>} : memref<1x1x1x128xf32, #tpu.memory_space<vmem>>, vector<1x1x1x128xf32>,
    %136 = arith.mulf %127, %127 : vector<64x128xf32>
    %cst_55 = arith.constant dense<0.000000e+00> : vector<128xf32>
    %137 = vector.multi_reduction <add>, %136, %cst_55 [0] : vector<64x128xf32> to vector<128xf32>
    %c0_56 = arith.constant 0 : index
    %c0_57 = arith.constant 0 : index
    %c0_58 = arith.constant 0 : index
    %c0_59 = arith.constant 0 : index
    %138 = vector.load %arg7[%c0_56, %c0_57, %c0_58, %c0_59] : memref<1x1x1x128xf32, #tpu.memory_space<vmem>>, vector<1x1x1x128xf32>
    %139 = vector.shape_cast %138 : vector<1x1x1x128xf32> to vector<128xf32>
    %140 = vector.shape_cast %137 : vector<128xf32> to vector<1x1x1x128xf32>
    tpu.vector_store %arg7[%c0_56, %c0_57, %c0_58, %c0_59], %140 {strides = array<i32>} : memref<1x1x1x128xf32, #tpu.memory_space<vmem>>, vector<1x1x1x128xf32>,
    return
  }
  func.func @transform_0(%arg0: i32, %arg1: i32) -> (i32, i32, i32, i32, i32) {
    %c0_i32 = arith.constant 0 : i32
    %c0_i32_0 = arith.constant 0 : i32
    %c0_i32_1 = arith.constant 0 : i32
    %c0_i32_2 = arith.constant 0 : i32
    %c0_i32_3 = arith.constant 0 : i32
    return %arg0, %c0_i32, %c0_i32_0, %c0_i32_1, %c0_i32_2 : i32, i32, i32, i32, i32
  }
  func.func @transform_1(%arg0: i32, %arg1: i32) -> (i32, i32) {
    %c0_i32 = arith.constant 0 : i32
    %c0_i32_0 = arith.constant 0 : i32
    %c0_i32_1 = arith.constant 0 : i32
    return %c0_i32, %c0_i32_0 : i32, i32
  }
  func.func @transform_2(%arg0: i32, %arg1: i32) -> (i32, i32) {
    %c0_i32 = arith.constant 0 : i32
    %c0_i32_0 = arith.constant 0 : i32
    %c0_i32_1 = arith.constant 0 : i32
    return %c0_i32, %c0_i32_0 : i32, i32
  }
  func.func @transform_3(%arg0: i32, %arg1: i32) -> (i32, i32, i32, i32, i32) {
    %c0_i32 = arith.constant 0 : i32
    %c0_i32_0 = arith.constant 0 : i32
    %c0_i32_1 = arith.constant 0 : i32
    %c0_i32_2 = arith.constant 0 : i32
    return %arg0, %arg1, %c0_i32, %c0_i32_0, %c0_i32_1 : i32, i32, i32, i32, i32
  }
  func.func @transform_4(%arg0: i32, %arg1: i32) -> (i32, i32, i32, i32) {
    %c0_i32 = arith.constant 0 : i32
    %c0_i32_0 = arith.constant 0 : i32
    %c0_i32_1 = arith.constant 0 : i32
    return %arg0, %arg1, %c0_i32, %c0_i32_0 : i32, i32, i32, i32
  }
  func.func @transform_5(%arg0: i32, %arg1: i32) -> (i32, i32, i32, i32) {
    %c0_i32 = arith.constant 0 : i32
    %c0_i32_0 = arith.constant 0 : i32
    %c0_i32_1 = arith.constant 0 : i32
    return %arg0, %arg1, %c0_i32, %c0_i32_0 : i32, i32, i32, i32
  }
}

module attributes {stable_mosaic.version = 11 : i64} {
  func.func @linear_bnrelu_kernel(%arg0: i32, %arg1: memref<2x2048xf32, #tpu.memory_space<vmem>>, %arg2: memref<1x2048xf32, #tpu.memory_space<vmem>>, %arg3: memref<1x2048xf32, #tpu.memory_space<vmem>>, %arg4: memref<2048x128xbf16, #tpu.memory_space<vmem>>, %arg5: memref<1x128xf32, #tpu.memory_space<vmem>>, %arg6: memref<2x128xf32, #tpu.memory_space<vmem>>, %arg7: memref<2x128xf32, #tpu.memory_space<vmem>>) attributes {dimension_semantics = [#tpu.dimension_semantics<arbitrary>], iteration_bounds = array<i64: 16>, scalar_prefetch = 0 : i64, scratch_operands = 1 : i64, tpu.core_type = #tpu.core_type<tc>, window_params = [{transform_indices = @transform_0, window_bounds = array<i64: 2, 2048>}, {transform_indices = @transform_1, window_bounds = array<i64: 1, 2048>}, {transform_indices = @transform_2, window_bounds = array<i64: 1, 2048>}, {transform_indices = @transform_3, window_bounds = array<i64: 2048, 128>}, {pipeline_mode = #tpu.pipeline_mode<synchronous>, transform_indices = @transform_4, window_bounds = array<i64: 1, 128>}, {pipeline_mode = #tpu.pipeline_mode<synchronous>, transform_indices = @transform_5, window_bounds = array<i64: 2, 128>}]} {
    %c0_i32 = arith.constant 0 : i32
    %0 = arith.cmpi eq, %arg0, %c0_i32 : i32
    %1 = arith.extui %0 : i1 to i32
    %c0_i32_0 = arith.constant 0 : i32
    %2 = arith.cmpi ne, %1, %c0_i32_0 : i32
    scf.if %2 {
      %cst_14 = arith.constant 0.000000e+00 : f32
      %21 = vector.broadcast %cst_14 : f32 to vector<2x128xf32>
      %c0_15 = arith.constant 0 : index
      %c0_16 = arith.constant 0 : index
      %22 = vector.load %arg7[%c0_15, %c0_16] : memref<2x128xf32, #tpu.memory_space<vmem>>, vector<2x128xf32>
      tpu.vector_store %arg7[%c0_15, %c0_16], %21 {strides = array<i32>} : memref<2x128xf32, #tpu.memory_space<vmem>>, vector<2x128xf32>,
    } else {
    }
    %c0 = arith.constant 0 : index
    %c0_1 = arith.constant 0 : index
    %3 = vector.load %arg1[%c0, %c0_1] : memref<2x2048xf32, #tpu.memory_space<vmem>>, vector<2x2048xf32>
    %c0_2 = arith.constant 0 : index
    %c0_3 = arith.constant 0 : index
    %4 = vector.load %arg2[%c0_2, %c0_3] : memref<1x2048xf32, #tpu.memory_space<vmem>>, vector<1x2048xf32>
    %5 = vector.broadcast %4 : vector<1x2048xf32> to vector<2x2048xf32>
    %6 = arith.mulf %3, %5 : vector<2x2048xf32>
    %c0_4 = arith.constant 0 : index
    %c0_5 = arith.constant 0 : index
    %7 = vector.load %arg3[%c0_4, %c0_5] : memref<1x2048xf32, #tpu.memory_space<vmem>>, vector<1x2048xf32>
    %8 = vector.broadcast %7 : vector<1x2048xf32> to vector<2x2048xf32>
    %9 = arith.addf %6, %8 : vector<2x2048xf32>
    %cst = arith.constant 0.000000e+00 : f32
    %10 = vector.broadcast %cst : f32 to vector<2x2048xf32>
    %11 = arith.maximumf %9, %10 : vector<2x2048xf32>
    %c0_6 = arith.constant 0 : index
    %c0_7 = arith.constant 0 : index
    %12 = vector.load %arg7[%c0_6, %c0_7] : memref<2x128xf32, #tpu.memory_space<vmem>>, vector<2x128xf32>
    %13 = arith.truncf %11 : vector<2x2048xf32> to vector<2x2048xbf16>
    %c0_8 = arith.constant 0 : index
    %c0_9 = arith.constant 0 : index
    %14 = vector.load %arg4[%c0_8, %c0_9] : memref<2048x128xbf16, #tpu.memory_space<vmem>>, vector<2048x128xbf16>
    %cst_10 = arith.constant dense<0.000000e+00> : vector<2x128xf32>
    %15 = tpu.matmul %13, %14, %cst_10 {dimension_numbers = #tpu.dot_dimension_numbers<[1], [0], [0], [1], [0, 0, 1, 1], [], []>} : vector<2x2048xbf16>, vector<2048x128xbf16>, vector<2x128xf32> -> vector<2x128xf32>
    %16 = arith.addf %12, %15 : vector<2x128xf32>
    %c0_11 = arith.constant 0 : index
    %c0_12 = arith.constant 0 : index
    %17 = vector.load %arg7[%c0_11, %c0_12] : memref<2x128xf32, #tpu.memory_space<vmem>>, vector<2x128xf32>
    tpu.vector_store %arg7[%c0_11, %c0_12], %16 {strides = array<i32>} : memref<2x128xf32, #tpu.memory_space<vmem>>, vector<2x128xf32>,
    %c15_i32 = arith.constant 15 : i32
    %18 = arith.cmpi eq, %arg0, %c15_i32 : i32
    %19 = arith.extui %18 : i1 to i32
    %c0_i32_13 = arith.constant 0 : i32
    %20 = arith.cmpi ne, %19, %c0_i32_13 : i32
    scf.if %20 {
      %c0_14 = arith.constant 0 : index
      %c0_15 = arith.constant 0 : index
      %21 = vector.load %arg7[%c0_14, %c0_15] : memref<2x128xf32, #tpu.memory_space<vmem>>, vector<2x128xf32>
      %c0_16 = arith.constant 0 : index
      %c0_17 = arith.constant 0 : index
      %22 = vector.load %arg5[%c0_16, %c0_17] : memref<1x128xf32, #tpu.memory_space<vmem>>, vector<1x128xf32>
      %23 = vector.broadcast %22 : vector<1x128xf32> to vector<2x128xf32>
      %24 = arith.addf %21, %23 : vector<2x128xf32>
      %c0_18 = arith.constant 0 : index
      %c0_19 = arith.constant 0 : index
      %25 = vector.load %arg6[%c0_18, %c0_19] : memref<2x128xf32, #tpu.memory_space<vmem>>, vector<2x128xf32>
      tpu.vector_store %arg6[%c0_18, %c0_19], %24 {strides = array<i32>} : memref<2x128xf32, #tpu.memory_space<vmem>>, vector<2x128xf32>,
    } else {
    }
    return
  }
  func.func @transform_0(%arg0: i32) -> (i32, i32) {
    %c0_i32 = arith.constant 0 : i32
    %c0_i32_0 = arith.constant 0 : i32
    return %c0_i32, %arg0 : i32, i32
  }
  func.func @transform_1(%arg0: i32) -> (i32, i32) {
    %c0_i32 = arith.constant 0 : i32
    %c0_i32_0 = arith.constant 0 : i32
    return %c0_i32, %arg0 : i32, i32
  }
  func.func @transform_2(%arg0: i32) -> (i32, i32) {
    %c0_i32 = arith.constant 0 : i32
    %c0_i32_0 = arith.constant 0 : i32
    return %c0_i32, %arg0 : i32, i32
  }
  func.func @transform_3(%arg0: i32) -> (i32, i32) {
    %c0_i32 = arith.constant 0 : i32
    %c0_i32_0 = arith.constant 0 : i32
    return %arg0, %c0_i32 : i32, i32
  }
  func.func @transform_4(%arg0: i32) -> (i32, i32) {
    %c0_i32 = arith.constant 0 : i32
    %c0_i32_0 = arith.constant 0 : i32
    %c0_i32_1 = arith.constant 0 : i32
    return %c0_i32, %c0_i32_0 : i32, i32
  }
  func.func @transform_5(%arg0: i32) -> (i32, i32) {
    %c0_i32 = arith.constant 0 : i32
    %c0_i32_0 = arith.constant 0 : i32
    %c0_i32_1 = arith.constant 0 : i32
    return %c0_i32, %c0_i32_0 : i32, i32
  }
}

</mosaic_0001>

<llo_original>
// kernel: transformer3d_forward.7
$region0: #{transformer3d_forward.7}
  #allocation0 [shape = 'u32[]', space=smem, size = 0x4, offset = 0x4, fixed_abs, tag = 'smem constant byte address 0x4 - core index']
  #allocation1 [shape = 'u32[144,128]{1,0:T(1,128)}', space=vmem, size = 0x12000, scoped, tag = 'internal scratch']
  %s0 = inlined_call_operand.vmem [shape: f32[2,4,8,8,32], index: 0, kind: input, shape index: {}]
  %s1 = inlined_call_operand.vmem [shape: f32[1,32], index: 1, kind: input, shape index: {}]
  %s2 = inlined_call_operand.vmem [shape: f32[1,32], index: 2, kind: input, shape index: {}]
  %s3 = inlined_call_operand.vmem [shape: f32[2,6,10,10,32], index: 3, kind: output, shape index: {}]
  %s4 = sld [smem:[#allocation0]]
  $region49: #{transformer3d_forward.7} parent=0
    _
  %s6 = ssub.s32 1, %s4
  %s7 = scalar_select 0, %s6, %s4
  loop: start=0, step=1, limit=14
  $region2: #{transformer3d_forward.7} parent=0 // loop_pre_header
    _
  $region3: #{transformer3d_forward.7} parent=0 // loop_header
    %s9 = sphi 0, %s13
    %p10 = scmp.ge.s32.totalorder %s9, 14
    %s16 = sphi 0, %s28
    %s17 = sphi 0, %s24
    %s18 = sphi 0, %s16
    %s19 = sphi 0, %s17
    %s20 = sphi 0, %s18
    %s21 = sphi 0, %s19
    %s43 = sphi 0, %s45
    %s46 = sphi 0, %s43
    %s47 = sphi 0, %s46
    %s63 = sphi 0, %s47
    %s67 = sphi 0, %s67
    %s69 = sphi 0, %s67
    %s70 = sphi 0, %s69
    %s84 = sphi 0, %s70
    %s88 = sphi 0, %s88
    %s90 = sphi 0, %s88
    %s91 = sphi 0, %s90
    %s105 = sphi 0, %s91
    %s113 = sphi 0, %s115
    %s116 = sphi 0, %s113
    %s117 = sphi 0, %s116
    %s133 = sphi 0, %s117
  $region4: #{transformer3d_forward.7} parent=0 // loop_header_branch
    %12 = sbr.rel (%p10) target = $region8
  $region5: #{transformer3d_forward.7} parent=0 // loop_body
    %s14 = ssub.s32 %s9, 1
    %s15 = ssub.s32 %s9, 2
    %s22 = sadd.s32 1, %s17
    %p23 = scmp.ge.s32.totalorder %s22, 6
    %s24 = scalar_select %p23, 0, %s22
    %s25 = sadd.s32 1, %s16
    %s26 = scalar_select %p23, %s25, %s16
    %p27 = scmp.ge.s32.totalorder %s26, 2
    %s28 = scalar_select %p27, 0, %s26
    %s29 = ssub.s32 %s17, 1
    %p30 = scmp.gt.s32.totalorder %s29, 0
    %s31 = scalar_select %p30, %s29, 0
    %p32 = scmp.lt.s32.totalorder %s31, 3
    %s33 = scalar_select %p32, %s31, 3
    %s34 = ssub.s32 %s24, 1
    %p35 = scmp.gt.s32.totalorder %s34, 0
    %s36 = scalar_select %p35, %s34, 0
    %p37 = scmp.lt.s32.totalorder %s36, 3
    %s38 = scalar_select %p37, %s36, 3
    %s39 = ssub.s32 %s16, %s28
    %s40 = ssub.s32 %s33, %s38
    %s41 = sor.u32 %s39, %s40
    %p42 = scmp.eq.s32.totalorder %s41, 0
    %s44 = sadd.s32 %s43, 1
    %s45 = scalar_select %p42, %s43, %s44
    %p48 = pneg %p42
    %p49 = scmp.eq.s32.totalorder %s9, 11
    %p50 = por %p48, %p49
    %p51 = scmp.ne.s32.totalorder %s43, %s46
    %p52 = scmp.eq.s32.totalorder %s9, 0
    %p53 = por %p51, %p52
    %p54 = scmp.ne.s32.totalorder %s43, %s46
    %p55 = scmp.eq.s32.totalorder %s14, 11
    %p56 = por %p54, %p55
    %p57 = scmp.ne.s32.totalorder %s46, %s47
    %p58 = scmp.eq.s32.totalorder %s14, 0
    %p59 = por %p57, %p58
    %p60 = scmp.ne.s32.totalorder %s46, %s47
    %p61 = scmp.eq.s32.totalorder %s15, 11
    %p62 = por %p60, %p61
    %p64 = scmp.ne.s32.totalorder %s47, %s63
    %p65 = scmp.eq.s32.totalorder %s15, 0
    %p66 = por %p64, %p65
    %s68 = sadd.s32 %s67, 1
    %p71 = scmp.eq.s32.totalorder %s9, 11
    %p72 = scmp.ne.s32.totalorder %s67, %s69
    %p73 = scmp.eq.s32.totalorder %s9, 0
    %p74 = por %p72, %p73
    %p75 = scmp.ne.s32.totalorder %s67, %s69
    %p76 = scmp.eq.s32.totalorder %s14, 11
    %p77 = por %p75, %p76
    %p78 = scmp.ne.s32.totalorder %s69, %s70
    %p79 = scmp.eq.s32.totalorder %s14, 0
    %p80 = por %p78, %p79
    %p81 = scmp.ne.s32.totalorder %s69, %s70
    %p82 = scmp.eq.s32.totalorder %s15, 11
    %p83 = por %p81, %p82
    %p85 = scmp.ne.s32.totalorder %s70, %s84
    %p86 = scmp.eq.s32.totalorder %s15, 0
    %p87 = por %p85, %p86
    %s89 = sadd.s32 %s88, 1
    %p92 = scmp.eq.s32.totalorder %s9, 11
    %p93 = scmp.ne.s32.totalorder %s88, %s90
    %p94 = scmp.eq.s32.totalorder %s9, 0
    %p95 = por %p93, %p94
    %p96 = scmp.ne.s32.totalorder %s88, %s90
    %p97 = scmp.eq.s32.totalorder %s14, 11
    %p98 = por %p96, %p97
    %p99 = scmp.ne.s32.totalorder %s90, %s91
    %p100 = scmp.eq.s32.totalorder %s14, 0
    %p101 = por %p99, %p100
    %p102 = scmp.ne.s32.totalorder %s90, %s91
    %p103 = scmp.eq.s32.totalorder %s15, 11
    %p104 = por %p102, %p103
    %p106 = scmp.ne.s32.totalorder %s91, %s105
    %p107 = scmp.eq.s32.totalorder %s15, 0
    %p108 = por %p106, %p107
    %s109 = ssub.s32 %s16, %s28
    %s110 = ssub.s32 %s17, %s24
    %s111 = sor.u32 %s109, %s110
    %p112 = scmp.eq.s32.totalorder %s111, 0
    %s114 = sadd.s32 %s113, 1
    %s115 = scalar_select %p112, %s113, %s114
    %p118 = pneg %p112
    %p119 = scmp.eq.s32.totalorder %s9, 11
    %p120 = por %p118, %p119
    %p121 = scmp.ne.s32.totalorder %s113, %s116
    %p122 = scmp.eq.s32.totalorder %s9, 0
    %p123 = por %p121, %p122
    %p124 = scmp.ne.s32.totalorder %s113, %s116
    %p125 = scmp.eq.s32.totalorder %s14, 11
    %p126 = por %p124, %p125
    %p127 = scmp.ne.s32.totalorder %s116, %s117
    %p128 = scmp.eq.s32.totalorder %s14, 0
    %p129 = por %p127, %p128
    %p130 = scmp.ne.s32.totalorder %s116, %s117
    %p131 = scmp.eq.s32.totalorder %s15, 11
    %p132 = por %p130, %p131
    %p134 = scmp.ne.s32.totalorder %s117, %s133
    %p135 = scmp.eq.s32.totalorder %s15, 0
    %p136 = por %p134, %p135
    %p137 = scmp.le.s32.totalorder 1, %s9
    %p138 = scmp.lt.s32.totalorder %s9, 13
    %p139 = pnand %p137, %p138
    %p140 = pneg %p139
    // Predicated region
    $region9: #{transformer3d_forward.7} parent=5 // pred_check
      _
    $region10: #{transformer3d_forward.7} parent=5 // pred_check_branch
      %142 = sbr.rel (%p139) target = $region12
    $region11: #{transformer3d_forward.7} parent=5 // pred_region
      %s143 = ssub.s32 %s9, 1
      // Predicated region
      $region13: #{transformer3d_forward.7} parent=11 // pred_check
        %p144 = pneg %p80
      $region14: #{transformer3d_forward.7} parent=11 // pred_check_branch
        %146 = sbr.rel (%p144) target = $region16
      $region15: #{transformer3d_forward.7} parent=11 // pred_region
        _
      $region16: #{transformer3d_forward.7} parent=11 // pred_fallthru
        _
      // Predicated region
      $region17: #{transformer3d_forward.7} parent=11 // pred_check
        %p147 = pneg %p101
      $region18: #{transformer3d_forward.7} parent=11 // pred_check_branch
        %149 = sbr.rel (%p147) target = $region20
      $region19: #{transformer3d_forward.7} parent=11 // pred_region
        _
      $region20: #{transformer3d_forward.7} parent=11 // pred_fallthru
        _
    $region12: #{transformer3d_forward.7} parent=5 // pred_fallthru
      _
    %p150 = scmp.lt.s32.totalorder %s9, 12
    // Predicated region
    $region21: #{transformer3d_forward.7} parent=5 // pred_check
      %p151 = pneg %p150
    $region22: #{transformer3d_forward.7} parent=5 // pred_check_branch
      %153 = sbr.rel (%p151) target = $region24
    $region23: #{transformer3d_forward.7} parent=5 // pred_region
      // Predicated region
      $region25: #{transformer3d_forward.7} parent=23 // pred_check
        %p154 = pneg %p53
      $region26: #{transformer3d_forward.7} parent=23 // pred_check_branch
        %156 = sbr.rel (%p154) target = $region28
      $region27: #{transformer3d_forward.7} parent=23 // pred_region
        %s157 = ssub.s32 %s17, 1
        %p158 = scmp.gt.s32.totalorder %s157, 0
        %s159 = scalar_select %p158, %s157, 0
        %p160 = scmp.lt.s32.totalorder %s159, 3
        %s161 = scalar_select %p160, %s159, 3
        %p162 = scmp.lt.s32.totalorder %s16, 1
        %s163 = scalar_select %p162, %s16, 1
        %p164 = scmp.lt.s32.totalorder %s161, 3
        %s165 = scalar_select %p164, %s161, 3
        %s166 = smul.addr %s165, 8
        %s167 = smul.addr %s163, 32
        %s168 = sadd.s32 %s166, %s167
        %s169 = smul.addr %s168, 8
        %s170 = scalar_lea.vmem %s0, %s169
        %s171 = ssub.s32 %s17, 1
        %p172 = scmp.gt.s32.totalorder %s171, 0
        %s173 = scalar_select %p172, %s171, 0
        %p174 = scmp.lt.s32.totalorder %s173, 3
        %s175 = scalar_select %p174, %s173, 3
      $region28: #{transformer3d_forward.7} parent=23 // pred_fallthru
        _
    $region24: #{transformer3d_forward.7} parent=5 // pred_fallthru
      _
    %p176 = scmp.le.s32.totalorder 1, %s9
    %p177 = scmp.lt.s32.totalorder %s9, 13
    %p178 = pnand %p176, %p177
    %p179 = pneg %p178
    // Predicated region
    $region29: #{transformer3d_forward.7} parent=5 // pred_check
      _
    $region30: #{transformer3d_forward.7} parent=5 // pred_check_branch
      %181 = sbr.rel (%p178) target = $region32
    $region31: #{transformer3d_forward.7} parent=5 // pred_region
      %s182 = ssub.s32 %s9, 1
      %s183 = ssub.s32 %s19, 1
      %p184 = scmp.gt.s32.totalorder %s183, 0
      %s185 = scalar_select %p184, %s183, 0
      %p186 = scmp.lt.s32.totalorder %s185, 3
      %s187 = scalar_select %p186, %s185, 3
      %p188 = scmp.lt.s32.totalorder %s18, 1
      %s189 = scalar_select %p188, %s18, 1
      %p190 = scmp.lt.s32.totalorder %s187, 3
      %s191 = scalar_select %p190, %s187, 3
      %s192 = smul.addr %s191, 8
      %s193 = smul.addr %s189, 32
      %s194 = sadd.s32 %s192, %s193
      %s195 = smul.addr %s194, 8
      %s196 = scalar_lea.vmem %s0, %s195
      %p197 = pneg %p59
      %p198 = pneg %p56
      %p199 = pneg %p80
      %p200 = pneg %p77
      %p201 = pneg %p101
      %p202 = pneg %p98
      %p203 = pneg %p129
      %p204 = pneg %p126
      %p205 = scmp.lt.s32.totalorder %s18, 1
      %s206 = scalar_select %p205, %s18, 1
      %p207 = scmp.lt.s32.totalorder %s19, 5
      %s208 = scalar_select %p207, %s19, 5
      %s209 = smul.addr %s208, 20
      %s210 = smul.addr %s206, 120
      %s211 = sadd.s32 %s209, %s210
      %s212 = smul.addr %s211, 8
      %s213 = scalar_lea.vmem %s3, %s212
      %s214 = ssub.s32 %s19, 1
      %p215 = scmp.gt.s32.totalorder %s214, 0
      %s216 = scalar_select %p215, %s214, 0
      %p217 = scmp.lt.s32.totalorder %s216, 3
      %s218 = scalar_select %p217, %s216, 3
      %p219 = scmp.lt.s32.totalorder %s18, 1
      %s220 = scalar_select %p219, %s18, 1
      %p221 = scmp.lt.s32.totalorder %s218, 3
      %s222 = scalar_select %p221, %s218, 3
      %s223 = smul.addr %s222, 8
      %s224 = smul.addr %s220, 32
      %s225 = sadd.s32 %s223, %s224
      %s226 = smul.addr %s225, 8
      %s227 = scalar_lea.vmem %s0, %s226
      %s228 = ssub.s32 %s19, 1
      %p229 = scmp.gt.s32.totalorder %s228, 0
      %s230 = scalar_select %p229, %s228, 0
      %p231 = scmp.lt.s32.totalorder %s230, 3
      %s232 = scalar_select %p231, %s230, 3
      %p233 = scmp.lt.s32.totalorder %s18, 1
      %s234 = scalar_select %p233, %s18, 1
      %p235 = scmp.lt.s32.totalorder %s19, 5
      %s236 = scalar_select %p235, %s19, 5
      %s237 = smul.addr %s236, 20
      %s238 = smul.addr %s234, 120
      %s239 = sadd.s32 %s237, %s238
      %s240 = smul.addr %s239, 8
      %s241 = scalar_lea.vmem %s3, %s240
      %vm242 = vcmask 261120
      %243 = vst.msk [vmem:[%s241] sm:$0xff] %vm242, 0.0
      %vm244 = vcmask 254976
      %245 = vst.msk [vmem:[%s241 + $0x8] sm:$0x3] %vm244, 0.0
      %246 = vst.msk [vmem:[%s241 + $0x10] sm:$0xff] %vm242, 0.0
      %247 = vst.msk [vmem:[%s241 + $0x18] sm:$0x3] %vm244, 0.0
      %248 = vst.msk [vmem:[%s241 + $0x20] sm:$0xff] %vm242, 0.0
      %249 = vst.msk [vmem:[%s241 + $0x28] sm:$0x3] %vm244, 0.0
      %250 = vst.msk [vmem:[%s241 + $0x30] sm:$0xff] %vm242, 0.0
      %251 = vst.msk [vmem:[%s241 + $0x38] sm:$0x3] %vm244, 0.0
      %252 = vst.msk [vmem:[%s241 + $0x40] sm:$0xff] %vm242, 0.0
      %253 = vst.msk [vmem:[%s241 + $0x48] sm:$0x3] %vm244, 0.0
      %254 = vst.msk [vmem:[%s241 + $0x50] sm:$0xff] %vm242, 0.0
      %255 = vst.msk [vmem:[%s241 + $0x58] sm:$0x3] %vm244, 0.0
      %256 = vst.msk [vmem:[%s241 + $0x60] sm:$0xff] %vm242, 0.0
      %257 = vst.msk [vmem:[%s241 + $0x68] sm:$0x3] %vm244, 0.0
      %258 = vst.msk [vmem:[%s241 + $0x70] sm:$0xff] %vm242, 0.0
      %259 = vst.msk [vmem:[%s241 + $0x78] sm:$0x3] %vm244, 0.0
      %260 = vst.msk [vmem:[%s241 + $0x80] sm:$0xff] %vm242, 0.0
      %261 = vst.msk [vmem:[%s241 + $0x88] sm:$0x3] %vm244, 0.0
      %262 = vst.msk [vmem:[%s241 + $0x90] sm:$0xff] %vm242, 0.0
      %263 = vst.msk [vmem:[%s241 + $0x98] sm:$0x3] %vm244, 0.0
      %p264 = scmp.ge.s32.totalorder %s19, 1
      %p265 = scmp.le.s32.totalorder %s19, 4
      %p266 = pnand %p264, %p265
      %p267 = pneg %p266
      // Predicated region
      $region33: #{transformer3d_forward.7} parent=31 // pred_check
        _
      $region34: #{transformer3d_forward.7} parent=31 // pred_check_branch
        %269 = sbr.rel (%p266) target = $region36
      $region35: #{transformer3d_forward.7} parent=31 // pred_region
        %v270 = vld [vmem:[%s227] sm:$0xff]
        %v271 = vld [vmem:[%s227 + $0x8] sm:$0xff]
        %v272 = vld [vmem:[%s227 + $0x10] sm:$0xff]
        %v273 = vld [vmem:[%s227 + $0x18] sm:$0xff]
        %v274 = vld [vmem:[%s227 + $0x20] sm:$0xff]
        %v275 = vld [vmem:[%s227 + $0x28] sm:$0xff]
        %v276 = vld [vmem:[%s227 + $0x30] sm:$0xff]
        %v277 = vld [vmem:[%s227 + $0x38] sm:$0xff]
        %v278 = vld [vmem:[%s1] sm:$0x1]
        %v280 = vlaneseq
        %v281 = vshrl.u32 %v280, 7
        %v282 = vsub.s32 0, %v281
        %v283 = vrot.slane %v278, %v282
        %v285 = vmul.f32 %v270, %v283
        %v286 = vmul.f32 %v271, %v283
        %v287 = vmul.f32 %v272, %v283
        %v288 = vmul.f32 %v273, %v283
        %v289 = vmul.f32 %v274, %v283
        %v290 = vmul.f32 %v275, %v283
        %v291 = vmul.f32 %v276, %v283
        %v292 = vmul.f32 %v277, %v283
        %v293 = vld [vmem:[%s2] sm:$0x1]
        %v295 = vlaneseq
        %v296 = vshrl.u32 %v295, 7
        %v297 = vsub.s32 0, %v296
        %v298 = vrot.slane %v293, %v297
        %v300 = vadd.f32 %v285, %v298
        %v301 = vadd.f32 %v286, %v298
        %v302 = vadd.f32 %v287, %v298
        %v303 = vadd.f32 %v288, %v298
        %v304 = vadd.f32 %v289, %v298
        %v305 = vadd.f32 %v290, %v298
        %v306 = vadd.f32 %v291, %v298
        %v307 = vadd.f32 %v292, %v298
        %v308 = vmax.f32 %v300, 0.0
        %v309 = vmax.f32 %v301, 0.0
        %v310 = vmax.f32 %v302, 0.0
        %v311 = vmax.f32 %v303, 0.0
        %v312 = vmax.f32 %v304, 0.0
        %v313 = vmax.f32 %v305, 0.0
        %v314 = vmax.f32 %v306, 0.0
        %v315 = vmax.f32 %v307, 0.0
        %s316 = scalar_lea.vmem %s241, 16
        %317 = vst.msk [vmem:[%s316 + $0x1] sm:$0xff] %vm242, %v308
        %318 = vst.msk [vmem:[%s316 + $0x11] sm:$0xff] %vm242, %v309
        %319 = vst.msk [vmem:[%s316 + $0x21] sm:$0xff] %vm242, %v310
        %320 = vst.msk [vmem:[%s316 + $0x31] sm:$0xff] %vm242, %v311
        %321 = vst.msk [vmem:[%s316 + $0x41] sm:$0xff] %vm242, %v312
        %322 = vst.msk [vmem:[%s316 + $0x51] sm:$0xff] %vm242, %v313
        %323 = vst.msk [vmem:[%s316 + $0x61] sm:$0xff] %vm242, %v314
        %324 = vst.msk [vmem:[%s316 + $0x71] sm:$0xff] %vm242, %v315
      $region36: #{transformer3d_forward.7} parent=31 // pred_fallthru
        _
      %p325 = scmp.lt.s32.totalorder %s18, 1
      %s326 = scalar_select %p325, %s18, 1
      %p327 = scmp.lt.s32.totalorder %s19, 5
      %s328 = scalar_select %p327, %s19, 5
      %s329 = smul.addr %s328, 20
      %s330 = smul.addr %s326, 120
      %s331 = sadd.s32 %s329, %s330
      %s332 = smul.addr %s331, 8
      %s333 = scalar_lea.vmem %s3, %s332
      // Predicated region
      $region37: #{transformer3d_forward.7} parent=31 // pred_check
        %p334 = pneg %p126
      $region38: #{transformer3d_forward.7} parent=31 // pred_check_branch
        %336 = sbr.rel (%p334) target = $region40
      $region39: #{transformer3d_forward.7} parent=31 // pred_region
        _
      $region40: #{transformer3d_forward.7} parent=31 // pred_fallthru
        _
    $region32: #{transformer3d_forward.7} parent=5 // pred_fallthru
      _
    %p337 = scmp.le.s32.totalorder 2, %s9
    // Predicated region
    $region41: #{transformer3d_forward.7} parent=5 // pred_check
      %p338 = pneg %p337
    $region42: #{transformer3d_forward.7} parent=5 // pred_check_branch
      %340 = sbr.rel (%p338) target = $region44
    $region43: #{transformer3d_forward.7} parent=5 // pred_region
      %s341 = ssub.s32 %s9, 2
      // Predicated region
      $region45: #{transformer3d_forward.7} parent=43 // pred_check
        %p342 = pneg %p132
      $region46: #{transformer3d_forward.7} parent=43 // pred_check_branch
        %344 = sbr.rel (%p342) target = $region48
      $region47: #{transformer3d_forward.7} parent=43 // pred_region
        %p345 = scmp.lt.s32.totalorder %s20, 1
        %s346 = scalar_select %p345, %s20, 1
        %p347 = scmp.lt.s32.totalorder %s21, 5
        %s348 = scalar_select %p347, %s21, 5
        %s349 = smul.addr %s348, 20
        %s350 = smul.addr %s346, 120
        %s351 = sadd.s32 %s349, %s350
        %s352 = smul.addr %s351, 8
        %s353 = scalar_lea.vmem %s3, %s352
      $region48: #{transformer3d_forward.7} parent=43 // pred_fallthru
        _
    $region44: #{transformer3d_forward.7} parent=5 // pred_fallthru
      _
  $region6: #{transformer3d_forward.7} parent=0 // loop_footer
    %s13 = sadd.s32 1, %s9
  $region7: #{transformer3d_forward.7} parent=0 // loop_footer_branch
    %8 = sbr.rel target = $region3
  $region8: #{transformer3d_forward.7} parent=0 // loop_exit
    _

// kernel: transformer3d_forward.9
$region0: #{transformer3d_forward.9}
  #allocation0 [shape = 'u32[]', space=smem, size = 0x4, offset = 0x4, fixed_abs, tag = 'smem constant byte address 0x4 - core index']
  #allocation1 [shape = 'u32[144,128]{1,0:T(1,128)}', space=vmem, size = 0x12000, scoped, tag = 'internal scratch']
  %s0 = inlined_call_operand.vmem [shape: f32[2,4,8,8,64], index: 0, kind: input, shape index: {}]
  %s1 = inlined_call_operand.vmem [shape: f32[1,64], index: 1, kind: input, shape index: {}]
  %s2 = inlined_call_operand.vmem [shape: f32[1,64], index: 2, kind: input, shape index: {}]
  %s3 = inlined_call_operand.vmem [shape: f32[2,6,10,10,64], index: 3, kind: output, shape index: {}]
  %s4 = sld [smem:[#allocation0]]
  $region49: #{transformer3d_forward.9} parent=0
    _
  %s6 = ssub.s32 1, %s4
  %s7 = scalar_select 0, %s6, %s4
  loop: start=0, step=1, limit=14
  $region2: #{transformer3d_forward.9} parent=0 // loop_pre_header
    _
  $region3: #{transformer3d_forward.9} parent=0 // loop_header
    %s9 = sphi 0, %s13
    %p10 = scmp.ge.s32.totalorder %s9, 14
    %s16 = sphi 0, %s28
    %s17 = sphi 0, %s24
    %s18 = sphi 0, %s16
    %s19 = sphi 0, %s17
    %s20 = sphi 0, %s18
    %s21 = sphi 0, %s19
    %s43 = sphi 0, %s45
    %s46 = sphi 0, %s43
    %s47 = sphi 0, %s46
    %s63 = sphi 0, %s47
    %s67 = sphi 0, %s67
    %s69 = sphi 0, %s67
    %s70 = sphi 0, %s69
    %s84 = sphi 0, %s70
    %s88 = sphi 0, %s88
    %s90 = sphi 0, %s88
    %s91 = sphi 0, %s90
    %s105 = sphi 0, %s91
    %s113 = sphi 0, %s115
    %s116 = sphi 0, %s113
    %s117 = sphi 0, %s116
    %s133 = sphi 0, %s117
  $region4: #{transformer3d_forward.9} parent=0 // loop_header_branch
    %12 = sbr.rel (%p10) target = $region8
  $region5: #{transformer3d_forward.9} parent=0 // loop_body
    %s14 = ssub.s32 %s9, 1
    %s15 = ssub.s32 %s9, 2
    %s22 = sadd.s32 1, %s17
    %p23 = scmp.ge.s32.totalorder %s22, 6
    %s24 = scalar_select %p23, 0, %s22
    %s25 = sadd.s32 1, %s16
    %s26 = scalar_select %p23, %s25, %s16
    %p27 = scmp.ge.s32.totalorder %s26, 2
    %s28 = scalar_select %p27, 0, %s26
    %s29 = ssub.s32 %s17, 1
    %p30 = scmp.gt.s32.totalorder %s29, 0
    %s31 = scalar_select %p30, %s29, 0
    %p32 = scmp.lt.s32.totalorder %s31, 3
    %s33 = scalar_select %p32, %s31, 3
    %s34 = ssub.s32 %s24, 1
    %p35 = scmp.gt.s32.totalorder %s34, 0
    %s36 = scalar_select %p35, %s34, 0
    %p37 = scmp.lt.s32.totalorder %s36, 3
    %s38 = scalar_select %p37, %s36, 3
    %s39 = ssub.s32 %s16, %s28
    %s40 = ssub.s32 %s33, %s38
    %s41 = sor.u32 %s39, %s40
    %p42 = scmp.eq.s32.totalorder %s41, 0
    %s44 = sadd.s32 %s43, 1
    %s45 = scalar_select %p42, %s43, %s44
    %p48 = pneg %p42
    %p49 = scmp.eq.s32.totalorder %s9, 11
    %p50 = por %p48, %p49
    %p51 = scmp.ne.s32.totalorder %s43, %s46
    %p52 = scmp.eq.s32.totalorder %s9, 0
    %p53 = por %p51, %p52
    %p54 = scmp.ne.s32.totalorder %s43, %s46
    %p55 = scmp.eq.s32.totalorder %s14, 11
    %p56 = por %p54, %p55
    %p57 = scmp.ne.s32.totalorder %s46, %s47
    %p58 = scmp.eq.s32.totalorder %s14, 0
    %p59 = por %p57, %p58
    %p60 = scmp.ne.s32.totalorder %s46, %s47
    %p61 = scmp.eq.s32.totalorder %s15, 11
    %p62 = por %p60, %p61
    %p64 = scmp.ne.s32.totalorder %s47, %s63
    %p65 = scmp.eq.s32.totalorder %s15, 0
    %p66 = por %p64, %p65
    %s68 = sadd.s32 %s67, 1
    %p71 = scmp.eq.s32.totalorder %s9, 11
    %p72 = scmp.ne.s32.totalorder %s67, %s69
    %p73 = scmp.eq.s32.totalorder %s9, 0
    %p74 = por %p72, %p73
    %p75 = scmp.ne.s32.totalorder %s67, %s69
    %p76 = scmp.eq.s32.totalorder %s14, 11
    %p77 = por %p75, %p76
    %p78 = scmp.ne.s32.totalorder %s69, %s70
    %p79 = scmp.eq.s32.totalorder %s14, 0
    %p80 = por %p78, %p79
    %p81 = scmp.ne.s32.totalorder %s69, %s70
    %p82 = scmp.eq.s32.totalorder %s15, 11
    %p83 = por %p81, %p82
    %p85 = scmp.ne.s32.totalorder %s70, %s84
    %p86 = scmp.eq.s32.totalorder %s15, 0
    %p87 = por %p85, %p86
    %s89 = sadd.s32 %s88, 1
    %p92 = scmp.eq.s32.totalorder %s9, 11
    %p93 = scmp.ne.s32.totalorder %s88, %s90
    %p94 = scmp.eq.s32.totalorder %s9, 0
    %p95 = por %p93, %p94
    %p96 = scmp.ne.s32.totalorder %s88, %s90
    %p97 = scmp.eq.s32.totalorder %s14, 11
    %p98 = por %p96, %p97
    %p99 = scmp.ne.s32.totalorder %s90, %s91
    %p100 = scmp.eq.s32.totalorder %s14, 0
    %p101 = por %p99, %p100
    %p102 = scmp.ne.s32.totalorder %s90, %s91
    %p103 = scmp.eq.s32.totalorder %s15, 11
    %p104 = por %p102, %p103
    %p106 = scmp.ne.s32.totalorder %s91, %s105
    %p107 = scmp.eq.s32.totalorder %s15, 0
    %p108 = por %p106, %p107
    %s109 = ssub.s32 %s16, %s28
    %s110 = ssub.s32 %s17, %s24
    %s111 = sor.u32 %s109, %s110
    %p112 = scmp.eq.s32.totalorder %s111, 0
    %s114 = sadd.s32 %s113, 1
    %s115 = scalar_select %p112, %s113, %s114
    %p118 = pneg %p112
    %p119 = scmp.eq.s32.totalorder %s9, 11
    %p120 = por %p118, %p119
    %p121 = scmp.ne.s32.totalorder %s113, %s116
    %p122 = scmp.eq.s32.totalorder %s9, 0
    %p123 = por %p121, %p122
    %p124 = scmp.ne.s32.totalorder %s113, %s116
    %p125 = scmp.eq.s32.totalorder %s14, 11
    %p126 = por %p124, %p125
    %p127 = scmp.ne.s32.totalorder %s116, %s117
    %p128 = scmp.eq.s32.totalorder %s14, 0
    %p129 = por %p127, %p128
    %p130 = scmp.ne.s32.totalorder %s116, %s117
    %p131 = scmp.eq.s32.totalorder %s15, 11
    %p132 = por %p130, %p131
    %p134 = scmp.ne.s32.totalorder %s117, %s133
    %p135 = scmp.eq.s32.totalorder %s15, 0
    %p136 = por %p134, %p135
    %p137 = scmp.le.s32.totalorder 1, %s9
    %p138 = scmp.lt.s32.totalorder %s9, 13
    %p139 = pnand %p137, %p138
    %p140 = pneg %p139
    // Predicated region
    $region9: #{transformer3d_forward.9} parent=5 // pred_check
      _
    $region10: #{transformer3d_forward.9} parent=5 // pred_check_branch
      %142 = sbr.rel (%p139) target = $region12
    $region11: #{transformer3d_forward.9} parent=5 // pred_region
      %s143 = ssub.s32 %s9, 1
      // Predicated region
      $region13: #{transformer3d_forward.9} parent=11 // pred_check
        %p144 = pneg %p80
      $region14: #{transformer3d_forward.9} parent=11 // pred_check_branch
        %146 = sbr.rel (%p144) target = $region16
      $region15: #{transformer3d_forward.9} parent=11 // pred_region
        _
      $region16: #{transformer3d_forward.9} parent=11 // pred_fallthru
        _
      // Predicated region
      $region17: #{transformer3d_forward.9} parent=11 // pred_check
        %p147 = pneg %p101
      $region18: #{transformer3d_forward.9} parent=11 // pred_check_branch
        %149 = sbr.rel (%p147) target = $region20
      $region19: #{transformer3d_forward.9} parent=11 // pred_region
        _
      $region20: #{transformer3d_forward.9} parent=11 // pred_fallthru
        _
    $region12: #{transformer3d_forward.9} parent=5 // pred_fallthru
      _
    %p150 = scmp.lt.s32.totalorder %s9, 12
    // Predicated region
    $region21: #{transformer3d_forward.9} parent=5 // pred_check
      %p151 = pneg %p150
    $region22: #{transformer3d_forward.9} parent=5 // pred_check_branch
      %153 = sbr.rel (%p151) target = $region24
    $region23: #{transformer3d_forward.9} parent=5 // pred_region
      // Predicated region
      $region25: #{transformer3d_forward.9} parent=23 // pred_check
        %p154 = pneg %p53
      $region26: #{transformer3d_forward.9} parent=23 // pred_check_branch
        %156 = sbr.rel (%p154) target = $region28
      $region27: #{transformer3d_forward.9} parent=23 // pred_region
        %s157 = ssub.s32 %s17, 1
        %p158 = scmp.gt.s32.totalorder %s157, 0
        %s159 = scalar_select %p158, %s157, 0
        %p160 = scmp.lt.s32.totalorder %s159, 3
        %s161 = scalar_select %p160, %s159, 3
        %p162 = scmp.lt.s32.totalorder %s16, 1
        %s163 = scalar_select %p162, %s16, 1
        %p164 = scmp.lt.s32.totalorder %s161, 3
        %s165 = scalar_select %p164, %s161, 3
        %s166 = smul.addr %s165, 8
        %s167 = smul.addr %s163, 32
        %s168 = sadd.s32 %s166, %s167
        %s169 = smul.addr %s168, 8
        %s170 = scalar_lea.vmem %s0, %s169
        %s171 = ssub.s32 %s17, 1
        %p172 = scmp.gt.s32.totalorder %s171, 0
        %s173 = scalar_select %p172, %s171, 0
        %p174 = scmp.lt.s32.totalorder %s173, 3
        %s175 = scalar_select %p174, %s173, 3
      $region28: #{transformer3d_forward.9} parent=23 // pred_fallthru
        _
    $region24: #{transformer3d_forward.9} parent=5 // pred_fallthru
      _
    %p176 = scmp.le.s32.totalorder 1, %s9
    %p177 = scmp.lt.s32.totalorder %s9, 13
    %p178 = pnand %p176, %p177
    %p179 = pneg %p178
    // Predicated region
    $region29: #{transformer3d_forward.9} parent=5 // pred_check
      _
    $region30: #{transformer3d_forward.9} parent=5 // pred_check_branch
      %181 = sbr.rel (%p178) target = $region32
    $region31: #{transformer3d_forward.9} parent=5 // pred_region
      %s182 = ssub.s32 %s9, 1
      %s183 = ssub.s32 %s19, 1
      %p184 = scmp.gt.s32.totalorder %s183, 0
      %s185 = scalar_select %p184, %s183, 0
      %p186 = scmp.lt.s32.totalorder %s185, 3
      %s187 = scalar_select %p186, %s185, 3
      %p188 = scmp.lt.s32.totalorder %s18, 1
      %s189 = scalar_select %p188, %s18, 1
      %p190 = scmp.lt.s32.totalorder %s187, 3
      %s191 = scalar_select %p190, %s187, 3
      %s192 = smul.addr %s191, 8
      %s193 = smul.addr %s189, 32
      %s194 = sadd.s32 %s192, %s193
      %s195 = smul.addr %s194, 8
      %s196 = scalar_lea.vmem %s0, %s195
      %p197 = pneg %p59
      %p198 = pneg %p56
      %p199 = pneg %p80
      %p200 = pneg %p77
      %p201 = pneg %p101
      %p202 = pneg %p98
      %p203 = pneg %p129
      %p204 = pneg %p126
      %p205 = scmp.lt.s32.totalorder %s18, 1
      %s206 = scalar_select %p205, %s18, 1
      %p207 = scmp.lt.s32.totalorder %s19, 5
      %s208 = scalar_select %p207, %s19, 5
      %s209 = smul.addr %s208, 20
      %s210 = smul.addr %s206, 120
      %s211 = sadd.s32 %s209, %s210
      %s212 = smul.addr %s211, 8
      %s213 = scalar_lea.vmem %s3, %s212
      %s214 = ssub.s32 %s19, 1
      %p215 = scmp.gt.s32.totalorder %s214, 0
      %s216 = scalar_select %p215, %s214, 0
      %p217 = scmp.lt.s32.totalorder %s216, 3
      %s218 = scalar_select %p217, %s216, 3
      %p219 = scmp.lt.s32.totalorder %s18, 1
      %s220 = scalar_select %p219, %s18, 1
      %p221 = scmp.lt.s32.totalorder %s218, 3
      %s222 = scalar_select %p221, %s218, 3
      %s223 = smul.addr %s222, 8
      %s224 = smul.addr %s220, 32
      %s225 = sadd.s32 %s223, %s224
      %s226 = smul.addr %s225, 8
      %s227 = scalar_lea.vmem %s0, %s226
      %s228 = ssub.s32 %s19, 1
      %p229 = scmp.gt.s32.totalorder %s228, 0
      %s230 = scalar_select %p229, %s228, 0
      %p231 = scmp.lt.s32.totalorder %s230, 3
      %s232 = scalar_select %p231, %s230, 3
      %p233 = scmp.lt.s32.totalorder %s18, 1
      %s234 = scalar_select %p233, %s18, 1
      %p235 = scmp.lt.s32.totalorder %s19, 5
      %s236 = scalar_select %p235, %s19, 5
      %s237 = smul.addr %s236, 20
      %s238 = smul.addr %s234, 120
      %s239 = sadd.s32 %s237, %s238
      %s240 = smul.addr %s239, 8
      %s241 = scalar_lea.vmem %s3, %s240
      %vm242 = vcmask 523264
      %243 = vst.msk [vmem:[%s241] sm:$0xff] %vm242, 0.0
      %vm244 = vcmask 517120
      %245 = vst.msk [vmem:[%s241 + $0x8] sm:$0x3] %vm244, 0.0
      %246 = vst.msk [vmem:[%s241 + $0x10] sm:$0xff] %vm242, 0.0
      %247 = vst.msk [vmem:[%s241 + $0x18] sm:$0x3] %vm244, 0.0
      %248 = vst.msk [vmem:[%s241 + $0x20] sm:$0xff] %vm242, 0.0
      %249 = vst.msk [vmem:[%s241 + $0x28] sm:$0x3] %vm244, 0.0
      %250 = vst.msk [vmem:[%s241 + $0x30] sm:$0xff] %vm242, 0.0
      %251 = vst.msk [vmem:[%s241 + $0x38] sm:$0x3] %vm244, 0.0
      %252 = vst.msk [vmem:[%s241 + $0x40] sm:$0xff] %vm242, 0.0
      %253 = vst.msk [vmem:[%s241 + $0x48] sm:$0x3] %vm244, 0.0
      %254 = vst.msk [vmem:[%s241 + $0x50] sm:$0xff] %vm242, 0.0
      %255 = vst.msk [vmem:[%s241 + $0x58] sm:$0x3] %vm244, 0.0
      %256 = vst.msk [vmem:[%s241 + $0x60] sm:$0xff] %vm242, 0.0
      %257 = vst.msk [vmem:[%s241 + $0x68] sm:$0x3] %vm244, 0.0
      %258 = vst.msk [vmem:[%s241 + $0x70] sm:$0xff] %vm242, 0.0
      %259 = vst.msk [vmem:[%s241 + $0x78] sm:$0x3] %vm244, 0.0
      %260 = vst.msk [vmem:[%s241 + $0x80] sm:$0xff] %vm242, 0.0
      %261 = vst.msk [vmem:[%s241 + $0x88] sm:$0x3] %vm244, 0.0
      %262 = vst.msk [vmem:[%s241 + $0x90] sm:$0xff] %vm242, 0.0
      %263 = vst.msk [vmem:[%s241 + $0x98] sm:$0x3] %vm244, 0.0
      %p264 = scmp.ge.s32.totalorder %s19, 1
      %p265 = scmp.le.s32.totalorder %s19, 4
      %p266 = pnand %p264, %p265
      %p267 = pneg %p266
      // Predicated region
      $region33: #{transformer3d_forward.9} parent=31 // pred_check
        _
      $region34: #{transformer3d_forward.9} parent=31 // pred_check_branch
        %269 = sbr.rel (%p266) target = $region36
      $region35: #{transformer3d_forward.9} parent=31 // pred_region
        %v270 = vld [vmem:[%s227] sm:$0xff]
        %v271 = vld [vmem:[%s227 + $0x8] sm:$0xff]
        %v272 = vld [vmem:[%s227 + $0x10] sm:$0xff]
        %v273 = vld [vmem:[%s227 + $0x18] sm:$0xff]
        %v274 = vld [vmem:[%s227 + $0x20] sm:$0xff]
        %v275 = vld [vmem:[%s227 + $0x28] sm:$0xff]
        %v276 = vld [vmem:[%s227 + $0x30] sm:$0xff]
        %v277 = vld [vmem:[%s227 + $0x38] sm:$0xff]
        %v278 = vld [vmem:[%s1] sm:$0x1]
        %v280 = vlaneseq
        %v281 = vshrl.u32 %v280, 7
        %v282 = vsub.s32 0, %v281
        %v283 = vrot.slane %v278, %v282
        %v285 = vmul.f32 %v270, %v283
        %v286 = vmul.f32 %v271, %v283
        %v287 = vmul.f32 %v272, %v283
        %v288 = vmul.f32 %v273, %v283
        %v289 = vmul.f32 %v274, %v283
        %v290 = vmul.f32 %v275, %v283
        %v291 = vmul.f32 %v276, %v283
        %v292 = vmul.f32 %v277, %v283
        %v293 = vld [vmem:[%s2] sm:$0x1]
        %v295 = vlaneseq
        %v296 = vshrl.u32 %v295, 7
        %v297 = vsub.s32 0, %v296
        %v298 = vrot.slane %v293, %v297
        %v300 = vadd.f32 %v285, %v298
        %v301 = vadd.f32 %v286, %v298
        %v302 = vadd.f32 %v287, %v298
        %v303 = vadd.f32 %v288, %v298
        %v304 = vadd.f32 %v289, %v298
        %v305 = vadd.f32 %v290, %v298
        %v306 = vadd.f32 %v291, %v298
        %v307 = vadd.f32 %v292, %v298
        %v308 = vmax.f32 %v300, 0.0
        %v309 = vmax.f32 %v301, 0.0
        %v310 = vmax.f32 %v302, 0.0
        %v311 = vmax.f32 %v303, 0.0
        %v312 = vmax.f32 %v304, 0.0
        %v313 = vmax.f32 %v305, 0.0
        %v314 = vmax.f32 %v306, 0.0
        %v315 = vmax.f32 %v307, 0.0
        %s316 = scalar_lea.vmem %s241, 16
        %317 = vst.msk [vmem:[%s316 + $0x1] sm:$0xff] %vm242, %v308
        %318 = vst.msk [vmem:[%s316 + $0x11] sm:$0xff] %vm242, %v309
        %319 = vst.msk [vmem:[%s316 + $0x21] sm:$0xff] %vm242, %v310
        %320 = vst.msk [vmem:[%s316 + $0x31] sm:$0xff] %vm242, %v311
        %321 = vst.msk [vmem:[%s316 + $0x41] sm:$0xff] %vm242, %v312
        %322 = vst.msk [vmem:[%s316 + $0x51] sm:$0xff] %vm242, %v313
        %323 = vst.msk [vmem:[%s316 + $0x61] sm:$0xff] %vm242, %v314
        %324 = vst.msk [vmem:[%s316 + $0x71] sm:$0xff] %vm242, %v315
      $region36: #{transformer3d_forward.9} parent=31 // pred_fallthru
        _
      %p325 = scmp.lt.s32.totalorder %s18, 1
      %s326 = scalar_select %p325, %s18, 1
      %p327 = scmp.lt.s32.totalorder %s19, 5
      %s328 = scalar_select %p327, %s19, 5
      %s329 = smul.addr %s328, 20
      %s330 = smul.addr %s326, 120
      %s331 = sadd.s32 %s329, %s330
      %s332 = smul.addr %s331, 8
      %s333 = scalar_lea.vmem %s3, %s332
      // Predicated region
      $region37: #{transformer3d_forward.9} parent=31 // pred_check
        %p334 = pneg %p126
      $region38: #{transformer3d_forward.9} parent=31 // pred_check_branch
        %336 = sbr.rel (%p334) target = $region40
      $region39: #{transformer3d_forward.9} parent=31 // pred_region
        _
      $region40: #{transformer3d_forward.9} parent=31 // pred_fallthru
        _
    $region32: #{transformer3d_forward.9} parent=5 // pred_fallthru
      _
    %p337 = scmp.le.s32.totalorder 2, %s9
    // Predicated region
    $region41: #{transformer3d_forward.9} parent=5 // pred_check
      %p338 = pneg %p337
    $region42: #{transformer3d_forward.9} parent=5 // pred_check_branch
      %340 = sbr.rel (%p338) target = $region44
    $region43: #{transformer3d_forward.9} parent=5 // pred_region
      %s341 = ssub.s32 %s9, 2
      // Predicated region
      $region45: #{transformer3d_forward.9} parent=43 // pred_check
        %p342 = pneg %p132
      $region46: #{transformer3d_forward.9} parent=43 // pred_check_branch
        %344 = sbr.rel (%p342) target = $region48
      $region47: #{transformer3d_forward.9} parent=43 // pred_region
        %p345 = scmp.lt.s32.totalorder %s20, 1
        %s346 = scalar_select %p345, %s20, 1
        %p347 = scmp.lt.s32.totalorder %s21, 5
        %s348 = scalar_select %p347, %s21, 5
        %s349 = smul.addr %s348, 20
        %s350 = smul.addr %s346, 120
        %s351 = sadd.s32 %s349, %s350
        %s352 = smul.addr %s351, 8
        %s353 = scalar_lea.vmem %s3, %s352
      $region48: #{transformer3d_forward.9} parent=43 // pred_fallthru
        _
    $region44: #{transformer3d_forward.9} parent=5 // pred_fallthru
      _
  $region6: #{transformer3d_forward.9} parent=0 // loop_footer
    %s13 = sadd.s32 1, %s9
  $region7: #{transformer3d_forward.9} parent=0 // loop_footer_branch
    %8 = sbr.rel target = $region3
  $region8: #{transformer3d_forward.9} parent=0 // loop_exit
    _

// kernel: transformer3d_forward.6
$region0: #{transformer3d_forward.6}
  #allocation0 [shape = 'u32[]', space=smem, size = 0x4, offset = 0x4, fixed_abs, tag = 'smem constant byte address 0x4 - core index']
  #allocation1 [shape = 'u32[144,128]{1,0:T(1,128)}', space=vmem, size = 0x12000, scoped, tag = 'internal scratch']
  #allocation2 [shape = 'bf16[64,27]{1,0:T(16,128)(2,1)}', space=vmem, size = 0x4000, scoped, tag = 'scratch operand']
  %s0 = inlined_call_operand.vmem [shape: f32[2,6,10,10,1], index: 0, kind: input, shape index: {}]
  %s1 = inlined_call_operand.hbm [shape: bf16[27,32], index: 1, kind: input, shape index: {}]
  %s2 = inlined_call_operand.hbm [shape: f32[1,32], index: 2, kind: input, shape index: {}]
  %s3 = inlined_call_operand.vmem [shape: f32[2,4,8,8,32], index: 3, kind: output, shape index: {0}]
  %s4 = inlined_call_operand.vmem [shape: f32[2,4,1,32], index: 4, kind: output, shape index: {1}]
  %s5 = inlined_call_operand.vmem [shape: f32[2,4,1,32], index: 5, kind: output, shape index: {2}]
  %6 = xla_tuple %s3, %s4, %s5
  %s7 = sld [smem:[#allocation0]]
  $region69: #{transformer3d_forward.6} parent=0
    _
  %s9 = ssub.s32 1, %s7
  %s10 = scalar_select 0, %s9, %s7
  $region1: #{transformer3d_forward.6} parent=0
    #allocation3 [shape = 'u8[8192]{0}', space=vmem, size = 0x2000, scoped, tag = 'input window, operand 1, single buffered']
    #allocation4 [shape = 's32[2]{0}', space=sflag, size = 0x8, scoped, tag = 'scoped memory for transformer3d_forward.6']
    #allocation5 [shape = 'u8[512]{0}', space=vmem, size = 0x400, scoped, tag = 'input window, operand 2, single buffered']
    #allocation6 [shape = 's32[1]{0}', space=sflag, size = 0x4, scoped, tag = 'scoped memory for transformer3d_forward.6']
    %11 = vsyncpa [#allocation4], 0
    %12 = vsyncpa [#allocation6], 0
    loop: start=0, step=1, limit=10
    $region2: #{transformer3d_forward.6} parent=1 // loop_pre_header
      _
    $region3: #{transformer3d_forward.6} parent=1 // loop_header
      %s14 = sphi 0, %s18
      %p15 = scmp.ge.s32.totalorder %s14, 10
      %s21 = sphi 0, %s33
      %s22 = sphi 0, %s29
      %s23 = sphi 0, %s21
      %s24 = sphi 0, %s22
      %s25 = sphi 0, %s23
      %s26 = sphi 0, %s24
      %s36 = sphi 0, %s38
      %s39 = sphi 0, %s36
      %s40 = sphi 0, %s39
      %s56 = sphi 0, %s40
      %s60 = sphi 0, %s60
      %s62 = sphi 0, %s60
      %s63 = sphi 0, %s62
      %s77 = sphi 0, %s63
      %s81 = sphi 0, %s81
      %s83 = sphi 0, %s81
      %s84 = sphi 0, %s83
      %s98 = sphi 0, %s84
      %s106 = sphi 0, %s108
      %s109 = sphi 0, %s106
      %s110 = sphi 0, %s109
      %s126 = sphi 0, %s110
      %s134 = sphi 0, %s136
      %s137 = sphi 0, %s134
      %s138 = sphi 0, %s137
      %s154 = sphi 0, %s138
      %s162 = sphi 0, %s164
      %s165 = sphi 0, %s162
      %s166 = sphi 0, %s165
      %s182 = sphi 0, %s166
    $region4: #{transformer3d_forward.6} parent=1 // loop_header_branch
      %17 = sbr.rel (%p15) target = $region8
    $region5: #{transformer3d_forward.6} parent=1 // loop_body
      %s19 = ssub.s32 %s14, 1
      %s20 = ssub.s32 %s14, 2
      %s27 = sadd.s32 1, %s22
      %p28 = scmp.ge.s32.totalorder %s27, 4
      %s29 = scalar_select %p28, 0, %s27
      %s30 = sadd.s32 1, %s21
      %s31 = scalar_select %p28, %s30, %s21
      %p32 = scmp.ge.s32.totalorder %s31, 2
      %s33 = scalar_select %p32, 0, %s31
      %s34 = ssub.s32 %s21, %s33
      %p35 = scmp.eq.s32.totalorder %s34, 0
      %s37 = sadd.s32 %s36, 1
      %s38 = scalar_select %p35, %s36, %s37
      %p41 = pneg %p35
      %p42 = scmp.eq.s32.totalorder %s14, 7
      %p43 = por %p41, %p42
      %p44 = scmp.ne.s32.totalorder %s36, %s39
      %p45 = scmp.eq.s32.totalorder %s14, 0
      %p46 = por %p44, %p45
      %p47 = scmp.ne.s32.totalorder %s36, %s39
      %p48 = scmp.eq.s32.totalorder %s19, 7
      %p49 = por %p47, %p48
      %p50 = scmp.ne.s32.totalorder %s39, %s40
      %p51 = scmp.eq.s32.totalorder %s19, 0
      %p52 = por %p50, %p51
      %p53 = scmp.ne.s32.totalorder %s39, %s40
      %p54 = scmp.eq.s32.totalorder %s20, 7
      %p55 = por %p53, %p54
      %p57 = scmp.ne.s32.totalorder %s40, %s56
      %p58 = scmp.eq.s32.totalorder %s20, 0
      %p59 = por %p57, %p58
      %s61 = sadd.s32 %s60, 1
      %p64 = scmp.eq.s32.totalorder %s14, 7
      %p65 = scmp.ne.s32.totalorder %s60, %s62
      %p66 = scmp.eq.s32.totalorder %s14, 0
      %p67 = por %p65, %p66
      %p68 = scmp.ne.s32.totalorder %s60, %s62
      %p69 = scmp.eq.s32.totalorder %s19, 7
      %p70 = por %p68, %p69
      %p71 = scmp.ne.s32.totalorder %s62, %s63
      %p72 = scmp.eq.s32.totalorder %s19, 0
      %p73 = por %p71, %p72
      %p74 = scmp.ne.s32.totalorder %s62, %s63
      %p75 = scmp.eq.s32.totalorder %s20, 7
      %p76 = por %p74, %p75
      %p78 = scmp.ne.s32.totalorder %s63, %s77
      %p79 = scmp.eq.s32.totalorder %s20, 0
      %p80 = por %p78, %p79
      %s82 = sadd.s32 %s81, 1
      %p85 = scmp.eq.s32.totalorder %s14, 7
      %p86 = scmp.ne.s32.totalorder %s81, %s83
      %p87 = scmp.eq.s32.totalorder %s14, 0
      %p88 = por %p86, %p87
      %p89 = scmp.ne.s32.totalorder %s81, %s83
      %p90 = scmp.eq.s32.totalorder %s19, 7
      %p91 = por %p89, %p90
      %p92 = scmp.ne.s32.totalorder %s83, %s84
      %p93 = scmp.eq.s32.totalorder %s19, 0
      %p94 = por %p92, %p93
      %p95 = scmp.ne.s32.totalorder %s83, %s84
      %p96 = scmp.eq.s32.totalorder %s20, 7
      %p97 = por %p95, %p96
      %p99 = scmp.ne.s32.totalorder %s84, %s98
      %p100 = scmp.eq.s32.totalorder %s20, 0
      %p101 = por %p99, %p100
      %s102 = ssub.s32 %s21, %s33
      %s103 = ssub.s32 %s22, %s29
      %s104 = sor.u32 %s102, %s103
      %p105 = scmp.eq.s32.totalorder %s104, 0
      %s107 = sadd.s32 %s106, 1
      %s108 = scalar_select %p105, %s106, %s107
      %p111 = pneg %p105
      %p112 = scmp.eq.s32.totalorder %s14, 7
      %p113 = por %p111, %p112
      %p114 = scmp.ne.s32.totalorder %s106, %s109
      %p115 = scmp.eq.s32.totalorder %s14, 0
      %p116 = por %p114, %p115
      %p117 = scmp.ne.s32.totalorder %s106, %s109
      %p118 = scmp.eq.s32.totalorder %s19, 7
      %p119 = por %p117, %p118
      %p120 = scmp.ne.s32.totalorder %s109, %s110
      %p121 = scmp.eq.s32.totalorder %s19, 0
      %p122 = por %p120, %p121
      %p123 = scmp.ne.s32.totalorder %s109, %s110
      %p124 = scmp.eq.s32.totalorder %s20, 7
      %p125 = por %p123, %p124
      %p127 = scmp.ne.s32.totalorder %s110, %s126
      %p128 = scmp.eq.s32.totalorder %s20, 0
      %p129 = por %p127, %p128
      %s130 = ssub.s32 %s21, %s33
      %s131 = ssub.s32 %s22, %s29
      %s132 = sor.u32 %s130, %s131
      %p133 = scmp.eq.s32.totalorder %s132, 0
      %s135 = sadd.s32 %s134, 1
      %s136 = scalar_select %p133, %s134, %s135
      %p139 = pneg %p133
      %p140 = scmp.eq.s32.totalorder %s14, 7
      %p141 = por %p139, %p140
      %p142 = scmp.ne.s32.totalorder %s134, %s137
      %p143 = scmp.eq.s32.totalorder %s14, 0
      %p144 = por %p142, %p143
      %p145 = scmp.ne.s32.totalorder %s134, %s137
      %p146 = scmp.eq.s32.totalorder %s19, 7
      %p147 = por %p145, %p146
      %p148 = scmp.ne.s32.totalorder %s137, %s138
      %p149 = scmp.eq.s32.totalorder %s19, 0
      %p150 = por %p148, %p149
      %p151 = scmp.ne.s32.totalorder %s137, %s138
      %p152 = scmp.eq.s32.totalorder %s20, 7
      %p153 = por %p151, %p152
      %p155 = scmp.ne.s32.totalorder %s138, %s154
      %p156 = scmp.eq.s32.totalorder %s20, 0
      %p157 = por %p155, %p156
      %s158 = ssub.s32 %s21, %s33
      %s159 = ssub.s32 %s22, %s29
      %s160 = sor.u32 %s158, %s159
      %p161 = scmp.eq.s32.totalorder %s160, 0
      %s163 = sadd.s32 %s162, 1
      %s164 = scalar_select %p161, %s162, %s163
      %p167 = pneg %p161
      %p168 = scmp.eq.s32.totalorder %s14, 7
      %p169 = por %p167, %p168
      %p170 = scmp.ne.s32.totalorder %s162, %s165
      %p171 = scmp.eq.s32.totalorder %s14, 0
      %p172 = por %p170, %p171
      %p173 = scmp.ne.s32.totalorder %s162, %s165
      %p174 = scmp.eq.s32.totalorder %s19, 7
      %p175 = por %p173, %p174
      %p176 = scmp.ne.s32.totalorder %s165, %s166
      %p177 = scmp.eq.s32.totalorder %s19, 0
      %p178 = por %p176, %p177
      %p179 = scmp.ne.s32.totalorder %s165, %s166
      %p180 = scmp.eq.s32.totalorder %s20, 7
      %p181 = por %p179, %p180
      %p183 = scmp.ne.s32.totalorder %s166, %s182
      %p184 = scmp.eq.s32.totalorder %s20, 0
      %p185 = por %p183, %p184
      %p186 = scmp.le.s32.totalorder 1, %s14
      %p187 = scmp.lt.s32.totalorder %s14, 9
      %p188 = pnand %p186, %p187
      %p189 = pneg %p188
      // Predicated region
      $region9: #{transformer3d_forward.6} parent=5 // pred_check
        _
      $region10: #{transformer3d_forward.6} parent=5 // pred_check_branch
        %191 = sbr.rel (%p188) target = $region12
      $region11: #{transformer3d_forward.6} parent=5 // pred_region
        %s192 = ssub.s32 %s14, 1
        // Predicated region
        $region13: #{transformer3d_forward.6} parent=11 // pred_check
          %p193 = pneg %p73
        $region14: #{transformer3d_forward.6} parent=11 // pred_check_branch
          %195 = sbr.rel (%p193) target = $region16
        $region15: #{transformer3d_forward.6} parent=11 // pred_region
          %s197 = ssub.s32 256, 256
          %198 = vsyncadd [#allocation4], %s197
          %s199 = sshll.u32 [#allocation3], 4
          %s200 = int_to_ptr.vmem [resolvable:$true] %s199
          %205 = dma.hbm_to_vmem [thread:$0]  %s1, 256, %s200, [#allocation4], 64, 64, 4
        $region16: #{transformer3d_forward.6} parent=11 // pred_fallthru
          _
        // Predicated region
        $region17: #{transformer3d_forward.6} parent=11 // pred_check
          %p206 = pneg %p94
        $region18: #{transformer3d_forward.6} parent=11 // pred_check_branch
          %208 = sbr.rel (%p206) target = $region20
        $region19: #{transformer3d_forward.6} parent=11 // pred_region
          %s210 = ssub.s32 16, 16
          %211 = vsyncadd [#allocation6], %s210
          %s213 = sshll.u32 [#allocation5], 4
          %s214 = int_to_ptr.vmem [resolvable:$true] %s213
          %216 = dma.hbm_to_vmem [thread:$0]  %s2, 16, %s214, [#allocation6]
        $region20: #{transformer3d_forward.6} parent=11 // pred_fallthru
          _
      $region12: #{transformer3d_forward.6} parent=5 // pred_fallthru
        _
      %p217 = scmp.lt.s32.totalorder %s14, 8
      // Predicated region
      $region21: #{transformer3d_forward.6} parent=5 // pred_check
        %p218 = pneg %p217
      $region22: #{transformer3d_forward.6} parent=5 // pred_check_branch
        %220 = sbr.rel (%p218) target = $region24
      $region23: #{transformer3d_forward.6} parent=5 // pred_region
        // Predicated region
        $region25: #{transformer3d_forward.6} parent=23 // pred_check
          %p221 = pneg %p46
        $region26: #{transformer3d_forward.6} parent=23 // pred_check_branch
          %223 = sbr.rel (%p221) target = $region28
        $region27: #{transformer3d_forward.6} parent=23 // pred_region
          %p224 = scmp.lt.s32.totalorder %s21, 1
          %s225 = scalar_select %p224, %s21, 1
          %s226 = smul.addr %s225, 120
          %s227 = smul.addr %s226, 8
          %s228 = scalar_lea.vmem %s0, %s227
        $region28: #{transformer3d_forward.6} parent=23 // pred_fallthru
          _
      $region24: #{transformer3d_forward.6} parent=5 // pred_fallthru
        _
      %p229 = scmp.le.s32.totalorder 1, %s14
      %p230 = scmp.lt.s32.totalorder %s14, 9
      %p231 = pnand %p229, %p230
      %p232 = pneg %p231
      // Predicated region
      $region29: #{transformer3d_forward.6} parent=5 // pred_check
        _
      $region30: #{transformer3d_forward.6} parent=5 // pred_check_branch
        %234 = sbr.rel (%p231) target = $region32
      $region31: #{transformer3d_forward.6} parent=5 // pred_region
        %s235 = ssub.s32 %s14, 1
        // Predicated region
        $region33: #{transformer3d_forward.6} parent=31 // pred_check
          %p236 = pneg %p73
        $region34: #{transformer3d_forward.6} parent=31 // pred_check_branch
          %238 = sbr.rel (%p236) target = $region36
        $region35: #{transformer3d_forward.6} parent=31 // pred_region
          %239 = dma.done [#allocation4], 256
        $region36: #{transformer3d_forward.6} parent=31 // pred_fallthru
          _
        // Predicated region
        $region37: #{transformer3d_forward.6} parent=31 // pred_check
          %p240 = pneg %p94
        $region38: #{transformer3d_forward.6} parent=31 // pred_check_branch
          %242 = sbr.rel (%p240) target = $region40
        $region39: #{transformer3d_forward.6} parent=31 // pred_region
          %243 = dma.done [#allocation6], 16
        $region40: #{transformer3d_forward.6} parent=31 // pred_fallthru
          _
        %p244 = scmp.lt.s32.totalorder %s23, 1
        %s245 = scalar_select %p244, %s23, 1
        %s246 = smul.addr %s245, 120
        %s247 = smul.addr %s246, 8
        %s248 = scalar_lea.vmem %s0, %s247
        %p249 = pneg %p52
        %p250 = pneg %p49
        %p251 = pneg %p73
        %p252 = pneg %p70
        %p253 = pneg %p94
        %p254 = pneg %p91
        %p255 = pneg %p122
        %p256 = pneg %p119
        %p257 = scmp.lt.s32.totalorder %s23, 1
        %s258 = scalar_select %p257, %s23, 1
        %p259 = scmp.lt.s32.totalorder %s24, 3
        %s260 = scalar_select %p259, %s24, 3
        %s261 = smul.addr %s260, 8
        %s262 = smul.addr %s258, 32
        %s263 = sadd.s32 %s261, %s262
        %s264 = smul.addr %s263, 8
        %s265 = scalar_lea.vmem %s3, %s264
        %p266 = pneg %p150
        %p267 = pneg %p147
        %p268 = scmp.lt.s32.totalorder %s23, 1
        %s269 = scalar_select %p268, %s23, 1
        %p270 = scmp.lt.s32.totalorder %s24, 3
        %s271 = scalar_select %p270, %s24, 3
        %s272 = smul.addr %s269, 4
        %s273 = sadd.s32 %s271, %s272
        %s274 = scalar_lea.vmem %s4, %s273
        %p275 = pneg %p178
        %p276 = pneg %p175
        %p277 = scmp.lt.s32.totalorder %s23, 1
        %s278 = scalar_select %p277, %s23, 1
        %p279 = scmp.lt.s32.totalorder %s24, 3
        %s280 = scalar_select %p279, %s24, 3
        %s281 = smul.addr %s278, 4
        %s282 = sadd.s32 %s280, %s281
        %s283 = scalar_lea.vmem %s5, %s282
        %p284 = scmp.lt.s32.totalorder %s23, 1
        %s285 = scalar_select %p284, %s23, 1
        %s286 = smul.addr %s285, 120
        %s287 = smul.addr %s286, 8
        %s288 = scalar_lea.vmem %s0, %s287
        %p289 = scmp.lt.s32.totalorder %s23, 1
        %s290 = scalar_select %p289, %s23, 1
        %p291 = scmp.lt.s32.totalorder %s24, 3
        %s292 = scalar_select %p291, %s24, 3
        %s293 = smul.addr %s292, 8
        %s294 = smul.addr %s290, 32
        %s295 = sadd.s32 %s293, %s294
        %s296 = smul.addr %s295, 8
        %s297 = scalar_lea.vmem %s3, %s296
        %p298 = scmp.lt.s32.totalorder %s23, 1
        %s299 = scalar_select %p298, %s23, 1
        %p300 = scmp.lt.s32.totalorder %s24, 3
        %s301 = scalar_select %p300, %s24, 3
        %s302 = smul.addr %s299, 4
        %s303 = sadd.s32 %s301, %s302
        %s304 = scalar_lea.vmem %s4, %s303
        %p305 = scmp.lt.s32.totalorder %s23, 1
        %s306 = scalar_select %p305, %s23, 1
        %p307 = scmp.lt.s32.totalorder %s24, 3
        %s308 = scalar_select %p307, %s24, 3
        %s309 = smul.addr %s306, 4
        %s310 = sadd.s32 %s308, %s309
        %s311 = scalar_lea.vmem %s5, %s310
        %s313 = smul.u32 %s24, 160
        %s314 = scalar_lea.vmem %s288, %s313
        %v315 = vld [vmem:[%s314] sm:$0xff]
        %v316 = vld [vmem:[%s314 + $0x8] sm:$0x3]
        %v317 = vld [vmem:[%s314 + $0x10] sm:$0xff]
        %v318 = vld [vmem:[%s314 + $0x18] sm:$0x3]
        %v319 = vld [vmem:[%s314 + $0x20] sm:$0xff]
        %v320 = vld [vmem:[%s314 + $0x28] sm:$0x3]
        %v321 = vld [vmem:[%s314 + $0x30] sm:$0xff]
        %v322 = vld [vmem:[%s314 + $0x38] sm:$0x3]
        %v323 = vld [vmem:[%s314 + $0x40] sm:$0xff]
        %v324 = vld [vmem:[%s314 + $0x48] sm:$0x3]
        %v325 = vld [vmem:[%s314 + $0x50] sm:$0xff]
        %v326 = vld [vmem:[%s314 + $0x58] sm:$0x3]
        %v327 = vld [vmem:[%s314 + $0x60] sm:$0xff]
        %v328 = vld [vmem:[%s314 + $0x68] sm:$0x3]
        %v329 = vld [vmem:[%s314 + $0x70] sm:$0xff]
        %v330 = vld [vmem:[%s314 + $0x78] sm:$0x3]
        %v331 = vld [vmem:[%s314 + $0x80] sm:$0xff]
        %v332 = vld [vmem:[%s314 + $0x88] sm:$0x3]
        %v333 = vld [vmem:[%s314 + $0x90] sm:$0xff]
        %v334 = vld [vmem:[%s314 + $0x98] sm:$0x3]
        %v335 = vpack.c.bf16 %v317, %v315
        %v336 = vpack.c.bf16 %v321, %v319
        %v337 = vpack.c.bf16 %v325, %v323
        %v338 = vpack.c.bf16 %v329, %v327
        %vm339 = vcmask 7168
        %340 = vst.msk [vmem:[#allocation2] sm:$0xff] %vm339, %v335
        %341 = vst.msk [vmem:[#allocation2 + $0x8] sm:$0xff] %vm339, %v336
        %342 = vst.msk [vmem:[#allocation2 + $0x10] sm:$0xff] %vm339, %v337
        %343 = vst.msk [vmem:[#allocation2 + $0x18] sm:$0xff] %vm339, %v338
        %vm360 = vcmask 1046528
        %v361 = vrot.slane %v315, 1
        %v362 = vrot.slane %v316, 1
        %v363 = vsel %vm360, %v361, %v362
        %v364 = vrot.slane %v317, 1
        %v365 = vrot.slane %v318, 1
        %v366 = vsel %vm360, %v364, %v365
        %v367 = vrot.slane %v319, 1
        %v368 = vrot.slane %v320, 1
        %v369 = vsel %vm360, %v367, %v368
        %v370 = vrot.slane %v321, 1
        %v371 = vrot.slane %v322, 1
        %v372 = vsel %vm360, %v370, %v371
        %v373 = vrot.slane %v323, 1
        %v374 = vrot.slane %v324, 1
        %v375 = vsel %vm360, %v373, %v374
        %v376 = vrot.slane %v325, 1
        %v377 = vrot.slane %v326, 1
        %v378 = vsel %vm360, %v376, %v377
        %v379 = vrot.slane %v327, 1
        %v380 = vrot.slane %v328, 1
        %v381 = vsel %vm360, %v379, %v380
        %v382 = vrot.slane %v329, 1
        %v383 = vrot.slane %v330, 1
        %v384 = vsel %vm360, %v382, %v383
        %v393 = vpack.c.bf16 %v366, %v363
        %v394 = vpack.c.bf16 %v372, %v369
        %v395 = vpack.c.bf16 %v378, %v375
        %v396 = vpack.c.bf16 %v384, %v381
        %401 = vrot.lane.b32.xlu0 %v393, 1
        %v402 = vpop.permute.xlu0 %401
        %403 = vrot.lane.b32.xlu0 %v394, 1
        %v404 = vpop.permute.xlu0 %403
        %405 = vrot.lane.b32.xlu0 %v395, 1
        %v406 = vpop.permute.xlu0 %405
        %407 = vrot.lane.b32.xlu0 %v396, 1
        %v408 = vpop.permute.xlu0 %407
        %vm413 = vcmask 15368
        %414 = vst.msk [vmem:[#allocation2] sm:$0xff] %vm413, %v402
        %415 = vst.msk [vmem:[#allocation2 + $0x8] sm:$0xff] %vm413, %v404
        %416 = vst.msk [vmem:[#allocation2 + $0x10] sm:$0xff] %vm413, %v406
        %417 = vst.msk [vmem:[#allocation2 + $0x18] sm:$0xff] %vm413, %v408
        %vm418 = vcmask 1045504
        %v419 = vrot.slane %v315, 2
        %v420 = vrot.slane %v316, 2
        %v421 = vsel %vm418, %v419, %v420
        %v422 = vrot.slane %v317, 2
        %v423 = vrot.slane %v318, 2
        %v424 = vsel %vm418, %v422, %v423
        %v425 = vrot.slane %v319, 2
        %v426 = vrot.slane %v320, 2
        %v427 = vsel %vm418, %v425, %v426
        %v428 = vrot.slane %v321, 2
        %v429 = vrot.slane %v322, 2
        %v430 = vsel %vm418, %v428, %v429
        %v431 = vrot.slane %v323, 2
        %v432 = vrot.slane %v324, 2
        %v433 = vsel %vm418, %v431, %v432
        %v434 = vrot.slane %v325, 2
        %v435 = vrot.slane %v326, 2
        %v436 = vsel %vm418, %v434, %v435
        %v437 = vrot.slane %v327, 2
        %v438 = vrot.slane %v328, 2
        %v439 = vsel %vm418, %v437, %v438
        %v440 = vrot.slane %v329, 2
        %v441 = vrot.slane %v330, 2
        %v442 = vsel %vm418, %v440, %v441
        %v451 = vpack.c.bf16 %v424, %v421
        %v452 = vpack.c.bf16 %v430, %v427
        %v453 = vpack.c.bf16 %v436, %v433
        %v454 = vpack.c.bf16 %v442, %v439
        %459 = vrot.lane.b32.xlu0 %v451, 2
        %v460 = vpop.permute.xlu0 %459
        %461 = vrot.lane.b32.xlu0 %v452, 2
        %v462 = vpop.permute.xlu0 %461
        %463 = vrot.lane.b32.xlu0 %v453, 2
        %v464 = vpop.permute.xlu0 %463
        %465 = vrot.lane.b32.xlu0 %v454, 2
        %v466 = vpop.permute.xlu0 %465
        %vm471 = vcmask 23568
        %472 = vst.msk [vmem:[#allocation2] sm:$0xff] %vm471, %v460
        %473 = vst.msk [vmem:[#allocation2 + $0x8] sm:$0xff] %vm471, %v462
        %474 = vst.msk [vmem:[#allocation2 + $0x10] sm:$0xff] %vm471, %v464
        %475 = vst.msk [vmem:[#allocation2 + $0x18] sm:$0xff] %vm471, %v466
        %v476 = vpack.c.bf16 %v319, %v317
        %v477 = vpack.c.bf16 %v323, %v321
        %v478 = vpack.c.bf16 %v327, %v325
        %v479 = vpack.c.bf16 %v331, %v329
        %484 = vrot.lane.b32.xlu0 %v476, 3
        %v485 = vpop.permute.xlu0 %484
        %486 = vrot.lane.b32.xlu0 %v477, 3
        %v487 = vpop.permute.xlu0 %486
        %488 = vrot.lane.b32.xlu0 %v478, 3
        %v489 = vpop.permute.xlu0 %488
        %490 = vrot.lane.b32.xlu0 %v479, 3
        %v491 = vpop.permute.xlu0 %490
        %vm496 = vcmask 31768
        %497 = vst.msk [vmem:[#allocation2] sm:$0xff] %vm496, %v485
        %498 = vst.msk [vmem:[#allocation2 + $0x8] sm:$0xff] %vm496, %v487
        %499 = vst.msk [vmem:[#allocation2 + $0x10] sm:$0xff] %vm496, %v489
        %500 = vst.msk [vmem:[#allocation2 + $0x18] sm:$0xff] %vm496, %v491
        %v503 = vrot.slane %v331, 1
        %v504 = vrot.slane %v332, 1
        %v505 = vsel %vm360, %v503, %v504
        %v507 = vpack.c.bf16 %v369, %v366
        %v508 = vpack.c.bf16 %v375, %v372
        %v509 = vpack.c.bf16 %v381, %v378
        %v510 = vpack.c.bf16 %v505, %v384
        %515 = vrot.lane.b32.xlu0 %v507, 4
        %v516 = vpop.permute.xlu0 %515
        %517 = vrot.lane.b32.xlu0 %v508, 4
        %v518 = vpop.permute.xlu0 %517
        %519 = vrot.lane.b32.xlu0 %v509, 4
        %v520 = vpop.permute.xlu0 %519
        %521 = vrot.lane.b32.xlu0 %v510, 4
        %v522 = vpop.permute.xlu0 %521
        %vm527 = vcmask 39968
        %528 = vst.msk [vmem:[#allocation2] sm:$0xff] %vm527, %v516
        %529 = vst.msk [vmem:[#allocation2 + $0x8] sm:$0xff] %vm527, %v518
        %530 = vst.msk [vmem:[#allocation2 + $0x10] sm:$0xff] %vm527, %v520
        %531 = vst.msk [vmem:[#allocation2 + $0x18] sm:$0xff] %vm527, %v522
        %v532 = vrot.slane %v331, 2
        %v533 = vrot.slane %v332, 2
        %v534 = vsel %vm418, %v532, %v533
        %v536 = vpack.c.bf16 %v427, %v424
        %v537 = vpack.c.bf16 %v433, %v430
        %v538 = vpack.c.bf16 %v439, %v436
        %v539 = vpack.c.bf16 %v534, %v442
        %544 = vrot.lane.b32.xlu0 %v536, 5
        %v545 = vpop.permute.xlu0 %544
        %546 = vrot.lane.b32.xlu0 %v537, 5
        %v547 = vpop.permute.xlu0 %546
        %548 = vrot.lane.b32.xlu0 %v538, 5
        %v549 = vpop.permute.xlu0 %548
        %550 = vrot.lane.b32.xlu0 %v539, 5
        %v551 = vpop.permute.xlu0 %550
        %vm556 = vcmask 48168
        %557 = vst.msk [vmem:[#allocation2] sm:$0xff] %vm556, %v545
        %558 = vst.msk [vmem:[#allocation2 + $0x8] sm:$0xff] %vm556, %v547
        %559 = vst.msk [vmem:[#allocation2 + $0x10] sm:$0xff] %vm556, %v549
        %560 = vst.msk [vmem:[#allocation2 + $0x18] sm:$0xff] %vm556, %v551
        %v561 = vpack.c.bf16 %v333, %v331
        %566 = vrot.lane.b32.xlu0 %v336, 6
        %v567 = vpop.permute.xlu0 %566
        %568 = vrot.lane.b32.xlu0 %v337, 6
        %v569 = vpop.permute.xlu0 %568
        %570 = vrot.lane.b32.xlu0 %v338, 6
        %v571 = vpop.permute.xlu0 %570
        %572 = vrot.lane.b32.xlu0 %v561, 6
        %v573 = vpop.permute.xlu0 %572
        %vm578 = vcmask 56368
        %579 = vst.msk [vmem:[#allocation2] sm:$0xff] %vm578, %v567
        %580 = vst.msk [vmem:[#allocation2 + $0x8] sm:$0xff] %vm578, %v569
        %581 = vst.msk [vmem:[#allocation2 + $0x10] sm:$0xff] %vm578, %v571
        %582 = vst.msk [vmem:[#allocation2 + $0x18] sm:$0xff] %vm578, %v573
        %v585 = vrot.slane %v333, 1
        %v586 = vrot.slane %v334, 1
        %v587 = vsel %vm360, %v585, %v586
        %v589 = vpack.c.bf16 %v587, %v505
        %591 = vrot.lane.b32.xlu0 %v394, 7
        %v592 = vpop.permute.xlu0 %591
        %593 = vrot.lane.b32.xlu0 %v395, 7
        %v594 = vpop.permute.xlu0 %593
        %595 = vrot.lane.b32.xlu0 %v396, 7
        %v596 = vpop.permute.xlu0 %595
        %597 = vrot.lane.b32.xlu0 %v589, 7
        %v598 = vpop.permute.xlu0 %597
        %vm603 = vcmask 64568
        %604 = vst.msk [vmem:[#allocation2] sm:$0xff] %vm603, %v592
        %605 = vst.msk [vmem:[#allocation2 + $0x8] sm:$0xff] %vm603, %v594
        %606 = vst.msk [vmem:[#allocation2 + $0x10] sm:$0xff] %vm603, %v596
        %607 = vst.msk [vmem:[#allocation2 + $0x18] sm:$0xff] %vm603, %v598
        %v608 = vrot.slane %v333, 2
        %v609 = vrot.slane %v334, 2
        %v610 = vsel %vm418, %v608, %v609
        %v612 = vpack.c.bf16 %v610, %v534
        %614 = vrot.lane.b32.xlu0 %v452, 8
        %v615 = vpop.permute.xlu0 %614
        %616 = vrot.lane.b32.xlu0 %v453, 8
        %v617 = vpop.permute.xlu0 %616
        %618 = vrot.lane.b32.xlu0 %v454, 8
        %v619 = vpop.permute.xlu0 %618
        %620 = vrot.lane.b32.xlu0 %v612, 8
        %v621 = vpop.permute.xlu0 %620
        %vm626 = vcmask 72768
        %627 = vst.msk [vmem:[#allocation2] sm:$0xff] %vm626, %v615
        %628 = vst.msk [vmem:[#allocation2 + $0x8] sm:$0xff] %vm626, %v617
        %629 = vst.msk [vmem:[#allocation2 + $0x10] sm:$0xff] %vm626, %v619
        %630 = vst.msk [vmem:[#allocation2 + $0x18] sm:$0xff] %vm626, %v621
        %s631 = sadd.s32 %s24, 1
        %s632 = smul.u32 %s631, 160
        %s633 = scalar_lea.vmem %s288, %s632
        %v634 = vld [vmem:[%s633] sm:$0xff]
        %v635 = vld [vmem:[%s633 + $0x8] sm:$0x3]
        %v636 = vld [vmem:[%s633 + $0x10] sm:$0xff]
        %v637 = vld [vmem:[%s633 + $0x18] sm:$0x3]
        %v638 = vld [vmem:[%s633 + $0x20] sm:$0xff]
        %v639 = vld [vmem:[%s633 + $0x28] sm:$0x3]
        %v640 = vld [vmem:[%s633 + $0x30] sm:$0xff]
        %v641 = vld [vmem:[%s633 + $0x38] sm:$0x3]
        %v642 = vld [vmem:[%s633 + $0x40] sm:$0xff]
        %v643 = vld [vmem:[%s633 + $0x48] sm:$0x3]
        %v644 = vld [vmem:[%s633 + $0x50] sm:$0xff]
        %v645 = vld [vmem:[%s633 + $0x58] sm:$0x3]
        %v646 = vld [vmem:[%s633 + $0x60] sm:$0xff]
        %v647 = vld [vmem:[%s633 + $0x68] sm:$0x3]
        %v648 = vld [vmem:[%s633 + $0x70] sm:$0xff]
        %v649 = vld [vmem:[%s633 + $0x78] sm:$0x3]
        %v650 = vld [vmem:[%s633 + $0x80] sm:$0xff]
        %v651 = vld [vmem:[%s633 + $0x88] sm:$0x3]
        %v652 = vld [vmem:[%s633 + $0x90] sm:$0xff]
        %v653 = vld [vmem:[%s633 + $0x98] sm:$0x3]
        %v654 = vpack.c.bf16 %v636, %v634
        %v655 = vpack.c.bf16 %v640, %v638
        %v656 = vpack.c.bf16 %v644, %v642
        %v657 = vpack.c.bf16 %v648, %v646
        %662 = vrot.lane.b32.xlu0 %v654, 9
        %v663 = vpop.permute.xlu0 %662
        %664 = vrot.lane.b32.xlu0 %v655, 9
        %v665 = vpop.permute.xlu0 %664
        %666 = vrot.lane.b32.xlu0 %v656, 9
        %v667 = vpop.permute.xlu0 %666
        %668 = vrot.lane.b32.xlu0 %v657, 9
        %v669 = vpop.permute.xlu0 %668
        %vm674 = vcmask 80968
        %675 = vst.msk [vmem:[#allocation2] sm:$0xff] %vm674, %v663
        %676 = vst.msk [vmem:[#allocation2 + $0x8] sm:$0xff] %vm674, %v665
        %677 = vst.msk [vmem:[#allocation2 + $0x10] sm:$0xff] %vm674, %v667
        %678 = vst.msk [vmem:[#allocation2 + $0x18] sm:$0xff] %vm674, %v669
        %v695 = vrot.slane %v634, 1
        %v696 = vrot.slane %v635, 1
        %v697 = vsel %vm360, %v695, %v696
        %v698 = vrot.slane %v636, 1
        %v699 = vrot.slane %v637, 1
        %v700 = vsel %vm360, %v698, %v699
        %v701 = vrot.slane %v638, 1
        %v702 = vrot.slane %v639, 1
        %v703 = vsel %vm360, %v701, %v702
        %v704 = vrot.slane %v640, 1
        %v705 = vrot.slane %v641, 1
        %v706 = vsel %vm360, %v704, %v705
        %v707 = vrot.slane %v642, 1
        %v708 = vrot.slane %v643, 1
        %v709 = vsel %vm360, %v707, %v708
        %v710 = vrot.slane %v644, 1
        %v711 = vrot.slane %v645, 1
        %v712 = vsel %vm360, %v710, %v711
        %v713 = vrot.slane %v646, 1
        %v714 = vrot.slane %v647, 1
        %v715 = vsel %vm360, %v713, %v714
        %v716 = vrot.slane %v648, 1
        %v717 = vrot.slane %v649, 1
        %v718 = vsel %vm360, %v716, %v717
        %v727 = vpack.c.bf16 %v700, %v697
        %v728 = vpack.c.bf16 %v706, %v703
        %v729 = vpack.c.bf16 %v712, %v709
        %v730 = vpack.c.bf16 %v718, %v715
        %735 = vrot.lane.b32.xlu0 %v727, 10
        %v736 = vpop.permute.xlu0 %735
        %737 = vrot.lane.b32.xlu0 %v728, 10
        %v738 = vpop.permute.xlu0 %737
        %739 = vrot.lane.b32.xlu0 %v729, 10
        %v740 = vpop.permute.xlu0 %739
        %741 = vrot.lane.b32.xlu0 %v730, 10
        %v742 = vpop.permute.xlu0 %741
        %vm747 = vcmask 89168
        %748 = vst.msk [vmem:[#allocation2] sm:$0xff] %vm747, %v736
        %749 = vst.msk [vmem:[#allocation2 + $0x8] sm:$0xff] %vm747, %v738
        %750 = vst.msk [vmem:[#allocation2 + $0x10] sm:$0xff] %vm747, %v740
        %751 = vst.msk [vmem:[#allocation2 + $0x18] sm:$0xff] %vm747, %v742
        %v752 = vrot.slane %v634, 2
        %v753 = vrot.slane %v635, 2
        %v754 = vsel %vm418, %v752, %v753
        %v755 = vrot.slane %v636, 2
        %v756 = vrot.slane %v637, 2
        %v757 = vsel %vm418, %v755, %v756
        %v758 = vrot.slane %v638, 2
        %v759 = vrot.slane %v639, 2
        %v760 = vsel %vm418, %v758, %v759
        %v761 = vrot.slane %v640, 2
        %v762 = vrot.slane %v641, 2
        %v763 = vsel %vm418, %v761, %v762
        %v764 = vrot.slane %v642, 2
        %v765 = vrot.slane %v643, 2
        %v766 = vsel %vm418, %v764, %v765
        %v767 = vrot.slane %v644, 2
        %v768 = vrot.slane %v645, 2
        %v769 = vsel %vm418, %v767, %v768
        %v770 = vrot.slane %v646, 2
        %v771 = vrot.slane %v647, 2
        %v772 = vsel %vm418, %v770, %v771
        %v773 = vrot.slane %v648, 2
        %v774 = vrot.slane %v649, 2
        %v775 = vsel %vm418, %v773, %v774
        %v784 = vpack.c.bf16 %v757, %v754
        %v785 = vpack.c.bf16 %v763, %v760
        %v786 = vpack.c.bf16 %v769, %v766
        %v787 = vpack.c.bf16 %v775, %v772
        %792 = vrot.lane.b32.xlu0 %v784, 11
        %v793 = vpop.permute.xlu0 %792
        %794 = vrot.lane.b32.xlu0 %v785, 11
        %v795 = vpop.permute.xlu0 %794
        %796 = vrot.lane.b32.xlu0 %v786, 11
        %v797 = vpop.permute.xlu0 %796
        %798 = vrot.lane.b32.xlu0 %v787, 11
        %v799 = vpop.permute.xlu0 %798
        %vm804 = vcmask 97368
        %805 = vst.msk [vmem:[#allocation2] sm:$0xff] %vm804, %v793
        %806 = vst.msk [vmem:[#allocation2 + $0x8] sm:$0xff] %vm804, %v795
        %807 = vst.msk [vmem:[#allocation2 + $0x10] sm:$0xff] %vm804, %v797
        %808 = vst.msk [vmem:[#allocation2 + $0x18] sm:$0xff] %vm804, %v799
        %v809 = vpack.c.bf16 %v638, %v636
        %v810 = vpack.c.bf16 %v642, %v640
        %v811 = vpack.c.bf16 %v646, %v644
        %v812 = vpack.c.bf16 %v650, %v648
        %817 = vrot.lane.b32.xlu0 %v809, 12
        %v818 = vpop.permute.xlu0 %817
        %819 = vrot.lane.b32.xlu0 %v810, 12
        %v820 = vpop.permute.xlu0 %819
        %821 = vrot.lane.b32.xlu0 %v811, 12
        %v822 = vpop.permute.xlu0 %821
        %823 = vrot.lane.b32.xlu0 %v812, 12
        %v824 = vpop.permute.xlu0 %823
        %vm829 = vcmask 105568
        %830 = vst.msk [vmem:[#allocation2] sm:$0xff] %vm829, %v818
        %831 = vst.msk [vmem:[#allocation2 + $0x8] sm:$0xff] %vm829, %v820
        %832 = vst.msk [vmem:[#allocation2 + $0x10] sm:$0xff] %vm829, %v822
        %833 = vst.msk [vmem:[#allocation2 + $0x18] sm:$0xff] %vm829, %v824
        %v836 = vrot.slane %v650, 1
        %v837 = vrot.slane %v651, 1
        %v838 = vsel %vm360, %v836, %v837
        %v840 = vpack.c.bf16 %v703, %v700
        %v841 = vpack.c.bf16 %v709, %v706
        %v842 = vpack.c.bf16 %v715, %v712
        %v843 = vpack.c.bf16 %v838, %v718
        %848 = vrot.lane.b32.xlu0 %v840, 13
        %v849 = vpop.permute.xlu0 %848
        %850 = vrot.lane.b32.xlu0 %v841, 13
        %v851 = vpop.permute.xlu0 %850
        %852 = vrot.lane.b32.xlu0 %v842, 13
        %v853 = vpop.permute.xlu0 %852
        %854 = vrot.lane.b32.xlu0 %v843, 13
        %v855 = vpop.permute.xlu0 %854
        %vm860 = vcmask 113768
        %861 = vst.msk [vmem:[#allocation2] sm:$0xff] %vm860, %v849
        %862 = vst.msk [vmem:[#allocation2 + $0x8] sm:$0xff] %vm860, %v851
        %863 = vst.msk [vmem:[#allocation2 + $0x10] sm:$0xff] %vm860, %v853
        %864 = vst.msk [vmem:[#allocation2 + $0x18] sm:$0xff] %vm860, %v855
        %v865 = vrot.slane %v650, 2
        %v866 = vrot.slane %v651, 2
        %v867 = vsel %vm418, %v865, %v866
        %v869 = vpack.c.bf16 %v760, %v757
        %v870 = vpack.c.bf16 %v766, %v763
        %v871 = vpack.c.bf16 %v772, %v769
        %v872 = vpack.c.bf16 %v867, %v775
        %877 = vrot.lane.b32.xlu0 %v869, 14
        %v878 = vpop.permute.xlu0 %877
        %879 = vrot.lane.b32.xlu0 %v870, 14
        %v880 = vpop.permute.xlu0 %879
        %881 = vrot.lane.b32.xlu0 %v871, 14
        %v882 = vpop.permute.xlu0 %881
        %883 = vrot.lane.b32.xlu0 %v872, 14
        %v884 = vpop.permute.xlu0 %883
        %vm889 = vcmask 121968
        %890 = vst.msk [vmem:[#allocation2] sm:$0xff] %vm889, %v878
        %891 = vst.msk [vmem:[#allocation2 + $0x8] sm:$0xff] %vm889, %v880
        %892 = vst.msk [vmem:[#allocation2 + $0x10] sm:$0xff] %vm889, %v882
        %893 = vst.msk [vmem:[#allocation2 + $0x18] sm:$0xff] %vm889, %v884
        %v894 = vpack.c.bf16 %v652, %v650
        %896 = vrot.lane.b32.xlu0 %v655, 15
        %v897 = vpop.permute.xlu0 %896
        %898 = vrot.lane.b32.xlu0 %v656, 15
        %v899 = vpop.permute.xlu0 %898
        %900 = vrot.lane.b32.xlu0 %v657, 15
        %v901 = vpop.permute.xlu0 %900
        %902 = vrot.lane.b32.xlu0 %v894, 15
        %v903 = vpop.permute.xlu0 %902
        %vm908 = vcmask 130168
        %909 = vst.msk [vmem:[#allocation2] sm:$0xff] %vm908, %v897
        %910 = vst.msk [vmem:[#allocation2 + $0x8] sm:$0xff] %vm908, %v899
        %911 = vst.msk [vmem:[#allocation2 + $0x10] sm:$0xff] %vm908, %v901
        %912 = vst.msk [vmem:[#allocation2 + $0x18] sm:$0xff] %vm908, %v903
        %v915 = vrot.slane %v652, 1
        %v916 = vrot.slane %v653, 1
        %v917 = vsel %vm360, %v915, %v916
        %v919 = vpack.c.bf16 %v917, %v838
        %921 = vrot.lane.b32.xlu0 %v728, 16
        %v922 = vpop.permute.xlu0 %921
        %923 = vrot.lane.b32.xlu0 %v729, 16
        %v924 = vpop.permute.xlu0 %923
        %925 = vrot.lane.b32.xlu0 %v730, 16
        %v926 = vpop.permute.xlu0 %925
        %927 = vrot.lane.b32.xlu0 %v919, 16
        %v928 = vpop.permute.xlu0 %927
        %vm933 = vcmask 138368
        %934 = vst.msk [vmem:[#allocation2] sm:$0xff] %vm933, %v922
        %935 = vst.msk [vmem:[#allocation2 + $0x8] sm:$0xff] %vm933, %v924
        %936 = vst.msk [vmem:[#allocation2 + $0x10] sm:$0xff] %vm933, %v926
        %937 = vst.msk [vmem:[#allocation2 + $0x18] sm:$0xff] %vm933, %v928
        %v938 = vrot.slane %v652, 2
        %v939 = vrot.slane %v653, 2
        %v940 = vsel %vm418, %v938, %v939
        %v942 = vpack.c.bf16 %v940, %v867
        %944 = vrot.lane.b32.xlu0 %v785, 17
        %v945 = vpop.permute.xlu0 %944
        %946 = vrot.lane.b32.xlu0 %v786, 17
        %v947 = vpop.permute.xlu0 %946
        %948 = vrot.lane.b32.xlu0 %v787, 17
        %v949 = vpop.permute.xlu0 %948
        %950 = vrot.lane.b32.xlu0 %v942, 17
        %v951 = vpop.permute.xlu0 %950
        %vm956 = vcmask 146568
        %957 = vst.msk [vmem:[#allocation2] sm:$0xff] %vm956, %v945
        %958 = vst.msk [vmem:[#allocation2 + $0x8] sm:$0xff] %vm956, %v947
        %959 = vst.msk [vmem:[#allocation2 + $0x10] sm:$0xff] %vm956, %v949
        %960 = vst.msk [vmem:[#allocation2 + $0x18] sm:$0xff] %vm956, %v951
        %s961 = sadd.s32 %s24, 2
        %s962 = smul.u32 %s961, 160
        %s963 = scalar_lea.vmem %s288, %s962
        %v964 = vld [vmem:[%s963] sm:$0xff]
        %v965 = vld [vmem:[%s963 + $0x8] sm:$0x3]
        %v966 = vld [vmem:[%s963 + $0x10] sm:$0xff]
        %v967 = vld [vmem:[%s963 + $0x18] sm:$0x3]
        %v968 = vld [vmem:[%s963 + $0x20] sm:$0xff]
        %v969 = vld [vmem:[%s963 + $0x28] sm:$0x3]
        %v970 = vld [vmem:[%s963 + $0x30] sm:$0xff]
        %v971 = vld [vmem:[%s963 + $0x38] sm:$0x3]
        %v972 = vld [vmem:[%s963 + $0x40] sm:$0xff]
        %v973 = vld [vmem:[%s963 + $0x48] sm:$0x3]
        %v974 = vld [vmem:[%s963 + $0x50] sm:$0xff]
        %v975 = vld [vmem:[%s963 + $0x58] sm:$0x3]
        %v976 = vld [vmem:[%s963 + $0x60] sm:$0xff]
        %v977 = vld [vmem:[%s963 + $0x68] sm:$0x3]
        %v978 = vld [vmem:[%s963 + $0x70] sm:$0xff]
        %v979 = vld [vmem:[%s963 + $0x78] sm:$0x3]
        %v980 = vld [vmem:[%s963 + $0x80] sm:$0xff]
        %v981 = vld [vmem:[%s963 + $0x88] sm:$0x3]
        %v982 = vld [vmem:[%s963 + $0x90] sm:$0xff]
        %v983 = vld [vmem:[%s963 + $0x98] sm:$0x3]
        %v984 = vpack.c.bf16 %v966, %v964
        %v985 = vpack.c.bf16 %v970, %v968
        %v986 = vpack.c.bf16 %v974, %v972
        %v987 = vpack.c.bf16 %v978, %v976
        %992 = vrot.lane.b32.xlu0 %v984, 18
        %v993 = vpop.permute.xlu0 %992
        %994 = vrot.lane.b32.xlu0 %v985, 18
        %v995 = vpop.permute.xlu0 %994
        %996 = vrot.lane.b32.xlu0 %v986, 18
        %v997 = vpop.permute.xlu0 %996
        %998 = vrot.lane.b32.xlu0 %v987, 18
        %v999 = vpop.permute.xlu0 %998
        %vm1004 = vcmask 154768
        %1005 = vst.msk [vmem:[#allocation2] sm:$0xff] %vm1004, %v993
        %1006 = vst.msk [vmem:[#allocation2 + $0x8] sm:$0xff] %vm1004, %v995
        %1007 = vst.msk [vmem:[#allocation2 + $0x10] sm:$0xff] %vm1004, %v997
        %1008 = vst.msk [vmem:[#allocation2 + $0x18] sm:$0xff] %vm1004, %v999
        %v1025 = vrot.slane %v964, 1
        %v1026 = vrot.slane %v965, 1
        %v1027 = vsel %vm360, %v1025, %v1026
        %v1028 = vrot.slane %v966, 1
        %v1029 = vrot.slane %v967, 1
        %v1030 = vsel %vm360, %v1028, %v1029
        %v1031 = vrot.slane %v968, 1
        %v1032 = vrot.slane %v969, 1
        %v1033 = vsel %vm360, %v1031, %v1032
        %v1034 = vrot.slane %v970, 1
        %v1035 = vrot.slane %v971, 1
        %v1036 = vsel %vm360, %v1034, %v1035
        %v1037 = vrot.slane %v972, 1
        %v1038 = vrot.slane %v973, 1
        %v1039 = vsel %vm360, %v1037, %v1038
        %v1040 = vrot.slane %v974, 1
        %v1041 = vrot.slane %v975, 1
        %v1042 = vsel %vm360, %v1040, %v1041
        %v1043 = vrot.slane %v976, 1
        %v1044 = vrot.slane %v977, 1
        %v1045 = vsel %vm360, %v1043, %v1044
        %v1046 = vrot.slane %v978, 1
        %v1047 = vrot.slane %v979, 1
        %v1048 = vsel %vm360, %v1046, %v1047
        %v1057 = vpack.c.bf16 %v1030, %v1027
        %v1058 = vpack.c.bf16 %v1036, %v1033
        %v1059 = vpack.c.bf16 %v1042, %v1039
        %v1060 = vpack.c.bf16 %v1048, %v1045
        %1065 = vrot.lane.b32.xlu0 %v1057, 19
        %v1066 = vpop.permute.xlu0 %1065
        %1067 = vrot.lane.b32.xlu0 %v1058, 19
        %v1068 = vpop.permute.xlu0 %1067
        %1069 = vrot.lane.b32.xlu0 %v1059, 19
        %v1070 = vpop.permute.xlu0 %1069
        %1071 = vrot.lane.b32.xlu0 %v1060, 19
        %v1072 = vpop.permute.xlu0 %1071
        %vm1077 = vcmask 162968
        %1078 = vst.msk [vmem:[#allocation2] sm:$0xff] %vm1077, %v1066
        %1079 = vst.msk [vmem:[#allocation2 + $0x8] sm:$0xff] %vm1077, %v1068
        %1080 = vst.msk [vmem:[#allocation2 + $0x10] sm:$0xff] %vm1077, %v1070
        %1081 = vst.msk [vmem:[#allocation2 + $0x18] sm:$0xff] %vm1077, %v1072
        %v1082 = vrot.slane %v964, 2
        %v1083 = vrot.slane %v965, 2
        %v1084 = vsel %vm418, %v1082, %v1083
        %v1085 = vrot.slane %v966, 2
        %v1086 = vrot.slane %v967, 2
        %v1087 = vsel %vm418, %v1085, %v1086
        %v1088 = vrot.slane %v968, 2
        %v1089 = vrot.slane %v969, 2
        %v1090 = vsel %vm418, %v1088, %v1089
        %v1091 = vrot.slane %v970, 2
        %v1092 = vrot.slane %v971, 2
        %v1093 = vsel %vm418, %v1091, %v1092
        %v1094 = vrot.slane %v972, 2
        %v1095 = vrot.slane %v973, 2
        %v1096 = vsel %vm418, %v1094, %v1095
        %v1097 = vrot.slane %v974, 2
        %v1098 = vrot.slane %v975, 2
        %v1099 = vsel %vm418, %v1097, %v1098
        %v1100 = vrot.slane %v976, 2
        %v1101 = vrot.slane %v977, 2
        %v1102 = vsel %vm418, %v1100, %v1101
        %v1103 = vrot.slane %v978, 2
        %v1104 = vrot.slane %v979, 2
        %v1105 = vsel %vm418, %v1103, %v1104
        %v1114 = vpack.c.bf16 %v1087, %v1084
        %v1115 = vpack.c.bf16 %v1093, %v1090
        %v1116 = vpack.c.bf16 %v1099, %v1096
        %v1117 = vpack.c.bf16 %v1105, %v1102
        %1122 = vrot.lane.b32.xlu0 %v1114, 20
        %v1123 = vpop.permute.xlu0 %1122
        %1124 = vrot.lane.b32.xlu0 %v1115, 20
        %v1125 = vpop.permute.xlu0 %1124
        %1126 = vrot.lane.b32.xlu0 %v1116, 20
        %v1127 = vpop.permute.xlu0 %1126
        %1128 = vrot.lane.b32.xlu0 %v1117, 20
        %v1129 = vpop.permute.xlu0 %1128
        %vm1134 = vcmask 171168
        %1135 = vst.msk [vmem:[#allocation2] sm:$0xff] %vm1134, %v1123
        %1136 = vst.msk [vmem:[#allocation2 + $0x8] sm:$0xff] %vm1134, %v1125
        %1137 = vst.msk [vmem:[#allocation2 + $0x10] sm:$0xff] %vm1134, %v1127
        %1138 = vst.msk [vmem:[#allocation2 + $0x18] sm:$0xff] %vm1134, %v1129
        %v1139 = vpack.c.bf16 %v968, %v966
        %v1140 = vpack.c.bf16 %v972, %v970
        %v1141 = vpack.c.bf16 %v976, %v974
        %v1142 = vpack.c.bf16 %v980, %v978
        %1147 = vrot.lane.b32.xlu0 %v1139, 21
        %v1148 = vpop.permute.xlu0 %1147
        %1149 = vrot.lane.b32.xlu0 %v1140, 21
        %v1150 = vpop.permute.xlu0 %1149
        %1151 = vrot.lane.b32.xlu0 %v1141, 21
        %v1152 = vpop.permute.xlu0 %1151
        %1153 = vrot.lane.b32.xlu0 %v1142, 21
        %v1154 = vpop.permute.xlu0 %1153
        %vm1159 = vcmask 179368
        %1160 = vst.msk [vmem:[#allocation2] sm:$0xff] %vm1159, %v1148
        %1161 = vst.msk [vmem:[#allocation2 + $0x8] sm:$0xff] %vm1159, %v1150
        %1162 = vst.msk [vmem:[#allocation2 + $0x10] sm:$0xff] %vm1159, %v1152
        %1163 = vst.msk [vmem:[#allocation2 + $0x18] sm:$0xff] %vm1159, %v1154
        %v1166 = vrot.slane %v980, 1
        %v1167 = vrot.slane %v981, 1
        %v1168 = vsel %vm360, %v1166, %v1167
        %v1170 = vpack.c.bf16 %v1033, %v1030
        %v1171 = vpack.c.bf16 %v1039, %v1036
        %v1172 = vpack.c.bf16 %v1045, %v1042
        %v1173 = vpack.c.bf16 %v1168, %v1048
        %1178 = vrot.lane.b32.xlu0 %v1170, 22
        %v1179 = vpop.permute.xlu0 %1178
        %1180 = vrot.lane.b32.xlu0 %v1171, 22
        %v1181 = vpop.permute.xlu0 %1180
        %1182 = vrot.lane.b32.xlu0 %v1172, 22
        %v1183 = vpop.permute.xlu0 %1182
        %1184 = vrot.lane.b32.xlu0 %v1173, 22
        %v1185 = vpop.permute.xlu0 %1184
        %vm1190 = vcmask 187568
        %1191 = vst.msk [vmem:[#allocation2] sm:$0xff] %vm1190, %v1179
        %1192 = vst.msk [vmem:[#allocation2 + $0x8] sm:$0xff] %vm1190, %v1181
        %1193 = vst.msk [vmem:[#allocation2 + $0x10] sm:$0xff] %vm1190, %v1183
        %1194 = vst.msk [vmem:[#allocation2 + $0x18] sm:$0xff] %vm1190, %v1185
        %v1195 = vrot.slane %v980, 2
        %v1196 = vrot.slane %v981, 2
        %v1197 = vsel %vm418, %v1195, %v1196
        %v1199 = vpack.c.bf16 %v1090, %v1087
        %v1200 = vpack.c.bf16 %v1096, %v1093
        %v1201 = vpack.c.bf16 %v1102, %v1099
        %v1202 = vpack.c.bf16 %v1197, %v1105
        %1207 = vrot.lane.b32.xlu0 %v1199, 23
        %v1208 = vpop.permute.xlu0 %1207
        %1209 = vrot.lane.b32.xlu0 %v1200, 23
        %v1210 = vpop.permute.xlu0 %1209
        %1211 = vrot.lane.b32.xlu0 %v1201, 23
        %v1212 = vpop.permute.xlu0 %1211
        %1213 = vrot.lane.b32.xlu0 %v1202, 23
        %v1214 = vpop.permute.xlu0 %1213
        %vm1219 = vcmask 195768
        %1220 = vst.msk [vmem:[#allocation2] sm:$0xff] %vm1219, %v1208
        %1221 = vst.msk [vmem:[#allocation2 + $0x8] sm:$0xff] %vm1219, %v1210
        %1222 = vst.msk [vmem:[#allocation2 + $0x10] sm:$0xff] %vm1219, %v1212
        %1223 = vst.msk [vmem:[#allocation2 + $0x18] sm:$0xff] %vm1219, %v1214
        %v1224 = vpack.c.bf16 %v982, %v980
        %1226 = vrot.lane.b32.xlu0 %v985, 24
        %v1227 = vpop.permute.xlu0 %1226
        %1228 = vrot.lane.b32.xlu0 %v986, 24
        %v1229 = vpop.permute.xlu0 %1228
        %1230 = vrot.lane.b32.xlu0 %v987, 24
        %v1231 = vpop.permute.xlu0 %1230
        %1232 = vrot.lane.b32.xlu0 %v1224, 24
        %v1233 = vpop.permute.xlu0 %1232
        %vm1238 = vcmask 203968
        %1239 = vst.msk [vmem:[#allocation2] sm:$0xff] %vm1238, %v1227
        %1240 = vst.msk [vmem:[#allocation2 + $0x8] sm:$0xff] %vm1238, %v1229
        %1241 = vst.msk [vmem:[#allocation2 + $0x10] sm:$0xff] %vm1238, %v1231
        %1242 = vst.msk [vmem:[#allocation2 + $0x18] sm:$0xff] %vm1238, %v1233
        %v1245 = vrot.slane %v982, 1
        %v1246 = vrot.slane %v983, 1
        %v1247 = vsel %vm360, %v1245, %v1246
        %v1249 = vpack.c.bf16 %v1247, %v1168
        %1251 = vrot.lane.b32.xlu0 %v1058, 25
        %v1252 = vpop.permute.xlu0 %1251
        %1253 = vrot.lane.b32.xlu0 %v1059, 25
        %v1254 = vpop.permute.xlu0 %1253
        %1255 = vrot.lane.b32.xlu0 %v1060, 25
        %v1256 = vpop.permute.xlu0 %1255
        %1257 = vrot.lane.b32.xlu0 %v1249, 25
        %v1258 = vpop.permute.xlu0 %1257
        %vm1263 = vcmask 212168
        %1264 = vst.msk [vmem:[#allocation2] sm:$0xff] %vm1263, %v1252
        %1265 = vst.msk [vmem:[#allocation2 + $0x8] sm:$0xff] %vm1263, %v1254
        %1266 = vst.msk [vmem:[#allocation2 + $0x10] sm:$0xff] %vm1263, %v1256
        %1267 = vst.msk [vmem:[#allocation2 + $0x18] sm:$0xff] %vm1263, %v1258
        %v1268 = vrot.slane %v982, 2
        %v1269 = vrot.slane %v983, 2
        %v1270 = vsel %vm418, %v1268, %v1269
        %v1272 = vpack.c.bf16 %v1270, %v1197
        %1274 = vrot.lane.b32.xlu0 %v1115, 26
        %v1275 = vpop.permute.xlu0 %1274
        %1276 = vrot.lane.b32.xlu0 %v1116, 26
        %v1277 = vpop.permute.xlu0 %1276
        %1278 = vrot.lane.b32.xlu0 %v1117, 26
        %v1279 = vpop.permute.xlu0 %1278
        %1280 = vrot.lane.b32.xlu0 %v1272, 26
        %v1281 = vpop.permute.xlu0 %1280
        %vm1286 = vcmask 220368
        %1287 = vst.msk [vmem:[#allocation2] sm:$0xff] %vm1286, %v1275
        %1288 = vst.msk [vmem:[#allocation2 + $0x8] sm:$0xff] %vm1286, %v1277
        %1289 = vst.msk [vmem:[#allocation2 + $0x10] sm:$0xff] %vm1286, %v1279
        %1290 = vst.msk [vmem:[#allocation2 + $0x18] sm:$0xff] %vm1286, %v1281
        %v1291 = vld [vmem:[#allocation2] sm:$0xff]
        %v1292 = vld [vmem:[#allocation2 + $0x8] sm:$0xff]
        %v1293 = vld [vmem:[#allocation2 + $0x10] sm:$0xff]
        %v1294 = vld [vmem:[#allocation2 + $0x18] sm:$0xff]
        %v1295 = vld [vmem:[#allocation3] sm:$0xf]
        %v1296 = vld [vmem:[#allocation3 + $0x4] sm:$0xf]
        %v1297 = vld [vmem:[#allocation3 + $0x8] sm:$0xf]
        %v1298 = vld [vmem:[#allocation3 + $0xc] sm:$0x3]
        %v1299 = vld [vmem:[#allocation5] sm:$0x1]
        %v1301 = vlaneseq
        %v1302 = vshrl.u32 %v1301, 7
        %v1303 = vsub.s32 0, %v1302
        %v1304 = vrot.slane %v1299, %v1303
        %v1310 = vunpack.c.l.b16 %v1295
        %v1311 = vunpack.c.l.b16 %v1296
        %v1312 = vunpack.c.l.b16 %v1297
        %v1313 = vunpack.c.l.b16 %v1298
        %v1314 = vpack.c.b16 %v1311, %v1310
        %v1315 = vpack.c.b16 %v1313, %v1312
        %vm1317 = vcmask 220160
        %v1319 = vsel %vm1317, %v1291, 0
        %v1322 = vsel %vm1317, %v1292, 0
        %v1325 = vsel %vm1317, %v1293, 0
        %v1328 = vsel %vm1317, %v1294, 0
        %vm1330 = vcmask 1044480
        %v1331 = vsel %vm1330, 4294967295, 65535
        %v1332 = vsel %vm418, %v1331, 0
        %v1334 = vand.u32 %v1315, %v1332
        %1336 = vmatprep.subr.bf16.mxu0 0
        %1337 = vmatpush1.bf16.msra.mxu0 %v1314
        %1338 = vmatprep.subr.bf16.mxu0 0
        %1339 = vmatpush1.bf16.msra.mxu0 %v1334
        %1340 = vmatprep.subr.bf16.mxu0 0
        %1341 = vmatpush1.bf16.msra.mxu0 0
        %1342 = vmatprep.subr.bf16.mxu0 0
        %1343 = vmatpush1.bf16.msra.mxu0 0
        %1344 = vmatprep.subr.bf16.mxu0 0
        %1345 = vmatpush1.bf16.msra.mxu0 0
        %1346 = vmatprep.subr.bf16.mxu0 0
        %1347 = vmatpush1.bf16.msra.mxu0 0
        %1348 = vmatprep.subr.bf16.mxu0 0
        %1349 = vmatpush1.bf16.msra.mxu0 0
        %1350 = vmatprep.subr.bf16.mxu0 0
        %1351 = vmatpush1.bf16.msra.mxu0 0
        %1352 = vmatprep.subr.bf16.mxu0 0
        %1353 = vmatpush1.bf16.msra.mxu0 0
        %1354 = vmatprep.subr.bf16.mxu0 0
        %1355 = vmatpush1.bf16.msra.mxu0 0
        %1356 = vmatprep.subr.bf16.mxu0 0
        %1357 = vmatpush1.bf16.msra.mxu0 0
        %1358 = vmatprep.subr.bf16.mxu0 0
        %1359 = vmatpush1.bf16.msra.mxu0 0
        %1360 = vmatprep.subr.bf16.mxu0 0
        %1361 = vmatpush1.bf16.msra.mxu0 0
        %1362 = vmatprep.subr.bf16.mxu0 0
        %1363 = vmatpush1.bf16.msra.mxu0 0
        %1364 = vmatprep.subr.bf16.mxu0 0
        %1365 = vmatpush1.bf16.msra.mxu0 0
        %1366 = vmatprep.subr.bf16.mxu0 0
        %1367 = vmatpush1.bf16.msra.mxu0 0
        %1368 = vmatprep.mubr.bf16.mxu0 0
        %1369 = vmatmul.mubr.bf16.gmra.mrb[0].mxu0 %v1319
        %v1370 = vpop.f32.mrb[0].mxu0
        %v1371 = vadd.f32 %v1304, %v1370
        %v1372 = vpop.f32.mrb[0].mxu0
        %v1373 = vpop.f32.mrb[0].mxu0
        %v1374 = vadd.f32 %v1304, %v1373
        %v1375 = vpop.f32.mrb[0].mxu0
        %1376 = vmatprep.mubr.bf16.mxu0 0
        %1377 = vmatmul.mubr.bf16.gmra.mrb[0].mxu0 %v1322
        %v1378 = vpop.f32.mrb[0].mxu0
        %v1379 = vadd.f32 %v1304, %v1378
        %v1380 = vpop.f32.mrb[0].mxu0
        %v1381 = vpop.f32.mrb[0].mxu0
        %v1382 = vadd.f32 %v1304, %v1381
        %v1383 = vpop.f32.mrb[0].mxu0
        %1384 = vmatprep.mubr.bf16.mxu0 0
        %1385 = vmatmul.mubr.bf16.gmra.mrb[0].mxu0 %v1325
        %v1386 = vpop.f32.mrb[0].mxu0
        %v1387 = vadd.f32 %v1304, %v1386
        %v1388 = vpop.f32.mrb[0].mxu0
        %v1389 = vpop.f32.mrb[0].mxu0
        %v1390 = vadd.f32 %v1304, %v1389
        %v1391 = vpop.f32.mrb[0].mxu0
        %1392 = vmatprep.mubr.bf16.mxu0 0
        %1393 = vmatmul.mubr.bf16.gmra.mrb[0].mxu0 %v1328
        %v1394 = vpop.f32.mrb[0].mxu0
        %v1395 = vadd.f32 %v1304, %v1394
        %v1396 = vpop.f32.mrb[0].mxu0
        %v1397 = vpop.f32.mrb[0].mxu0
        %v1398 = vadd.f32 %v1304, %v1397
        %v1399 = vpop.f32.mrb[0].mxu0
        %1400 = vdwg.mxu0
        %vm1401 = vcmask 261120
        %1402 = vst.msk [vmem:[%s297] sm:$0xff] %vm1401, %v1371
        %1403 = vst.msk [vmem:[%s297 + $0x8] sm:$0xff] %vm1401, %v1374
        %1404 = vst.msk [vmem:[%s297 + $0x10] sm:$0xff] %vm1401, %v1379
        %1405 = vst.msk [vmem:[%s297 + $0x18] sm:$0xff] %vm1401, %v1382
        %1406 = vst.msk [vmem:[%s297 + $0x20] sm:$0xff] %vm1401, %v1387
        %1407 = vst.msk [vmem:[%s297 + $0x28] sm:$0xff] %vm1401, %v1390
        %1408 = vst.msk [vmem:[%s297 + $0x30] sm:$0xff] %vm1401, %v1395
        %1409 = vst.msk [vmem:[%s297 + $0x38] sm:$0xff] %vm1401, %v1398
        %v1410 = vsel %vm1401, %v1371, 0.0
        %v1411 = vsel %vm1401, %v1374, 0.0
        %v1412 = vadd.f32 %v1410, %v1411
        %v1413 = vsel %vm1401, %v1379, 0.0
        %v1414 = vadd.f32 %v1412, %v1413
        %v1415 = vsel %vm1401, %v1382, 0.0
        %v1416 = vadd.f32 %v1414, %v1415
        %v1417 = vsel %vm1401, %v1387, 0.0
        %v1418 = vadd.f32 %v1416, %v1417
        %v1419 = vsel %vm1401, %v1390, 0.0
        %v1420 = vadd.f32 %v1418, %v1419
        %v1421 = vsel %vm1401, %v1395, 0.0
        %v1422 = vadd.f32 %v1420, %v1421
        %v1423 = vsel %vm1401, %v1398, 0.0
        %v1424 = vadd.f32 %v1422, %v1423
        %v1425 = vrot.slane %v1424, 4
        %v1426 = vadd.f32 %v1424, %v1425
        %v1427 = vrot.slane %v1426, 2
        %v1428 = vadd.f32 %v1426, %v1427
        %v1429 = vrot.slane %v1428, 1
        %v1430 = vadd.f32 %v1428, %v1429
        %vm1431 = vcmask 253952
        %1432 = vst.msk [vmem:[%s304] sm:$0x1] %vm1431, %v1430
        %v1433 = vmul.f32 %v1371, %v1371
        %v1434 = vmul.f32 %v1374, %v1374
        %v1435 = vmul.f32 %v1379, %v1379
        %v1436 = vmul.f32 %v1382, %v1382
        %v1437 = vmul.f32 %v1387, %v1387
        %v1438 = vmul.f32 %v1390, %v1390
        %v1439 = vmul.f32 %v1395, %v1395
        %v1440 = vmul.f32 %v1398, %v1398
        %v1441 = vsel %vm1401, %v1433, 0.0
        %v1442 = vsel %vm1401, %v1434, 0.0
        %v1443 = vadd.f32 %v1441, %v1442
        %v1444 = vsel %vm1401, %v1435, 0.0
        %v1445 = vadd.f32 %v1443, %v1444
        %v1446 = vsel %vm1401, %v1436, 0.0
        %v1447 = vadd.f32 %v1445, %v1446
        %v1448 = vsel %vm1401, %v1437, 0.0
        %v1449 = vadd.f32 %v1447, %v1448
        %v1450 = vsel %vm1401, %v1438, 0.0
        %v1451 = vadd.f32 %v1449, %v1450
        %v1452 = vsel %vm1401, %v1439, 0.0
        %v1453 = vadd.f32 %v1451, %v1452
        %v1454 = vsel %vm1401, %v1440, 0.0
        %v1455 = vadd.f32 %v1453, %v1454
        %v1456 = vrot.slane %v1455, 4
        %v1457 = vadd.f32 %v1455, %v1456
        %v1458 = vrot.slane %v1457, 2
        %v1459 = vadd.f32 %v1457, %v1458
        %v1460 = vrot.slane %v1459, 1
        %v1461 = vadd.f32 %v1459, %v1460
        %1462 = vst.msk [vmem:[%s311] sm:$0x1] %vm1431, %v1461
        %p1463 = scmp.lt.s32.totalorder %s23, 1
        %s1464 = scalar_select %p1463, %s23, 1
        %p1465 = scmp.lt.s32.totalorder %s24, 3
        %s1466 = scalar_select %p1465, %s24, 3
        %s1467 = smul.addr %s1466, 8
        %s1468 = smul.addr %s1464, 32
        %s1469 = sadd.s32 %s1467, %s1468
        %s1470 = smul.addr %s1469, 8
        %s1471 = scalar_lea.vmem %s3, %s1470
        %p1472 = scmp.lt.s32.totalorder %s23, 1
        %s1473 = scalar_select %p1472, %s23, 1
        %p1474 = scmp.lt.s32.totalorder %s24, 3
        %s1475 = scalar_select %p1474, %s24, 3
        %s1476 = smul.addr %s1473, 4
        %s1477 = sadd.s32 %s1475, %s1476
        %s1478 = scalar_lea.vmem %s4, %s1477
        %p1479 = scmp.lt.s32.totalorder %s23, 1
        %s1480 = scalar_select %p1479, %s23, 1
        %p1481 = scmp.lt.s32.totalorder %s24, 3
        %s1482 = scalar_select %p1481, %s24, 3
        %s1483 = smul.addr %s1480, 4
        %s1484 = sadd.s32 %s1482, %s1483
        %s1485 = scalar_lea.vmem %s5, %s1484
        // Predicated region
        $region41: #{transformer3d_forward.6} parent=31 // pred_check
          %p1486 = pneg %p119
        $region42: #{transformer3d_forward.6} parent=31 // pred_check_branch
          %1488 = sbr.rel (%p1486) target = $region44
        $region43: #{transformer3d_forward.6} parent=31 // pred_region
          _
        $region44: #{transformer3d_forward.6} parent=31 // pred_fallthru
          _
        // Predicated region
        $region45: #{transformer3d_forward.6} parent=31 // pred_check
          %p1489 = pneg %p147
        $region46: #{transformer3d_forward.6} parent=31 // pred_check_branch
          %1491 = sbr.rel (%p1489) target = $region48
        $region47: #{transformer3d_forward.6} parent=31 // pred_region
          _
        $region48: #{transformer3d_forward.6} parent=31 // pred_fallthru
          _
        // Predicated region
        $region49: #{transformer3d_forward.6} parent=31 // pred_check
          %p1492 = pneg %p175
        $region50: #{transformer3d_forward.6} parent=31 // pred_check_branch
          %1494 = sbr.rel (%p1492) target = $region52
        $region51: #{transformer3d_forward.6} parent=31 // pred_region
          _
        $region52: #{transformer3d_forward.6} parent=31 // pred_fallthru
          _
      $region32: #{transformer3d_forward.6} parent=5 // pred_fallthru
        _
      %p1495 = scmp.le.s32.totalorder 2, %s14
      // Predicated region
      $region53: #{transformer3d_forward.6} parent=5 // pred_check
        %p1496 = pneg %p1495
      $region54: #{transformer3d_forward.6} parent=5 // pred_check_branch
        %1498 = sbr.rel (%p1496) target = $region56
      $region55: #{transformer3d_forward.6} parent=5 // pred_region
        %s1499 = ssub.s32 %s14, 2
        // Predicated region
        $region57: #{transformer3d_forward.6} parent=55 // pred_check
          %p1500 = pneg %p125
        $region58: #{transformer3d_forward.6} parent=55 // pred_check_branch
          %1502 = sbr.rel (%p1500) target = $region60
        $region59: #{transformer3d_forward.6} parent=55 // pred_region
          %p1503 = scmp.lt.s32.totalorder %s25, 1
          %s1504 = scalar_select %p1503, %s25, 1
          %p1505 = scmp.lt.s32.totalorder %s26, 3
          %s1506 = scalar_select %p1505, %s26, 3
          %s1507 = smul.addr %s1506, 8
          %s1508 = smul.addr %s1504, 32
          %s1509 = sadd.s32 %s1507, %s1508
          %s1510 = smul.addr %s1509, 8
          %s1511 = scalar_lea.vmem %s3, %s1510
        $region60: #{transformer3d_forward.6} parent=55 // pred_fallthru
          _
        // Predicated region
        $region61: #{transformer3d_forward.6} parent=55 // pred_check
          %p1512 = pneg %p153
        $region62: #{transformer3d_forward.6} parent=55 // pred_check_branch
          %1514 = sbr.rel (%p1512) target = $region64
        $region63: #{transformer3d_forward.6} parent=55 // pred_region
          %p1515 = scmp.lt.s32.totalorder %s25, 1
          %s1516 = scalar_select %p1515, %s25, 1
          %p1517 = scmp.lt.s32.totalorder %s26, 3
          %s1518 = scalar_select %p1517, %s26, 3
          %s1519 = smul.addr %s1516, 4
          %s1520 = sadd.s32 %s1518, %s1519
          %s1521 = scalar_lea.vmem %s4, %s1520
        $region64: #{transformer3d_forward.6} parent=55 // pred_fallthru
          _
        // Predicated region
        $region65: #{transformer3d_forward.6} parent=55 // pred_check
          %p1522 = pneg %p181
        $region66: #{transformer3d_forward.6} parent=55 // pred_check_branch
          %1524 = sbr.rel (%p1522) target = $region68
        $region67: #{transformer3d_forward.6} parent=55 // pred_region
          %p1525 = scmp.lt.s32.totalorder %s25, 1
          %s1526 = scalar_select %p1525, %s25, 1
          %p1527 = scmp.lt.s32.totalorder %s26, 3
          %s1528 = scalar_select %p1527, %s26, 3
          %s1529 = smul.addr %s1526, 4
          %s1530 = sadd.s32 %s1528, %s1529
          %s1531 = scalar_lea.vmem %s5, %s1530
        $region68: #{transformer3d_forward.6} parent=55 // pred_fallthru
          _
      $region56: #{transformer3d_forward.6} parent=5 // pred_fallthru
        _
    $region6: #{transformer3d_forward.6} parent=1 // loop_footer
      %s18 = sadd.s32 1, %s14
    $region7: #{transformer3d_forward.6} parent=1 // loop_footer_branch
      %13 = sbr.rel target = $region3
    $region8: #{transformer3d_forward.6} parent=1 // loop_exit
      _
    %1532 = vsyncpa [#allocation4], 1
    %s1533 = scalar_lea.sflag [#allocation4], 1
    %1534 = vsyncpa %s1533, 1
    %1535 = vsyncpa [#allocation6], 1

// kernel: transformer3d_forward.8
$region0: #{transformer3d_forward.8}
  #allocation0 [shape = 'u32[]', space=smem, size = 0x4, offset = 0x4, fixed_abs, tag = 'smem constant byte address 0x4 - core index']
  #allocation1 [shape = 'u32[144,128]{1,0:T(1,128)}', space=vmem, size = 0x12000, scoped, tag = 'internal scratch']
  #allocation2 [shape = 'bf16[64,864]{1,0:T(16,128)(2,1)}', space=vmem, size = 0x1c000, scoped, tag = 'scratch operand']
  %s0 = inlined_call_operand.vmem [shape: f32[2,6,10,10,32], index: 0, kind: input, shape index: {}]
  %s1 = inlined_call_operand.vmem [shape: bf16[864,64], index: 1, kind: input, shape index: {}]
  %s2 = inlined_call_operand.hbm [shape: f32[1,64], index: 2, kind: input, shape index: {}]
  %s3 = inlined_call_operand.vmem [shape: f32[2,4,8,8,64], index: 3, kind: output, shape index: {0}]
  %s4 = inlined_call_operand.vmem [shape: f32[2,4,1,64], index: 4, kind: output, shape index: {1}]
  %s5 = inlined_call_operand.vmem [shape: f32[2,4,1,64], index: 5, kind: output, shape index: {2}]
  %6 = xla_tuple %s3, %s4, %s5
  %s7 = sld [smem:[#allocation0]]
  $region65: #{transformer3d_forward.8} parent=0
    _
  %s9 = ssub.s32 1, %s7
  %s10 = scalar_select 0, %s9, %s7
  $region1: #{transformer3d_forward.8} parent=0
    #allocation3 [shape = 'u8[512]{0}', space=vmem, size = 0x400, scoped, tag = 'input window, operand 2, single buffered']
    #allocation4 [shape = 's32[2]{0}', space=sflag, size = 0x8, scoped, tag = 'scoped memory for transformer3d_forward.8']
    %11 = vsyncpa [#allocation4], 0
    loop: start=0, step=1, limit=10
    $region2: #{transformer3d_forward.8} parent=1 // loop_pre_header
      _
    $region3: #{transformer3d_forward.8} parent=1 // loop_header
      %s13 = sphi 0, %s17
      %p14 = scmp.ge.s32.totalorder %s13, 10
      %s20 = sphi 0, %s32
      %s21 = sphi 0, %s28
      %s22 = sphi 0, %s20
      %s23 = sphi 0, %s21
      %s24 = sphi 0, %s22
      %s25 = sphi 0, %s23
      %s35 = sphi 0, %s37
      %s38 = sphi 0, %s35
      %s39 = sphi 0, %s38
      %s55 = sphi 0, %s39
      %s59 = sphi 0, %s59
      %s61 = sphi 0, %s59
      %s62 = sphi 0, %s61
      %s76 = sphi 0, %s62
      %s80 = sphi 0, %s80
      %s82 = sphi 0, %s80
      %s83 = sphi 0, %s82
      %s97 = sphi 0, %s83
      %s105 = sphi 0, %s107
      %s108 = sphi 0, %s105
      %s109 = sphi 0, %s108
      %s125 = sphi 0, %s109
      %s133 = sphi 0, %s135
      %s136 = sphi 0, %s133
      %s137 = sphi 0, %s136
      %s153 = sphi 0, %s137
      %s161 = sphi 0, %s163
      %s164 = sphi 0, %s161
      %s165 = sphi 0, %s164
      %s181 = sphi 0, %s165
    $region4: #{transformer3d_forward.8} parent=1 // loop_header_branch
      %16 = sbr.rel (%p14) target = $region8
    $region5: #{transformer3d_forward.8} parent=1 // loop_body
      %s18 = ssub.s32 %s13, 1
      %s19 = ssub.s32 %s13, 2
      %s26 = sadd.s32 1, %s21
      %p27 = scmp.ge.s32.totalorder %s26, 4
      %s28 = scalar_select %p27, 0, %s26
      %s29 = sadd.s32 1, %s20
      %s30 = scalar_select %p27, %s29, %s20
      %p31 = scmp.ge.s32.totalorder %s30, 2
      %s32 = scalar_select %p31, 0, %s30
      %s33 = ssub.s32 %s20, %s32
      %p34 = scmp.eq.s32.totalorder %s33, 0
      %s36 = sadd.s32 %s35, 1
      %s37 = scalar_select %p34, %s35, %s36
      %p40 = pneg %p34
      %p41 = scmp.eq.s32.totalorder %s13, 7
      %p42 = por %p40, %p41
      %p43 = scmp.ne.s32.totalorder %s35, %s38
      %p44 = scmp.eq.s32.totalorder %s13, 0
      %p45 = por %p43, %p44
      %p46 = scmp.ne.s32.totalorder %s35, %s38
      %p47 = scmp.eq.s32.totalorder %s18, 7
      %p48 = por %p46, %p47
      %p49 = scmp.ne.s32.totalorder %s38, %s39
      %p50 = scmp.eq.s32.totalorder %s18, 0
      %p51 = por %p49, %p50
      %p52 = scmp.ne.s32.totalorder %s38, %s39
      %p53 = scmp.eq.s32.totalorder %s19, 7
      %p54 = por %p52, %p53
      %p56 = scmp.ne.s32.totalorder %s39, %s55
      %p57 = scmp.eq.s32.totalorder %s19, 0
      %p58 = por %p56, %p57
      %s60 = sadd.s32 %s59, 1
      %p63 = scmp.eq.s32.totalorder %s13, 7
      %p64 = scmp.ne.s32.totalorder %s59, %s61
      %p65 = scmp.eq.s32.totalorder %s13, 0
      %p66 = por %p64, %p65
      %p67 = scmp.ne.s32.totalorder %s59, %s61
      %p68 = scmp.eq.s32.totalorder %s18, 7
      %p69 = por %p67, %p68
      %p70 = scmp.ne.s32.totalorder %s61, %s62
      %p71 = scmp.eq.s32.totalorder %s18, 0
      %p72 = por %p70, %p71
      %p73 = scmp.ne.s32.totalorder %s61, %s62
      %p74 = scmp.eq.s32.totalorder %s19, 7
      %p75 = por %p73, %p74
      %p77 = scmp.ne.s32.totalorder %s62, %s76
      %p78 = scmp.eq.s32.totalorder %s19, 0
      %p79 = por %p77, %p78
      %s81 = sadd.s32 %s80, 1
      %p84 = scmp.eq.s32.totalorder %s13, 7
      %p85 = scmp.ne.s32.totalorder %s80, %s82
      %p86 = scmp.eq.s32.totalorder %s13, 0
      %p87 = por %p85, %p86
      %p88 = scmp.ne.s32.totalorder %s80, %s82
      %p89 = scmp.eq.s32.totalorder %s18, 7
      %p90 = por %p88, %p89
      %p91 = scmp.ne.s32.totalorder %s82, %s83
      %p92 = scmp.eq.s32.totalorder %s18, 0
      %p93 = por %p91, %p92
      %p94 = scmp.ne.s32.totalorder %s82, %s83
      %p95 = scmp.eq.s32.totalorder %s19, 7
      %p96 = por %p94, %p95
      %p98 = scmp.ne.s32.totalorder %s83, %s97
      %p99 = scmp.eq.s32.totalorder %s19, 0
      %p100 = por %p98, %p99
      %s101 = ssub.s32 %s20, %s32
      %s102 = ssub.s32 %s21, %s28
      %s103 = sor.u32 %s101, %s102
      %p104 = scmp.eq.s32.totalorder %s103, 0
      %s106 = sadd.s32 %s105, 1
      %s107 = scalar_select %p104, %s105, %s106
      %p110 = pneg %p104
      %p111 = scmp.eq.s32.totalorder %s13, 7
      %p112 = por %p110, %p111
      %p113 = scmp.ne.s32.totalorder %s105, %s108
      %p114 = scmp.eq.s32.totalorder %s13, 0
      %p115 = por %p113, %p114
      %p116 = scmp.ne.s32.totalorder %s105, %s108
      %p117 = scmp.eq.s32.totalorder %s18, 7
      %p118 = por %p116, %p117
      %p119 = scmp.ne.s32.totalorder %s108, %s109
      %p120 = scmp.eq.s32.totalorder %s18, 0
      %p121 = por %p119, %p120
      %p122 = scmp.ne.s32.totalorder %s108, %s109
      %p123 = scmp.eq.s32.totalorder %s19, 7
      %p124 = por %p122, %p123
      %p126 = scmp.ne.s32.totalorder %s109, %s125
      %p127 = scmp.eq.s32.totalorder %s19, 0
      %p128 = por %p126, %p127
      %s129 = ssub.s32 %s20, %s32
      %s130 = ssub.s32 %s21, %s28
      %s131 = sor.u32 %s129, %s130
      %p132 = scmp.eq.s32.totalorder %s131, 0
      %s134 = sadd.s32 %s133, 1
      %s135 = scalar_select %p132, %s133, %s134
      %p138 = pneg %p132
      %p139 = scmp.eq.s32.totalorder %s13, 7
      %p140 = por %p138, %p139
      %p141 = scmp.ne.s32.totalorder %s133, %s136
      %p142 = scmp.eq.s32.totalorder %s13, 0
      %p143 = por %p141, %p142
      %p144 = scmp.ne.s32.totalorder %s133, %s136
      %p145 = scmp.eq.s32.totalorder %s18, 7
      %p146 = por %p144, %p145
      %p147 = scmp.ne.s32.totalorder %s136, %s137
      %p148 = scmp.eq.s32.totalorder %s18, 0
      %p149 = por %p147, %p148
      %p150 = scmp.ne.s32.totalorder %s136, %s137
      %p151 = scmp.eq.s32.totalorder %s19, 7
      %p152 = por %p150, %p151
      %p154 = scmp.ne.s32.totalorder %s137, %s153
      %p155 = scmp.eq.s32.totalorder %s19, 0
      %p156 = por %p154, %p155
      %s157 = ssub.s32 %s20, %s32
      %s158 = ssub.s32 %s21, %s28
      %s159 = sor.u32 %s157, %s158
      %p160 = scmp.eq.s32.totalorder %s159, 0
      %s162 = sadd.s32 %s161, 1
      %s163 = scalar_select %p160, %s161, %s162
      %p166 = pneg %p160
      %p167 = scmp.eq.s32.totalorder %s13, 7
      %p168 = por %p166, %p167
      %p169 = scmp.ne.s32.totalorder %s161, %s164
      %p170 = scmp.eq.s32.totalorder %s13, 0
      %p171 = por %p169, %p170
      %p172 = scmp.ne.s32.totalorder %s161, %s164
      %p173 = scmp.eq.s32.totalorder %s18, 7
      %p174 = por %p172, %p173
      %p175 = scmp.ne.s32.totalorder %s164, %s165
      %p176 = scmp.eq.s32.totalorder %s18, 0
      %p177 = por %p175, %p176
      %p178 = scmp.ne.s32.totalorder %s164, %s165
      %p179 = scmp.eq.s32.totalorder %s19, 7
      %p180 = por %p178, %p179
      %p182 = scmp.ne.s32.totalorder %s165, %s181
      %p183 = scmp.eq.s32.totalorder %s19, 0
      %p184 = por %p182, %p183
      %p185 = scmp.le.s32.totalorder 1, %s13
      %p186 = scmp.lt.s32.totalorder %s13, 9
      %p187 = pnand %p185, %p186
      %p188 = pneg %p187
      // Predicated region
      $region9: #{transformer3d_forward.8} parent=5 // pred_check
        _
      $region10: #{transformer3d_forward.8} parent=5 // pred_check_branch
        %190 = sbr.rel (%p187) target = $region12
      $region11: #{transformer3d_forward.8} parent=5 // pred_region
        %s191 = ssub.s32 %s13, 1
        // Predicated region
        $region13: #{transformer3d_forward.8} parent=11 // pred_check
          %p192 = pneg %p72
        $region14: #{transformer3d_forward.8} parent=11 // pred_check_branch
          %194 = sbr.rel (%p192) target = $region16
        $region15: #{transformer3d_forward.8} parent=11 // pred_region
          _
        $region16: #{transformer3d_forward.8} parent=11 // pred_fallthru
          _
        // Predicated region
        $region17: #{transformer3d_forward.8} parent=11 // pred_check
          %p195 = pneg %p93
        $region18: #{transformer3d_forward.8} parent=11 // pred_check_branch
          %197 = sbr.rel (%p195) target = $region20
        $region19: #{transformer3d_forward.8} parent=11 // pred_region
          %s199 = ssub.s32 16, 16
          %200 = vsyncadd [#allocation4], %s199
          %s202 = sshll.u32 [#allocation3], 4
          %s203 = int_to_ptr.vmem [resolvable:$true] %s202
          %205 = dma.hbm_to_vmem [thread:$0]  %s2, 16, %s203, [#allocation4]
        $region20: #{transformer3d_forward.8} parent=11 // pred_fallthru
          _
      $region12: #{transformer3d_forward.8} parent=5 // pred_fallthru
        _
      %p206 = scmp.lt.s32.totalorder %s13, 8
      // Predicated region
      $region21: #{transformer3d_forward.8} parent=5 // pred_check
        %p207 = pneg %p206
      $region22: #{transformer3d_forward.8} parent=5 // pred_check_branch
        %209 = sbr.rel (%p207) target = $region24
      $region23: #{transformer3d_forward.8} parent=5 // pred_region
        // Predicated region
        $region25: #{transformer3d_forward.8} parent=23 // pred_check
          %p210 = pneg %p45
        $region26: #{transformer3d_forward.8} parent=23 // pred_check_branch
          %212 = sbr.rel (%p210) target = $region28
        $region27: #{transformer3d_forward.8} parent=23 // pred_region
          %p213 = scmp.lt.s32.totalorder %s20, 1
          %s214 = scalar_select %p213, %s20, 1
          %s215 = smul.addr %s214, 120
          %s216 = smul.addr %s215, 8
          %s217 = scalar_lea.vmem %s0, %s216
        $region28: #{transformer3d_forward.8} parent=23 // pred_fallthru
          _
      $region24: #{transformer3d_forward.8} parent=5 // pred_fallthru
        _
      %p218 = scmp.le.s32.totalorder 1, %s13
      %p219 = scmp.lt.s32.totalorder %s13, 9
      %p220 = pnand %p218, %p219
      %p221 = pneg %p220
      // Predicated region
      $region29: #{transformer3d_forward.8} parent=5 // pred_check
        _
      $region30: #{transformer3d_forward.8} parent=5 // pred_check_branch
        %223 = sbr.rel (%p220) target = $region32
      $region31: #{transformer3d_forward.8} parent=5 // pred_region
        %s224 = ssub.s32 %s13, 1
        // Predicated region
        $region33: #{transformer3d_forward.8} parent=31 // pred_check
          %p225 = pneg %p93
        $region34: #{transformer3d_forward.8} parent=31 // pred_check_branch
          %227 = sbr.rel (%p225) target = $region36
        $region35: #{transformer3d_forward.8} parent=31 // pred_region
          %228 = dma.done [#allocation4], 16
        $region36: #{transformer3d_forward.8} parent=31 // pred_fallthru
          _
        %p229 = scmp.lt.s32.totalorder %s22, 1
        %s230 = scalar_select %p229, %s22, 1
        %s231 = smul.addr %s230, 120
        %s232 = smul.addr %s231, 8
        %s233 = scalar_lea.vmem %s0, %s232
        %p234 = pneg %p51
        %p235 = pneg %p48
        %p236 = pneg %p72
        %p237 = pneg %p69
        %p238 = pneg %p93
        %p239 = pneg %p90
        %p240 = pneg %p121
        %p241 = pneg %p118
        %p242 = scmp.lt.s32.totalorder %s22, 1
        %s243 = scalar_select %p242, %s22, 1
        %p244 = scmp.lt.s32.totalorder %s23, 3
        %s245 = scalar_select %p244, %s23, 3
        %s246 = smul.addr %s245, 8
        %s247 = smul.addr %s243, 32
        %s248 = sadd.s32 %s246, %s247
        %s249 = smul.addr %s248, 8
        %s250 = scalar_lea.vmem %s3, %s249
        %p251 = pneg %p149
        %p252 = pneg %p146
        %p253 = scmp.lt.s32.totalorder %s22, 1
        %s254 = scalar_select %p253, %s22, 1
        %p255 = scmp.lt.s32.totalorder %s23, 3
        %s256 = scalar_select %p255, %s23, 3
        %s257 = smul.addr %s254, 4
        %s258 = sadd.s32 %s256, %s257
        %s259 = scalar_lea.vmem %s4, %s258
        %p260 = pneg %p177
        %p261 = pneg %p174
        %p262 = scmp.lt.s32.totalorder %s22, 1
        %s263 = scalar_select %p262, %s22, 1
        %p264 = scmp.lt.s32.totalorder %s23, 3
        %s265 = scalar_select %p264, %s23, 3
        %s266 = smul.addr %s263, 4
        %s267 = sadd.s32 %s265, %s266
        %s268 = scalar_lea.vmem %s5, %s267
        %p269 = scmp.lt.s32.totalorder %s22, 1
        %s270 = scalar_select %p269, %s22, 1
        %s271 = smul.addr %s270, 120
        %s272 = smul.addr %s271, 8
        %s273 = scalar_lea.vmem %s0, %s272
        %p274 = scmp.lt.s32.totalorder %s22, 1
        %s275 = scalar_select %p274, %s22, 1
        %p276 = scmp.lt.s32.totalorder %s23, 3
        %s277 = scalar_select %p276, %s23, 3
        %s278 = smul.addr %s277, 8
        %s279 = smul.addr %s275, 32
        %s280 = sadd.s32 %s278, %s279
        %s281 = smul.addr %s280, 8
        %s282 = scalar_lea.vmem %s3, %s281
        %p283 = scmp.lt.s32.totalorder %s22, 1
        %s284 = scalar_select %p283, %s22, 1
        %p285 = scmp.lt.s32.totalorder %s23, 3
        %s286 = scalar_select %p285, %s23, 3
        %s287 = smul.addr %s284, 4
        %s288 = sadd.s32 %s286, %s287
        %s289 = scalar_lea.vmem %s4, %s288
        %p290 = scmp.lt.s32.totalorder %s22, 1
        %s291 = scalar_select %p290, %s22, 1
        %p292 = scmp.lt.s32.totalorder %s23, 3
        %s293 = scalar_select %p292, %s23, 3
        %s294 = smul.addr %s291, 4
        %s295 = sadd.s32 %s293, %s294
        %s296 = scalar_lea.vmem %s5, %s295
        %s298 = smul.u32 %s23, 160
        %s299 = scalar_lea.vmem %s273, %s298
        %v300 = vld [vmem:[%s299] sm:$0xff]
        %v301 = vld [vmem:[%s299 + $0x8] sm:$0x3]
        %v302 = vld [vmem:[%s299 + $0x10] sm:$0xff]
        %v303 = vld [vmem:[%s299 + $0x18] sm:$0x3]
        %v304 = vld [vmem:[%s299 + $0x20] sm:$0xff]
        %v305 = vld [vmem:[%s299 + $0x28] sm:$0x3]
        %v306 = vld [vmem:[%s299 + $0x30] sm:$0xff]
        %v307 = vld [vmem:[%s299 + $0x38] sm:$0x3]
        %v308 = vld [vmem:[%s299 + $0x40] sm:$0xff]
        %v309 = vld [vmem:[%s299 + $0x48] sm:$0x3]
        %v310 = vld [vmem:[%s299 + $0x50] sm:$0xff]
        %v311 = vld [vmem:[%s299 + $0x58] sm:$0x3]
        %v312 = vld [vmem:[%s299 + $0x60] sm:$0xff]
        %v313 = vld [vmem:[%s299 + $0x68] sm:$0x3]
        %v314 = vld [vmem:[%s299 + $0x70] sm:$0xff]
        %v315 = vld [vmem:[%s299 + $0x78] sm:$0x3]
        %v316 = vld [vmem:[%s299 + $0x80] sm:$0xff]
        %v317 = vld [vmem:[%s299 + $0x88] sm:$0x3]
        %v318 = vld [vmem:[%s299 + $0x90] sm:$0xff]
        %v319 = vld [vmem:[%s299 + $0x98] sm:$0x3]
        %v320 = vpack.c.bf16 %v302, %v300
        %v321 = vpack.c.bf16 %v306, %v304
        %v322 = vpack.c.bf16 %v310, %v308
        %v323 = vpack.c.bf16 %v314, %v312
        %vm324 = vcmask 261120
        %325 = vst.msk [vmem:[#allocation2] sm:$0xff] %vm324, %v320
        %326 = vst.msk [vmem:[#allocation2 + $0x38] sm:$0xff] %vm324, %v321
        %327 = vst.msk [vmem:[#allocation2 + $0x70] sm:$0xff] %vm324, %v322
        %328 = vst.msk [vmem:[#allocation2 + $0xa8] sm:$0xff] %vm324, %v323
        %vm345 = vcmask 1046528
        %v346 = vrot.slane %v300, 1
        %v347 = vrot.slane %v301, 1
        %v348 = vsel %vm345, %v346, %v347
        %v349 = vrot.slane %v302, 1
        %v350 = vrot.slane %v303, 1
        %v351 = vsel %vm345, %v349, %v350
        %v352 = vrot.slane %v304, 1
        %v353 = vrot.slane %v305, 1
        %v354 = vsel %vm345, %v352, %v353
        %v355 = vrot.slane %v306, 1
        %v356 = vrot.slane %v307, 1
        %v357 = vsel %vm345, %v355, %v356
        %v358 = vrot.slane %v308, 1
        %v359 = vrot.slane %v309, 1
        %v360 = vsel %vm345, %v358, %v359
        %v361 = vrot.slane %v310, 1
        %v362 = vrot.slane %v311, 1
        %v363 = vsel %vm345, %v361, %v362
        %v364 = vrot.slane %v312, 1
        %v365 = vrot.slane %v313, 1
        %v366 = vsel %vm345, %v364, %v365
        %v367 = vrot.slane %v314, 1
        %v368 = vrot.slane %v315, 1
        %v369 = vsel %vm345, %v367, %v368
        %v378 = vpack.c.bf16 %v351, %v348
        %v379 = vpack.c.bf16 %v357, %v354
        %v380 = vpack.c.bf16 %v363, %v360
        %v381 = vpack.c.bf16 %v369, %v366
        %386 = vrot.lane.b32.xlu0 %v378, 32
        %v387 = vpop.permute.xlu0 %386
        %388 = vrot.lane.b32.xlu0 %v379, 32
        %v389 = vpop.permute.xlu0 %388
        %390 = vrot.lane.b32.xlu0 %v380, 32
        %v391 = vpop.permute.xlu0 %390
        %392 = vrot.lane.b32.xlu0 %v381, 32
        %v393 = vpop.permute.xlu0 %392
        %vm398 = vcmask 523520
        %399 = vst.msk [vmem:[#allocation2] sm:$0xff] %vm398, %v387
        %400 = vst.msk [vmem:[#allocation2 + $0x38] sm:$0xff] %vm398, %v389
        %401 = vst.msk [vmem:[#allocation2 + $0x70] sm:$0xff] %vm398, %v391
        %402 = vst.msk [vmem:[#allocation2 + $0xa8] sm:$0xff] %vm398, %v393
        %vm403 = vcmask 1045504
        %v404 = vrot.slane %v300, 2
        %v405 = vrot.slane %v301, 2
        %v406 = vsel %vm403, %v404, %v405
        %v407 = vrot.slane %v302, 2
        %v408 = vrot.slane %v303, 2
        %v409 = vsel %vm403, %v407, %v408
        %v410 = vrot.slane %v304, 2
        %v411 = vrot.slane %v305, 2
        %v412 = vsel %vm403, %v410, %v411
        %v413 = vrot.slane %v306, 2
        %v414 = vrot.slane %v307, 2
        %v415 = vsel %vm403, %v413, %v414
        %v416 = vrot.slane %v308, 2
        %v417 = vrot.slane %v309, 2
        %v418 = vsel %vm403, %v416, %v417
        %v419 = vrot.slane %v310, 2
        %v420 = vrot.slane %v311, 2
        %v421 = vsel %vm403, %v419, %v420
        %v422 = vrot.slane %v312, 2
        %v423 = vrot.slane %v313, 2
        %v424 = vsel %vm403, %v422, %v423
        %v425 = vrot.slane %v314, 2
        %v426 = vrot.slane %v315, 2
        %v427 = vsel %vm403, %v425, %v426
        %v436 = vpack.c.bf16 %v409, %v406
        %v437 = vpack.c.bf16 %v415, %v412
        %v438 = vpack.c.bf16 %v421, %v418
        %v439 = vpack.c.bf16 %v427, %v424
        %444 = vrot.lane.b32.xlu0 %v436, 64
        %v445 = vpop.permute.xlu0 %444
        %446 = vrot.lane.b32.xlu0 %v437, 64
        %v447 = vpop.permute.xlu0 %446
        %448 = vrot.lane.b32.xlu0 %v438, 64
        %v449 = vpop.permute.xlu0 %448
        %450 = vrot.lane.b32.xlu0 %v439, 64
        %v451 = vpop.permute.xlu0 %450
        %vm456 = vcmask 785920
        %457 = vst.msk [vmem:[#allocation2] sm:$0xff] %vm456, %v445
        %458 = vst.msk [vmem:[#allocation2 + $0x38] sm:$0xff] %vm456, %v447
        %459 = vst.msk [vmem:[#allocation2 + $0x70] sm:$0xff] %vm456, %v449
        %460 = vst.msk [vmem:[#allocation2 + $0xa8] sm:$0xff] %vm456, %v451
        %v461 = vpack.c.bf16 %v304, %v302
        %v462 = vpack.c.bf16 %v308, %v306
        %v463 = vpack.c.bf16 %v312, %v310
        %v464 = vpack.c.bf16 %v316, %v314
        %469 = vrot.lane.b32.xlu0 %v461, 96
        %v470 = vpop.permute.xlu0 %469
        %471 = vrot.lane.b32.xlu0 %v462, 96
        %v472 = vpop.permute.xlu0 %471
        %473 = vrot.lane.b32.xlu0 %v463, 96
        %v474 = vpop.permute.xlu0 %473
        %475 = vrot.lane.b32.xlu0 %v464, 96
        %v476 = vpop.permute.xlu0 %475
        %vm481 = vcmask 1048320
        %482 = vst.msk [vmem:[#allocation2] sm:$0xff] %vm481, %v470
        %483 = vst.msk [vmem:[#allocation2 + $0x38] sm:$0xff] %vm481, %v472
        %484 = vst.msk [vmem:[#allocation2 + $0x70] sm:$0xff] %vm481, %v474
        %485 = vst.msk [vmem:[#allocation2 + $0xa8] sm:$0xff] %vm481, %v476
        %v488 = vrot.slane %v316, 1
        %v489 = vrot.slane %v317, 1
        %v490 = vsel %vm345, %v488, %v489
        %v492 = vpack.c.bf16 %v354, %v351
        %v493 = vpack.c.bf16 %v360, %v357
        %v494 = vpack.c.bf16 %v366, %v363
        %v495 = vpack.c.bf16 %v490, %v369
        %496 = vst.msk [vmem:[#allocation2 + $0x8] sm:$0xff] %vm324, %v492
        %497 = vst.msk [vmem:[#allocation2 + $0x40] sm:$0xff] %vm324, %v493
        %498 = vst.msk [vmem:[#allocation2 + $0x78] sm:$0xff] %vm324, %v494
        %499 = vst.msk [vmem:[#allocation2 + $0xb0] sm:$0xff] %vm324, %v495
        %v500 = vrot.slane %v316, 2
        %v501 = vrot.slane %v317, 2
        %v502 = vsel %vm403, %v500, %v501
        %v504 = vpack.c.bf16 %v412, %v409
        %v505 = vpack.c.bf16 %v418, %v415
        %v506 = vpack.c.bf16 %v424, %v421
        %v507 = vpack.c.bf16 %v502, %v427
        %512 = vrot.lane.b32.xlu0 %v504, 32
        %v513 = vpop.permute.xlu0 %512
        %514 = vrot.lane.b32.xlu0 %v505, 32
        %v515 = vpop.permute.xlu0 %514
        %516 = vrot.lane.b32.xlu0 %v506, 32
        %v517 = vpop.permute.xlu0 %516
        %518 = vrot.lane.b32.xlu0 %v507, 32
        %v519 = vpop.permute.xlu0 %518
        %524 = vst.msk [vmem:[#allocation2 + $0x8] sm:$0xff] %vm398, %v513
        %525 = vst.msk [vmem:[#allocation2 + $0x40] sm:$0xff] %vm398, %v515
        %526 = vst.msk [vmem:[#allocation2 + $0x78] sm:$0xff] %vm398, %v517
        %527 = vst.msk [vmem:[#allocation2 + $0xb0] sm:$0xff] %vm398, %v519
        %v528 = vpack.c.bf16 %v318, %v316
        %533 = vrot.lane.b32.xlu0 %v321, 64
        %v534 = vpop.permute.xlu0 %533
        %535 = vrot.lane.b32.xlu0 %v322, 64
        %v536 = vpop.permute.xlu0 %535
        %537 = vrot.lane.b32.xlu0 %v323, 64
        %v538 = vpop.permute.xlu0 %537
        %539 = vrot.lane.b32.xlu0 %v528, 64
        %v540 = vpop.permute.xlu0 %539
        %545 = vst.msk [vmem:[#allocation2 + $0x8] sm:$0xff] %vm456, %v534
        %546 = vst.msk [vmem:[#allocation2 + $0x40] sm:$0xff] %vm456, %v536
        %547 = vst.msk [vmem:[#allocation2 + $0x78] sm:$0xff] %vm456, %v538
        %548 = vst.msk [vmem:[#allocation2 + $0xb0] sm:$0xff] %vm456, %v540
        %v551 = vrot.slane %v318, 1
        %v552 = vrot.slane %v319, 1
        %v553 = vsel %vm345, %v551, %v552
        %v555 = vpack.c.bf16 %v553, %v490
        %557 = vrot.lane.b32.xlu0 %v379, 96
        %v558 = vpop.permute.xlu0 %557
        %559 = vrot.lane.b32.xlu0 %v380, 96
        %v560 = vpop.permute.xlu0 %559
        %561 = vrot.lane.b32.xlu0 %v381, 96
        %v562 = vpop.permute.xlu0 %561
        %563 = vrot.lane.b32.xlu0 %v555, 96
        %v564 = vpop.permute.xlu0 %563
        %569 = vst.msk [vmem:[#allocation2 + $0x8] sm:$0xff] %vm481, %v558
        %570 = vst.msk [vmem:[#allocation2 + $0x40] sm:$0xff] %vm481, %v560
        %571 = vst.msk [vmem:[#allocation2 + $0x78] sm:$0xff] %vm481, %v562
        %572 = vst.msk [vmem:[#allocation2 + $0xb0] sm:$0xff] %vm481, %v564
        %v573 = vrot.slane %v318, 2
        %v574 = vrot.slane %v319, 2
        %v575 = vsel %vm403, %v573, %v574
        %v577 = vpack.c.bf16 %v575, %v502
        %578 = vst.msk [vmem:[#allocation2 + $0x10] sm:$0xff] %vm324, %v437
        %579 = vst.msk [vmem:[#allocation2 + $0x48] sm:$0xff] %vm324, %v438
        %580 = vst.msk [vmem:[#allocation2 + $0x80] sm:$0xff] %vm324, %v439
        %581 = vst.msk [vmem:[#allocation2 + $0xb8] sm:$0xff] %vm324, %v577
        %s582 = sadd.s32 %s23, 1
        %s583 = smul.u32 %s582, 160
        %s584 = scalar_lea.vmem %s273, %s583
        %v585 = vld [vmem:[%s584] sm:$0xff]
        %v586 = vld [vmem:[%s584 + $0x8] sm:$0x3]
        %v587 = vld [vmem:[%s584 + $0x10] sm:$0xff]
        %v588 = vld [vmem:[%s584 + $0x18] sm:$0x3]
        %v589 = vld [vmem:[%s584 + $0x20] sm:$0xff]
        %v590 = vld [vmem:[%s584 + $0x28] sm:$0x3]
        %v591 = vld [vmem:[%s584 + $0x30] sm:$0xff]
        %v592 = vld [vmem:[%s584 + $0x38] sm:$0x3]
        %v593 = vld [vmem:[%s584 + $0x40] sm:$0xff]
        %v594 = vld [vmem:[%s584 + $0x48] sm:$0x3]
        %v595 = vld [vmem:[%s584 + $0x50] sm:$0xff]
        %v596 = vld [vmem:[%s584 + $0x58] sm:$0x3]
        %v597 = vld [vmem:[%s584 + $0x60] sm:$0xff]
        %v598 = vld [vmem:[%s584 + $0x68] sm:$0x3]
        %v599 = vld [vmem:[%s584 + $0x70] sm:$0xff]
        %v600 = vld [vmem:[%s584 + $0x78] sm:$0x3]
        %v601 = vld [vmem:[%s584 + $0x80] sm:$0xff]
        %v602 = vld [vmem:[%s584 + $0x88] sm:$0x3]
        %v603 = vld [vmem:[%s584 + $0x90] sm:$0xff]
        %v604 = vld [vmem:[%s584 + $0x98] sm:$0x3]
        %v605 = vpack.c.bf16 %v587, %v585
        %v606 = vpack.c.bf16 %v591, %v589
        %v607 = vpack.c.bf16 %v595, %v593
        %v608 = vpack.c.bf16 %v599, %v597
        %613 = vrot.lane.b32.xlu0 %v605, 32
        %v614 = vpop.permute.xlu0 %613
        %615 = vrot.lane.b32.xlu0 %v606, 32
        %v616 = vpop.permute.xlu0 %615
        %617 = vrot.lane.b32.xlu0 %v607, 32
        %v618 = vpop.permute.xlu0 %617
        %619 = vrot.lane.b32.xlu0 %v608, 32
        %v620 = vpop.permute.xlu0 %619
        %625 = vst.msk [vmem:[#allocation2 + $0x10] sm:$0xff] %vm398, %v614
        %626 = vst.msk [vmem:[#allocation2 + $0x48] sm:$0xff] %vm398, %v616
        %627 = vst.msk [vmem:[#allocation2 + $0x80] sm:$0xff] %vm398, %v618
        %628 = vst.msk [vmem:[#allocation2 + $0xb8] sm:$0xff] %vm398, %v620
        %v645 = vrot.slane %v585, 1
        %v646 = vrot.slane %v586, 1
        %v647 = vsel %vm345, %v645, %v646
        %v648 = vrot.slane %v587, 1
        %v649 = vrot.slane %v588, 1
        %v650 = vsel %vm345, %v648, %v649
        %v651 = vrot.slane %v589, 1
        %v652 = vrot.slane %v590, 1
        %v653 = vsel %vm345, %v651, %v652
        %v654 = vrot.slane %v591, 1
        %v655 = vrot.slane %v592, 1
        %v656 = vsel %vm345, %v654, %v655
        %v657 = vrot.slane %v593, 1
        %v658 = vrot.slane %v594, 1
        %v659 = vsel %vm345, %v657, %v658
        %v660 = vrot.slane %v595, 1
        %v661 = vrot.slane %v596, 1
        %v662 = vsel %vm345, %v660, %v661
        %v663 = vrot.slane %v597, 1
        %v664 = vrot.slane %v598, 1
        %v665 = vsel %vm345, %v663, %v664
        %v666 = vrot.slane %v599, 1
        %v667 = vrot.slane %v600, 1
        %v668 = vsel %vm345, %v666, %v667
        %v677 = vpack.c.bf16 %v650, %v647
        %v678 = vpack.c.bf16 %v656, %v653
        %v679 = vpack.c.bf16 %v662, %v659
        %v680 = vpack.c.bf16 %v668, %v665
        %685 = vrot.lane.b32.xlu0 %v677, 64
        %v686 = vpop.permute.xlu0 %685
        %687 = vrot.lane.b32.xlu0 %v678, 64
        %v688 = vpop.permute.xlu0 %687
        %689 = vrot.lane.b32.xlu0 %v679, 64
        %v690 = vpop.permute.xlu0 %689
        %691 = vrot.lane.b32.xlu0 %v680, 64
        %v692 = vpop.permute.xlu0 %691
        %697 = vst.msk [vmem:[#allocation2 + $0x10] sm:$0xff] %vm456, %v686
        %698 = vst.msk [vmem:[#allocation2 + $0x48] sm:$0xff] %vm456, %v688
        %699 = vst.msk [vmem:[#allocation2 + $0x80] sm:$0xff] %vm456, %v690
        %700 = vst.msk [vmem:[#allocation2 + $0xb8] sm:$0xff] %vm456, %v692
        %v701 = vrot.slane %v585, 2
        %v702 = vrot.slane %v586, 2
        %v703 = vsel %vm403, %v701, %v702
        %v704 = vrot.slane %v587, 2
        %v705 = vrot.slane %v588, 2
        %v706 = vsel %vm403, %v704, %v705
        %v707 = vrot.slane %v589, 2
        %v708 = vrot.slane %v590, 2
        %v709 = vsel %vm403, %v707, %v708
        %v710 = vrot.slane %v591, 2
        %v711 = vrot.slane %v592, 2
        %v712 = vsel %vm403, %v710, %v711
        %v713 = vrot.slane %v593, 2
        %v714 = vrot.slane %v594, 2
        %v715 = vsel %vm403, %v713, %v714
        %v716 = vrot.slane %v595, 2
        %v717 = vrot.slane %v596, 2
        %v718 = vsel %vm403, %v716, %v717
        %v719 = vrot.slane %v597, 2
        %v720 = vrot.slane %v598, 2
        %v721 = vsel %vm403, %v719, %v720
        %v722 = vrot.slane %v599, 2
        %v723 = vrot.slane %v600, 2
        %v724 = vsel %vm403, %v722, %v723
        %v733 = vpack.c.bf16 %v706, %v703
        %v734 = vpack.c.bf16 %v712, %v709
        %v735 = vpack.c.bf16 %v718, %v715
        %v736 = vpack.c.bf16 %v724, %v721
        %741 = vrot.lane.b32.xlu0 %v733, 96
        %v742 = vpop.permute.xlu0 %741
        %743 = vrot.lane.b32.xlu0 %v734, 96
        %v744 = vpop.permute.xlu0 %743
        %745 = vrot.lane.b32.xlu0 %v735, 96
        %v746 = vpop.permute.xlu0 %745
        %747 = vrot.lane.b32.xlu0 %v736, 96
        %v748 = vpop.permute.xlu0 %747
        %753 = vst.msk [vmem:[#allocation2 + $0x10] sm:$0xff] %vm481, %v742
        %754 = vst.msk [vmem:[#allocation2 + $0x48] sm:$0xff] %vm481, %v744
        %755 = vst.msk [vmem:[#allocation2 + $0x80] sm:$0xff] %vm481, %v746
        %756 = vst.msk [vmem:[#allocation2 + $0xb8] sm:$0xff] %vm481, %v748
        %v757 = vpack.c.bf16 %v589, %v587
        %v758 = vpack.c.bf16 %v593, %v591
        %v759 = vpack.c.bf16 %v597, %v595
        %v760 = vpack.c.bf16 %v601, %v599
        %761 = vst.msk [vmem:[#allocation2 + $0x18] sm:$0xff] %vm324, %v757
        %762 = vst.msk [vmem:[#allocation2 + $0x50] sm:$0xff] %vm324, %v758
        %763 = vst.msk [vmem:[#allocation2 + $0x88] sm:$0xff] %vm324, %v759
        %764 = vst.msk [vmem:[#allocation2 + $0xc0] sm:$0xff] %vm324, %v760
        %v767 = vrot.slane %v601, 1
        %v768 = vrot.slane %v602, 1
        %v769 = vsel %vm345, %v767, %v768
        %v771 = vpack.c.bf16 %v653, %v650
        %v772 = vpack.c.bf16 %v659, %v656
        %v773 = vpack.c.bf16 %v665, %v662
        %v774 = vpack.c.bf16 %v769, %v668
        %779 = vrot.lane.b32.xlu0 %v771, 32
        %v780 = vpop.permute.xlu0 %779
        %781 = vrot.lane.b32.xlu0 %v772, 32
        %v782 = vpop.permute.xlu0 %781
        %783 = vrot.lane.b32.xlu0 %v773, 32
        %v784 = vpop.permute.xlu0 %783
        %785 = vrot.lane.b32.xlu0 %v774, 32
        %v786 = vpop.permute.xlu0 %785
        %791 = vst.msk [vmem:[#allocation2 + $0x18] sm:$0xff] %vm398, %v780
        %792 = vst.msk [vmem:[#allocation2 + $0x50] sm:$0xff] %vm398, %v782
        %793 = vst.msk [vmem:[#allocation2 + $0x88] sm:$0xff] %vm398, %v784
        %794 = vst.msk [vmem:[#allocation2 + $0xc0] sm:$0xff] %vm398, %v786
        %v795 = vrot.slane %v601, 2
        %v796 = vrot.slane %v602, 2
        %v797 = vsel %vm403, %v795, %v796
        %v799 = vpack.c.bf16 %v709, %v706
        %v800 = vpack.c.bf16 %v715, %v712
        %v801 = vpack.c.bf16 %v721, %v718
        %v802 = vpack.c.bf16 %v797, %v724
        %807 = vrot.lane.b32.xlu0 %v799, 64
        %v808 = vpop.permute.xlu0 %807
        %809 = vrot.lane.b32.xlu0 %v800, 64
        %v810 = vpop.permute.xlu0 %809
        %811 = vrot.lane.b32.xlu0 %v801, 64
        %v812 = vpop.permute.xlu0 %811
        %813 = vrot.lane.b32.xlu0 %v802, 64
        %v814 = vpop.permute.xlu0 %813
        %819 = vst.msk [vmem:[#allocation2 + $0x18] sm:$0xff] %vm456, %v808
        %820 = vst.msk [vmem:[#allocation2 + $0x50] sm:$0xff] %vm456, %v810
        %821 = vst.msk [vmem:[#allocation2 + $0x88] sm:$0xff] %vm456, %v812
        %822 = vst.msk [vmem:[#allocation2 + $0xc0] sm:$0xff] %vm456, %v814
        %v823 = vpack.c.bf16 %v603, %v601
        %825 = vrot.lane.b32.xlu0 %v606, 96
        %v826 = vpop.permute.xlu0 %825
        %827 = vrot.lane.b32.xlu0 %v607, 96
        %v828 = vpop.permute.xlu0 %827
        %829 = vrot.lane.b32.xlu0 %v608, 96
        %v830 = vpop.permute.xlu0 %829
        %831 = vrot.lane.b32.xlu0 %v823, 96
        %v832 = vpop.permute.xlu0 %831
        %837 = vst.msk [vmem:[#allocation2 + $0x18] sm:$0xff] %vm481, %v826
        %838 = vst.msk [vmem:[#allocation2 + $0x50] sm:$0xff] %vm481, %v828
        %839 = vst.msk [vmem:[#allocation2 + $0x88] sm:$0xff] %vm481, %v830
        %840 = vst.msk [vmem:[#allocation2 + $0xc0] sm:$0xff] %vm481, %v832
        %v843 = vrot.slane %v603, 1
        %v844 = vrot.slane %v604, 1
        %v845 = vsel %vm345, %v843, %v844
        %v847 = vpack.c.bf16 %v845, %v769
        %848 = vst.msk [vmem:[#allocation2 + $0x20] sm:$0xff] %vm324, %v678
        %849 = vst.msk [vmem:[#allocation2 + $0x58] sm:$0xff] %vm324, %v679
        %850 = vst.msk [vmem:[#allocation2 + $0x90] sm:$0xff] %vm324, %v680
        %851 = vst.msk [vmem:[#allocation2 + $0xc8] sm:$0xff] %vm324, %v847
        %v852 = vrot.slane %v603, 2
        %v853 = vrot.slane %v604, 2
        %v854 = vsel %vm403, %v852, %v853
        %v856 = vpack.c.bf16 %v854, %v797
        %858 = vrot.lane.b32.xlu0 %v734, 32
        %v859 = vpop.permute.xlu0 %858
        %860 = vrot.lane.b32.xlu0 %v735, 32
        %v861 = vpop.permute.xlu0 %860
        %862 = vrot.lane.b32.xlu0 %v736, 32
        %v863 = vpop.permute.xlu0 %862
        %864 = vrot.lane.b32.xlu0 %v856, 32
        %v865 = vpop.permute.xlu0 %864
        %870 = vst.msk [vmem:[#allocation2 + $0x20] sm:$0xff] %vm398, %v859
        %871 = vst.msk [vmem:[#allocation2 + $0x58] sm:$0xff] %vm398, %v861
        %872 = vst.msk [vmem:[#allocation2 + $0x90] sm:$0xff] %vm398, %v863
        %873 = vst.msk [vmem:[#allocation2 + $0xc8] sm:$0xff] %vm398, %v865
        %s874 = sadd.s32 %s23, 2
        %s875 = smul.u32 %s874, 160
        %s876 = scalar_lea.vmem %s273, %s875
        %v877 = vld [vmem:[%s876] sm:$0xff]
        %v878 = vld [vmem:[%s876 + $0x8] sm:$0x3]
        %v879 = vld [vmem:[%s876 + $0x10] sm:$0xff]
        %v880 = vld [vmem:[%s876 + $0x18] sm:$0x3]
        %v881 = vld [vmem:[%s876 + $0x20] sm:$0xff]
        %v882 = vld [vmem:[%s876 + $0x28] sm:$0x3]
        %v883 = vld [vmem:[%s876 + $0x30] sm:$0xff]
        %v884 = vld [vmem:[%s876 + $0x38] sm:$0x3]
        %v885 = vld [vmem:[%s876 + $0x40] sm:$0xff]
        %v886 = vld [vmem:[%s876 + $0x48] sm:$0x3]
        %v887 = vld [vmem:[%s876 + $0x50] sm:$0xff]
        %v888 = vld [vmem:[%s876 + $0x58] sm:$0x3]
        %v889 = vld [vmem:[%s876 + $0x60] sm:$0xff]
        %v890 = vld [vmem:[%s876 + $0x68] sm:$0x3]
        %v891 = vld [vmem:[%s876 + $0x70] sm:$0xff]
        %v892 = vld [vmem:[%s876 + $0x78] sm:$0x3]
        %v893 = vld [vmem:[%s876 + $0x80] sm:$0xff]
        %v894 = vld [vmem:[%s876 + $0x88] sm:$0x3]
        %v895 = vld [vmem:[%s876 + $0x90] sm:$0xff]
        %v896 = vld [vmem:[%s876 + $0x98] sm:$0x3]
        %v897 = vpack.c.bf16 %v879, %v877
        %v898 = vpack.c.bf16 %v883, %v881
        %v899 = vpack.c.bf16 %v887, %v885
        %v900 = vpack.c.bf16 %v891, %v889
        %905 = vrot.lane.b32.xlu0 %v897, 64
        %v906 = vpop.permute.xlu0 %905
        %907 = vrot.lane.b32.xlu0 %v898, 64
        %v908 = vpop.permute.xlu0 %907
        %909 = vrot.lane.b32.xlu0 %v899, 64
        %v910 = vpop.permute.xlu0 %909
        %911 = vrot.lane.b32.xlu0 %v900, 64
        %v912 = vpop.permute.xlu0 %911
        %917 = vst.msk [vmem:[#allocation2 + $0x20] sm:$0xff] %vm456, %v906
        %918 = vst.msk [vmem:[#allocation2 + $0x58] sm:$0xff] %vm456, %v908
        %919 = vst.msk [vmem:[#allocation2 + $0x90] sm:$0xff] %vm456, %v910
        %920 = vst.msk [vmem:[#allocation2 + $0xc8] sm:$0xff] %vm456, %v912
        %v937 = vrot.slane %v877, 1
        %v938 = vrot.slane %v878, 1
        %v939 = vsel %vm345, %v937, %v938
        %v940 = vrot.slane %v879, 1
        %v941 = vrot.slane %v880, 1
        %v942 = vsel %vm345, %v940, %v941
        %v943 = vrot.slane %v881, 1
        %v944 = vrot.slane %v882, 1
        %v945 = vsel %vm345, %v943, %v944
        %v946 = vrot.slane %v883, 1
        %v947 = vrot.slane %v884, 1
        %v948 = vsel %vm345, %v946, %v947
        %v949 = vrot.slane %v885, 1
        %v950 = vrot.slane %v886, 1
        %v951 = vsel %vm345, %v949, %v950
        %v952 = vrot.slane %v887, 1
        %v953 = vrot.slane %v888, 1
        %v954 = vsel %vm345, %v952, %v953
        %v955 = vrot.slane %v889, 1
        %v956 = vrot.slane %v890, 1
        %v957 = vsel %vm345, %v955, %v956
        %v958 = vrot.slane %v891, 1
        %v959 = vrot.slane %v892, 1
        %v960 = vsel %vm345, %v958, %v959
        %v969 = vpack.c.bf16 %v942, %v939
        %v970 = vpack.c.bf16 %v948, %v945
        %v971 = vpack.c.bf16 %v954, %v951
        %v972 = vpack.c.bf16 %v960, %v957
        %977 = vrot.lane.b32.xlu0 %v969, 96
        %v978 = vpop.permute.xlu0 %977
        %979 = vrot.lane.b32.xlu0 %v970, 96
        %v980 = vpop.permute.xlu0 %979
        %981 = vrot.lane.b32.xlu0 %v971, 96
        %v982 = vpop.permute.xlu0 %981
        %983 = vrot.lane.b32.xlu0 %v972, 96
        %v984 = vpop.permute.xlu0 %983
        %989 = vst.msk [vmem:[#allocation2 + $0x20] sm:$0xff] %vm481, %v978
        %990 = vst.msk [vmem:[#allocation2 + $0x58] sm:$0xff] %vm481, %v980
        %991 = vst.msk [vmem:[#allocation2 + $0x90] sm:$0xff] %vm481, %v982
        %992 = vst.msk [vmem:[#allocation2 + $0xc8] sm:$0xff] %vm481, %v984
        %v993 = vrot.slane %v877, 2
        %v994 = vrot.slane %v878, 2
        %v995 = vsel %vm403, %v993, %v994
        %v996 = vrot.slane %v879, 2
        %v997 = vrot.slane %v880, 2
        %v998 = vsel %vm403, %v996, %v997
        %v999 = vrot.slane %v881, 2
        %v1000 = vrot.slane %v882, 2
        %v1001 = vsel %vm403, %v999, %v1000
        %v1002 = vrot.slane %v883, 2
        %v1003 = vrot.slane %v884, 2
        %v1004 = vsel %vm403, %v1002, %v1003
        %v1005 = vrot.slane %v885, 2
        %v1006 = vrot.slane %v886, 2
        %v1007 = vsel %vm403, %v1005, %v1006
        %v1008 = vrot.slane %v887, 2
        %v1009 = vrot.slane %v888, 2
        %v1010 = vsel %vm403, %v1008, %v1009
        %v1011 = vrot.slane %v889, 2
        %v1012 = vrot.slane %v890, 2
        %v1013 = vsel %vm403, %v1011, %v1012
        %v1014 = vrot.slane %v891, 2
        %v1015 = vrot.slane %v892, 2
        %v1016 = vsel %vm403, %v1014, %v1015
        %v1025 = vpack.c.bf16 %v998, %v995
        %v1026 = vpack.c.bf16 %v1004, %v1001
        %v1027 = vpack.c.bf16 %v1010, %v1007
        %v1028 = vpack.c.bf16 %v1016, %v1013
        %1029 = vst.msk [vmem:[#allocation2 + $0x28] sm:$0xff] %vm324, %v1025
        %1030 = vst.msk [vmem:[#allocation2 + $0x60] sm:$0xff] %vm324, %v1026
        %1031 = vst.msk [vmem:[#allocation2 + $0x98] sm:$0xff] %vm324, %v1027
        %1032 = vst.msk [vmem:[#allocation2 + $0xd0] sm:$0xff] %vm324, %v1028
        %v1033 = vpack.c.bf16 %v881, %v879
        %v1034 = vpack.c.bf16 %v885, %v883
        %v1035 = vpack.c.bf16 %v889, %v887
        %v1036 = vpack.c.bf16 %v893, %v891
        %1041 = vrot.lane.b32.xlu0 %v1033, 32
        %v1042 = vpop.permute.xlu0 %1041
        %1043 = vrot.lane.b32.xlu0 %v1034, 32
        %v1044 = vpop.permute.xlu0 %1043
        %1045 = vrot.lane.b32.xlu0 %v1035, 32
        %v1046 = vpop.permute.xlu0 %1045
        %1047 = vrot.lane.b32.xlu0 %v1036, 32
        %v1048 = vpop.permute.xlu0 %1047
        %1053 = vst.msk [vmem:[#allocation2 + $0x28] sm:$0xff] %vm398, %v1042
        %1054 = vst.msk [vmem:[#allocation2 + $0x60] sm:$0xff] %vm398, %v1044
        %1055 = vst.msk [vmem:[#allocation2 + $0x98] sm:$0xff] %vm398, %v1046
        %1056 = vst.msk [vmem:[#allocation2 + $0xd0] sm:$0xff] %vm398, %v1048
        %v1059 = vrot.slane %v893, 1
        %v1060 = vrot.slane %v894, 1
        %v1061 = vsel %vm345, %v1059, %v1060
        %v1063 = vpack.c.bf16 %v945, %v942
        %v1064 = vpack.c.bf16 %v951, %v948
        %v1065 = vpack.c.bf16 %v957, %v954
        %v1066 = vpack.c.bf16 %v1061, %v960
        %1071 = vrot.lane.b32.xlu0 %v1063, 64
        %v1072 = vpop.permute.xlu0 %1071
        %1073 = vrot.lane.b32.xlu0 %v1064, 64
        %v1074 = vpop.permute.xlu0 %1073
        %1075 = vrot.lane.b32.xlu0 %v1065, 64
        %v1076 = vpop.permute.xlu0 %1075
        %1077 = vrot.lane.b32.xlu0 %v1066, 64
        %v1078 = vpop.permute.xlu0 %1077
        %1083 = vst.msk [vmem:[#allocation2 + $0x28] sm:$0xff] %vm456, %v1072
        %1084 = vst.msk [vmem:[#allocation2 + $0x60] sm:$0xff] %vm456, %v1074
        %1085 = vst.msk [vmem:[#allocation2 + $0x98] sm:$0xff] %vm456, %v1076
        %1086 = vst.msk [vmem:[#allocation2 + $0xd0] sm:$0xff] %vm456, %v1078
        %v1087 = vrot.slane %v893, 2
        %v1088 = vrot.slane %v894, 2
        %v1089 = vsel %vm403, %v1087, %v1088
        %v1091 = vpack.c.bf16 %v1001, %v998
        %v1092 = vpack.c.bf16 %v1007, %v1004
        %v1093 = vpack.c.bf16 %v1013, %v1010
        %v1094 = vpack.c.bf16 %v1089, %v1016
        %1099 = vrot.lane.b32.xlu0 %v1091, 96
        %v1100 = vpop.permute.xlu0 %1099
        %1101 = vrot.lane.b32.xlu0 %v1092, 96
        %v1102 = vpop.permute.xlu0 %1101
        %1103 = vrot.lane.b32.xlu0 %v1093, 96
        %v1104 = vpop.permute.xlu0 %1103
        %1105 = vrot.lane.b32.xlu0 %v1094, 96
        %v1106 = vpop.permute.xlu0 %1105
        %1111 = vst.msk [vmem:[#allocation2 + $0x28] sm:$0xff] %vm481, %v1100
        %1112 = vst.msk [vmem:[#allocation2 + $0x60] sm:$0xff] %vm481, %v1102
        %1113 = vst.msk [vmem:[#allocation2 + $0x98] sm:$0xff] %vm481, %v1104
        %1114 = vst.msk [vmem:[#allocation2 + $0xd0] sm:$0xff] %vm481, %v1106
        %v1115 = vpack.c.bf16 %v895, %v893
        %1116 = vst.msk [vmem:[#allocation2 + $0x30] sm:$0xff] %vm324, %v898
        %1117 = vst.msk [vmem:[#allocation2 + $0x68] sm:$0xff] %vm324, %v899
        %1118 = vst.msk [vmem:[#allocation2 + $0xa0] sm:$0xff] %vm324, %v900
        %1119 = vst.msk [vmem:[#allocation2 + $0xd8] sm:$0xff] %vm324, %v1115
        %v1122 = vrot.slane %v895, 1
        %v1123 = vrot.slane %v896, 1
        %v1124 = vsel %vm345, %v1122, %v1123
        %v1126 = vpack.c.bf16 %v1124, %v1061
        %1128 = vrot.lane.b32.xlu0 %v970, 32
        %v1129 = vpop.permute.xlu0 %1128
        %1130 = vrot.lane.b32.xlu0 %v971, 32
        %v1131 = vpop.permute.xlu0 %1130
        %1132 = vrot.lane.b32.xlu0 %v972, 32
        %v1133 = vpop.permute.xlu0 %1132
        %1134 = vrot.lane.b32.xlu0 %v1126, 32
        %v1135 = vpop.permute.xlu0 %1134
        %1140 = vst.msk [vmem:[#allocation2 + $0x30] sm:$0xff] %vm398, %v1129
        %1141 = vst.msk [vmem:[#allocation2 + $0x68] sm:$0xff] %vm398, %v1131
        %1142 = vst.msk [vmem:[#allocation2 + $0xa0] sm:$0xff] %vm398, %v1133
        %1143 = vst.msk [vmem:[#allocation2 + $0xd8] sm:$0xff] %vm398, %v1135
        %v1144 = vrot.slane %v895, 2
        %v1145 = vrot.slane %v896, 2
        %v1146 = vsel %vm403, %v1144, %v1145
        %v1148 = vpack.c.bf16 %v1146, %v1089
        %1153 = vrot.lane.b32.xlu0 %v1026, 64
        %v1154 = vpop.permute.xlu0 %1153
        %1155 = vrot.lane.b32.xlu0 %v1027, 64
        %v1156 = vpop.permute.xlu0 %1155
        %1157 = vrot.lane.b32.xlu0 %v1028, 64
        %v1158 = vpop.permute.xlu0 %1157
        %1159 = vrot.lane.b32.xlu0 %v1148, 64
        %v1160 = vpop.permute.xlu0 %1159
        %1165 = vst.msk [vmem:[#allocation2 + $0x30] sm:$0xff] %vm456, %v1154
        %1166 = vst.msk [vmem:[#allocation2 + $0x68] sm:$0xff] %vm456, %v1156
        %1167 = vst.msk [vmem:[#allocation2 + $0xa0] sm:$0xff] %vm456, %v1158
        %1168 = vst.msk [vmem:[#allocation2 + $0xd8] sm:$0xff] %vm456, %v1160
        %v1169 = vld [vmem:[#allocation2] sm:$0xff]
        %v1170 = vld [vmem:[#allocation2 + $0x8] sm:$0xff]
        %v1171 = vld [vmem:[#allocation2 + $0x10] sm:$0xff]
        %v1172 = vld [vmem:[#allocation2 + $0x18] sm:$0xff]
        %v1173 = vld [vmem:[#allocation2 + $0x20] sm:$0xff]
        %v1174 = vld [vmem:[#allocation2 + $0x28] sm:$0xff]
        %v1175 = vld [vmem:[#allocation2 + $0x30] sm:$0xff]
        %v1176 = vld [vmem:[#allocation2 + $0x38] sm:$0xff]
        %v1177 = vld [vmem:[#allocation2 + $0x40] sm:$0xff]
        %v1178 = vld [vmem:[#allocation2 + $0x48] sm:$0xff]
        %v1179 = vld [vmem:[#allocation2 + $0x50] sm:$0xff]
        %v1180 = vld [vmem:[#allocation2 + $0x58] sm:$0xff]
        %v1181 = vld [vmem:[#allocation2 + $0x60] sm:$0xff]
        %v1182 = vld [vmem:[#allocation2 + $0x68] sm:$0xff]
        %v1183 = vld [vmem:[#allocation2 + $0x70] sm:$0xff]
        %v1184 = vld [vmem:[#allocation2 + $0x78] sm:$0xff]
        %v1185 = vld [vmem:[#allocation2 + $0x80] sm:$0xff]
        %v1186 = vld [vmem:[#allocation2 + $0x88] sm:$0xff]
        %v1187 = vld [vmem:[#allocation2 + $0x90] sm:$0xff]
        %v1188 = vld [vmem:[#allocation2 + $0x98] sm:$0xff]
        %v1189 = vld [vmem:[#allocation2 + $0xa0] sm:$0xff]
        %v1190 = vld [vmem:[#allocation2 + $0xa8] sm:$0xff]
        %v1191 = vld [vmem:[#allocation2 + $0xb0] sm:$0xff]
        %v1192 = vld [vmem:[#allocation2 + $0xb8] sm:$0xff]
        %v1193 = vld [vmem:[#allocation2 + $0xc0] sm:$0xff]
        %v1194 = vld [vmem:[#allocation2 + $0xc8] sm:$0xff]
        %v1195 = vld [vmem:[#allocation2 + $0xd0] sm:$0xff]
        %v1196 = vld [vmem:[#allocation2 + $0xd8] sm:$0xff]
        %v1197 = vld [vmem:[%s1] sm:$0xf]
        %v1198 = vld [vmem:[%s1 + $0x4] sm:$0xf]
        %v1199 = vld [vmem:[%s1 + $0x8] sm:$0xf]
        %v1200 = vld [vmem:[%s1 + $0xc] sm:$0xf]
        %v1201 = vld [vmem:[%s1 + $0x10] sm:$0xf]
        %v1202 = vld [vmem:[%s1 + $0x14] sm:$0xf]
        %v1203 = vld [vmem:[%s1 + $0x18] sm:$0xf]
        %v1204 = vld [vmem:[%s1 + $0x1c] sm:$0xf]
        %v1205 = vld [vmem:[%s1 + $0x20] sm:$0xf]
        %v1206 = vld [vmem:[%s1 + $0x24] sm:$0xf]
        %v1207 = vld [vmem:[%s1 + $0x28] sm:$0xf]
        %v1208 = vld [vmem:[%s1 + $0x2c] sm:$0xf]
        %v1209 = vld [vmem:[%s1 + $0x30] sm:$0xf]
        %v1210 = vld [vmem:[%s1 + $0x34] sm:$0xf]
        %v1211 = vld [vmem:[%s1 + $0x38] sm:$0xf]
        %v1212 = vld [vmem:[%s1 + $0x3c] sm:$0xf]
        %v1213 = vld [vmem:[%s1 + $0x40] sm:$0xf]
        %v1214 = vld [vmem:[%s1 + $0x44] sm:$0xf]
        %v1215 = vld [vmem:[%s1 + $0x48] sm:$0xf]
        %v1216 = vld [vmem:[%s1 + $0x4c] sm:$0xf]
        %v1217 = vld [vmem:[%s1 + $0x50] sm:$0xf]
        %v1218 = vld [vmem:[%s1 + $0x54] sm:$0xf]
        %v1219 = vld [vmem:[%s1 + $0x58] sm:$0xf]
        %v1220 = vld [vmem:[%s1 + $0x5c] sm:$0xf]
        %v1221 = vld [vmem:[%s1 + $0x60] sm:$0xf]
        %v1222 = vld [vmem:[%s1 + $0x64] sm:$0xf]
        %v1223 = vld [vmem:[%s1 + $0x68] sm:$0xf]
        %v1224 = vld [vmem:[%s1 + $0x6c] sm:$0xf]
        %v1225 = vld [vmem:[%s1 + $0x70] sm:$0xf]
        %v1226 = vld [vmem:[%s1 + $0x74] sm:$0xf]
        %v1227 = vld [vmem:[%s1 + $0x78] sm:$0xf]
        %v1228 = vld [vmem:[%s1 + $0x7c] sm:$0xf]
        %v1229 = vld [vmem:[%s1 + $0x80] sm:$0xf]
        %v1230 = vld [vmem:[%s1 + $0x84] sm:$0xf]
        %v1231 = vld [vmem:[%s1 + $0x88] sm:$0xf]
        %v1232 = vld [vmem:[%s1 + $0x8c] sm:$0xf]
        %v1233 = vld [vmem:[%s1 + $0x90] sm:$0xf]
        %v1234 = vld [vmem:[%s1 + $0x94] sm:$0xf]
        %v1235 = vld [vmem:[%s1 + $0x98] sm:$0xf]
        %v1236 = vld [vmem:[%s1 + $0x9c] sm:$0xf]
        %v1237 = vld [vmem:[%s1 + $0xa0] sm:$0xf]
        %v1238 = vld [vmem:[%s1 + $0xa4] sm:$0xf]
        %v1239 = vld [vmem:[%s1 + $0xa8] sm:$0xf]
        %v1240 = vld [vmem:[%s1 + $0xac] sm:$0xf]
        %v1241 = vld [vmem:[%s1 + $0xb0] sm:$0xf]
        %v1242 = vld [vmem:[%s1 + $0xb4] sm:$0xf]
        %v1243 = vld [vmem:[%s1 + $0xb8] sm:$0xf]
        %v1244 = vld [vmem:[%s1 + $0xbc] sm:$0xf]
        %v1245 = vld [vmem:[%s1 + $0xc0] sm:$0xf]
        %v1246 = vld [vmem:[%s1 + $0xc4] sm:$0xf]
        %v1247 = vld [vmem:[%s1 + $0xc8] sm:$0xf]
        %v1248 = vld [vmem:[%s1 + $0xcc] sm:$0xf]
        %v1249 = vld [vmem:[%s1 + $0xd0] sm:$0xf]
        %v1250 = vld [vmem:[%s1 + $0xd4] sm:$0xf]
        %v1251 = vld [vmem:[%s1 + $0xd8] sm:$0xf]
        %v1252 = vld [vmem:[%s1 + $0xdc] sm:$0xf]
        %v1253 = vld [vmem:[%s1 + $0xe0] sm:$0xf]
        %v1254 = vld [vmem:[%s1 + $0xe4] sm:$0xf]
        %v1255 = vld [vmem:[%s1 + $0xe8] sm:$0xf]
        %v1256 = vld [vmem:[%s1 + $0xec] sm:$0xf]
        %v1257 = vld [vmem:[%s1 + $0xf0] sm:$0xf]
        %v1258 = vld [vmem:[%s1 + $0xf4] sm:$0xf]
        %v1259 = vld [vmem:[%s1 + $0xf8] sm:$0xf]
        %v1260 = vld [vmem:[%s1 + $0xfc] sm:$0xf]
        %v1261 = vld [vmem:[%s1 + $0x100] sm:$0xf]
        %v1262 = vld [vmem:[%s1 + $0x104] sm:$0xf]
        %v1263 = vld [vmem:[%s1 + $0x108] sm:$0xf]
        %v1264 = vld [vmem:[%s1 + $0x10c] sm:$0xf]
        %v1265 = vld [vmem:[%s1 + $0x110] sm:$0xf]
        %v1266 = vld [vmem:[%s1 + $0x114] sm:$0xf]
        %v1267 = vld [vmem:[%s1 + $0x118] sm:$0xf]
        %v1268 = vld [vmem:[%s1 + $0x11c] sm:$0xf]
        %v1269 = vld [vmem:[%s1 + $0x120] sm:$0xf]
        %v1270 = vld [vmem:[%s1 + $0x124] sm:$0xf]
        %v1271 = vld [vmem:[%s1 + $0x128] sm:$0xf]
        %v1272 = vld [vmem:[%s1 + $0x12c] sm:$0xf]
        %v1273 = vld [vmem:[%s1 + $0x130] sm:$0xf]
        %v1274 = vld [vmem:[%s1 + $0x134] sm:$0xf]
        %v1275 = vld [vmem:[%s1 + $0x138] sm:$0xf]
        %v1276 = vld [vmem:[%s1 + $0x13c] sm:$0xf]
        %v1277 = vld [vmem:[%s1 + $0x140] sm:$0xf]
        %v1278 = vld [vmem:[%s1 + $0x144] sm:$0xf]
        %v1279 = vld [vmem:[%s1 + $0x148] sm:$0xf]
        %v1280 = vld [vmem:[%s1 + $0x14c] sm:$0xf]
        %v1281 = vld [vmem:[%s1 + $0x150] sm:$0xf]
        %v1282 = vld [vmem:[%s1 + $0x154] sm:$0xf]
        %v1283 = vld [vmem:[%s1 + $0x158] sm:$0xf]
        %v1284 = vld [vmem:[%s1 + $0x15c] sm:$0xf]
        %v1285 = vld [vmem:[%s1 + $0x160] sm:$0xf]
        %v1286 = vld [vmem:[%s1 + $0x164] sm:$0xf]
        %v1287 = vld [vmem:[%s1 + $0x168] sm:$0xf]
        %v1288 = vld [vmem:[%s1 + $0x16c] sm:$0xf]
        %v1289 = vld [vmem:[%s1 + $0x170] sm:$0xf]
        %v1290 = vld [vmem:[%s1 + $0x174] sm:$0xf]
        %v1291 = vld [vmem:[%s1 + $0x178] sm:$0xf]
        %v1292 = vld [vmem:[%s1 + $0x17c] sm:$0xf]
        %v1293 = vld [vmem:[%s1 + $0x180] sm:$0xf]
        %v1294 = vld [vmem:[%s1 + $0x184] sm:$0xf]
        %v1295 = vld [vmem:[%s1 + $0x188] sm:$0xf]
        %v1296 = vld [vmem:[%s1 + $0x18c] sm:$0xf]
        %v1297 = vld [vmem:[%s1 + $0x190] sm:$0xf]
        %v1298 = vld [vmem:[%s1 + $0x194] sm:$0xf]
        %v1299 = vld [vmem:[%s1 + $0x198] sm:$0xf]
        %v1300 = vld [vmem:[%s1 + $0x19c] sm:$0xf]
        %v1301 = vld [vmem:[%s1 + $0x1a0] sm:$0xf]
        %v1302 = vld [vmem:[%s1 + $0x1a4] sm:$0xf]
        %v1303 = vld [vmem:[%s1 + $0x1a8] sm:$0xf]
        %v1304 = vld [vmem:[%s1 + $0x1ac] sm:$0xf]
        %v1305 = vld [vmem:[#allocation3] sm:$0x1]
        %v1307 = vlaneseq
        %v1308 = vshrl.u32 %v1307, 7
        %v1309 = vsub.s32 0, %v1308
        %v1310 = vrot.slane %v1305, %v1309
        %v1420 = vunpack.c.l.b16 %v1197
        %v1421 = vunpack.c.l.b16 %v1198
        %v1422 = vunpack.c.l.b16 %v1199
        %v1423 = vunpack.c.l.b16 %v1200
        %v1424 = vunpack.c.l.b16 %v1201
        %v1425 = vunpack.c.l.b16 %v1202
        %v1426 = vunpack.c.l.b16 %v1203
        %v1427 = vunpack.c.l.b16 %v1204
        %v1428 = vunpack.c.l.b16 %v1205
        %v1429 = vunpack.c.l.b16 %v1206
        %v1430 = vunpack.c.l.b16 %v1207
        %v1431 = vunpack.c.l.b16 %v1208
        %v1432 = vunpack.c.l.b16 %v1209
        %v1433 = vunpack.c.l.b16 %v1210
        %v1434 = vunpack.c.l.b16 %v1211
        %v1435 = vunpack.c.l.b16 %v1212
        %v1436 = vunpack.c.l.b16 %v1213
        %v1437 = vunpack.c.l.b16 %v1214
        %v1438 = vunpack.c.l.b16 %v1215
        %v1439 = vunpack.c.l.b16 %v1216
        %v1440 = vunpack.c.l.b16 %v1217
        %v1441 = vunpack.c.l.b16 %v1218
        %v1442 = vunpack.c.l.b16 %v1219
        %v1443 = vunpack.c.l.b16 %v1220
        %v1444 = vunpack.c.l.b16 %v1221
        %v1445 = vunpack.c.l.b16 %v1222
        %v1446 = vunpack.c.l.b16 %v1223
        %v1447 = vunpack.c.l.b16 %v1224
        %v1448 = vunpack.c.l.b16 %v1225
        %v1449 = vunpack.c.l.b16 %v1226
        %v1450 = vunpack.c.l.b16 %v1227
        %v1451 = vunpack.c.l.b16 %v1228
        %v1452 = vunpack.c.l.b16 %v1229
        %v1453 = vunpack.c.l.b16 %v1230
        %v1454 = vunpack.c.l.b16 %v1231
        %v1455 = vunpack.c.l.b16 %v1232
        %v1456 = vunpack.c.l.b16 %v1233
        %v1457 = vunpack.c.l.b16 %v1234
        %v1458 = vunpack.c.l.b16 %v1235
        %v1459 = vunpack.c.l.b16 %v1236
        %v1460 = vunpack.c.l.b16 %v1237
        %v1461 = vunpack.c.l.b16 %v1238
        %v1462 = vunpack.c.l.b16 %v1239
        %v1463 = vunpack.c.l.b16 %v1240
        %v1464 = vunpack.c.l.b16 %v1241
        %v1465 = vunpack.c.l.b16 %v1242
        %v1466 = vunpack.c.l.b16 %v1243
        %v1467 = vunpack.c.l.b16 %v1244
        %v1468 = vunpack.c.l.b16 %v1245
        %v1469 = vunpack.c.l.b16 %v1246
        %v1470 = vunpack.c.l.b16 %v1247
        %v1471 = vunpack.c.l.b16 %v1248
        %v1472 = vunpack.c.l.b16 %v1249
        %v1473 = vunpack.c.l.b16 %v1250
        %v1474 = vunpack.c.l.b16 %v1251
        %v1475 = vunpack.c.l.b16 %v1252
        %v1476 = vunpack.c.l.b16 %v1253
        %v1477 = vunpack.c.l.b16 %v1254
        %v1478 = vunpack.c.l.b16 %v1255
        %v1479 = vunpack.c.l.b16 %v1256
        %v1480 = vunpack.c.l.b16 %v1257
        %v1481 = vunpack.c.l.b16 %v1258
        %v1482 = vunpack.c.l.b16 %v1259
        %v1483 = vunpack.c.l.b16 %v1260
        %v1484 = vunpack.c.l.b16 %v1261
        %v1485 = vunpack.c.l.b16 %v1262
        %v1486 = vunpack.c.l.b16 %v1263
        %v1487 = vunpack.c.l.b16 %v1264
        %v1488 = vunpack.c.l.b16 %v1265
        %v1489 = vunpack.c.l.b16 %v1266
        %v1490 = vunpack.c.l.b16 %v1267
        %v1491 = vunpack.c.l.b16 %v1268
        %v1492 = vunpack.c.l.b16 %v1269
        %v1493 = vunpack.c.l.b16 %v1270
        %v1494 = vunpack.c.l.b16 %v1271
        %v1495 = vunpack.c.l.b16 %v1272
        %v1496 = vunpack.c.l.b16 %v1273
        %v1497 = vunpack.c.l.b16 %v1274
        %v1498 = vunpack.c.l.b16 %v1275
        %v1499 = vunpack.c.l.b16 %v1276
        %v1500 = vunpack.c.l.b16 %v1277
        %v1501 = vunpack.c.l.b16 %v1278
        %v1502 = vunpack.c.l.b16 %v1279
        %v1503 = vunpack.c.l.b16 %v1280
        %v1504 = vunpack.c.l.b16 %v1281
        %v1505 = vunpack.c.l.b16 %v1282
        %v1506 = vunpack.c.l.b16 %v1283
        %v1507 = vunpack.c.l.b16 %v1284
        %v1508 = vunpack.c.l.b16 %v1285
        %v1509 = vunpack.c.l.b16 %v1286
        %v1510 = vunpack.c.l.b16 %v1287
        %v1511 = vunpack.c.l.b16 %v1288
        %v1512 = vunpack.c.l.b16 %v1289
        %v1513 = vunpack.c.l.b16 %v1290
        %v1514 = vunpack.c.l.b16 %v1291
        %v1515 = vunpack.c.l.b16 %v1292
        %v1516 = vunpack.c.l.b16 %v1293
        %v1517 = vunpack.c.l.b16 %v1294
        %v1518 = vunpack.c.l.b16 %v1295
        %v1519 = vunpack.c.l.b16 %v1296
        %v1520 = vunpack.c.l.b16 %v1297
        %v1521 = vunpack.c.l.b16 %v1298
        %v1522 = vunpack.c.l.b16 %v1299
        %v1523 = vunpack.c.l.b16 %v1300
        %v1524 = vunpack.c.l.b16 %v1301
        %v1525 = vunpack.c.l.b16 %v1302
        %v1526 = vunpack.c.l.b16 %v1303
        %v1527 = vunpack.c.l.b16 %v1304
        %v1528 = vpack.c.b16 %v1421, %v1420
        %v1529 = vpack.c.b16 %v1423, %v1422
        %v1530 = vpack.c.b16 %v1425, %v1424
        %v1531 = vpack.c.b16 %v1427, %v1426
        %v1532 = vpack.c.b16 %v1429, %v1428
        %v1533 = vpack.c.b16 %v1431, %v1430
        %v1534 = vpack.c.b16 %v1433, %v1432
        %v1535 = vpack.c.b16 %v1435, %v1434
        %v1536 = vpack.c.b16 %v1437, %v1436
        %v1537 = vpack.c.b16 %v1439, %v1438
        %v1538 = vpack.c.b16 %v1441, %v1440
        %v1539 = vpack.c.b16 %v1443, %v1442
        %v1540 = vpack.c.b16 %v1445, %v1444
        %v1541 = vpack.c.b16 %v1447, %v1446
        %v1542 = vpack.c.b16 %v1449, %v1448
        %v1543 = vpack.c.b16 %v1451, %v1450
        %v1544 = vpack.c.b16 %v1453, %v1452
        %v1545 = vpack.c.b16 %v1455, %v1454
        %v1546 = vpack.c.b16 %v1457, %v1456
        %v1547 = vpack.c.b16 %v1459, %v1458
        %v1548 = vpack.c.b16 %v1461, %v1460
        %v1549 = vpack.c.b16 %v1463, %v1462
        %v1550 = vpack.c.b16 %v1465, %v1464
        %v1551 = vpack.c.b16 %v1467, %v1466
        %v1552 = vpack.c.b16 %v1469, %v1468
        %v1553 = vpack.c.b16 %v1471, %v1470
        %v1554 = vpack.c.b16 %v1473, %v1472
        %v1555 = vpack.c.b16 %v1475, %v1474
        %v1556 = vpack.c.b16 %v1477, %v1476
        %v1557 = vpack.c.b16 %v1479, %v1478
        %v1558 = vpack.c.b16 %v1481, %v1480
        %v1559 = vpack.c.b16 %v1483, %v1482
        %v1560 = vpack.c.b16 %v1485, %v1484
        %v1561 = vpack.c.b16 %v1487, %v1486
        %v1562 = vpack.c.b16 %v1489, %v1488
        %v1563 = vpack.c.b16 %v1491, %v1490
        %v1564 = vpack.c.b16 %v1493, %v1492
        %v1565 = vpack.c.b16 %v1495, %v1494
        %v1566 = vpack.c.b16 %v1497, %v1496
        %v1567 = vpack.c.b16 %v1499, %v1498
        %v1568 = vpack.c.b16 %v1501, %v1500
        %v1569 = vpack.c.b16 %v1503, %v1502
        %v1570 = vpack.c.b16 %v1505, %v1504
        %v1571 = vpack.c.b16 %v1507, %v1506
        %v1572 = vpack.c.b16 %v1509, %v1508
        %v1573 = vpack.c.b16 %v1511, %v1510
        %v1574 = vpack.c.b16 %v1513, %v1512
        %v1575 = vpack.c.b16 %v1515, %v1514
        %v1576 = vpack.c.b16 %v1517, %v1516
        %v1577 = vpack.c.b16 %v1519, %v1518
        %v1578 = vpack.c.b16 %v1521, %v1520
        %v1579 = vpack.c.b16 %v1523, %v1522
        %v1580 = vpack.c.b16 %v1525, %v1524
        %v1581 = vpack.c.b16 %v1527, %v1526
        %vm1636 = vcmask 785408
        %v1638 = vsel %vm1636, %v1175, 0
        %v1641 = vsel %vm1636, %v1182, 0
        %v1644 = vsel %vm1636, %v1189, 0
        %v1647 = vsel %vm1636, %v1196, 0
        %1649 = vmatprep.subr.bf16.mxu0 0
        %1650 = vmatpush1.bf16.msra.mxu0 %v1528
        %1651 = vmatprep.subr.bf16.mxu0 0
        %1652 = vmatpush1.bf16.msra.mxu0 %v1529
        %1653 = vmatprep.subr.bf16.mxu0 0
        %1654 = vmatpush1.bf16.msra.mxu0 %v1530
        %1655 = vmatprep.subr.bf16.mxu0 0
        %1656 = vmatpush1.bf16.msra.mxu0 %v1531
        %1657 = vmatprep.subr.bf16.mxu0 0
        %1658 = vmatpush1.bf16.msra.mxu0 %v1532
        %1659 = vmatprep.subr.bf16.mxu0 0
        %1660 = vmatpush1.bf16.msra.mxu0 %v1533
        %1661 = vmatprep.subr.bf16.mxu0 0
        %1662 = vmatpush1.bf16.msra.mxu0 %v1534
        %1663 = vmatprep.subr.bf16.mxu0 0
        %1664 = vmatpush1.bf16.msra.mxu0 %v1535
        %1665 = vmatprep.subr.bf16.mxu0 0
        %1666 = vmatpush1.bf16.msra.mxu0 %v1536
        %1667 = vmatprep.subr.bf16.mxu0 0
        %1668 = vmatpush1.bf16.msra.mxu0 %v1537
        %1669 = vmatprep.subr.bf16.mxu0 0
        %1670 = vmatpush1.bf16.msra.mxu0 %v1538
        %1671 = vmatprep.subr.bf16.mxu0 0
        %1672 = vmatpush1.bf16.msra.mxu0 %v1539
        %1673 = vmatprep.subr.bf16.mxu0 0
        %1674 = vmatpush1.bf16.msra.mxu0 %v1540
        %1675 = vmatprep.subr.bf16.mxu0 0
        %1676 = vmatpush1.bf16.msra.mxu0 %v1541
        %1677 = vmatprep.subr.bf16.mxu0 0
        %1678 = vmatpush1.bf16.msra.mxu0 %v1542
        %1679 = vmatprep.subr.bf16.mxu0 0
        %1680 = vmatpush1.bf16.msra.mxu0 %v1543
        %1681 = vmatprep.mubr.bf16.mxu0 %v1170
        %1682 = vmatmul.mubr.bf16.gmra.mrb[0].mxu0 %v1169
        %v1683 = vpop.f32.mrb[0].mxu0
        %v1684 = vadd.f32 %v1310, %v1683
        %v1685 = vpop.f32.mrb[0].mxu0
        %v1686 = vpop.f32.mrb[0].mxu0
        %v1687 = vadd.f32 %v1310, %v1686
        %v1688 = vpop.f32.mrb[0].mxu0
        %1689 = vmatprep.mubr.bf16.mxu0 %v1177
        %1690 = vmatmul.mubr.bf16.gmra.mrb[0].mxu0 %v1176
        %v1691 = vpop.f32.mrb[0].mxu0
        %v1692 = vadd.f32 %v1310, %v1691
        %v1693 = vpop.f32.mrb[0].mxu0
        %v1694 = vpop.f32.mrb[0].mxu0
        %v1695 = vadd.f32 %v1310, %v1694
        %v1696 = vpop.f32.mrb[0].mxu0
        %1697 = vmatprep.mubr.bf16.mxu0 %v1184
        %1698 = vmatmul.mubr.bf16.gmra.mrb[0].mxu0 %v1183
        %v1699 = vpop.f32.mrb[0].mxu0
        %v1700 = vadd.f32 %v1310, %v1699
        %v1701 = vpop.f32.mrb[0].mxu0
        %v1702 = vpop.f32.mrb[0].mxu0
        %v1703 = vadd.f32 %v1310, %v1702
        %v1704 = vpop.f32.mrb[0].mxu0
        %1705 = vmatprep.mubr.bf16.mxu0 %v1191
        %1706 = vmatmul.mubr.bf16.gmra.mrb[0].mxu0 %v1190
        %v1707 = vpop.f32.mrb[0].mxu0
        %v1708 = vadd.f32 %v1310, %v1707
        %v1709 = vpop.f32.mrb[0].mxu0
        %v1710 = vpop.f32.mrb[0].mxu0
        %v1711 = vadd.f32 %v1310, %v1710
        %v1712 = vpop.f32.mrb[0].mxu0
        %1713 = vdwg.mxu0
        %1714 = vmatprep.subr.bf16.mxu0 0
        %1715 = vmatpush1.bf16.msra.mxu0 %v1544
        %1716 = vmatprep.subr.bf16.mxu0 0
        %1717 = vmatpush1.bf16.msra.mxu0 %v1545
        %1718 = vmatprep.subr.bf16.mxu0 0
        %1719 = vmatpush1.bf16.msra.mxu0 %v1546
        %1720 = vmatprep.subr.bf16.mxu0 0
        %1721 = vmatpush1.bf16.msra.mxu0 %v1547
        %1722 = vmatprep.subr.bf16.mxu0 0
        %1723 = vmatpush1.bf16.msra.mxu0 %v1548
        %1724 = vmatprep.subr.bf16.mxu0 0
        %1725 = vmatpush1.bf16.msra.mxu0 %v1549
        %1726 = vmatprep.subr.bf16.mxu0 0
        %1727 = vmatpush1.bf16.msra.mxu0 %v1550
        %1728 = vmatprep.subr.bf16.mxu0 0
        %1729 = vmatpush1.bf16.msra.mxu0 %v1551
        %1730 = vmatprep.subr.bf16.mxu0 0
        %1731 = vmatpush1.bf16.msra.mxu0 %v1552
        %1732 = vmatprep.subr.bf16.mxu0 0
        %1733 = vmatpush1.bf16.msra.mxu0 %v1553
        %1734 = vmatprep.subr.bf16.mxu0 0
        %1735 = vmatpush1.bf16.msra.mxu0 %v1554
        %1736 = vmatprep.subr.bf16.mxu0 0
        %1737 = vmatpush1.bf16.msra.mxu0 %v1555
        %1738 = vmatprep.subr.bf16.mxu0 0
        %1739 = vmatpush1.bf16.msra.mxu0 %v1556
        %1740 = vmatprep.subr.bf16.mxu0 0
        %1741 = vmatpush1.bf16.msra.mxu0 %v1557
        %1742 = vmatprep.subr.bf16.mxu0 0
        %1743 = vmatpush1.bf16.msra.mxu0 %v1558
        %1744 = vmatprep.subr.bf16.mxu0 0
        %1745 = vmatpush1.bf16.msra.mxu0 %v1559
        %1746 = vmatprep.mubr.bf16.mxu0 %v1172
        %1747 = vmatmul.mubr.bf16.gmra.mrb[0].mxu0 %v1171
        %v1748 = vpop.f32.mrb[0].mxu0
        %v1749 = vadd.f32 %v1684, %v1748
        %v1750 = vpop.f32.mrb[0].mxu0
        %v1751 = vpop.f32.mrb[0].mxu0
        %v1752 = vadd.f32 %v1687, %v1751
        %v1753 = vpop.f32.mrb[0].mxu0
        %1754 = vmatprep.mubr.bf16.mxu0 %v1179
        %1755 = vmatmul.mubr.bf16.gmra.mrb[0].mxu0 %v1178
        %v1756 = vpop.f32.mrb[0].mxu0
        %v1757 = vadd.f32 %v1692, %v1756
        %v1758 = vpop.f32.mrb[0].mxu0
        %v1759 = vpop.f32.mrb[0].mxu0
        %v1760 = vadd.f32 %v1695, %v1759
        %v1761 = vpop.f32.mrb[0].mxu0
        %1762 = vmatprep.mubr.bf16.mxu0 %v1186
        %1763 = vmatmul.mubr.bf16.gmra.mrb[0].mxu0 %v1185
        %v1764 = vpop.f32.mrb[0].mxu0
        %v1765 = vadd.f32 %v1700, %v1764
        %v1766 = vpop.f32.mrb[0].mxu0
        %v1767 = vpop.f32.mrb[0].mxu0
        %v1768 = vadd.f32 %v1703, %v1767
        %v1769 = vpop.f32.mrb[0].mxu0
        %1770 = vmatprep.mubr.bf16.mxu0 %v1193
        %1771 = vmatmul.mubr.bf16.gmra.mrb[0].mxu0 %v1192
        %v1772 = vpop.f32.mrb[0].mxu0
        %v1773 = vadd.f32 %v1708, %v1772
        %v1774 = vpop.f32.mrb[0].mxu0
        %v1775 = vpop.f32.mrb[0].mxu0
        %v1776 = vadd.f32 %v1711, %v1775
        %v1777 = vpop.f32.mrb[0].mxu0
        %1778 = vdwg.mxu0
        %1779 = vmatprep.subr.bf16.mxu0 0
        %1780 = vmatpush1.bf16.msra.mxu0 %v1560
        %1781 = vmatprep.subr.bf16.mxu0 0
        %1782 = vmatpush1.bf16.msra.mxu0 %v1561
        %1783 = vmatprep.subr.bf16.mxu0 0
        %1784 = vmatpush1.bf16.msra.mxu0 %v1562
        %1785 = vmatprep.subr.bf16.mxu0 0
        %1786 = vmatpush1.bf16.msra.mxu0 %v1563
        %1787 = vmatprep.subr.bf16.mxu0 0
        %1788 = vmatpush1.bf16.msra.mxu0 %v1564
        %1789 = vmatprep.subr.bf16.mxu0 0
        %1790 = vmatpush1.bf16.msra.mxu0 %v1565
        %1791 = vmatprep.subr.bf16.mxu0 0
        %1792 = vmatpush1.bf16.msra.mxu0 %v1566
        %1793 = vmatprep.subr.bf16.mxu0 0
        %1794 = vmatpush1.bf16.msra.mxu0 %v1567
        %1795 = vmatprep.subr.bf16.mxu0 0
        %1796 = vmatpush1.bf16.msra.mxu0 %v1568
        %1797 = vmatprep.subr.bf16.mxu0 0
        %1798 = vmatpush1.bf16.msra.mxu0 %v1569
        %1799 = vmatprep.subr.bf16.mxu0 0
        %1800 = vmatpush1.bf16.msra.mxu0 %v1570
        %1801 = vmatprep.subr.bf16.mxu0 0
        %1802 = vmatpush1.bf16.msra.mxu0 %v1571
        %1803 = vmatprep.subr.bf16.mxu0 0
        %1804 = vmatpush1.bf16.msra.mxu0 %v1572
        %1805 = vmatprep.subr.bf16.mxu0 0
        %1806 = vmatpush1.bf16.msra.mxu0 %v1573
        %1807 = vmatprep.subr.bf16.mxu0 0
        %1808 = vmatpush1.bf16.msra.mxu0 %v1574
        %1809 = vmatprep.subr.bf16.mxu0 0
        %1810 = vmatpush1.bf16.msra.mxu0 %v1575
        %1811 = vmatprep.mubr.bf16.mxu0 %v1174
        %1812 = vmatmul.mubr.bf16.gmra.mrb[0].mxu0 %v1173
        %v1813 = vpop.f32.mrb[0].mxu0
        %v1814 = vadd.f32 %v1749, %v1813
        %v1815 = vpop.f32.mrb[0].mxu0
        %v1816 = vpop.f32.mrb[0].mxu0
        %v1817 = vadd.f32 %v1752, %v1816
        %v1818 = vpop.f32.mrb[0].mxu0
        %1819 = vmatprep.mubr.bf16.mxu0 %v1181
        %1820 = vmatmul.mubr.bf16.gmra.mrb[0].mxu0 %v1180
        %v1821 = vpop.f32.mrb[0].mxu0
        %v1822 = vadd.f32 %v1757, %v1821
        %v1823 = vpop.f32.mrb[0].mxu0
        %v1824 = vpop.f32.mrb[0].mxu0
        %v1825 = vadd.f32 %v1760, %v1824
        %v1826 = vpop.f32.mrb[0].mxu0
        %1827 = vmatprep.mubr.bf16.mxu0 %v1188
        %1828 = vmatmul.mubr.bf16.gmra.mrb[0].mxu0 %v1187
        %v1829 = vpop.f32.mrb[0].mxu0
        %v1830 = vadd.f32 %v1765, %v1829
        %v1831 = vpop.f32.mrb[0].mxu0
        %v1832 = vpop.f32.mrb[0].mxu0
        %v1833 = vadd.f32 %v1768, %v1832
        %v1834 = vpop.f32.mrb[0].mxu0
        %1835 = vmatprep.mubr.bf16.mxu0 %v1195
        %1836 = vmatmul.mubr.bf16.gmra.mrb[0].mxu0 %v1194
        %v1837 = vpop.f32.mrb[0].mxu0
        %v1838 = vadd.f32 %v1773, %v1837
        %v1839 = vpop.f32.mrb[0].mxu0
        %v1840 = vpop.f32.mrb[0].mxu0
        %v1841 = vadd.f32 %v1776, %v1840
        %v1842 = vpop.f32.mrb[0].mxu0
        %1843 = vdwg.mxu0
        %1844 = vmatprep.subr.bf16.mxu0 0
        %1845 = vmatpush1.bf16.msra.mxu0 %v1576
        %1846 = vmatprep.subr.bf16.mxu0 0
        %1847 = vmatpush1.bf16.msra.mxu0 %v1577
        %1848 = vmatprep.subr.bf16.mxu0 0
        %1849 = vmatpush1.bf16.msra.mxu0 %v1578
        %1850 = vmatprep.subr.bf16.mxu0 0
        %1851 = vmatpush1.bf16.msra.mxu0 %v1579
        %1852 = vmatprep.subr.bf16.mxu0 0
        %1853 = vmatpush1.bf16.msra.mxu0 %v1580
        %1854 = vmatprep.subr.bf16.mxu0 0
        %1855 = vmatpush1.bf16.msra.mxu0 %v1581
        %1856 = vmatprep.subr.bf16.mxu0 0
        %1857 = vmatpush1.bf16.msra.mxu0 0
        %1858 = vmatprep.subr.bf16.mxu0 0
        %1859 = vmatpush1.bf16.msra.mxu0 0
        %1860 = vmatprep.subr.bf16.mxu0 0
        %1861 = vmatpush1.bf16.msra.mxu0 0
        %1862 = vmatprep.subr.bf16.mxu0 0
        %1863 = vmatpush1.bf16.msra.mxu0 0
        %1864 = vmatprep.subr.bf16.mxu0 0
        %1865 = vmatpush1.bf16.msra.mxu0 0
        %1866 = vmatprep.subr.bf16.mxu0 0
        %1867 = vmatpush1.bf16.msra.mxu0 0
        %1868 = vmatprep.subr.bf16.mxu0 0
        %1869 = vmatpush1.bf16.msra.mxu0 0
        %1870 = vmatprep.subr.bf16.mxu0 0
        %1871 = vmatpush1.bf16.msra.mxu0 0
        %1872 = vmatprep.subr.bf16.mxu0 0
        %1873 = vmatpush1.bf16.msra.mxu0 0
        %1874 = vmatprep.subr.bf16.mxu0 0
        %1875 = vmatpush1.bf16.msra.mxu0 0
        %1876 = vmatprep.mubr.bf16.mxu0 0
        %1877 = vmatmul.mubr.bf16.gmra.mrb[0].mxu0 %v1638
        %v1878 = vpop.f32.mrb[0].mxu0
        %v1879 = vadd.f32 %v1814, %v1878
        %v1880 = vpop.f32.mrb[0].mxu0
        %v1881 = vpop.f32.mrb[0].mxu0
        %v1882 = vadd.f32 %v1817, %v1881
        %v1883 = vpop.f32.mrb[0].mxu0
        %1884 = vmatprep.mubr.bf16.mxu0 0
        %1885 = vmatmul.mubr.bf16.gmra.mrb[0].mxu0 %v1641
        %v1886 = vpop.f32.mrb[0].mxu0
        %v1887 = vadd.f32 %v1822, %v1886
        %v1888 = vpop.f32.mrb[0].mxu0
        %v1889 = vpop.f32.mrb[0].mxu0
        %v1890 = vadd.f32 %v1825, %v1889
        %v1891 = vpop.f32.mrb[0].mxu0
        %1892 = vmatprep.mubr.bf16.mxu0 0
        %1893 = vmatmul.mubr.bf16.gmra.mrb[0].mxu0 %v1644
        %v1894 = vpop.f32.mrb[0].mxu0
        %v1895 = vadd.f32 %v1830, %v1894
        %v1896 = vpop.f32.mrb[0].mxu0
        %v1897 = vpop.f32.mrb[0].mxu0
        %v1898 = vadd.f32 %v1833, %v1897
        %v1899 = vpop.f32.mrb[0].mxu0
        %1900 = vmatprep.mubr.bf16.mxu0 0
        %1901 = vmatmul.mubr.bf16.gmra.mrb[0].mxu0 %v1647
        %v1902 = vpop.f32.mrb[0].mxu0
        %v1903 = vadd.f32 %v1838, %v1902
        %v1904 = vpop.f32.mrb[0].mxu0
        %v1905 = vpop.f32.mrb[0].mxu0
        %v1906 = vadd.f32 %v1841, %v1905
        %v1907 = vpop.f32.mrb[0].mxu0
        %1908 = vdwg.mxu0
        %vm1909 = vcmask 523264
        %1910 = vst.msk [vmem:[%s282] sm:$0xff] %vm1909, %v1879
        %1911 = vst.msk [vmem:[%s282 + $0x8] sm:$0xff] %vm1909, %v1882
        %1912 = vst.msk [vmem:[%s282 + $0x10] sm:$0xff] %vm1909, %v1887
        %1913 = vst.msk [vmem:[%s282 + $0x18] sm:$0xff] %vm1909, %v1890
        %1914 = vst.msk [vmem:[%s282 + $0x20] sm:$0xff] %vm1909, %v1895
        %1915 = vst.msk [vmem:[%s282 + $0x28] sm:$0xff] %vm1909, %v1898
        %1916 = vst.msk [vmem:[%s282 + $0x30] sm:$0xff] %vm1909, %v1903
        %1917 = vst.msk [vmem:[%s282 + $0x38] sm:$0xff] %vm1909, %v1906
        %v1918 = vsel %vm1909, %v1879, 0.0
        %v1919 = vsel %vm1909, %v1882, 0.0
        %v1920 = vadd.f32 %v1918, %v1919
        %v1921 = vsel %vm1909, %v1887, 0.0
        %v1922 = vadd.f32 %v1920, %v1921
        %v1923 = vsel %vm1909, %v1890, 0.0
        %v1924 = vadd.f32 %v1922, %v1923
        %v1925 = vsel %vm1909, %v1895, 0.0
        %v1926 = vadd.f32 %v1924, %v1925
        %v1927 = vsel %vm1909, %v1898, 0.0
        %v1928 = vadd.f32 %v1926, %v1927
        %v1929 = vsel %vm1909, %v1903, 0.0
        %v1930 = vadd.f32 %v1928, %v1929
        %v1931 = vsel %vm1909, %v1906, 0.0
        %v1932 = vadd.f32 %v1930, %v1931
        %v1933 = vrot.slane %v1932, 4
        %v1934 = vadd.f32 %v1932, %v1933
        %v1935 = vrot.slane %v1934, 2
        %v1936 = vadd.f32 %v1934, %v1935
        %v1937 = vrot.slane %v1936, 1
        %v1938 = vadd.f32 %v1936, %v1937
        %vm1939 = vcmask 516096
        %1940 = vst.msk [vmem:[%s289] sm:$0x1] %vm1939, %v1938
        %v1941 = vmul.f32 %v1879, %v1879
        %v1942 = vmul.f32 %v1882, %v1882
        %v1943 = vmul.f32 %v1887, %v1887
        %v1944 = vmul.f32 %v1890, %v1890
        %v1945 = vmul.f32 %v1895, %v1895
        %v1946 = vmul.f32 %v1898, %v1898
        %v1947 = vmul.f32 %v1903, %v1903
        %v1948 = vmul.f32 %v1906, %v1906
        %v1949 = vsel %vm1909, %v1941, 0.0
        %v1950 = vsel %vm1909, %v1942, 0.0
        %v1951 = vadd.f32 %v1949, %v1950
        %v1952 = vsel %vm1909, %v1943, 0.0
        %v1953 = vadd.f32 %v1951, %v1952
        %v1954 = vsel %vm1909, %v1944, 0.0
        %v1955 = vadd.f32 %v1953, %v1954
        %v1956 = vsel %vm1909, %v1945, 0.0
        %v1957 = vadd.f32 %v1955, %v1956
        %v1958 = vsel %vm1909, %v1946, 0.0
        %v1959 = vadd.f32 %v1957, %v1958
        %v1960 = vsel %vm1909, %v1947, 0.0
        %v1961 = vadd.f32 %v1959, %v1960
        %v1962 = vsel %vm1909, %v1948, 0.0
        %v1963 = vadd.f32 %v1961, %v1962
        %v1964 = vrot.slane %v1963, 4
        %v1965 = vadd.f32 %v1963, %v1964
        %v1966 = vrot.slane %v1965, 2
        %v1967 = vadd.f32 %v1965, %v1966
        %v1968 = vrot.slane %v1967, 1
        %v1969 = vadd.f32 %v1967, %v1968
        %1970 = vst.msk [vmem:[%s296] sm:$0x1] %vm1939, %v1969
        %p1971 = scmp.lt.s32.totalorder %s22, 1
        %s1972 = scalar_select %p1971, %s22, 1
        %p1973 = scmp.lt.s32.totalorder %s23, 3
        %s1974 = scalar_select %p1973, %s23, 3
        %s1975 = smul.addr %s1974, 8
        %s1976 = smul.addr %s1972, 32
        %s1977 = sadd.s32 %s1975, %s1976
        %s1978 = smul.addr %s1977, 8
        %s1979 = scalar_lea.vmem %s3, %s1978
        %p1980 = scmp.lt.s32.totalorder %s22, 1
        %s1981 = scalar_select %p1980, %s22, 1
        %p1982 = scmp.lt.s32.totalorder %s23, 3
        %s1983 = scalar_select %p1982, %s23, 3
        %s1984 = smul.addr %s1981, 4
        %s1985 = sadd.s32 %s1983, %s1984
        %s1986 = scalar_lea.vmem %s4, %s1985
        %p1987 = scmp.lt.s32.totalorder %s22, 1
        %s1988 = scalar_select %p1987, %s22, 1
        %p1989 = scmp.lt.s32.totalorder %s23, 3
        %s1990 = scalar_select %p1989, %s23, 3
        %s1991 = smul.addr %s1988, 4
        %s1992 = sadd.s32 %s1990, %s1991
        %s1993 = scalar_lea.vmem %s5, %s1992
        // Predicated region
        $region37: #{transformer3d_forward.8} parent=31 // pred_check
          %p1994 = pneg %p118
        $region38: #{transformer3d_forward.8} parent=31 // pred_check_branch
          %1996 = sbr.rel (%p1994) target = $region40
        $region39: #{transformer3d_forward.8} parent=31 // pred_region
          _
        $region40: #{transformer3d_forward.8} parent=31 // pred_fallthru
          _
        // Predicated region
        $region41: #{transformer3d_forward.8} parent=31 // pred_check
          %p1997 = pneg %p146
        $region42: #{transformer3d_forward.8} parent=31 // pred_check_branch
          %1999 = sbr.rel (%p1997) target = $region44
        $region43: #{transformer3d_forward.8} parent=31 // pred_region
          _
        $region44: #{transformer3d_forward.8} parent=31 // pred_fallthru
          _
        // Predicated region
        $region45: #{transformer3d_forward.8} parent=31 // pred_check
          %p2000 = pneg %p174
        $region46: #{transformer3d_forward.8} parent=31 // pred_check_branch
          %2002 = sbr.rel (%p2000) target = $region48
        $region47: #{transformer3d_forward.8} parent=31 // pred_region
          _
        $region48: #{transformer3d_forward.8} parent=31 // pred_fallthru
          _
      $region32: #{transformer3d_forward.8} parent=5 // pred_fallthru
        _
      %p2003 = scmp.le.s32.totalorder 2, %s13
      // Predicated region
      $region49: #{transformer3d_forward.8} parent=5 // pred_check
        %p2004 = pneg %p2003
      $region50: #{transformer3d_forward.8} parent=5 // pred_check_branch
        %2006 = sbr.rel (%p2004) target = $region52
      $region51: #{transformer3d_forward.8} parent=5 // pred_region
        %s2007 = ssub.s32 %s13, 2
        // Predicated region
        $region53: #{transformer3d_forward.8} parent=51 // pred_check
          %p2008 = pneg %p124
        $region54: #{transformer3d_forward.8} parent=51 // pred_check_branch
          %2010 = sbr.rel (%p2008) target = $region56
        $region55: #{transformer3d_forward.8} parent=51 // pred_region
          %p2011 = scmp.lt.s32.totalorder %s24, 1
          %s2012 = scalar_select %p2011, %s24, 1
          %p2013 = scmp.lt.s32.totalorder %s25, 3
          %s2014 = scalar_select %p2013, %s25, 3
          %s2015 = smul.addr %s2014, 8
          %s2016 = smul.addr %s2012, 32
          %s2017 = sadd.s32 %s2015, %s2016
          %s2018 = smul.addr %s2017, 8
          %s2019 = scalar_lea.vmem %s3, %s2018
        $region56: #{transformer3d_forward.8} parent=51 // pred_fallthru
          _
        // Predicated region
        $region57: #{transformer3d_forward.8} parent=51 // pred_check
          %p2020 = pneg %p152
        $region58: #{transformer3d_forward.8} parent=51 // pred_check_branch
          %2022 = sbr.rel (%p2020) target = $region60
        $region59: #{transformer3d_forward.8} parent=51 // pred_region
          %p2023 = scmp.lt.s32.totalorder %s24, 1
          %s2024 = scalar_select %p2023, %s24, 1
          %p2025 = scmp.lt.s32.totalorder %s25, 3
          %s2026 = scalar_select %p2025, %s25, 3
          %s2027 = smul.addr %s2024, 4
          %s2028 = sadd.s32 %s2026, %s2027
          %s2029 = scalar_lea.vmem %s4, %s2028
        $region60: #{transformer3d_forward.8} parent=51 // pred_fallthru
          _
        // Predicated region
        $region61: #{transformer3d_forward.8} parent=51 // pred_check
          %p2030 = pneg %p180
        $region62: #{transformer3d_forward.8} parent=51 // pred_check_branch
          %2032 = sbr.rel (%p2030) target = $region64
        $region63: #{transformer3d_forward.8} parent=51 // pred_region
          %p2033 = scmp.lt.s32.totalorder %s24, 1
          %s2034 = scalar_select %p2033, %s24, 1
          %p2035 = scmp.lt.s32.totalorder %s25, 3
          %s2036 = scalar_select %p2035, %s25, 3
          %s2037 = smul.addr %s2034, 4
          %s2038 = sadd.s32 %s2036, %s2037
          %s2039 = scalar_lea.vmem %s5, %s2038
        $region64: #{transformer3d_forward.8} parent=51 // pred_fallthru
          _
      $region52: #{transformer3d_forward.8} parent=5 // pred_fallthru
        _
    $region6: #{transformer3d_forward.8} parent=1 // loop_footer
      %s17 = sadd.s32 1, %s13
    $region7: #{transformer3d_forward.8} parent=1 // loop_footer_branch
      %12 = sbr.rel target = $region3
    $region8: #{transformer3d_forward.8} parent=1 // loop_exit
      _
    %2040 = vsyncpa [#allocation4], 1
    %s2041 = scalar_lea.sflag [#allocation4], 1
    %2042 = vsyncpa %s2041, 1

// kernel: tile.14
$region0: #{tile.14}
  #allocation0 [shape = 's32[1]{0}', space=sflag, size = 0x4, scoped, tag = 'scoped memory for tile.14']
  %s0 = inlined_call_operand.vmem [shape: f32[128], index: 0, kind: input, shape index: {}]
  %s1 = inlined_call_operand.vmem [shape: f32[256,128], index: 1, kind: output, shape index: {}]
  // Predicated region
  $region2: #{tile.14} parent=0 // pred_check
    _
  $region3: #{tile.14} parent=0 // pred_check_branch
    %3 = sbr.rel (0) target = $region5
  $region4: #{tile.14} parent=0 // pred_region
    _
  $region5: #{tile.14} parent=0 // pred_fallthru
    _
  %v4 = vld [vmem:[%s0] ss:$0 sm:$0xff]
  %5 = vst [vmem:[%s1] sm:$0xff] %v4
  %s6 = scalar_lea.vmem %s1, 8
  %7 = vst [vmem:[%s6] sm:$0xff] %v4
  %s8 = scalar_lea.vmem %s1, 16
  %9 = vst [vmem:[%s8] sm:$0xff] %v4
  %s10 = scalar_lea.vmem %s1, 24
  %11 = vst [vmem:[%s10] sm:$0xff] %v4
  %s12 = scalar_lea.vmem %s1, 32
  %13 = vst [vmem:[%s12] sm:$0xff] %v4
  %s14 = scalar_lea.vmem %s1, 40
  %15 = vst [vmem:[%s14] sm:$0xff] %v4
  %s16 = scalar_lea.vmem %s1, 48
  %17 = vst [vmem:[%s16] sm:$0xff] %v4
  %s18 = scalar_lea.vmem %s1, 56
  %19 = vst [vmem:[%s18] sm:$0xff] %v4
  %s20 = scalar_lea.vmem %s1, 64
  %21 = vst [vmem:[%s20] sm:$0xff] %v4
  %s22 = scalar_lea.vmem %s1, 72
  %23 = vst [vmem:[%s22] sm:$0xff] %v4
  %s24 = scalar_lea.vmem %s1, 80
  %25 = vst [vmem:[%s24] sm:$0xff] %v4
  %s26 = scalar_lea.vmem %s1, 88
  %27 = vst [vmem:[%s26] sm:$0xff] %v4
  %s28 = scalar_lea.vmem %s1, 96
  %29 = vst [vmem:[%s28] sm:$0xff] %v4
  %s30 = scalar_lea.vmem %s1, 104
  %31 = vst [vmem:[%s30] sm:$0xff] %v4
  %s32 = scalar_lea.vmem %s1, 112
  %33 = vst [vmem:[%s32] sm:$0xff] %v4
  %s34 = scalar_lea.vmem %s1, 120
  %35 = vst [vmem:[%s34] sm:$0xff] %v4
  %s36 = scalar_lea.vmem %s1, 128
  %37 = vst [vmem:[%s36] sm:$0xff] %v4
  %s38 = scalar_lea.vmem %s1, 136
  %39 = vst [vmem:[%s38] sm:$0xff] %v4
  %s40 = scalar_lea.vmem %s1, 144
  %41 = vst [vmem:[%s40] sm:$0xff] %v4
  %s42 = scalar_lea.vmem %s1, 152
  %43 = vst [vmem:[%s42] sm:$0xff] %v4
  %s44 = scalar_lea.vmem %s1, 160
  %45 = vst [vmem:[%s44] sm:$0xff] %v4
  %s46 = scalar_lea.vmem %s1, 168
  %47 = vst [vmem:[%s46] sm:$0xff] %v4
  %s48 = scalar_lea.vmem %s1, 176
  %49 = vst [vmem:[%s48] sm:$0xff] %v4
  %s50 = scalar_lea.vmem %s1, 184
  %51 = vst [vmem:[%s50] sm:$0xff] %v4
  %s52 = scalar_lea.vmem %s1, 192
  %53 = vst [vmem:[%s52] sm:$0xff] %v4
  %s54 = scalar_lea.vmem %s1, 200
  %55 = vst [vmem:[%s54] sm:$0xff] %v4
  %s56 = scalar_lea.vmem %s1, 208
  %57 = vst [vmem:[%s56] sm:$0xff] %v4
  %s58 = scalar_lea.vmem %s1, 216
  %59 = vst [vmem:[%s58] sm:$0xff] %v4
  %s60 = scalar_lea.vmem %s1, 224
  %61 = vst [vmem:[%s60] sm:$0xff] %v4
  %s62 = scalar_lea.vmem %s1, 232
  %63 = vst [vmem:[%s62] sm:$0xff] %v4
  %s64 = scalar_lea.vmem %s1, 240
  %65 = vst [vmem:[%s64] sm:$0xff] %v4
  %s66 = scalar_lea.vmem %s1, 248
  %67 = vst [vmem:[%s66] sm:$0xff] %v4

// kernel: transformer3d_forward.10
$region0: #{transformer3d_forward.10}
  #allocation0 [shape = 'u32[]', space=smem, size = 0x4, offset = 0x4, fixed_abs, tag = 'smem constant byte address 0x4 - core index']
  #allocation1 [shape = 'u32[144,128]{1,0:T(1,128)}', space=vmem, size = 0x12000, scoped, tag = 'internal scratch']
  #allocation2 [shape = 'bf16[64,1728]{1,0:T(16,128)(2,1)}', space=vmem, size = 0x38000, scoped, tag = 'scratch operand']
  %s0 = inlined_call_operand.vmem [shape: f32[2,6,10,10,64], index: 0, kind: input, shape index: {}]
  %s1 = inlined_call_operand.hbm [shape: bf16[1728,128], index: 1, kind: input, shape index: {}]
  %s2 = inlined_call_operand.hbm [shape: f32[1,128], index: 2, kind: input, shape index: {}]
  %s3 = inlined_call_operand.vmem [shape: f32[2,4,8,8,128], index: 3, kind: output, shape index: {0}]
  %s4 = inlined_call_operand.vmem [shape: f32[2,4,1,128], index: 4, kind: output, shape index: {1}]
  %s5 = inlined_call_operand.vmem [shape: f32[2,4,1,128], index: 5, kind: output, shape index: {2}]
  %6 = xla_tuple %s3, %s4, %s5
  %s7 = sld [smem:[#allocation0]]
  $region69: #{transformer3d_forward.10} parent=0
    _
  %s9 = ssub.s32 1, %s7
  %s10 = scalar_select 0, %s9, %s7
  $region1: #{transformer3d_forward.10} parent=0
    #allocation3 [shape = 'u8[442368]{0}', space=vmem, size = 0x6c000, scoped, tag = 'input window, operand 1, single buffered']
    #allocation4 [shape = 's32[2]{0}', space=sflag, size = 0x8, scoped, tag = 'scoped memory for transformer3d_forward.10']
    #allocation5 [shape = 'u8[512]{0}', space=vmem, size = 0x400, scoped, tag = 'input window, operand 2, single buffered']
    #allocation6 [shape = 's32[1]{0}', space=sflag, size = 0x4, scoped, tag = 'scoped memory for transformer3d_forward.10']
    %11 = vsyncpa [#allocation4], 0
    %12 = vsyncpa [#allocation6], 0
    loop: start=0, step=1, limit=10
    $region2: #{transformer3d_forward.10} parent=1 // loop_pre_header
      _
    $region3: #{transformer3d_forward.10} parent=1 // loop_header
      %s14 = sphi 0, %s18
      %p15 = scmp.ge.s32.totalorder %s14, 10
      %s21 = sphi 0, %s33
      %s22 = sphi 0, %s29
      %s23 = sphi 0, %s21
      %s24 = sphi 0, %s22
      %s25 = sphi 0, %s23
      %s26 = sphi 0, %s24
      %s36 = sphi 0, %s38
      %s39 = sphi 0, %s36
      %s40 = sphi 0, %s39
      %s56 = sphi 0, %s40
      %s60 = sphi 0, %s60
      %s62 = sphi 0, %s60
      %s63 = sphi 0, %s62
      %s77 = sphi 0, %s63
      %s81 = sphi 0, %s81
      %s83 = sphi 0, %s81
      %s84 = sphi 0, %s83
      %s98 = sphi 0, %s84
      %s106 = sphi 0, %s108
      %s109 = sphi 0, %s106
      %s110 = sphi 0, %s109
      %s126 = sphi 0, %s110
      %s134 = sphi 0, %s136
      %s137 = sphi 0, %s134
      %s138 = sphi 0, %s137
      %s154 = sphi 0, %s138
      %s162 = sphi 0, %s164
      %s165 = sphi 0, %s162
      %s166 = sphi 0, %s165
      %s182 = sphi 0, %s166
    $region4: #{transformer3d_forward.10} parent=1 // loop_header_branch
      %17 = sbr.rel (%p15) target = $region8
    $region5: #{transformer3d_forward.10} parent=1 // loop_body
      %s19 = ssub.s32 %s14, 1
      %s20 = ssub.s32 %s14, 2
      %s27 = sadd.s32 1, %s22
      %p28 = scmp.ge.s32.totalorder %s27, 4
      %s29 = scalar_select %p28, 0, %s27
      %s30 = sadd.s32 1, %s21
      %s31 = scalar_select %p28, %s30, %s21
      %p32 = scmp.ge.s32.totalorder %s31, 2
      %s33 = scalar_select %p32, 0, %s31
      %s34 = ssub.s32 %s21, %s33
      %p35 = scmp.eq.s32.totalorder %s34, 0
      %s37 = sadd.s32 %s36, 1
      %s38 = scalar_select %p35, %s36, %s37
      %p41 = pneg %p35
      %p42 = scmp.eq.s32.totalorder %s14, 7
      %p43 = por %p41, %p42
      %p44 = scmp.ne.s32.totalorder %s36, %s39
      %p45 = scmp.eq.s32.totalorder %s14, 0
      %p46 = por %p44, %p45
      %p47 = scmp.ne.s32.totalorder %s36, %s39
      %p48 = scmp.eq.s32.totalorder %s19, 7
      %p49 = por %p47, %p48
      %p50 = scmp.ne.s32.totalorder %s39, %s40
      %p51 = scmp.eq.s32.totalorder %s19, 0
      %p52 = por %p50, %p51
      %p53 = scmp.ne.s32.totalorder %s39, %s40
      %p54 = scmp.eq.s32.totalorder %s20, 7
      %p55 = por %p53, %p54
      %p57 = scmp.ne.s32.totalorder %s40, %s56
      %p58 = scmp.eq.s32.totalorder %s20, 0
      %p59 = por %p57, %p58
      %s61 = sadd.s32 %s60, 1
      %p64 = scmp.eq.s32.totalorder %s14, 7
      %p65 = scmp.ne.s32.totalorder %s60, %s62
      %p66 = scmp.eq.s32.totalorder %s14, 0
      %p67 = por %p65, %p66
      %p68 = scmp.ne.s32.totalorder %s60, %s62
      %p69 = scmp.eq.s32.totalorder %s19, 7
      %p70 = por %p68, %p69
      %p71 = scmp.ne.s32.totalorder %s62, %s63
      %p72 = scmp.eq.s32.totalorder %s19, 0
      %p73 = por %p71, %p72
      %p74 = scmp.ne.s32.totalorder %s62, %s63
      %p75 = scmp.eq.s32.totalorder %s20, 7
      %p76 = por %p74, %p75
      %p78 = scmp.ne.s32.totalorder %s63, %s77
      %p79 = scmp.eq.s32.totalorder %s20, 0
      %p80 = por %p78, %p79
      %s82 = sadd.s32 %s81, 1
      %p85 = scmp.eq.s32.totalorder %s14, 7
      %p86 = scmp.ne.s32.totalorder %s81, %s83
      %p87 = scmp.eq.s32.totalorder %s14, 0
      %p88 = por %p86, %p87
      %p89 = scmp.ne.s32.totalorder %s81, %s83
      %p90 = scmp.eq.s32.totalorder %s19, 7
      %p91 = por %p89, %p90
      %p92 = scmp.ne.s32.totalorder %s83, %s84
      %p93 = scmp.eq.s32.totalorder %s19, 0
      %p94 = por %p92, %p93
      %p95 = scmp.ne.s32.totalorder %s83, %s84
      %p96 = scmp.eq.s32.totalorder %s20, 7
      %p97 = por %p95, %p96
      %p99 = scmp.ne.s32.totalorder %s84, %s98
      %p100 = scmp.eq.s32.totalorder %s20, 0
      %p101 = por %p99, %p100
      %s102 = ssub.s32 %s21, %s33
      %s103 = ssub.s32 %s22, %s29
      %s104 = sor.u32 %s102, %s103
      %p105 = scmp.eq.s32.totalorder %s104, 0
      %s107 = sadd.s32 %s106, 1
      %s108 = scalar_select %p105, %s106, %s107
      %p111 = pneg %p105
      %p112 = scmp.eq.s32.totalorder %s14, 7
      %p113 = por %p111, %p112
      %p114 = scmp.ne.s32.totalorder %s106, %s109
      %p115 = scmp.eq.s32.totalorder %s14, 0
      %p116 = por %p114, %p115
      %p117 = scmp.ne.s32.totalorder %s106, %s109
      %p118 = scmp.eq.s32.totalorder %s19, 7
      %p119 = por %p117, %p118
      %p120 = scmp.ne.s32.totalorder %s109, %s110
      %p121 = scmp.eq.s32.totalorder %s19, 0
      %p122 = por %p120, %p121
      %p123 = scmp.ne.s32.totalorder %s109, %s110
      %p124 = scmp.eq.s32.totalorder %s20, 7
      %p125 = por %p123, %p124
      %p127 = scmp.ne.s32.totalorder %s110, %s126
      %p128 = scmp.eq.s32.totalorder %s20, 0
      %p129 = por %p127, %p128
      %s130 = ssub.s32 %s21, %s33
      %s131 = ssub.s32 %s22, %s29
      %s132 = sor.u32 %s130, %s131
      %p133 = scmp.eq.s32.totalorder %s132, 0
      %s135 = sadd.s32 %s134, 1
      %s136 = scalar_select %p133, %s134, %s135
      %p139 = pneg %p133
      %p140 = scmp.eq.s32.totalorder %s14, 7
      %p141 = por %p139, %p140
      %p142 = scmp.ne.s32.totalorder %s134, %s137
      %p143 = scmp.eq.s32.totalorder %s14, 0
      %p144 = por %p142, %p143
      %p145 = scmp.ne.s32.totalorder %s134, %s137
      %p146 = scmp.eq.s32.totalorder %s19, 7
      %p147 = por %p145, %p146
      %p148 = scmp.ne.s32.totalorder %s137, %s138
      %p149 = scmp.eq.s32.totalorder %s19, 0
      %p150 = por %p148, %p149
      %p151 = scmp.ne.s32.totalorder %s137, %s138
      %p152 = scmp.eq.s32.totalorder %s20, 7
      %p153 = por %p151, %p152
      %p155 = scmp.ne.s32.totalorder %s138, %s154
      %p156 = scmp.eq.s32.totalorder %s20, 0
      %p157 = por %p155, %p156
      %s158 = ssub.s32 %s21, %s33
      %s159 = ssub.s32 %s22, %s29
      %s160 = sor.u32 %s158, %s159
      %p161 = scmp.eq.s32.totalorder %s160, 0
      %s163 = sadd.s32 %s162, 1
      %s164 = scalar_select %p161, %s162, %s163
      %p167 = pneg %p161
      %p168 = scmp.eq.s32.totalorder %s14, 7
      %p169 = por %p167, %p168
      %p170 = scmp.ne.s32.totalorder %s162, %s165
      %p171 = scmp.eq.s32.totalorder %s14, 0
      %p172 = por %p170, %p171
      %p173 = scmp.ne.s32.totalorder %s162, %s165
      %p174 = scmp.eq.s32.totalorder %s19, 7
      %p175 = por %p173, %p174
      %p176 = scmp.ne.s32.totalorder %s165, %s166
      %p177 = scmp.eq.s32.totalorder %s19, 0
      %p178 = por %p176, %p177
      %p179 = scmp.ne.s32.totalorder %s165, %s166
      %p180 = scmp.eq.s32.totalorder %s20, 7
      %p181 = por %p179, %p180
      %p183 = scmp.ne.s32.totalorder %s166, %s182
      %p184 = scmp.eq.s32.totalorder %s20, 0
      %p185 = por %p183, %p184
      %p186 = scmp.le.s32.totalorder 1, %s14
      %p187 = scmp.lt.s32.totalorder %s14, 9
      %p188 = pnand %p186, %p187
      %p189 = pneg %p188
      // Predicated region
      $region9: #{transformer3d_forward.10} parent=5 // pred_check
        _
      $region10: #{transformer3d_forward.10} parent=5 // pred_check_branch
        %191 = sbr.rel (%p188) target = $region12
      $region11: #{transformer3d_forward.10} parent=5 // pred_region
        %s192 = ssub.s32 %s14, 1
        // Predicated region
        $region13: #{transformer3d_forward.10} parent=11 // pred_check
          %p193 = pneg %p73
        $region14: #{transformer3d_forward.10} parent=11 // pred_check_branch
          %195 = sbr.rel (%p193) target = $region16
        $region15: #{transformer3d_forward.10} parent=11 // pred_region
          %s197 = ssub.s32 13824, 13824
          %198 = vsyncadd [#allocation4], %s197
          %s199 = sshll.u32 [#allocation3], 4
          %s200 = int_to_ptr.vmem [resolvable:$true] %s199
          %205 = dma.hbm_to_vmem [thread:$0]  %s1, 13824, %s200, [#allocation4], 64, 64, 4
        $region16: #{transformer3d_forward.10} parent=11 // pred_fallthru
          _
        // Predicated region
        $region17: #{transformer3d_forward.10} parent=11 // pred_check
          %p206 = pneg %p94
        $region18: #{transformer3d_forward.10} parent=11 // pred_check_branch
          %208 = sbr.rel (%p206) target = $region20
        $region19: #{transformer3d_forward.10} parent=11 // pred_region
          %s210 = ssub.s32 16, 16
          %211 = vsyncadd [#allocation6], %s210
          %s213 = sshll.u32 [#allocation5], 4
          %s214 = int_to_ptr.vmem [resolvable:$true] %s213
          %216 = dma.hbm_to_vmem [thread:$0]  %s2, 16, %s214, [#allocation6]
        $region20: #{transformer3d_forward.10} parent=11 // pred_fallthru
          _
      $region12: #{transformer3d_forward.10} parent=5 // pred_fallthru
        _
      %p217 = scmp.lt.s32.totalorder %s14, 8
      // Predicated region
      $region21: #{transformer3d_forward.10} parent=5 // pred_check
        %p218 = pneg %p217
      $region22: #{transformer3d_forward.10} parent=5 // pred_check_branch
        %220 = sbr.rel (%p218) target = $region24
      $region23: #{transformer3d_forward.10} parent=5 // pred_region
        // Predicated region
        $region25: #{transformer3d_forward.10} parent=23 // pred_check
          %p221 = pneg %p46
        $region26: #{transformer3d_forward.10} parent=23 // pred_check_branch
          %223 = sbr.rel (%p221) target = $region28
        $region27: #{transformer3d_forward.10} parent=23 // pred_region
          %p224 = scmp.lt.s32.totalorder %s21, 1
          %s225 = scalar_select %p224, %s21, 1
          %s226 = smul.addr %s225, 120
          %s227 = smul.addr %s226, 8
          %s228 = scalar_lea.vmem %s0, %s227
        $region28: #{transformer3d_forward.10} parent=23 // pred_fallthru
          _
      $region24: #{transformer3d_forward.10} parent=5 // pred_fallthru
        _
      %p229 = scmp.le.s32.totalorder 1, %s14
      %p230 = scmp.lt.s32.totalorder %s14, 9
      %p231 = pnand %p229, %p230
      %p232 = pneg %p231
      // Predicated region
      $region29: #{transformer3d_forward.10} parent=5 // pred_check
        _
      $region30: #{transformer3d_forward.10} parent=5 // pred_check_branch
        %234 = sbr.rel (%p231) target = $region32
      $region31: #{transformer3d_forward.10} parent=5 // pred_region
        %s235 = ssub.s32 %s14, 1
        // Predicated region
        $region33: #{transformer3d_forward.10} parent=31 // pred_check
          %p236 = pneg %p73
        $region34: #{transformer3d_forward.10} parent=31 // pred_check_branch
          %238 = sbr.rel (%p236) target = $region36
        $region35: #{transformer3d_forward.10} parent=31 // pred_region
          %239 = dma.done [#allocation4], 13824
        $region36: #{transformer3d_forward.10} parent=31 // pred_fallthru
          _
        // Predicated region
        $region37: #{transformer3d_forward.10} parent=31 // pred_check
          %p240 = pneg %p94
        $region38: #{transformer3d_forward.10} parent=31 // pred_check_branch
          %242 = sbr.rel (%p240) target = $region40
        $region39: #{transformer3d_forward.10} parent=31 // pred_region
          %243 = dma.done [#allocation6], 16
        $region40: #{transformer3d_forward.10} parent=31 // pred_fallthru
          _
        %p244 = scmp.lt.s32.totalorder %s23, 1
        %s245 = scalar_select %p244, %s23, 1
        %s246 = smul.addr %s245, 120
        %s247 = smul.addr %s246, 8
        %s248 = scalar_lea.vmem %s0, %s247
        %p249 = pneg %p52
        %p250 = pneg %p49
        %p251 = pneg %p73
        %p252 = pneg %p70
        %p253 = pneg %p94
        %p254 = pneg %p91
        %p255 = pneg %p122
        %p256 = pneg %p119
        %p257 = scmp.lt.s32.totalorder %s23, 1
        %s258 = scalar_select %p257, %s23, 1
        %p259 = scmp.lt.s32.totalorder %s24, 3
        %s260 = scalar_select %p259, %s24, 3
        %s261 = smul.addr %s260, 8
        %s262 = smul.addr %s258, 32
        %s263 = sadd.s32 %s261, %s262
        %s264 = smul.addr %s263, 8
        %s265 = scalar_lea.vmem %s3, %s264
        %p266 = pneg %p150
        %p267 = pneg %p147
        %p268 = scmp.lt.s32.totalorder %s23, 1
        %s269 = scalar_select %p268, %s23, 1
        %p270 = scmp.lt.s32.totalorder %s24, 3
        %s271 = scalar_select %p270, %s24, 3
        %s272 = smul.addr %s269, 4
        %s273 = sadd.s32 %s271, %s272
        %s274 = scalar_lea.vmem %s4, %s273
        %p275 = pneg %p178
        %p276 = pneg %p175
        %p277 = scmp.lt.s32.totalorder %s23, 1
        %s278 = scalar_select %p277, %s23, 1
        %p279 = scmp.lt.s32.totalorder %s24, 3
        %s280 = scalar_select %p279, %s24, 3
        %s281 = smul.addr %s278, 4
        %s282 = sadd.s32 %s280, %s281
        %s283 = scalar_lea.vmem %s5, %s282
        %p284 = scmp.lt.s32.totalorder %s23, 1
        %s285 = scalar_select %p284, %s23, 1
        %s286 = smul.addr %s285, 120
        %s287 = smul.addr %s286, 8
        %s288 = scalar_lea.vmem %s0, %s287
        %p289 = scmp.lt.s32.totalorder %s23, 1
        %s290 = scalar_select %p289, %s23, 1
        %p291 = scmp.lt.s32.totalorder %s24, 3
        %s292 = scalar_select %p291, %s24, 3
        %s293 = smul.addr %s292, 8
        %s294 = smul.addr %s290, 32
        %s295 = sadd.s32 %s293, %s294
        %s296 = smul.addr %s295, 8
        %s297 = scalar_lea.vmem %s3, %s296
        %p298 = scmp.lt.s32.totalorder %s23, 1
        %s299 = scalar_select %p298, %s23, 1
        %p300 = scmp.lt.s32.totalorder %s24, 3
        %s301 = scalar_select %p300, %s24, 3
        %s302 = smul.addr %s299, 4
        %s303 = sadd.s32 %s301, %s302
        %s304 = scalar_lea.vmem %s4, %s303
        %p305 = scmp.lt.s32.totalorder %s23, 1
        %s306 = scalar_select %p305, %s23, 1
        %p307 = scmp.lt.s32.totalorder %s24, 3
        %s308 = scalar_select %p307, %s24, 3
        %s309 = smul.addr %s306, 4
        %s310 = sadd.s32 %s308, %s309
        %s311 = scalar_lea.vmem %s5, %s310
        %s313 = smul.u32 %s24, 160
        %s314 = scalar_lea.vmem %s288, %s313
        %v315 = vld [vmem:[%s314] sm:$0xff]
        %v316 = vld [vmem:[%s314 + $0x8] sm:$0x3]
        %v317 = vld [vmem:[%s314 + $0x10] sm:$0xff]
        %v318 = vld [vmem:[%s314 + $0x18] sm:$0x3]
        %v319 = vld [vmem:[%s314 + $0x20] sm:$0xff]
        %v320 = vld [vmem:[%s314 + $0x28] sm:$0x3]
        %v321 = vld [vmem:[%s314 + $0x30] sm:$0xff]
        %v322 = vld [vmem:[%s314 + $0x38] sm:$0x3]
        %v323 = vld [vmem:[%s314 + $0x40] sm:$0xff]
        %v324 = vld [vmem:[%s314 + $0x48] sm:$0x3]
        %v325 = vld [vmem:[%s314 + $0x50] sm:$0xff]
        %v326 = vld [vmem:[%s314 + $0x58] sm:$0x3]
        %v327 = vld [vmem:[%s314 + $0x60] sm:$0xff]
        %v328 = vld [vmem:[%s314 + $0x68] sm:$0x3]
        %v329 = vld [vmem:[%s314 + $0x70] sm:$0xff]
        %v330 = vld [vmem:[%s314 + $0x78] sm:$0x3]
        %v331 = vld [vmem:[%s314 + $0x80] sm:$0xff]
        %v332 = vld [vmem:[%s314 + $0x88] sm:$0x3]
        %v333 = vld [vmem:[%s314 + $0x90] sm:$0xff]
        %v334 = vld [vmem:[%s314 + $0x98] sm:$0x3]
        %v335 = vpack.c.bf16 %v317, %v315
        %v336 = vpack.c.bf16 %v321, %v319
        %v337 = vpack.c.bf16 %v325, %v323
        %v338 = vpack.c.bf16 %v329, %v327
        %vm339 = vcmask 523264
        %340 = vst.msk [vmem:[#allocation2] sm:$0xff] %vm339, %v335
        %341 = vst.msk [vmem:[#allocation2 + $0x70] sm:$0xff] %vm339, %v336
        %342 = vst.msk [vmem:[#allocation2 + $0xe0] sm:$0xff] %vm339, %v337
        %343 = vst.msk [vmem:[#allocation2 + $0x150] sm:$0xff] %vm339, %v338
        %vm360 = vcmask 1046528
        %v361 = vrot.slane %v315, 1
        %v362 = vrot.slane %v316, 1
        %v363 = vsel %vm360, %v361, %v362
        %v364 = vrot.slane %v317, 1
        %v365 = vrot.slane %v318, 1
        %v366 = vsel %vm360, %v364, %v365
        %v367 = vrot.slane %v319, 1
        %v368 = vrot.slane %v320, 1
        %v369 = vsel %vm360, %v367, %v368
        %v370 = vrot.slane %v321, 1
        %v371 = vrot.slane %v322, 1
        %v372 = vsel %vm360, %v370, %v371
        %v373 = vrot.slane %v323, 1
        %v374 = vrot.slane %v324, 1
        %v375 = vsel %vm360, %v373, %v374
        %v376 = vrot.slane %v325, 1
        %v377 = vrot.slane %v326, 1
        %v378 = vsel %vm360, %v376, %v377
        %v379 = vrot.slane %v327, 1
        %v380 = vrot.slane %v328, 1
        %v381 = vsel %vm360, %v379, %v380
        %v382 = vrot.slane %v329, 1
        %v383 = vrot.slane %v330, 1
        %v384 = vsel %vm360, %v382, %v383
        %v393 = vpack.c.bf16 %v366, %v363
        %v394 = vpack.c.bf16 %v372, %v369
        %v395 = vpack.c.bf16 %v378, %v375
        %v396 = vpack.c.bf16 %v384, %v381
        %401 = vrot.lane.b32.xlu0 %v393, 64
        %v402 = vpop.permute.xlu0 %401
        %403 = vrot.lane.b32.xlu0 %v394, 64
        %v404 = vpop.permute.xlu0 %403
        %405 = vrot.lane.b32.xlu0 %v395, 64
        %v406 = vpop.permute.xlu0 %405
        %407 = vrot.lane.b32.xlu0 %v396, 64
        %v408 = vpop.permute.xlu0 %407
        %vm413 = vcmask 1048064
        %414 = vst.msk [vmem:[#allocation2] sm:$0xff] %vm413, %v402
        %415 = vst.msk [vmem:[#allocation2 + $0x70] sm:$0xff] %vm413, %v404
        %416 = vst.msk [vmem:[#allocation2 + $0xe0] sm:$0xff] %vm413, %v406
        %417 = vst.msk [vmem:[#allocation2 + $0x150] sm:$0xff] %vm413, %v408
        %vm418 = vcmask 1045504
        %v419 = vrot.slane %v315, 2
        %v420 = vrot.slane %v316, 2
        %v421 = vsel %vm418, %v419, %v420
        %v422 = vrot.slane %v317, 2
        %v423 = vrot.slane %v318, 2
        %v424 = vsel %vm418, %v422, %v423
        %v425 = vrot.slane %v319, 2
        %v426 = vrot.slane %v320, 2
        %v427 = vsel %vm418, %v425, %v426
        %v428 = vrot.slane %v321, 2
        %v429 = vrot.slane %v322, 2
        %v430 = vsel %vm418, %v428, %v429
        %v431 = vrot.slane %v323, 2
        %v432 = vrot.slane %v324, 2
        %v433 = vsel %vm418, %v431, %v432
        %v434 = vrot.slane %v325, 2
        %v435 = vrot.slane %v326, 2
        %v436 = vsel %vm418, %v434, %v435
        %v437 = vrot.slane %v327, 2
        %v438 = vrot.slane %v328, 2
        %v439 = vsel %vm418, %v437, %v438
        %v440 = vrot.slane %v329, 2
        %v441 = vrot.slane %v330, 2
        %v442 = vsel %vm418, %v440, %v441
        %v451 = vpack.c.bf16 %v424, %v421
        %v452 = vpack.c.bf16 %v430, %v427
        %v453 = vpack.c.bf16 %v436, %v433
        %v454 = vpack.c.bf16 %v442, %v439
        %455 = vst.msk [vmem:[#allocation2 + $0x8] sm:$0xff] %vm339, %v451
        %456 = vst.msk [vmem:[#allocation2 + $0x78] sm:$0xff] %vm339, %v452
        %457 = vst.msk [vmem:[#allocation2 + $0xe8] sm:$0xff] %vm339, %v453
        %458 = vst.msk [vmem:[#allocation2 + $0x158] sm:$0xff] %vm339, %v454
        %v459 = vpack.c.bf16 %v319, %v317
        %v460 = vpack.c.bf16 %v323, %v321
        %v461 = vpack.c.bf16 %v327, %v325
        %v462 = vpack.c.bf16 %v331, %v329
        %467 = vrot.lane.b32.xlu0 %v459, 64
        %v468 = vpop.permute.xlu0 %467
        %469 = vrot.lane.b32.xlu0 %v460, 64
        %v470 = vpop.permute.xlu0 %469
        %471 = vrot.lane.b32.xlu0 %v461, 64
        %v472 = vpop.permute.xlu0 %471
        %473 = vrot.lane.b32.xlu0 %v462, 64
        %v474 = vpop.permute.xlu0 %473
        %479 = vst.msk [vmem:[#allocation2 + $0x8] sm:$0xff] %vm413, %v468
        %480 = vst.msk [vmem:[#allocation2 + $0x78] sm:$0xff] %vm413, %v470
        %481 = vst.msk [vmem:[#allocation2 + $0xe8] sm:$0xff] %vm413, %v472
        %482 = vst.msk [vmem:[#allocation2 + $0x158] sm:$0xff] %vm413, %v474
        %v485 = vrot.slane %v331, 1
        %v486 = vrot.slane %v332, 1
        %v487 = vsel %vm360, %v485, %v486
        %v489 = vpack.c.bf16 %v369, %v366
        %v490 = vpack.c.bf16 %v375, %v372
        %v491 = vpack.c.bf16 %v381, %v378
        %v492 = vpack.c.bf16 %v487, %v384
        %493 = vst.msk [vmem:[#allocation2 + $0x10] sm:$0xff] %vm339, %v489
        %494 = vst.msk [vmem:[#allocation2 + $0x80] sm:$0xff] %vm339, %v490
        %495 = vst.msk [vmem:[#allocation2 + $0xf0] sm:$0xff] %vm339, %v491
        %496 = vst.msk [vmem:[#allocation2 + $0x160] sm:$0xff] %vm339, %v492
        %v497 = vrot.slane %v331, 2
        %v498 = vrot.slane %v332, 2
        %v499 = vsel %vm418, %v497, %v498
        %v501 = vpack.c.bf16 %v427, %v424
        %v502 = vpack.c.bf16 %v433, %v430
        %v503 = vpack.c.bf16 %v439, %v436
        %v504 = vpack.c.bf16 %v499, %v442
        %509 = vrot.lane.b32.xlu0 %v501, 64
        %v510 = vpop.permute.xlu0 %509
        %511 = vrot.lane.b32.xlu0 %v502, 64
        %v512 = vpop.permute.xlu0 %511
        %513 = vrot.lane.b32.xlu0 %v503, 64
        %v514 = vpop.permute.xlu0 %513
        %515 = vrot.lane.b32.xlu0 %v504, 64
        %v516 = vpop.permute.xlu0 %515
        %521 = vst.msk [vmem:[#allocation2 + $0x10] sm:$0xff] %vm413, %v510
        %522 = vst.msk [vmem:[#allocation2 + $0x80] sm:$0xff] %vm413, %v512
        %523 = vst.msk [vmem:[#allocation2 + $0xf0] sm:$0xff] %vm413, %v514
        %524 = vst.msk [vmem:[#allocation2 + $0x160] sm:$0xff] %vm413, %v516
        %v525 = vpack.c.bf16 %v333, %v331
        %526 = vst.msk [vmem:[#allocation2 + $0x18] sm:$0xff] %vm339, %v336
        %527 = vst.msk [vmem:[#allocation2 + $0x88] sm:$0xff] %vm339, %v337
        %528 = vst.msk [vmem:[#allocation2 + $0xf8] sm:$0xff] %vm339, %v338
        %529 = vst.msk [vmem:[#allocation2 + $0x168] sm:$0xff] %vm339, %v525
        %v532 = vrot.slane %v333, 1
        %v533 = vrot.slane %v334, 1
        %v534 = vsel %vm360, %v532, %v533
        %v536 = vpack.c.bf16 %v534, %v487
        %538 = vrot.lane.b32.xlu0 %v536, 64
        %v539 = vpop.permute.xlu0 %538
        %541 = vst.msk [vmem:[#allocation2 + $0x18] sm:$0xff] %vm413, %v404
        %542 = vst.msk [vmem:[#allocation2 + $0x88] sm:$0xff] %vm413, %v406
        %543 = vst.msk [vmem:[#allocation2 + $0xf8] sm:$0xff] %vm413, %v408
        %544 = vst.msk [vmem:[#allocation2 + $0x168] sm:$0xff] %vm413, %v539
        %v545 = vrot.slane %v333, 2
        %v546 = vrot.slane %v334, 2
        %v547 = vsel %vm418, %v545, %v546
        %v549 = vpack.c.bf16 %v547, %v499
        %550 = vst.msk [vmem:[#allocation2 + $0x20] sm:$0xff] %vm339, %v452
        %551 = vst.msk [vmem:[#allocation2 + $0x90] sm:$0xff] %vm339, %v453
        %552 = vst.msk [vmem:[#allocation2 + $0x100] sm:$0xff] %vm339, %v454
        %553 = vst.msk [vmem:[#allocation2 + $0x170] sm:$0xff] %vm339, %v549
        %s554 = sadd.s32 %s24, 1
        %s555 = smul.u32 %s554, 160
        %s556 = scalar_lea.vmem %s288, %s555
        %v557 = vld [vmem:[%s556] sm:$0xff]
        %v558 = vld [vmem:[%s556 + $0x8] sm:$0x3]
        %v559 = vld [vmem:[%s556 + $0x10] sm:$0xff]
        %v560 = vld [vmem:[%s556 + $0x18] sm:$0x3]
        %v561 = vld [vmem:[%s556 + $0x20] sm:$0xff]
        %v562 = vld [vmem:[%s556 + $0x28] sm:$0x3]
        %v563 = vld [vmem:[%s556 + $0x30] sm:$0xff]
        %v564 = vld [vmem:[%s556 + $0x38] sm:$0x3]
        %v565 = vld [vmem:[%s556 + $0x40] sm:$0xff]
        %v566 = vld [vmem:[%s556 + $0x48] sm:$0x3]
        %v567 = vld [vmem:[%s556 + $0x50] sm:$0xff]
        %v568 = vld [vmem:[%s556 + $0x58] sm:$0x3]
        %v569 = vld [vmem:[%s556 + $0x60] sm:$0xff]
        %v570 = vld [vmem:[%s556 + $0x68] sm:$0x3]
        %v571 = vld [vmem:[%s556 + $0x70] sm:$0xff]
        %v572 = vld [vmem:[%s556 + $0x78] sm:$0x3]
        %v573 = vld [vmem:[%s556 + $0x80] sm:$0xff]
        %v574 = vld [vmem:[%s556 + $0x88] sm:$0x3]
        %v575 = vld [vmem:[%s556 + $0x90] sm:$0xff]
        %v576 = vld [vmem:[%s556 + $0x98] sm:$0x3]
        %v577 = vpack.c.bf16 %v559, %v557
        %v578 = vpack.c.bf16 %v563, %v561
        %v579 = vpack.c.bf16 %v567, %v565
        %v580 = vpack.c.bf16 %v571, %v569
        %585 = vrot.lane.b32.xlu0 %v577, 64
        %v586 = vpop.permute.xlu0 %585
        %587 = vrot.lane.b32.xlu0 %v578, 64
        %v588 = vpop.permute.xlu0 %587
        %589 = vrot.lane.b32.xlu0 %v579, 64
        %v590 = vpop.permute.xlu0 %589
        %591 = vrot.lane.b32.xlu0 %v580, 64
        %v592 = vpop.permute.xlu0 %591
        %597 = vst.msk [vmem:[#allocation2 + $0x20] sm:$0xff] %vm413, %v586
        %598 = vst.msk [vmem:[#allocation2 + $0x90] sm:$0xff] %vm413, %v588
        %599 = vst.msk [vmem:[#allocation2 + $0x100] sm:$0xff] %vm413, %v590
        %600 = vst.msk [vmem:[#allocation2 + $0x170] sm:$0xff] %vm413, %v592
        %v617 = vrot.slane %v557, 1
        %v618 = vrot.slane %v558, 1
        %v619 = vsel %vm360, %v617, %v618
        %v620 = vrot.slane %v559, 1
        %v621 = vrot.slane %v560, 1
        %v622 = vsel %vm360, %v620, %v621
        %v623 = vrot.slane %v561, 1
        %v624 = vrot.slane %v562, 1
        %v625 = vsel %vm360, %v623, %v624
        %v626 = vrot.slane %v563, 1
        %v627 = vrot.slane %v564, 1
        %v628 = vsel %vm360, %v626, %v627
        %v629 = vrot.slane %v565, 1
        %v630 = vrot.slane %v566, 1
        %v631 = vsel %vm360, %v629, %v630
        %v632 = vrot.slane %v567, 1
        %v633 = vrot.slane %v568, 1
        %v634 = vsel %vm360, %v632, %v633
        %v635 = vrot.slane %v569, 1
        %v636 = vrot.slane %v570, 1
        %v637 = vsel %vm360, %v635, %v636
        %v638 = vrot.slane %v571, 1
        %v639 = vrot.slane %v572, 1
        %v640 = vsel %vm360, %v638, %v639
        %v649 = vpack.c.bf16 %v622, %v619
        %v650 = vpack.c.bf16 %v628, %v625
        %v651 = vpack.c.bf16 %v634, %v631
        %v652 = vpack.c.bf16 %v640, %v637
        %653 = vst.msk [vmem:[#allocation2 + $0x28] sm:$0xff] %vm339, %v649
        %654 = vst.msk [vmem:[#allocation2 + $0x98] sm:$0xff] %vm339, %v650
        %655 = vst.msk [vmem:[#allocation2 + $0x108] sm:$0xff] %vm339, %v651
        %656 = vst.msk [vmem:[#allocation2 + $0x178] sm:$0xff] %vm339, %v652
        %v657 = vrot.slane %v557, 2
        %v658 = vrot.slane %v558, 2
        %v659 = vsel %vm418, %v657, %v658
        %v660 = vrot.slane %v559, 2
        %v661 = vrot.slane %v560, 2
        %v662 = vsel %vm418, %v660, %v661
        %v663 = vrot.slane %v561, 2
        %v664 = vrot.slane %v562, 2
        %v665 = vsel %vm418, %v663, %v664
        %v666 = vrot.slane %v563, 2
        %v667 = vrot.slane %v564, 2
        %v668 = vsel %vm418, %v666, %v667
        %v669 = vrot.slane %v565, 2
        %v670 = vrot.slane %v566, 2
        %v671 = vsel %vm418, %v669, %v670
        %v672 = vrot.slane %v567, 2
        %v673 = vrot.slane %v568, 2
        %v674 = vsel %vm418, %v672, %v673
        %v675 = vrot.slane %v569, 2
        %v676 = vrot.slane %v570, 2
        %v677 = vsel %vm418, %v675, %v676
        %v678 = vrot.slane %v571, 2
        %v679 = vrot.slane %v572, 2
        %v680 = vsel %vm418, %v678, %v679
        %v689 = vpack.c.bf16 %v662, %v659
        %v690 = vpack.c.bf16 %v668, %v665
        %v691 = vpack.c.bf16 %v674, %v671
        %v692 = vpack.c.bf16 %v680, %v677
        %697 = vrot.lane.b32.xlu0 %v689, 64
        %v698 = vpop.permute.xlu0 %697
        %699 = vrot.lane.b32.xlu0 %v690, 64
        %v700 = vpop.permute.xlu0 %699
        %701 = vrot.lane.b32.xlu0 %v691, 64
        %v702 = vpop.permute.xlu0 %701
        %703 = vrot.lane.b32.xlu0 %v692, 64
        %v704 = vpop.permute.xlu0 %703
        %709 = vst.msk [vmem:[#allocation2 + $0x28] sm:$0xff] %vm413, %v698
        %710 = vst.msk [vmem:[#allocation2 + $0x98] sm:$0xff] %vm413, %v700
        %711 = vst.msk [vmem:[#allocation2 + $0x108] sm:$0xff] %vm413, %v702
        %712 = vst.msk [vmem:[#allocation2 + $0x178] sm:$0xff] %vm413, %v704
        %v713 = vpack.c.bf16 %v561, %v559
        %v714 = vpack.c.bf16 %v565, %v563
        %v715 = vpack.c.bf16 %v569, %v567
        %v716 = vpack.c.bf16 %v573, %v571
        %717 = vst.msk [vmem:[#allocation2 + $0x30] sm:$0xff] %vm339, %v713
        %718 = vst.msk [vmem:[#allocation2 + $0xa0] sm:$0xff] %vm339, %v714
        %719 = vst.msk [vmem:[#allocation2 + $0x110] sm:$0xff] %vm339, %v715
        %720 = vst.msk [vmem:[#allocation2 + $0x180] sm:$0xff] %vm339, %v716
        %v723 = vrot.slane %v573, 1
        %v724 = vrot.slane %v574, 1
        %v725 = vsel %vm360, %v723, %v724
        %v727 = vpack.c.bf16 %v625, %v622
        %v728 = vpack.c.bf16 %v631, %v628
        %v729 = vpack.c.bf16 %v637, %v634
        %v730 = vpack.c.bf16 %v725, %v640
        %735 = vrot.lane.b32.xlu0 %v727, 64
        %v736 = vpop.permute.xlu0 %735
        %737 = vrot.lane.b32.xlu0 %v728, 64
        %v738 = vpop.permute.xlu0 %737
        %739 = vrot.lane.b32.xlu0 %v729, 64
        %v740 = vpop.permute.xlu0 %739
        %741 = vrot.lane.b32.xlu0 %v730, 64
        %v742 = vpop.permute.xlu0 %741
        %747 = vst.msk [vmem:[#allocation2 + $0x30] sm:$0xff] %vm413, %v736
        %748 = vst.msk [vmem:[#allocation2 + $0xa0] sm:$0xff] %vm413, %v738
        %749 = vst.msk [vmem:[#allocation2 + $0x110] sm:$0xff] %vm413, %v740
        %750 = vst.msk [vmem:[#allocation2 + $0x180] sm:$0xff] %vm413, %v742
        %v751 = vrot.slane %v573, 2
        %v752 = vrot.slane %v574, 2
        %v753 = vsel %vm418, %v751, %v752
        %v755 = vpack.c.bf16 %v665, %v662
        %v756 = vpack.c.bf16 %v671, %v668
        %v757 = vpack.c.bf16 %v677, %v674
        %v758 = vpack.c.bf16 %v753, %v680
        %759 = vst.msk [vmem:[#allocation2 + $0x38] sm:$0xff] %vm339, %v755
        %760 = vst.msk [vmem:[#allocation2 + $0xa8] sm:$0xff] %vm339, %v756
        %761 = vst.msk [vmem:[#allocation2 + $0x118] sm:$0xff] %vm339, %v757
        %762 = vst.msk [vmem:[#allocation2 + $0x188] sm:$0xff] %vm339, %v758
        %v763 = vpack.c.bf16 %v575, %v573
        %765 = vrot.lane.b32.xlu0 %v763, 64
        %v766 = vpop.permute.xlu0 %765
        %768 = vst.msk [vmem:[#allocation2 + $0x38] sm:$0xff] %vm413, %v588
        %769 = vst.msk [vmem:[#allocation2 + $0xa8] sm:$0xff] %vm413, %v590
        %770 = vst.msk [vmem:[#allocation2 + $0x118] sm:$0xff] %vm413, %v592
        %771 = vst.msk [vmem:[#allocation2 + $0x188] sm:$0xff] %vm413, %v766
        %v774 = vrot.slane %v575, 1
        %v775 = vrot.slane %v576, 1
        %v776 = vsel %vm360, %v774, %v775
        %v778 = vpack.c.bf16 %v776, %v725
        %779 = vst.msk [vmem:[#allocation2 + $0x40] sm:$0xff] %vm339, %v650
        %780 = vst.msk [vmem:[#allocation2 + $0xb0] sm:$0xff] %vm339, %v651
        %781 = vst.msk [vmem:[#allocation2 + $0x120] sm:$0xff] %vm339, %v652
        %782 = vst.msk [vmem:[#allocation2 + $0x190] sm:$0xff] %vm339, %v778
        %v783 = vrot.slane %v575, 2
        %v784 = vrot.slane %v576, 2
        %v785 = vsel %vm418, %v783, %v784
        %v787 = vpack.c.bf16 %v785, %v753
        %789 = vrot.lane.b32.xlu0 %v787, 64
        %v790 = vpop.permute.xlu0 %789
        %792 = vst.msk [vmem:[#allocation2 + $0x40] sm:$0xff] %vm413, %v700
        %793 = vst.msk [vmem:[#allocation2 + $0xb0] sm:$0xff] %vm413, %v702
        %794 = vst.msk [vmem:[#allocation2 + $0x120] sm:$0xff] %vm413, %v704
        %795 = vst.msk [vmem:[#allocation2 + $0x190] sm:$0xff] %vm413, %v790
        %s796 = sadd.s32 %s24, 2
        %s797 = smul.u32 %s796, 160
        %s798 = scalar_lea.vmem %s288, %s797
        %v799 = vld [vmem:[%s798] sm:$0xff]
        %v800 = vld [vmem:[%s798 + $0x8] sm:$0x3]
        %v801 = vld [vmem:[%s798 + $0x10] sm:$0xff]
        %v802 = vld [vmem:[%s798 + $0x18] sm:$0x3]
        %v803 = vld [vmem:[%s798 + $0x20] sm:$0xff]
        %v804 = vld [vmem:[%s798 + $0x28] sm:$0x3]
        %v805 = vld [vmem:[%s798 + $0x30] sm:$0xff]
        %v806 = vld [vmem:[%s798 + $0x38] sm:$0x3]
        %v807 = vld [vmem:[%s798 + $0x40] sm:$0xff]
        %v808 = vld [vmem:[%s798 + $0x48] sm:$0x3]
        %v809 = vld [vmem:[%s798 + $0x50] sm:$0xff]
        %v810 = vld [vmem:[%s798 + $0x58] sm:$0x3]
        %v811 = vld [vmem:[%s798 + $0x60] sm:$0xff]
        %v812 = vld [vmem:[%s798 + $0x68] sm:$0x3]
        %v813 = vld [vmem:[%s798 + $0x70] sm:$0xff]
        %v814 = vld [vmem:[%s798 + $0x78] sm:$0x3]
        %v815 = vld [vmem:[%s798 + $0x80] sm:$0xff]
        %v816 = vld [vmem:[%s798 + $0x88] sm:$0x3]
        %v817 = vld [vmem:[%s798 + $0x90] sm:$0xff]
        %v818 = vld [vmem:[%s798 + $0x98] sm:$0x3]
        %v819 = vpack.c.bf16 %v801, %v799
        %v820 = vpack.c.bf16 %v805, %v803
        %v821 = vpack.c.bf16 %v809, %v807
        %v822 = vpack.c.bf16 %v813, %v811
        %823 = vst.msk [vmem:[#allocation2 + $0x48] sm:$0xff] %vm339, %v819
        %824 = vst.msk [vmem:[#allocation2 + $0xb8] sm:$0xff] %vm339, %v820
        %825 = vst.msk [vmem:[#allocation2 + $0x128] sm:$0xff] %vm339, %v821
        %826 = vst.msk [vmem:[#allocation2 + $0x198] sm:$0xff] %vm339, %v822
        %v843 = vrot.slane %v799, 1
        %v844 = vrot.slane %v800, 1
        %v845 = vsel %vm360, %v843, %v844
        %v846 = vrot.slane %v801, 1
        %v847 = vrot.slane %v802, 1
        %v848 = vsel %vm360, %v846, %v847
        %v849 = vrot.slane %v803, 1
        %v850 = vrot.slane %v804, 1
        %v851 = vsel %vm360, %v849, %v850
        %v852 = vrot.slane %v805, 1
        %v853 = vrot.slane %v806, 1
        %v854 = vsel %vm360, %v852, %v853
        %v855 = vrot.slane %v807, 1
        %v856 = vrot.slane %v808, 1
        %v857 = vsel %vm360, %v855, %v856
        %v858 = vrot.slane %v809, 1
        %v859 = vrot.slane %v810, 1
        %v860 = vsel %vm360, %v858, %v859
        %v861 = vrot.slane %v811, 1
        %v862 = vrot.slane %v812, 1
        %v863 = vsel %vm360, %v861, %v862
        %v864 = vrot.slane %v813, 1
        %v865 = vrot.slane %v814, 1
        %v866 = vsel %vm360, %v864, %v865
        %v875 = vpack.c.bf16 %v848, %v845
        %v876 = vpack.c.bf16 %v854, %v851
        %v877 = vpack.c.bf16 %v860, %v857
        %v878 = vpack.c.bf16 %v866, %v863
        %883 = vrot.lane.b32.xlu0 %v875, 64
        %v884 = vpop.permute.xlu0 %883
        %885 = vrot.lane.b32.xlu0 %v876, 64
        %v886 = vpop.permute.xlu0 %885
        %887 = vrot.lane.b32.xlu0 %v877, 64
        %v888 = vpop.permute.xlu0 %887
        %889 = vrot.lane.b32.xlu0 %v878, 64
        %v890 = vpop.permute.xlu0 %889
        %895 = vst.msk [vmem:[#allocation2 + $0x48] sm:$0xff] %vm413, %v884
        %896 = vst.msk [vmem:[#allocation2 + $0xb8] sm:$0xff] %vm413, %v886
        %897 = vst.msk [vmem:[#allocation2 + $0x128] sm:$0xff] %vm413, %v888
        %898 = vst.msk [vmem:[#allocation2 + $0x198] sm:$0xff] %vm413, %v890
        %v899 = vrot.slane %v799, 2
        %v900 = vrot.slane %v800, 2
        %v901 = vsel %vm418, %v899, %v900
        %v902 = vrot.slane %v801, 2
        %v903 = vrot.slane %v802, 2
        %v904 = vsel %vm418, %v902, %v903
        %v905 = vrot.slane %v803, 2
        %v906 = vrot.slane %v804, 2
        %v907 = vsel %vm418, %v905, %v906
        %v908 = vrot.slane %v805, 2
        %v909 = vrot.slane %v806, 2
        %v910 = vsel %vm418, %v908, %v909
        %v911 = vrot.slane %v807, 2
        %v912 = vrot.slane %v808, 2
        %v913 = vsel %vm418, %v911, %v912
        %v914 = vrot.slane %v809, 2
        %v915 = vrot.slane %v810, 2
        %v916 = vsel %vm418, %v914, %v915
        %v917 = vrot.slane %v811, 2
        %v918 = vrot.slane %v812, 2
        %v919 = vsel %vm418, %v917, %v918
        %v920 = vrot.slane %v813, 2
        %v921 = vrot.slane %v814, 2
        %v922 = vsel %vm418, %v920, %v921
        %v931 = vpack.c.bf16 %v904, %v901
        %v932 = vpack.c.bf16 %v910, %v907
        %v933 = vpack.c.bf16 %v916, %v913
        %v934 = vpack.c.bf16 %v922, %v919
        %935 = vst.msk [vmem:[#allocation2 + $0x50] sm:$0xff] %vm339, %v931
        %936 = vst.msk [vmem:[#allocation2 + $0xc0] sm:$0xff] %vm339, %v932
        %937 = vst.msk [vmem:[#allocation2 + $0x130] sm:$0xff] %vm339, %v933
        %938 = vst.msk [vmem:[#allocation2 + $0x1a0] sm:$0xff] %vm339, %v934
        %v939 = vpack.c.bf16 %v803, %v801
        %v940 = vpack.c.bf16 %v807, %v805
        %v941 = vpack.c.bf16 %v811, %v809
        %v942 = vpack.c.bf16 %v815, %v813
        %947 = vrot.lane.b32.xlu0 %v939, 64
        %v948 = vpop.permute.xlu0 %947
        %949 = vrot.lane.b32.xlu0 %v940, 64
        %v950 = vpop.permute.xlu0 %949
        %951 = vrot.lane.b32.xlu0 %v941, 64
        %v952 = vpop.permute.xlu0 %951
        %953 = vrot.lane.b32.xlu0 %v942, 64
        %v954 = vpop.permute.xlu0 %953
        %959 = vst.msk [vmem:[#allocation2 + $0x50] sm:$0xff] %vm413, %v948
        %960 = vst.msk [vmem:[#allocation2 + $0xc0] sm:$0xff] %vm413, %v950
        %961 = vst.msk [vmem:[#allocation2 + $0x130] sm:$0xff] %vm413, %v952
        %962 = vst.msk [vmem:[#allocation2 + $0x1a0] sm:$0xff] %vm413, %v954
        %v965 = vrot.slane %v815, 1
        %v966 = vrot.slane %v816, 1
        %v967 = vsel %vm360, %v965, %v966
        %v969 = vpack.c.bf16 %v851, %v848
        %v970 = vpack.c.bf16 %v857, %v854
        %v971 = vpack.c.bf16 %v863, %v860
        %v972 = vpack.c.bf16 %v967, %v866
        %973 = vst.msk [vmem:[#allocation2 + $0x58] sm:$0xff] %vm339, %v969
        %974 = vst.msk [vmem:[#allocation2 + $0xc8] sm:$0xff] %vm339, %v970
        %975 = vst.msk [vmem:[#allocation2 + $0x138] sm:$0xff] %vm339, %v971
        %976 = vst.msk [vmem:[#allocation2 + $0x1a8] sm:$0xff] %vm339, %v972
        %v977 = vrot.slane %v815, 2
        %v978 = vrot.slane %v816, 2
        %v979 = vsel %vm418, %v977, %v978
        %v981 = vpack.c.bf16 %v907, %v904
        %v982 = vpack.c.bf16 %v913, %v910
        %v983 = vpack.c.bf16 %v919, %v916
        %v984 = vpack.c.bf16 %v979, %v922
        %989 = vrot.lane.b32.xlu0 %v981, 64
        %v990 = vpop.permute.xlu0 %989
        %991 = vrot.lane.b32.xlu0 %v982, 64
        %v992 = vpop.permute.xlu0 %991
        %993 = vrot.lane.b32.xlu0 %v983, 64
        %v994 = vpop.permute.xlu0 %993
        %995 = vrot.lane.b32.xlu0 %v984, 64
        %v996 = vpop.permute.xlu0 %995
        %1001 = vst.msk [vmem:[#allocation2 + $0x58] sm:$0xff] %vm413, %v990
        %1002 = vst.msk [vmem:[#allocation2 + $0xc8] sm:$0xff] %vm413, %v992
        %1003 = vst.msk [vmem:[#allocation2 + $0x138] sm:$0xff] %vm413, %v994
        %1004 = vst.msk [vmem:[#allocation2 + $0x1a8] sm:$0xff] %vm413, %v996
        %v1005 = vpack.c.bf16 %v817, %v815
        %1006 = vst.msk [vmem:[#allocation2 + $0x60] sm:$0xff] %vm339, %v820
        %1007 = vst.msk [vmem:[#allocation2 + $0xd0] sm:$0xff] %vm339, %v821
        %1008 = vst.msk [vmem:[#allocation2 + $0x140] sm:$0xff] %vm339, %v822
        %1009 = vst.msk [vmem:[#allocation2 + $0x1b0] sm:$0xff] %vm339, %v1005
        %v1012 = vrot.slane %v817, 1
        %v1013 = vrot.slane %v818, 1
        %v1014 = vsel %vm360, %v1012, %v1013
        %v1016 = vpack.c.bf16 %v1014, %v967
        %1018 = vrot.lane.b32.xlu0 %v1016, 64
        %v1019 = vpop.permute.xlu0 %1018
        %1021 = vst.msk [vmem:[#allocation2 + $0x60] sm:$0xff] %vm413, %v886
        %1022 = vst.msk [vmem:[#allocation2 + $0xd0] sm:$0xff] %vm413, %v888
        %1023 = vst.msk [vmem:[#allocation2 + $0x140] sm:$0xff] %vm413, %v890
        %1024 = vst.msk [vmem:[#allocation2 + $0x1b0] sm:$0xff] %vm413, %v1019
        %v1025 = vrot.slane %v817, 2
        %v1026 = vrot.slane %v818, 2
        %v1027 = vsel %vm418, %v1025, %v1026
        %v1029 = vpack.c.bf16 %v1027, %v979
        %1030 = vst.msk [vmem:[#allocation2 + $0x68] sm:$0xff] %vm339, %v932
        %1031 = vst.msk [vmem:[#allocation2 + $0xd8] sm:$0xff] %vm339, %v933
        %1032 = vst.msk [vmem:[#allocation2 + $0x148] sm:$0xff] %vm339, %v934
        %1033 = vst.msk [vmem:[#allocation2 + $0x1b8] sm:$0xff] %vm339, %v1029
        %v1034 = vld [vmem:[#allocation2] sm:$0xff]
        %v1035 = vld [vmem:[#allocation2 + $0x8] sm:$0xff]
        %v1036 = vld [vmem:[#allocation2 + $0x10] sm:$0xff]
        %v1037 = vld [vmem:[#allocation2 + $0x18] sm:$0xff]
        %v1038 = vld [vmem:[#allocation2 + $0x20] sm:$0xff]
        %v1039 = vld [vmem:[#allocation2 + $0x28] sm:$0xff]
        %v1040 = vld [vmem:[#allocation2 + $0x30] sm:$0xff]
        %v1041 = vld [vmem:[#allocation2 + $0x38] sm:$0xff]
        %v1042 = vld [vmem:[#allocation2 + $0x40] sm:$0xff]
        %v1043 = vld [vmem:[#allocation2 + $0x48] sm:$0xff]
        %v1044 = vld [vmem:[#allocation2 + $0x50] sm:$0xff]
        %v1045 = vld [vmem:[#allocation2 + $0x58] sm:$0xff]
        %v1046 = vld [vmem:[#allocation2 + $0x60] sm:$0xff]
        %v1047 = vld [vmem:[#allocation2 + $0x68] sm:$0xff]
        %v1048 = vld [vmem:[#allocation2 + $0x70] sm:$0xff]
        %v1049 = vld [vmem:[#allocation2 + $0x78] sm:$0xff]
        %v1050 = vld [vmem:[#allocation2 + $0x80] sm:$0xff]
        %v1051 = vld [vmem:[#allocation2 + $0x88] sm:$0xff]
        %v1052 = vld [vmem:[#allocation2 + $0x90] sm:$0xff]
        %v1053 = vld [vmem:[#allocation2 + $0x98] sm:$0xff]
        %v1054 = vld [vmem:[#allocation2 + $0xa0] sm:$0xff]
        %v1055 = vld [vmem:[#allocation2 + $0xa8] sm:$0xff]
        %v1056 = vld [vmem:[#allocation2 + $0xb0] sm:$0xff]
        %v1057 = vld [vmem:[#allocation2 + $0xb8] sm:$0xff]
        %v1058 = vld [vmem:[#allocation2 + $0xc0] sm:$0xff]
        %v1059 = vld [vmem:[#allocation2 + $0xc8] sm:$0xff]
        %v1060 = vld [vmem:[#allocation2 + $0xd0] sm:$0xff]
        %v1061 = vld [vmem:[#allocation2 + $0xd8] sm:$0xff]
        %v1062 = vld [vmem:[#allocation2 + $0xe0] sm:$0xff]
        %v1063 = vld [vmem:[#allocation2 + $0xe8] sm:$0xff]
        %v1064 = vld [vmem:[#allocation2 + $0xf0] sm:$0xff]
        %v1065 = vld [vmem:[#allocation2 + $0xf8] sm:$0xff]
        %v1066 = vld [vmem:[#allocation2 + $0x100] sm:$0xff]
        %v1067 = vld [vmem:[#allocation2 + $0x108] sm:$0xff]
        %v1068 = vld [vmem:[#allocation2 + $0x110] sm:$0xff]
        %v1069 = vld [vmem:[#allocation2 + $0x118] sm:$0xff]
        %v1070 = vld [vmem:[#allocation2 + $0x120] sm:$0xff]
        %v1071 = vld [vmem:[#allocation2 + $0x128] sm:$0xff]
        %v1072 = vld [vmem:[#allocation2 + $0x130] sm:$0xff]
        %v1073 = vld [vmem:[#allocation2 + $0x138] sm:$0xff]
        %v1074 = vld [vmem:[#allocation2 + $0x140] sm:$0xff]
        %v1075 = vld [vmem:[#allocation2 + $0x148] sm:$0xff]
        %v1076 = vld [vmem:[#allocation2 + $0x150] sm:$0xff]
        %v1077 = vld [vmem:[#allocation2 + $0x158] sm:$0xff]
        %v1078 = vld [vmem:[#allocation2 + $0x160] sm:$0xff]
        %v1079 = vld [vmem:[#allocation2 + $0x168] sm:$0xff]
        %v1080 = vld [vmem:[#allocation2 + $0x170] sm:$0xff]
        %v1081 = vld [vmem:[#allocation2 + $0x178] sm:$0xff]
        %v1082 = vld [vmem:[#allocation2 + $0x180] sm:$0xff]
        %v1083 = vld [vmem:[#allocation2 + $0x188] sm:$0xff]
        %v1084 = vld [vmem:[#allocation2 + $0x190] sm:$0xff]
        %v1085 = vld [vmem:[#allocation2 + $0x198] sm:$0xff]
        %v1086 = vld [vmem:[#allocation2 + $0x1a0] sm:$0xff]
        %v1087 = vld [vmem:[#allocation2 + $0x1a8] sm:$0xff]
        %v1088 = vld [vmem:[#allocation2 + $0x1b0] sm:$0xff]
        %v1089 = vld [vmem:[#allocation2 + $0x1b8] sm:$0xff]
        %v1090 = vld [vmem:[#allocation3] sm:$0xf]
        %v1091 = vld [vmem:[#allocation3 + $0x4] sm:$0xf]
        %v1092 = vld [vmem:[#allocation3 + $0x8] sm:$0xf]
        %v1093 = vld [vmem:[#allocation3 + $0xc] sm:$0xf]
        %v1094 = vld [vmem:[#allocation3 + $0x10] sm:$0xf]
        %v1095 = vld [vmem:[#allocation3 + $0x14] sm:$0xf]
        %v1096 = vld [vmem:[#allocation3 + $0x18] sm:$0xf]
        %v1097 = vld [vmem:[#allocation3 + $0x1c] sm:$0xf]
        %v1098 = vld [vmem:[#allocation3 + $0x20] sm:$0xf]
        %v1099 = vld [vmem:[#allocation3 + $0x24] sm:$0xf]
        %v1100 = vld [vmem:[#allocation3 + $0x28] sm:$0xf]
        %v1101 = vld [vmem:[#allocation3 + $0x2c] sm:$0xf]
        %v1102 = vld [vmem:[#allocation3 + $0x30] sm:$0xf]
        %v1103 = vld [vmem:[#allocation3 + $0x34] sm:$0xf]
        %v1104 = vld [vmem:[#allocation3 + $0x38] sm:$0xf]
        %v1105 = vld [vmem:[#allocation3 + $0x3c] sm:$0xf]
        %v1106 = vld [vmem:[#allocation3 + $0x40] sm:$0xf]
        %v1107 = vld [vmem:[#allocation3 + $0x44] sm:$0xf]
        %v1108 = vld [vmem:[#allocation3 + $0x48] sm:$0xf]
        %v1109 = vld [vmem:[#allocation3 + $0x4c] sm:$0xf]
        %v1110 = vld [vmem:[#allocation3 + $0x50] sm:$0xf]
        %v1111 = vld [vmem:[#allocation3 + $0x54] sm:$0xf]
        %v1112 = vld [vmem:[#allocation3 + $0x58] sm:$0xf]
        %v1113 = vld [vmem:[#allocation3 + $0x5c] sm:$0xf]
        %v1114 = vld [vmem:[#allocation3 + $0x60] sm:$0xf]
        %v1115 = vld [vmem:[#allocation3 + $0x64] sm:$0xf]
        %v1116 = vld [vmem:[#allocation3 + $0x68] sm:$0xf]
        %v1117 = vld [vmem:[#allocation3 + $0x6c] sm:$0xf]
        %v1118 = vld [vmem:[#allocation3 + $0x70] sm:$0xf]
        %v1119 = vld [vmem:[#allocation3 + $0x74] sm:$0xf]
        %v1120 = vld [vmem:[#allocation3 + $0x78] sm:$0xf]
        %v1121 = vld [vmem:[#allocation3 + $0x7c] sm:$0xf]
        %v1122 = vld [vmem:[#allocation3 + $0x80] sm:$0xf]
        %v1123 = vld [vmem:[#allocation3 + $0x84] sm:$0xf]
        %v1124 = vld [vmem:[#allocation3 + $0x88] sm:$0xf]
        %v1125 = vld [vmem:[#allocation3 + $0x8c] sm:$0xf]
        %v1126 = vld [vmem:[#allocation3 + $0x90] sm:$0xf]
        %v1127 = vld [vmem:[#allocation3 + $0x94] sm:$0xf]
        %v1128 = vld [vmem:[#allocation3 + $0x98] sm:$0xf]
        %v1129 = vld [vmem:[#allocation3 + $0x9c] sm:$0xf]
        %v1130 = vld [vmem:[#allocation3 + $0xa0] sm:$0xf]
        %v1131 = vld [vmem:[#allocation3 + $0xa4] sm:$0xf]
        %v1132 = vld [vmem:[#allocation3 + $0xa8] sm:$0xf]
        %v1133 = vld [vmem:[#allocation3 + $0xac] sm:$0xf]
        %v1134 = vld [vmem:[#allocation3 + $0xb0] sm:$0xf]
        %v1135 = vld [vmem:[#allocation3 + $0xb4] sm:$0xf]
        %v1136 = vld [vmem:[#allocation3 + $0xb8] sm:$0xf]
        %v1137 = vld [vmem:[#allocation3 + $0xbc] sm:$0xf]
        %v1138 = vld [vmem:[#allocation3 + $0xc0] sm:$0xf]
        %v1139 = vld [vmem:[#allocation3 + $0xc4] sm:$0xf]
        %v1140 = vld [vmem:[#allocation3 + $0xc8] sm:$0xf]
        %v1141 = vld [vmem:[#allocation3 + $0xcc] sm:$0xf]
        %v1142 = vld [vmem:[#allocation3 + $0xd0] sm:$0xf]
        %v1143 = vld [vmem:[#allocation3 + $0xd4] sm:$0xf]
        %v1144 = vld [vmem:[#allocation3 + $0xd8] sm:$0xf]
        %v1145 = vld [vmem:[#allocation3 + $0xdc] sm:$0xf]
        %v1146 = vld [vmem:[#allocation3 + $0xe0] sm:$0xf]
        %v1147 = vld [vmem:[#allocation3 + $0xe4] sm:$0xf]
        %v1148 = vld [vmem:[#allocation3 + $0xe8] sm:$0xf]
        %v1149 = vld [vmem:[#allocation3 + $0xec] sm:$0xf]
        %v1150 = vld [vmem:[#allocation3 + $0xf0] sm:$0xf]
        %v1151 = vld [vmem:[#allocation3 + $0xf4] sm:$0xf]
        %v1152 = vld [vmem:[#allocation3 + $0xf8] sm:$0xf]
        %v1153 = vld [vmem:[#allocation3 + $0xfc] sm:$0xf]
        %v1154 = vld [vmem:[#allocation3 + $0x100] sm:$0xf]
        %v1155 = vld [vmem:[#allocation3 + $0x104] sm:$0xf]
        %v1156 = vld [vmem:[#allocation3 + $0x108] sm:$0xf]
        %v1157 = vld [vmem:[#allocation3 + $0x10c] sm:$0xf]
        %v1158 = vld [vmem:[#allocation3 + $0x110] sm:$0xf]
        %v1159 = vld [vmem:[#allocation3 + $0x114] sm:$0xf]
        %v1160 = vld [vmem:[#allocation3 + $0x118] sm:$0xf]
        %v1161 = vld [vmem:[#allocation3 + $0x11c] sm:$0xf]
        %v1162 = vld [vmem:[#allocation3 + $0x120] sm:$0xf]
        %v1163 = vld [vmem:[#allocation3 + $0x124] sm:$0xf]
        %v1164 = vld [vmem:[#allocation3 + $0x128] sm:$0xf]
        %v1165 = vld [vmem:[#allocation3 + $0x12c] sm:$0xf]
        %v1166 = vld [vmem:[#allocation3 + $0x130] sm:$0xf]
        %v1167 = vld [vmem:[#allocation3 + $0x134] sm:$0xf]
        %v1168 = vld [vmem:[#allocation3 + $0x138] sm:$0xf]
        %v1169 = vld [vmem:[#allocation3 + $0x13c] sm:$0xf]
        %v1170 = vld [vmem:[#allocation3 + $0x140] sm:$0xf]
        %v1171 = vld [vmem:[#allocation3 + $0x144] sm:$0xf]
        %v1172 = vld [vmem:[#allocation3 + $0x148] sm:$0xf]
        %v1173 = vld [vmem:[#allocation3 + $0x14c] sm:$0xf]
        %v1174 = vld [vmem:[#allocation3 + $0x150] sm:$0xf]
        %v1175 = vld [vmem:[#allocation3 + $0x154] sm:$0xf]
        %v1176 = vld [vmem:[#allocation3 + $0x158] sm:$0xf]
        %v1177 = vld [vmem:[#allocation3 + $0x15c] sm:$0xf]
        %v1178 = vld [vmem:[#allocation3 + $0x160] sm:$0xf]
        %v1179 = vld [vmem:[#allocation3 + $0x164] sm:$0xf]
        %v1180 = vld [vmem:[#allocation3 + $0x168] sm:$0xf]
        %v1181 = vld [vmem:[#allocation3 + $0x16c] sm:$0xf]
        %v1182 = vld [vmem:[#allocation3 + $0x170] sm:$0xf]
        %v1183 = vld [vmem:[#allocation3 + $0x174] sm:$0xf]
        %v1184 = vld [vmem:[#allocation3 + $0x178] sm:$0xf]
        %v1185 = vld [vmem:[#allocation3 + $0x17c] sm:$0xf]
        %v1186 = vld [vmem:[#allocation3 + $0x180] sm:$0xf]
        %v1187 = vld [vmem:[#allocation3 + $0x184] sm:$0xf]
        %v1188 = vld [vmem:[#allocation3 + $0x188] sm:$0xf]
        %v1189 = vld [vmem:[#allocation3 + $0x18c] sm:$0xf]
        %v1190 = vld [vmem:[#allocation3 + $0x190] sm:$0xf]
        %v1191 = vld [vmem:[#allocation3 + $0x194] sm:$0xf]
        %v1192 = vld [vmem:[#allocation3 + $0x198] sm:$0xf]
        %v1193 = vld [vmem:[#allocation3 + $0x19c] sm:$0xf]
        %v1194 = vld [vmem:[#allocation3 + $0x1a0] sm:$0xf]
        %v1195 = vld [vmem:[#allocation3 + $0x1a4] sm:$0xf]
        %v1196 = vld [vmem:[#allocation3 + $0x1a8] sm:$0xf]
        %v1197 = vld [vmem:[#allocation3 + $0x1ac] sm:$0xf]
        %v1198 = vld [vmem:[#allocation3 + $0x1b0] sm:$0xf]
        %v1199 = vld [vmem:[#allocation3 + $0x1b4] sm:$0xf]
        %v1200 = vld [vmem:[#allocation3 + $0x1b8] sm:$0xf]
        %v1201 = vld [vmem:[#allocation3 + $0x1bc] sm:$0xf]
        %v1202 = vld [vmem:[#allocation3 + $0x1c0] sm:$0xf]
        %v1203 = vld [vmem:[#allocation3 + $0x1c4] sm:$0xf]
        %v1204 = vld [vmem:[#allocation3 + $0x1c8] sm:$0xf]
        %v1205 = vld [vmem:[#allocation3 + $0x1cc] sm:$0xf]
        %v1206 = vld [vmem:[#allocation3 + $0x1d0] sm:$0xf]
        %v1207 = vld [vmem:[#allocation3 + $0x1d4] sm:$0xf]
        %v1208 = vld [vmem:[#allocation3 + $0x1d8] sm:$0xf]
        %v1209 = vld [vmem:[#allocation3 + $0x1dc] sm:$0xf]
        %v1210 = vld [vmem:[#allocation3 + $0x1e0] sm:$0xf]
        %v1211 = vld [vmem:[#allocation3 + $0x1e4] sm:$0xf]
        %v1212 = vld [vmem:[#allocation3 + $0x1e8] sm:$0xf]
        %v1213 = vld [vmem:[#allocation3 + $0x1ec] sm:$0xf]
        %v1214 = vld [vmem:[#allocation3 + $0x1f0] sm:$0xf]
        %v1215 = vld [vmem:[#allocation3 + $0x1f4] sm:$0xf]
        %v1216 = vld [vmem:[#allocation3 + $0x1f8] sm:$0xf]
        %v1217 = vld [vmem:[#allocation3 + $0x1fc] sm:$0xf]
        %v1218 = vld [vmem:[#allocation3 + $0x200] sm:$0xf]
        %v1219 = vld [vmem:[#allocation3 + $0x204] sm:$0xf]
        %v1220 = vld [vmem:[#allocation3 + $0x208] sm:$0xf]
        %v1221 = vld [vmem:[#allocation3 + $0x20c] sm:$0xf]
        %v1222 = vld [vmem:[#allocation3 + $0x210] sm:$0xf]
        %v1223 = vld [vmem:[#allocation3 + $0x214] sm:$0xf]
        %v1224 = vld [vmem:[#allocation3 + $0x218] sm:$0xf]
        %v1225 = vld [vmem:[#allocation3 + $0x21c] sm:$0xf]
        %v1226 = vld [vmem:[#allocation3 + $0x220] sm:$0xf]
        %v1227 = vld [vmem:[#allocation3 + $0x224] sm:$0xf]
        %v1228 = vld [vmem:[#allocation3 + $0x228] sm:$0xf]
        %v1229 = vld [vmem:[#allocation3 + $0x22c] sm:$0xf]
        %v1230 = vld [vmem:[#allocation3 + $0x230] sm:$0xf]
        %v1231 = vld [vmem:[#allocation3 + $0x234] sm:$0xf]
        %v1232 = vld [vmem:[#allocation3 + $0x238] sm:$0xf]
        %v1233 = vld [vmem:[#allocation3 + $0x23c] sm:$0xf]
        %v1234 = vld [vmem:[#allocation3 + $0x240] sm:$0xf]
        %v1235 = vld [vmem:[#allocation3 + $0x244] sm:$0xf]
        %v1236 = vld [vmem:[#allocation3 + $0x248] sm:$0xf]
        %v1237 = vld [vmem:[#allocation3 + $0x24c] sm:$0xf]
        %v1238 = vld [vmem:[#allocation3 + $0x250] sm:$0xf]
        %v1239 = vld [vmem:[#allocation3 + $0x254] sm:$0xf]
        %v1240 = vld [vmem:[#allocation3 + $0x258] sm:$0xf]
        %v1241 = vld [vmem:[#allocation3 + $0x25c] sm:$0xf]
        %v1242 = vld [vmem:[#allocation3 + $0x260] sm:$0xf]
        %v1243 = vld [vmem:[#allocation3 + $0x264] sm:$0xf]
        %v1244 = vld [vmem:[#allocation3 + $0x268] sm:$0xf]
        %v1245 = vld [vmem:[#allocation3 + $0x26c] sm:$0xf]
        %v1246 = vld [vmem:[#allocation3 + $0x270] sm:$0xf]
        %v1247 = vld [vmem:[#allocation3 + $0x274] sm:$0xf]
        %v1248 = vld [vmem:[#allocation3 + $0x278] sm:$0xf]
        %v1249 = vld [vmem:[#allocation3 + $0x27c] sm:$0xf]
        %v1250 = vld [vmem:[#allocation3 + $0x280] sm:$0xf]
        %v1251 = vld [vmem:[#allocation3 + $0x284] sm:$0xf]
        %v1252 = vld [vmem:[#allocation3 + $0x288] sm:$0xf]
        %v1253 = vld [vmem:[#allocation3 + $0x28c] sm:$0xf]
        %v1254 = vld [vmem:[#allocation3 + $0x290] sm:$0xf]
        %v1255 = vld [vmem:[#allocation3 + $0x294] sm:$0xf]
        %v1256 = vld [vmem:[#allocation3 + $0x298] sm:$0xf]
        %v1257 = vld [vmem:[#allocation3 + $0x29c] sm:$0xf]
        %v1258 = vld [vmem:[#allocation3 + $0x2a0] sm:$0xf]
        %v1259 = vld [vmem:[#allocation3 + $0x2a4] sm:$0xf]
        %v1260 = vld [vmem:[#allocation3 + $0x2a8] sm:$0xf]
        %v1261 = vld [vmem:[#allocation3 + $0x2ac] sm:$0xf]
        %v1262 = vld [vmem:[#allocation3 + $0x2b0] sm:$0xf]
        %v1263 = vld [vmem:[#allocation3 + $0x2b4] sm:$0xf]
        %v1264 = vld [vmem:[#allocation3 + $0x2b8] sm:$0xf]
        %v1265 = vld [vmem:[#allocation3 + $0x2bc] sm:$0xf]
        %v1266 = vld [vmem:[#allocation3 + $0x2c0] sm:$0xf]
        %v1267 = vld [vmem:[#allocation3 + $0x2c4] sm:$0xf]
        %v1268 = vld [vmem:[#allocation3 + $0x2c8] sm:$0xf]
        %v1269 = vld [vmem:[#allocation3 + $0x2cc] sm:$0xf]
        %v1270 = vld [vmem:[#allocation3 + $0x2d0] sm:$0xf]
        %v1271 = vld [vmem:[#allocation3 + $0x2d4] sm:$0xf]
        %v1272 = vld [vmem:[#allocation3 + $0x2d8] sm:$0xf]
        %v1273 = vld [vmem:[#allocation3 + $0x2dc] sm:$0xf]
        %v1274 = vld [vmem:[#allocation3 + $0x2e0] sm:$0xf]
        %v1275 = vld [vmem:[#allocation3 + $0x2e4] sm:$0xf]
        %v1276 = vld [vmem:[#allocation3 + $0x2e8] sm:$0xf]
        %v1277 = vld [vmem:[#allocation3 + $0x2ec] sm:$0xf]
        %v1278 = vld [vmem:[#allocation3 + $0x2f0] sm:$0xf]
        %v1279 = vld [vmem:[#allocation3 + $0x2f4] sm:$0xf]
        %v1280 = vld [vmem:[#allocation3 + $0x2f8] sm:$0xf]
        %v1281 = vld [vmem:[#allocation3 + $0x2fc] sm:$0xf]
        %v1282 = vld [vmem:[#allocation3 + $0x300] sm:$0xf]
        %v1283 = vld [vmem:[#allocation3 + $0x304] sm:$0xf]
        %v1284 = vld [vmem:[#allocation3 + $0x308] sm:$0xf]
        %v1285 = vld [vmem:[#allocation3 + $0x30c] sm:$0xf]
        %v1286 = vld [vmem:[#allocation3 + $0x310] sm:$0xf]
        %v1287 = vld [vmem:[#allocation3 + $0x314] sm:$0xf]
        %v1288 = vld [vmem:[#allocation3 + $0x318] sm:$0xf]
        %v1289 = vld [vmem:[#allocation3 + $0x31c] sm:$0xf]
        %v1290 = vld [vmem:[#allocation3 + $0x320] sm:$0xf]
        %v1291 = vld [vmem:[#allocation3 + $0x324] sm:$0xf]
        %v1292 = vld [vmem:[#allocation3 + $0x328] sm:$0xf]
        %v1293 = vld [vmem:[#allocation3 + $0x32c] sm:$0xf]
        %v1294 = vld [vmem:[#allocation3 + $0x330] sm:$0xf]
        %v1295 = vld [vmem:[#allocation3 + $0x334] sm:$0xf]
        %v1296 = vld [vmem:[#allocation3 + $0x338] sm:$0xf]
        %v1297 = vld [vmem:[#allocation3 + $0x33c] sm:$0xf]
        %v1298 = vld [vmem:[#allocation3 + $0x340] sm:$0xf]
        %v1299 = vld [vmem:[#allocation3 + $0x344] sm:$0xf]
        %v1300 = vld [vmem:[#allocation3 + $0x348] sm:$0xf]
        %v1301 = vld [vmem:[#allocation3 + $0x34c] sm:$0xf]
        %v1302 = vld [vmem:[#allocation3 + $0x350] sm:$0xf]
        %v1303 = vld [vmem:[#allocation3 + $0x354] sm:$0xf]
        %v1304 = vld [vmem:[#allocation3 + $0x358] sm:$0xf]
        %v1305 = vld [vmem:[#allocation3 + $0x35c] sm:$0xf]
        %v1306 = vld [vmem:[#allocation5] sm:$0x1]
        %v1308 = vlaneseq
        %v1309 = vshrl.u32 %v1308, 7
        %v1310 = vsub.s32 0, %v1309
        %v1311 = vrot.slane %v1306, %v1310
        %v1529 = vunpack.c.l.b16 %v1090
        %v1530 = vunpack.c.l.b16 %v1091
        %v1531 = vunpack.c.l.b16 %v1092
        %v1532 = vunpack.c.l.b16 %v1093
        %v1533 = vunpack.c.l.b16 %v1094
        %v1534 = vunpack.c.l.b16 %v1095
        %v1535 = vunpack.c.l.b16 %v1096
        %v1536 = vunpack.c.l.b16 %v1097
        %v1537 = vunpack.c.l.b16 %v1098
        %v1538 = vunpack.c.l.b16 %v1099
        %v1539 = vunpack.c.l.b16 %v1100
        %v1540 = vunpack.c.l.b16 %v1101
        %v1541 = vunpack.c.l.b16 %v1102
        %v1542 = vunpack.c.l.b16 %v1103
        %v1543 = vunpack.c.l.b16 %v1104
        %v1544 = vunpack.c.l.b16 %v1105
        %v1545 = vunpack.c.l.b16 %v1106
        %v1546 = vunpack.c.l.b16 %v1107
        %v1547 = vunpack.c.l.b16 %v1108
        %v1548 = vunpack.c.l.b16 %v1109
        %v1549 = vunpack.c.l.b16 %v1110
        %v1550 = vunpack.c.l.b16 %v1111
        %v1551 = vunpack.c.l.b16 %v1112
        %v1552 = vunpack.c.l.b16 %v1113
        %v1553 = vunpack.c.l.b16 %v1114
        %v1554 = vunpack.c.l.b16 %v1115
        %v1555 = vunpack.c.l.b16 %v1116
        %v1556 = vunpack.c.l.b16 %v1117
        %v1557 = vunpack.c.l.b16 %v1118
        %v1558 = vunpack.c.l.b16 %v1119
        %v1559 = vunpack.c.l.b16 %v1120
        %v1560 = vunpack.c.l.b16 %v1121
        %v1561 = vunpack.c.l.b16 %v1122
        %v1562 = vunpack.c.l.b16 %v1123
        %v1563 = vunpack.c.l.b16 %v1124
        %v1564 = vunpack.c.l.b16 %v1125
        %v1565 = vunpack.c.l.b16 %v1126
        %v1566 = vunpack.c.l.b16 %v1127
        %v1567 = vunpack.c.l.b16 %v1128
        %v1568 = vunpack.c.l.b16 %v1129
        %v1569 = vunpack.c.l.b16 %v1130
        %v1570 = vunpack.c.l.b16 %v1131
        %v1571 = vunpack.c.l.b16 %v1132
        %v1572 = vunpack.c.l.b16 %v1133
        %v1573 = vunpack.c.l.b16 %v1134
        %v1574 = vunpack.c.l.b16 %v1135
        %v1575 = vunpack.c.l.b16 %v1136
        %v1576 = vunpack.c.l.b16 %v1137
        %v1577 = vunpack.c.l.b16 %v1138
        %v1578 = vunpack.c.l.b16 %v1139
        %v1579 = vunpack.c.l.b16 %v1140
        %v1580 = vunpack.c.l.b16 %v1141
        %v1581 = vunpack.c.l.b16 %v1142
        %v1582 = vunpack.c.l.b16 %v1143
        %v1583 = vunpack.c.l.b16 %v1144
        %v1584 = vunpack.c.l.b16 %v1145
        %v1585 = vunpack.c.l.b16 %v1146
        %v1586 = vunpack.c.l.b16 %v1147
        %v1587 = vunpack.c.l.b16 %v1148
        %v1588 = vunpack.c.l.b16 %v1149
        %v1589 = vunpack.c.l.b16 %v1150
        %v1590 = vunpack.c.l.b16 %v1151
        %v1591 = vunpack.c.l.b16 %v1152
        %v1592 = vunpack.c.l.b16 %v1153
        %v1593 = vunpack.c.l.b16 %v1154
        %v1594 = vunpack.c.l.b16 %v1155
        %v1595 = vunpack.c.l.b16 %v1156
        %v1596 = vunpack.c.l.b16 %v1157
        %v1597 = vunpack.c.l.b16 %v1158
        %v1598 = vunpack.c.l.b16 %v1159
        %v1599 = vunpack.c.l.b16 %v1160
        %v1600 = vunpack.c.l.b16 %v1161
        %v1601 = vunpack.c.l.b16 %v1162
        %v1602 = vunpack.c.l.b16 %v1163
        %v1603 = vunpack.c.l.b16 %v1164
        %v1604 = vunpack.c.l.b16 %v1165
        %v1605 = vunpack.c.l.b16 %v1166
        %v1606 = vunpack.c.l.b16 %v1167
        %v1607 = vunpack.c.l.b16 %v1168
        %v1608 = vunpack.c.l.b16 %v1169
        %v1609 = vunpack.c.l.b16 %v1170
        %v1610 = vunpack.c.l.b16 %v1171
        %v1611 = vunpack.c.l.b16 %v1172
        %v1612 = vunpack.c.l.b16 %v1173
        %v1613 = vunpack.c.l.b16 %v1174
        %v1614 = vunpack.c.l.b16 %v1175
        %v1615 = vunpack.c.l.b16 %v1176
        %v1616 = vunpack.c.l.b16 %v1177
        %v1617 = vunpack.c.l.b16 %v1178
        %v1618 = vunpack.c.l.b16 %v1179
        %v1619 = vunpack.c.l.b16 %v1180
        %v1620 = vunpack.c.l.b16 %v1181
        %v1621 = vunpack.c.l.b16 %v1182
        %v1622 = vunpack.c.l.b16 %v1183
        %v1623 = vunpack.c.l.b16 %v1184
        %v1624 = vunpack.c.l.b16 %v1185
        %v1625 = vunpack.c.l.b16 %v1186
        %v1626 = vunpack.c.l.b16 %v1187
        %v1627 = vunpack.c.l.b16 %v1188
        %v1628 = vunpack.c.l.b16 %v1189
        %v1629 = vunpack.c.l.b16 %v1190
        %v1630 = vunpack.c.l.b16 %v1191
        %v1631 = vunpack.c.l.b16 %v1192
        %v1632 = vunpack.c.l.b16 %v1193
        %v1633 = vunpack.c.l.b16 %v1194
        %v1634 = vunpack.c.l.b16 %v1195
        %v1635 = vunpack.c.l.b16 %v1196
        %v1636 = vunpack.c.l.b16 %v1197
        %v1637 = vunpack.c.l.b16 %v1198
        %v1638 = vunpack.c.l.b16 %v1199
        %v1639 = vunpack.c.l.b16 %v1200
        %v1640 = vunpack.c.l.b16 %v1201
        %v1641 = vunpack.c.l.b16 %v1202
        %v1642 = vunpack.c.l.b16 %v1203
        %v1643 = vunpack.c.l.b16 %v1204
        %v1644 = vunpack.c.l.b16 %v1205
        %v1645 = vunpack.c.l.b16 %v1206
        %v1646 = vunpack.c.l.b16 %v1207
        %v1647 = vunpack.c.l.b16 %v1208
        %v1648 = vunpack.c.l.b16 %v1209
        %v1649 = vunpack.c.l.b16 %v1210
        %v1650 = vunpack.c.l.b16 %v1211
        %v1651 = vunpack.c.l.b16 %v1212
        %v1652 = vunpack.c.l.b16 %v1213
        %v1653 = vunpack.c.l.b16 %v1214
        %v1654 = vunpack.c.l.b16 %v1215
        %v1655 = vunpack.c.l.b16 %v1216
        %v1656 = vunpack.c.l.b16 %v1217
        %v1657 = vunpack.c.l.b16 %v1218
        %v1658 = vunpack.c.l.b16 %v1219
        %v1659 = vunpack.c.l.b16 %v1220
        %v1660 = vunpack.c.l.b16 %v1221
        %v1661 = vunpack.c.l.b16 %v1222
        %v1662 = vunpack.c.l.b16 %v1223
        %v1663 = vunpack.c.l.b16 %v1224
        %v1664 = vunpack.c.l.b16 %v1225
        %v1665 = vunpack.c.l.b16 %v1226
        %v1666 = vunpack.c.l.b16 %v1227
        %v1667 = vunpack.c.l.b16 %v1228
        %v1668 = vunpack.c.l.b16 %v1229
        %v1669 = vunpack.c.l.b16 %v1230
        %v1670 = vunpack.c.l.b16 %v1231
        %v1671 = vunpack.c.l.b16 %v1232
        %v1672 = vunpack.c.l.b16 %v1233
        %v1673 = vunpack.c.l.b16 %v1234
        %v1674 = vunpack.c.l.b16 %v1235
        %v1675 = vunpack.c.l.b16 %v1236
        %v1676 = vunpack.c.l.b16 %v1237
        %v1677 = vunpack.c.l.b16 %v1238
        %v1678 = vunpack.c.l.b16 %v1239
        %v1679 = vunpack.c.l.b16 %v1240
        %v1680 = vunpack.c.l.b16 %v1241
        %v1681 = vunpack.c.l.b16 %v1242
        %v1682 = vunpack.c.l.b16 %v1243
        %v1683 = vunpack.c.l.b16 %v1244
        %v1684 = vunpack.c.l.b16 %v1245
        %v1685 = vunpack.c.l.b16 %v1246
        %v1686 = vunpack.c.l.b16 %v1247
        %v1687 = vunpack.c.l.b16 %v1248
        %v1688 = vunpack.c.l.b16 %v1249
        %v1689 = vunpack.c.l.b16 %v1250
        %v1690 = vunpack.c.l.b16 %v1251
        %v1691 = vunpack.c.l.b16 %v1252
        %v1692 = vunpack.c.l.b16 %v1253
        %v1693 = vunpack.c.l.b16 %v1254
        %v1694 = vunpack.c.l.b16 %v1255
        %v1695 = vunpack.c.l.b16 %v1256
        %v1696 = vunpack.c.l.b16 %v1257
        %v1697 = vunpack.c.l.b16 %v1258
        %v1698 = vunpack.c.l.b16 %v1259
        %v1699 = vunpack.c.l.b16 %v1260
        %v1700 = vunpack.c.l.b16 %v1261
        %v1701 = vunpack.c.l.b16 %v1262
        %v1702 = vunpack.c.l.b16 %v1263
        %v1703 = vunpack.c.l.b16 %v1264
        %v1704 = vunpack.c.l.b16 %v1265
        %v1705 = vunpack.c.l.b16 %v1266
        %v1706 = vunpack.c.l.b16 %v1267
        %v1707 = vunpack.c.l.b16 %v1268
        %v1708 = vunpack.c.l.b16 %v1269
        %v1709 = vunpack.c.l.b16 %v1270
        %v1710 = vunpack.c.l.b16 %v1271
        %v1711 = vunpack.c.l.b16 %v1272
        %v1712 = vunpack.c.l.b16 %v1273
        %v1713 = vunpack.c.l.b16 %v1274
        %v1714 = vunpack.c.l.b16 %v1275
        %v1715 = vunpack.c.l.b16 %v1276
        %v1716 = vunpack.c.l.b16 %v1277
        %v1717 = vunpack.c.l.b16 %v1278
        %v1718 = vunpack.c.l.b16 %v1279
        %v1719 = vunpack.c.l.b16 %v1280
        %v1720 = vunpack.c.l.b16 %v1281
        %v1721 = vunpack.c.l.b16 %v1282
        %v1722 = vunpack.c.l.b16 %v1283
        %v1723 = vunpack.c.l.b16 %v1284
        %v1724 = vunpack.c.l.b16 %v1285
        %v1725 = vunpack.c.l.b16 %v1286
        %v1726 = vunpack.c.l.b16 %v1287
        %v1727 = vunpack.c.l.b16 %v1288
        %v1728 = vunpack.c.l.b16 %v1289
        %v1729 = vunpack.c.l.b16 %v1290
        %v1730 = vunpack.c.l.b16 %v1291
        %v1731 = vunpack.c.l.b16 %v1292
        %v1732 = vunpack.c.l.b16 %v1293
        %v1733 = vunpack.c.l.b16 %v1294
        %v1734 = vunpack.c.l.b16 %v1295
        %v1735 = vunpack.c.l.b16 %v1296
        %v1736 = vunpack.c.l.b16 %v1297
        %v1737 = vunpack.c.l.b16 %v1298
        %v1738 = vunpack.c.l.b16 %v1299
        %v1739 = vunpack.c.l.b16 %v1300
        %v1740 = vunpack.c.l.b16 %v1301
        %v1741 = vunpack.c.l.b16 %v1302
        %v1742 = vunpack.c.l.b16 %v1303
        %v1743 = vunpack.c.l.b16 %v1304
        %v1744 = vunpack.c.l.b16 %v1305
        %v1745 = vpack.c.b16 %v1530, %v1529
        %v1746 = vpack.c.b16 %v1532, %v1531
        %v1747 = vpack.c.b16 %v1534, %v1533
        %v1748 = vpack.c.b16 %v1536, %v1535
        %v1749 = vpack.c.b16 %v1538, %v1537
        %v1750 = vpack.c.b16 %v1540, %v1539
        %v1751 = vpack.c.b16 %v1542, %v1541
        %v1752 = vpack.c.b16 %v1544, %v1543
        %v1753 = vpack.c.b16 %v1546, %v1545
        %v1754 = vpack.c.b16 %v1548, %v1547
        %v1755 = vpack.c.b16 %v1550, %v1549
        %v1756 = vpack.c.b16 %v1552, %v1551
        %v1757 = vpack.c.b16 %v1554, %v1553
        %v1758 = vpack.c.b16 %v1556, %v1555
        %v1759 = vpack.c.b16 %v1558, %v1557
        %v1760 = vpack.c.b16 %v1560, %v1559
        %v1761 = vpack.c.b16 %v1562, %v1561
        %v1762 = vpack.c.b16 %v1564, %v1563
        %v1763 = vpack.c.b16 %v1566, %v1565
        %v1764 = vpack.c.b16 %v1568, %v1567
        %v1765 = vpack.c.b16 %v1570, %v1569
        %v1766 = vpack.c.b16 %v1572, %v1571
        %v1767 = vpack.c.b16 %v1574, %v1573
        %v1768 = vpack.c.b16 %v1576, %v1575
        %v1769 = vpack.c.b16 %v1578, %v1577
        %v1770 = vpack.c.b16 %v1580, %v1579
        %v1771 = vpack.c.b16 %v1582, %v1581
        %v1772 = vpack.c.b16 %v1584, %v1583
        %v1773 = vpack.c.b16 %v1586, %v1585
        %v1774 = vpack.c.b16 %v1588, %v1587
        %v1775 = vpack.c.b16 %v1590, %v1589
        %v1776 = vpack.c.b16 %v1592, %v1591
        %v1777 = vpack.c.b16 %v1594, %v1593
        %v1778 = vpack.c.b16 %v1596, %v1595
        %v1779 = vpack.c.b16 %v1598, %v1597
        %v1780 = vpack.c.b16 %v1600, %v1599
        %v1781 = vpack.c.b16 %v1602, %v1601
        %v1782 = vpack.c.b16 %v1604, %v1603
        %v1783 = vpack.c.b16 %v1606, %v1605
        %v1784 = vpack.c.b16 %v1608, %v1607
        %v1785 = vpack.c.b16 %v1610, %v1609
        %v1786 = vpack.c.b16 %v1612, %v1611
        %v1787 = vpack.c.b16 %v1614, %v1613
        %v1788 = vpack.c.b16 %v1616, %v1615
        %v1789 = vpack.c.b16 %v1618, %v1617
        %v1790 = vpack.c.b16 %v1620, %v1619
        %v1791 = vpack.c.b16 %v1622, %v1621
        %v1792 = vpack.c.b16 %v1624, %v1623
        %v1793 = vpack.c.b16 %v1626, %v1625
        %v1794 = vpack.c.b16 %v1628, %v1627
        %v1795 = vpack.c.b16 %v1630, %v1629
        %v1796 = vpack.c.b16 %v1632, %v1631
        %v1797 = vpack.c.b16 %v1634, %v1633
        %v1798 = vpack.c.b16 %v1636, %v1635
        %v1799 = vpack.c.b16 %v1638, %v1637
        %v1800 = vpack.c.b16 %v1640, %v1639
        %v1801 = vpack.c.b16 %v1642, %v1641
        %v1802 = vpack.c.b16 %v1644, %v1643
        %v1803 = vpack.c.b16 %v1646, %v1645
        %v1804 = vpack.c.b16 %v1648, %v1647
        %v1805 = vpack.c.b16 %v1650, %v1649
        %v1806 = vpack.c.b16 %v1652, %v1651
        %v1807 = vpack.c.b16 %v1654, %v1653
        %v1808 = vpack.c.b16 %v1656, %v1655
        %v1809 = vpack.c.b16 %v1658, %v1657
        %v1810 = vpack.c.b16 %v1660, %v1659
        %v1811 = vpack.c.b16 %v1662, %v1661
        %v1812 = vpack.c.b16 %v1664, %v1663
        %v1813 = vpack.c.b16 %v1666, %v1665
        %v1814 = vpack.c.b16 %v1668, %v1667
        %v1815 = vpack.c.b16 %v1670, %v1669
        %v1816 = vpack.c.b16 %v1672, %v1671
        %v1817 = vpack.c.b16 %v1674, %v1673
        %v1818 = vpack.c.b16 %v1676, %v1675
        %v1819 = vpack.c.b16 %v1678, %v1677
        %v1820 = vpack.c.b16 %v1680, %v1679
        %v1821 = vpack.c.b16 %v1682, %v1681
        %v1822 = vpack.c.b16 %v1684, %v1683
        %v1823 = vpack.c.b16 %v1686, %v1685
        %v1824 = vpack.c.b16 %v1688, %v1687
        %v1825 = vpack.c.b16 %v1690, %v1689
        %v1826 = vpack.c.b16 %v1692, %v1691
        %v1827 = vpack.c.b16 %v1694, %v1693
        %v1828 = vpack.c.b16 %v1696, %v1695
        %v1829 = vpack.c.b16 %v1698, %v1697
        %v1830 = vpack.c.b16 %v1700, %v1699
        %v1831 = vpack.c.b16 %v1702, %v1701
        %v1832 = vpack.c.b16 %v1704, %v1703
        %v1833 = vpack.c.b16 %v1706, %v1705
        %v1834 = vpack.c.b16 %v1708, %v1707
        %v1835 = vpack.c.b16 %v1710, %v1709
        %v1836 = vpack.c.b16 %v1712, %v1711
        %v1837 = vpack.c.b16 %v1714, %v1713
        %v1838 = vpack.c.b16 %v1716, %v1715
        %v1839 = vpack.c.b16 %v1718, %v1717
        %v1840 = vpack.c.b16 %v1720, %v1719
        %v1841 = vpack.c.b16 %v1722, %v1721
        %v1842 = vpack.c.b16 %v1724, %v1723
        %v1843 = vpack.c.b16 %v1726, %v1725
        %v1844 = vpack.c.b16 %v1728, %v1727
        %v1845 = vpack.c.b16 %v1730, %v1729
        %v1846 = vpack.c.b16 %v1732, %v1731
        %v1847 = vpack.c.b16 %v1734, %v1733
        %v1848 = vpack.c.b16 %v1736, %v1735
        %v1849 = vpack.c.b16 %v1738, %v1737
        %v1850 = vpack.c.b16 %v1740, %v1739
        %v1851 = vpack.c.b16 %v1742, %v1741
        %v1852 = vpack.c.b16 %v1744, %v1743
        %v1962 = vsel %vm339, %v1047, 0
        %v1965 = vsel %vm339, %v1061, 0
        %v1968 = vsel %vm339, %v1075, 0
        %v1971 = vsel %vm339, %v1089, 0
        %1973 = vmatprep.subr.bf16.mxu0 0
        %1974 = vmatpush1.bf16.msra.mxu0 %v1745
        %1975 = vmatprep.subr.bf16.mxu0 0
        %1976 = vmatpush1.bf16.msra.mxu0 %v1746
        %1977 = vmatprep.subr.bf16.mxu0 0
        %1978 = vmatpush1.bf16.msra.mxu0 %v1747
        %1979 = vmatprep.subr.bf16.mxu0 0
        %1980 = vmatpush1.bf16.msra.mxu0 %v1748
        %1981 = vmatprep.subr.bf16.mxu0 0
        %1982 = vmatpush1.bf16.msra.mxu0 %v1749
        %1983 = vmatprep.subr.bf16.mxu0 0
        %1984 = vmatpush1.bf16.msra.mxu0 %v1750
        %1985 = vmatprep.subr.bf16.mxu0 0
        %1986 = vmatpush1.bf16.msra.mxu0 %v1751
        %1987 = vmatprep.subr.bf16.mxu0 0
        %1988 = vmatpush1.bf16.msra.mxu0 %v1752
        %1989 = vmatprep.subr.bf16.mxu0 0
        %1990 = vmatpush1.bf16.msra.mxu0 %v1753
        %1991 = vmatprep.subr.bf16.mxu0 0
        %1992 = vmatpush1.bf16.msra.mxu0 %v1754
        %1993 = vmatprep.subr.bf16.mxu0 0
        %1994 = vmatpush1.bf16.msra.mxu0 %v1755
        %1995 = vmatprep.subr.bf16.mxu0 0
        %1996 = vmatpush1.bf16.msra.mxu0 %v1756
        %1997 = vmatprep.subr.bf16.mxu0 0
        %1998 = vmatpush1.bf16.msra.mxu0 %v1757
        %1999 = vmatprep.subr.bf16.mxu0 0
        %2000 = vmatpush1.bf16.msra.mxu0 %v1758
        %2001 = vmatprep.subr.bf16.mxu0 0
        %2002 = vmatpush1.bf16.msra.mxu0 %v1759
        %2003 = vmatprep.subr.bf16.mxu0 0
        %2004 = vmatpush1.bf16.msra.mxu0 %v1760
        %2005 = vmatprep.mubr.bf16.mxu0 %v1035
        %2006 = vmatmul.mubr.bf16.gmra.mrb[0].mxu0 %v1034
        %v2007 = vpop.f32.mrb[0].mxu0
        %v2008 = vadd.f32 %v1311, %v2007
        %v2009 = vpop.f32.mrb[0].mxu0
        %v2010 = vpop.f32.mrb[0].mxu0
        %v2011 = vadd.f32 %v1311, %v2010
        %v2012 = vpop.f32.mrb[0].mxu0
        %2013 = vmatprep.mubr.bf16.mxu0 %v1049
        %2014 = vmatmul.mubr.bf16.gmra.mrb[0].mxu0 %v1048
        %v2015 = vpop.f32.mrb[0].mxu0
        %v2016 = vadd.f32 %v1311, %v2015
        %v2017 = vpop.f32.mrb[0].mxu0
        %v2018 = vpop.f32.mrb[0].mxu0
        %v2019 = vadd.f32 %v1311, %v2018
        %v2020 = vpop.f32.mrb[0].mxu0
        %2021 = vmatprep.mubr.bf16.mxu0 %v1063
        %2022 = vmatmul.mubr.bf16.gmra.mrb[0].mxu0 %v1062
        %v2023 = vpop.f32.mrb[0].mxu0
        %v2024 = vadd.f32 %v1311, %v2023
        %v2025 = vpop.f32.mrb[0].mxu0
        %v2026 = vpop.f32.mrb[0].mxu0
        %v2027 = vadd.f32 %v1311, %v2026
        %v2028 = vpop.f32.mrb[0].mxu0
        %2029 = vmatprep.mubr.bf16.mxu0 %v1077
        %2030 = vmatmul.mubr.bf16.gmra.mrb[0].mxu0 %v1076
        %v2031 = vpop.f32.mrb[0].mxu0
        %v2032 = vadd.f32 %v1311, %v2031
        %v2033 = vpop.f32.mrb[0].mxu0
        %v2034 = vpop.f32.mrb[0].mxu0
        %v2035 = vadd.f32 %v1311, %v2034
        %v2036 = vpop.f32.mrb[0].mxu0
        %2037 = vdwg.mxu0
        %2038 = vmatprep.subr.bf16.mxu0 0
        %2039 = vmatpush1.bf16.msra.mxu0 %v1761
        %2040 = vmatprep.subr.bf16.mxu0 0
        %2041 = vmatpush1.bf16.msra.mxu0 %v1762
        %2042 = vmatprep.subr.bf16.mxu0 0
        %2043 = vmatpush1.bf16.msra.mxu0 %v1763
        %2044 = vmatprep.subr.bf16.mxu0 0
        %2045 = vmatpush1.bf16.msra.mxu0 %v1764
        %2046 = vmatprep.subr.bf16.mxu0 0
        %2047 = vmatpush1.bf16.msra.mxu0 %v1765
        %2048 = vmatprep.subr.bf16.mxu0 0
        %2049 = vmatpush1.bf16.msra.mxu0 %v1766
        %2050 = vmatprep.subr.bf16.mxu0 0
        %2051 = vmatpush1.bf16.msra.mxu0 %v1767
        %2052 = vmatprep.subr.bf16.mxu0 0
        %2053 = vmatpush1.bf16.msra.mxu0 %v1768
        %2054 = vmatprep.subr.bf16.mxu0 0
        %2055 = vmatpush1.bf16.msra.mxu0 %v1769
        %2056 = vmatprep.subr.bf16.mxu0 0
        %2057 = vmatpush1.bf16.msra.mxu0 %v1770
        %2058 = vmatprep.subr.bf16.mxu0 0
        %2059 = vmatpush1.bf16.msra.mxu0 %v1771
        %2060 = vmatprep.subr.bf16.mxu0 0
        %2061 = vmatpush1.bf16.msra.mxu0 %v1772
        %2062 = vmatprep.subr.bf16.mxu0 0
        %2063 = vmatpush1.bf16.msra.mxu0 %v1773
        %2064 = vmatprep.subr.bf16.mxu0 0
        %2065 = vmatpush1.bf16.msra.mxu0 %v1774
        %2066 = vmatprep.subr.bf16.mxu0 0
        %2067 = vmatpush1.bf16.msra.mxu0 %v1775
        %2068 = vmatprep.subr.bf16.mxu0 0
        %2069 = vmatpush1.bf16.msra.mxu0 %v1776
        %2070 = vmatprep.mubr.bf16.mxu0 %v1037
        %2071 = vmatmul.mubr.bf16.gmra.mrb[0].mxu0 %v1036
        %v2072 = vpop.f32.mrb[0].mxu0
        %v2073 = vadd.f32 %v2008, %v2072
        %v2074 = vpop.f32.mrb[0].mxu0
        %v2075 = vpop.f32.mrb[0].mxu0
        %v2076 = vadd.f32 %v2011, %v2075
        %v2077 = vpop.f32.mrb[0].mxu0
        %2078 = vmatprep.mubr.bf16.mxu0 %v1051
        %2079 = vmatmul.mubr.bf16.gmra.mrb[0].mxu0 %v1050
        %v2080 = vpop.f32.mrb[0].mxu0
        %v2081 = vadd.f32 %v2016, %v2080
        %v2082 = vpop.f32.mrb[0].mxu0
        %v2083 = vpop.f32.mrb[0].mxu0
        %v2084 = vadd.f32 %v2019, %v2083
        %v2085 = vpop.f32.mrb[0].mxu0
        %2086 = vmatprep.mubr.bf16.mxu0 %v1065
        %2087 = vmatmul.mubr.bf16.gmra.mrb[0].mxu0 %v1064
        %v2088 = vpop.f32.mrb[0].mxu0
        %v2089 = vadd.f32 %v2024, %v2088
        %v2090 = vpop.f32.mrb[0].mxu0
        %v2091 = vpop.f32.mrb[0].mxu0
        %v2092 = vadd.f32 %v2027, %v2091
        %v2093 = vpop.f32.mrb[0].mxu0
        %2094 = vmatprep.mubr.bf16.mxu0 %v1079
        %2095 = vmatmul.mubr.bf16.gmra.mrb[0].mxu0 %v1078
        %v2096 = vpop.f32.mrb[0].mxu0
        %v2097 = vadd.f32 %v2032, %v2096
        %v2098 = vpop.f32.mrb[0].mxu0
        %v2099 = vpop.f32.mrb[0].mxu0
        %v2100 = vadd.f32 %v2035, %v2099
        %v2101 = vpop.f32.mrb[0].mxu0
        %2102 = vdwg.mxu0
        %2103 = vmatprep.subr.bf16.mxu0 0
        %2104 = vmatpush1.bf16.msra.mxu0 %v1777
        %2105 = vmatprep.subr.bf16.mxu0 0
        %2106 = vmatpush1.bf16.msra.mxu0 %v1778
        %2107 = vmatprep.subr.bf16.mxu0 0
        %2108 = vmatpush1.bf16.msra.mxu0 %v1779
        %2109 = vmatprep.subr.bf16.mxu0 0
        %2110 = vmatpush1.bf16.msra.mxu0 %v1780
        %2111 = vmatprep.subr.bf16.mxu0 0
        %2112 = vmatpush1.bf16.msra.mxu0 %v1781
        %2113 = vmatprep.subr.bf16.mxu0 0
        %2114 = vmatpush1.bf16.msra.mxu0 %v1782
        %2115 = vmatprep.subr.bf16.mxu0 0
        %2116 = vmatpush1.bf16.msra.mxu0 %v1783
        %2117 = vmatprep.subr.bf16.mxu0 0
        %2118 = vmatpush1.bf16.msra.mxu0 %v1784
        %2119 = vmatprep.subr.bf16.mxu0 0
        %2120 = vmatpush1.bf16.msra.mxu0 %v1785
        %2121 = vmatprep.subr.bf16.mxu0 0
        %2122 = vmatpush1.bf16.msra.mxu0 %v1786
        %2123 = vmatprep.subr.bf16.mxu0 0
        %2124 = vmatpush1.bf16.msra.mxu0 %v1787
        %2125 = vmatprep.subr.bf16.mxu0 0
        %2126 = vmatpush1.bf16.msra.mxu0 %v1788
        %2127 = vmatprep.subr.bf16.mxu0 0
        %2128 = vmatpush1.bf16.msra.mxu0 %v1789
        %2129 = vmatprep.subr.bf16.mxu0 0
        %2130 = vmatpush1.bf16.msra.mxu0 %v1790
        %2131 = vmatprep.subr.bf16.mxu0 0
        %2132 = vmatpush1.bf16.msra.mxu0 %v1791
        %2133 = vmatprep.subr.bf16.mxu0 0
        %2134 = vmatpush1.bf16.msra.mxu0 %v1792
        %2135 = vmatprep.mubr.bf16.mxu0 %v1039
        %2136 = vmatmul.mubr.bf16.gmra.mrb[0].mxu0 %v1038
        %v2137 = vpop.f32.mrb[0].mxu0
        %v2138 = vadd.f32 %v2073, %v2137
        %v2139 = vpop.f32.mrb[0].mxu0
        %v2140 = vpop.f32.mrb[0].mxu0
        %v2141 = vadd.f32 %v2076, %v2140
        %v2142 = vpop.f32.mrb[0].mxu0
        %2143 = vmatprep.mubr.bf16.mxu0 %v1053
        %2144 = vmatmul.mubr.bf16.gmra.mrb[0].mxu0 %v1052
        %v2145 = vpop.f32.mrb[0].mxu0
        %v2146 = vadd.f32 %v2081, %v2145
        %v2147 = vpop.f32.mrb[0].mxu0
        %v2148 = vpop.f32.mrb[0].mxu0
        %v2149 = vadd.f32 %v2084, %v2148
        %v2150 = vpop.f32.mrb[0].mxu0
        %2151 = vmatprep.mubr.bf16.mxu0 %v1067
        %2152 = vmatmul.mubr.bf16.gmra.mrb[0].mxu0 %v1066
        %v2153 = vpop.f32.mrb[0].mxu0
        %v2154 = vadd.f32 %v2089, %v2153
        %v2155 = vpop.f32.mrb[0].mxu0
        %v2156 = vpop.f32.mrb[0].mxu0
        %v2157 = vadd.f32 %v2092, %v2156
        %v2158 = vpop.f32.mrb[0].mxu0
        %2159 = vmatprep.mubr.bf16.mxu0 %v1081
        %2160 = vmatmul.mubr.bf16.gmra.mrb[0].mxu0 %v1080
        %v2161 = vpop.f32.mrb[0].mxu0
        %v2162 = vadd.f32 %v2097, %v2161
        %v2163 = vpop.f32.mrb[0].mxu0
        %v2164 = vpop.f32.mrb[0].mxu0
        %v2165 = vadd.f32 %v2100, %v2164
        %v2166 = vpop.f32.mrb[0].mxu0
        %2167 = vdwg.mxu0
        %2168 = vmatprep.subr.bf16.mxu0 0
        %2169 = vmatpush1.bf16.msra.mxu0 %v1793
        %2170 = vmatprep.subr.bf16.mxu0 0
        %2171 = vmatpush1.bf16.msra.mxu0 %v1794
        %2172 = vmatprep.subr.bf16.mxu0 0
        %2173 = vmatpush1.bf16.msra.mxu0 %v1795
        %2174 = vmatprep.subr.bf16.mxu0 0
        %2175 = vmatpush1.bf16.msra.mxu0 %v1796
        %2176 = vmatprep.subr.bf16.mxu0 0
        %2177 = vmatpush1.bf16.msra.mxu0 %v1797
        %2178 = vmatprep.subr.bf16.mxu0 0
        %2179 = vmatpush1.bf16.msra.mxu0 %v1798
        %2180 = vmatprep.subr.bf16.mxu0 0
        %2181 = vmatpush1.bf16.msra.mxu0 %v1799
        %2182 = vmatprep.subr.bf16.mxu0 0
        %2183 = vmatpush1.bf16.msra.mxu0 %v1800
        %2184 = vmatprep.subr.bf16.mxu0 0
        %2185 = vmatpush1.bf16.msra.mxu0 %v1801
        %2186 = vmatprep.subr.bf16.mxu0 0
        %2187 = vmatpush1.bf16.msra.mxu0 %v1802
        %2188 = vmatprep.subr.bf16.mxu0 0
        %2189 = vmatpush1.bf16.msra.mxu0 %v1803
        %2190 = vmatprep.subr.bf16.mxu0 0
        %2191 = vmatpush1.bf16.msra.mxu0 %v1804
        %2192 = vmatprep.subr.bf16.mxu0 0
        %2193 = vmatpush1.bf16.msra.mxu0 %v1805
        %2194 = vmatprep.subr.bf16.mxu0 0
        %2195 = vmatpush1.bf16.msra.mxu0 %v1806
        %2196 = vmatprep.subr.bf16.mxu0 0
        %2197 = vmatpush1.bf16.msra.mxu0 %v1807
        %2198 = vmatprep.subr.bf16.mxu0 0
        %2199 = vmatpush1.bf16.msra.mxu0 %v1808
        %2200 = vmatprep.mubr.bf16.mxu0 %v1041
        %2201 = vmatmul.mubr.bf16.gmra.mrb[0].mxu0 %v1040
        %v2202 = vpop.f32.mrb[0].mxu0
        %v2203 = vadd.f32 %v2138, %v2202
        %v2204 = vpop.f32.mrb[0].mxu0
        %v2205 = vpop.f32.mrb[0].mxu0
        %v2206 = vadd.f32 %v2141, %v2205
        %v2207 = vpop.f32.mrb[0].mxu0
        %2208 = vmatprep.mubr.bf16.mxu0 %v1055
        %2209 = vmatmul.mubr.bf16.gmra.mrb[0].mxu0 %v1054
        %v2210 = vpop.f32.mrb[0].mxu0
        %v2211 = vadd.f32 %v2146, %v2210
        %v2212 = vpop.f32.mrb[0].mxu0
        %v2213 = vpop.f32.mrb[0].mxu0
        %v2214 = vadd.f32 %v2149, %v2213
        %v2215 = vpop.f32.mrb[0].mxu0
        %2216 = vmatprep.mubr.bf16.mxu0 %v1069
        %2217 = vmatmul.mubr.bf16.gmra.mrb[0].mxu0 %v1068
        %v2218 = vpop.f32.mrb[0].mxu0
        %v2219 = vadd.f32 %v2154, %v2218
        %v2220 = vpop.f32.mrb[0].mxu0
        %v2221 = vpop.f32.mrb[0].mxu0
        %v2222 = vadd.f32 %v2157, %v2221
        %v2223 = vpop.f32.mrb[0].mxu0
        %2224 = vmatprep.mubr.bf16.mxu0 %v1083
        %2225 = vmatmul.mubr.bf16.gmra.mrb[0].mxu0 %v1082
        %v2226 = vpop.f32.mrb[0].mxu0
        %v2227 = vadd.f32 %v2162, %v2226
        %v2228 = vpop.f32.mrb[0].mxu0
        %v2229 = vpop.f32.mrb[0].mxu0
        %v2230 = vadd.f32 %v2165, %v2229
        %v2231 = vpop.f32.mrb[0].mxu0
        %2232 = vdwg.mxu0
        %2233 = vmatprep.subr.bf16.mxu0 0
        %2234 = vmatpush1.bf16.msra.mxu0 %v1809
        %2235 = vmatprep.subr.bf16.mxu0 0
        %2236 = vmatpush1.bf16.msra.mxu0 %v1810
        %2237 = vmatprep.subr.bf16.mxu0 0
        %2238 = vmatpush1.bf16.msra.mxu0 %v1811
        %2239 = vmatprep.subr.bf16.mxu0 0
        %2240 = vmatpush1.bf16.msra.mxu0 %v1812
        %2241 = vmatprep.subr.bf16.mxu0 0
        %2242 = vmatpush1.bf16.msra.mxu0 %v1813
        %2243 = vmatprep.subr.bf16.mxu0 0
        %2244 = vmatpush1.bf16.msra.mxu0 %v1814
        %2245 = vmatprep.subr.bf16.mxu0 0
        %2246 = vmatpush1.bf16.msra.mxu0 %v1815
        %2247 = vmatprep.subr.bf16.mxu0 0
        %2248 = vmatpush1.bf16.msra.mxu0 %v1816
        %2249 = vmatprep.subr.bf16.mxu0 0
        %2250 = vmatpush1.bf16.msra.mxu0 %v1817
        %2251 = vmatprep.subr.bf16.mxu0 0
        %2252 = vmatpush1.bf16.msra.mxu0 %v1818
        %2253 = vmatprep.subr.bf16.mxu0 0
        %2254 = vmatpush1.bf16.msra.mxu0 %v1819
        %2255 = vmatprep.subr.bf16.mxu0 0
        %2256 = vmatpush1.bf16.msra.mxu0 %v1820
        %2257 = vmatprep.subr.bf16.mxu0 0
        %2258 = vmatpush1.bf16.msra.mxu0 %v1821
        %2259 = vmatprep.subr.bf16.mxu0 0
        %2260 = vmatpush1.bf16.msra.mxu0 %v1822
        %2261 = vmatprep.subr.bf16.mxu0 0
        %2262 = vmatpush1.bf16.msra.mxu0 %v1823
        %2263 = vmatprep.subr.bf16.mxu0 0
        %2264 = vmatpush1.bf16.msra.mxu0 %v1824
        %2265 = vmatprep.mubr.bf16.mxu0 %v1043
        %2266 = vmatmul.mubr.bf16.gmra.mrb[0].mxu0 %v1042
        %v2267 = vpop.f32.mrb[0].mxu0
        %v2268 = vadd.f32 %v2203, %v2267
        %v2269 = vpop.f32.mrb[0].mxu0
        %v2270 = vpop.f32.mrb[0].mxu0
        %v2271 = vadd.f32 %v2206, %v2270
        %v2272 = vpop.f32.mrb[0].mxu0
        %2273 = vmatprep.mubr.bf16.mxu0 %v1057
        %2274 = vmatmul.mubr.bf16.gmra.mrb[0].mxu0 %v1056
        %v2275 = vpop.f32.mrb[0].mxu0
        %v2276 = vadd.f32 %v2211, %v2275
        %v2277 = vpop.f32.mrb[0].mxu0
        %v2278 = vpop.f32.mrb[0].mxu0
        %v2279 = vadd.f32 %v2214, %v2278
        %v2280 = vpop.f32.mrb[0].mxu0
        %2281 = vmatprep.mubr.bf16.mxu0 %v1071
        %2282 = vmatmul.mubr.bf16.gmra.mrb[0].mxu0 %v1070
        %v2283 = vpop.f32.mrb[0].mxu0
        %v2284 = vadd.f32 %v2219, %v2283
        %v2285 = vpop.f32.mrb[0].mxu0
        %v2286 = vpop.f32.mrb[0].mxu0
        %v2287 = vadd.f32 %v2222, %v2286
        %v2288 = vpop.f32.mrb[0].mxu0
        %2289 = vmatprep.mubr.bf16.mxu0 %v1085
        %2290 = vmatmul.mubr.bf16.gmra.mrb[0].mxu0 %v1084
        %v2291 = vpop.f32.mrb[0].mxu0
        %v2292 = vadd.f32 %v2227, %v2291
        %v2293 = vpop.f32.mrb[0].mxu0
        %v2294 = vpop.f32.mrb[0].mxu0
        %v2295 = vadd.f32 %v2230, %v2294
        %v2296 = vpop.f32.mrb[0].mxu0
        %2297 = vdwg.mxu0
        %2298 = vmatprep.subr.bf16.mxu0 0
        %2299 = vmatpush1.bf16.msra.mxu0 %v1825
        %2300 = vmatprep.subr.bf16.mxu0 0
        %2301 = vmatpush1.bf16.msra.mxu0 %v1826
        %2302 = vmatprep.subr.bf16.mxu0 0
        %2303 = vmatpush1.bf16.msra.mxu0 %v1827
        %2304 = vmatprep.subr.bf16.mxu0 0
        %2305 = vmatpush1.bf16.msra.mxu0 %v1828
        %2306 = vmatprep.subr.bf16.mxu0 0
        %2307 = vmatpush1.bf16.msra.mxu0 %v1829
        %2308 = vmatprep.subr.bf16.mxu0 0
        %2309 = vmatpush1.bf16.msra.mxu0 %v1830
        %2310 = vmatprep.subr.bf16.mxu0 0
        %2311 = vmatpush1.bf16.msra.mxu0 %v1831
        %2312 = vmatprep.subr.bf16.mxu0 0
        %2313 = vmatpush1.bf16.msra.mxu0 %v1832
        %2314 = vmatprep.subr.bf16.mxu0 0
        %2315 = vmatpush1.bf16.msra.mxu0 %v1833
        %2316 = vmatprep.subr.bf16.mxu0 0
        %2317 = vmatpush1.bf16.msra.mxu0 %v1834
        %2318 = vmatprep.subr.bf16.mxu0 0
        %2319 = vmatpush1.bf16.msra.mxu0 %v1835
        %2320 = vmatprep.subr.bf16.mxu0 0
        %2321 = vmatpush1.bf16.msra.mxu0 %v1836
        %2322 = vmatprep.subr.bf16.mxu0 0
        %2323 = vmatpush1.bf16.msra.mxu0 %v1837
        %2324 = vmatprep.subr.bf16.mxu0 0
        %2325 = vmatpush1.bf16.msra.mxu0 %v1838
        %2326 = vmatprep.subr.bf16.mxu0 0
        %2327 = vmatpush1.bf16.msra.mxu0 %v1839
        %2328 = vmatprep.subr.bf16.mxu0 0
        %2329 = vmatpush1.bf16.msra.mxu0 %v1840
        %2330 = vmatprep.mubr.bf16.mxu0 %v1045
        %2331 = vmatmul.mubr.bf16.gmra.mrb[0].mxu0 %v1044
        %v2332 = vpop.f32.mrb[0].mxu0
        %v2333 = vadd.f32 %v2268, %v2332
        %v2334 = vpop.f32.mrb[0].mxu0
        %v2335 = vpop.f32.mrb[0].mxu0
        %v2336 = vadd.f32 %v2271, %v2335
        %v2337 = vpop.f32.mrb[0].mxu0
        %2338 = vmatprep.mubr.bf16.mxu0 %v1059
        %2339 = vmatmul.mubr.bf16.gmra.mrb[0].mxu0 %v1058
        %v2340 = vpop.f32.mrb[0].mxu0
        %v2341 = vadd.f32 %v2276, %v2340
        %v2342 = vpop.f32.mrb[0].mxu0
        %v2343 = vpop.f32.mrb[0].mxu0
        %v2344 = vadd.f32 %v2279, %v2343
        %v2345 = vpop.f32.mrb[0].mxu0
        %2346 = vmatprep.mubr.bf16.mxu0 %v1073
        %2347 = vmatmul.mubr.bf16.gmra.mrb[0].mxu0 %v1072
        %v2348 = vpop.f32.mrb[0].mxu0
        %v2349 = vadd.f32 %v2284, %v2348
        %v2350 = vpop.f32.mrb[0].mxu0
        %v2351 = vpop.f32.mrb[0].mxu0
        %v2352 = vadd.f32 %v2287, %v2351
        %v2353 = vpop.f32.mrb[0].mxu0
        %2354 = vmatprep.mubr.bf16.mxu0 %v1087
        %2355 = vmatmul.mubr.bf16.gmra.mrb[0].mxu0 %v1086
        %v2356 = vpop.f32.mrb[0].mxu0
        %v2357 = vadd.f32 %v2292, %v2356
        %v2358 = vpop.f32.mrb[0].mxu0
        %v2359 = vpop.f32.mrb[0].mxu0
        %v2360 = vadd.f32 %v2295, %v2359
        %v2361 = vpop.f32.mrb[0].mxu0
        %2362 = vdwg.mxu0
        %2363 = vmatprep.subr.bf16.mxu0 0
        %2364 = vmatpush1.bf16.msra.mxu0 %v1841
        %2365 = vmatprep.subr.bf16.mxu0 0
        %2366 = vmatpush1.bf16.msra.mxu0 %v1842
        %2367 = vmatprep.subr.bf16.mxu0 0
        %2368 = vmatpush1.bf16.msra.mxu0 %v1843
        %2369 = vmatprep.subr.bf16.mxu0 0
        %2370 = vmatpush1.bf16.msra.mxu0 %v1844
        %2371 = vmatprep.subr.bf16.mxu0 0
        %2372 = vmatpush1.bf16.msra.mxu0 %v1845
        %2373 = vmatprep.subr.bf16.mxu0 0
        %2374 = vmatpush1.bf16.msra.mxu0 %v1846
        %2375 = vmatprep.subr.bf16.mxu0 0
        %2376 = vmatpush1.bf16.msra.mxu0 %v1847
        %2377 = vmatprep.subr.bf16.mxu0 0
        %2378 = vmatpush1.bf16.msra.mxu0 %v1848
        %2379 = vmatprep.subr.bf16.mxu0 0
        %2380 = vmatpush1.bf16.msra.mxu0 %v1849
        %2381 = vmatprep.subr.bf16.mxu0 0
        %2382 = vmatpush1.bf16.msra.mxu0 %v1850
        %2383 = vmatprep.subr.bf16.mxu0 0
        %2384 = vmatpush1.bf16.msra.mxu0 %v1851
        %2385 = vmatprep.subr.bf16.mxu0 0
        %2386 = vmatpush1.bf16.msra.mxu0 %v1852
        %2387 = vmatprep.subr.bf16.mxu0 0
        %2388 = vmatpush1.bf16.msra.mxu0 0
        %2389 = vmatprep.subr.bf16.mxu0 0
        %2390 = vmatpush1.bf16.msra.mxu0 0
        %2391 = vmatprep.subr.bf16.mxu0 0
        %2392 = vmatpush1.bf16.msra.mxu0 0
        %2393 = vmatprep.subr.bf16.mxu0 0
        %2394 = vmatpush1.bf16.msra.mxu0 0
        %2395 = vmatprep.mubr.bf16.mxu0 %v1962
        %2396 = vmatmul.mubr.bf16.gmra.mrb[0].mxu0 %v1046
        %v2397 = vpop.f32.mrb[0].mxu0
        %v2398 = vadd.f32 %v2333, %v2397
        %v2399 = vpop.f32.mrb[0].mxu0
        %v2400 = vpop.f32.mrb[0].mxu0
        %v2401 = vadd.f32 %v2336, %v2400
        %v2402 = vpop.f32.mrb[0].mxu0
        %2403 = vmatprep.mubr.bf16.mxu0 %v1965
        %2404 = vmatmul.mubr.bf16.gmra.mrb[0].mxu0 %v1060
        %v2405 = vpop.f32.mrb[0].mxu0
        %v2406 = vadd.f32 %v2341, %v2405
        %v2407 = vpop.f32.mrb[0].mxu0
        %v2408 = vpop.f32.mrb[0].mxu0
        %v2409 = vadd.f32 %v2344, %v2408
        %v2410 = vpop.f32.mrb[0].mxu0
        %2411 = vmatprep.mubr.bf16.mxu0 %v1968
        %2412 = vmatmul.mubr.bf16.gmra.mrb[0].mxu0 %v1074
        %v2413 = vpop.f32.mrb[0].mxu0
        %v2414 = vadd.f32 %v2349, %v2413
        %v2415 = vpop.f32.mrb[0].mxu0
        %v2416 = vpop.f32.mrb[0].mxu0
        %v2417 = vadd.f32 %v2352, %v2416
        %v2418 = vpop.f32.mrb[0].mxu0
        %2419 = vmatprep.mubr.bf16.mxu0 %v1971
        %2420 = vmatmul.mubr.bf16.gmra.mrb[0].mxu0 %v1088
        %v2421 = vpop.f32.mrb[0].mxu0
        %v2422 = vadd.f32 %v2357, %v2421
        %v2423 = vpop.f32.mrb[0].mxu0
        %v2424 = vpop.f32.mrb[0].mxu0
        %v2425 = vadd.f32 %v2360, %v2424
        %v2426 = vpop.f32.mrb[0].mxu0
        %2427 = vdwg.mxu0
        %2428 = vst [vmem:[%s297] sm:$0xff] %v2398
        %2429 = vst [vmem:[%s297 + $0x8] sm:$0xff] %v2401
        %2430 = vst [vmem:[%s297 + $0x10] sm:$0xff] %v2406
        %2431 = vst [vmem:[%s297 + $0x18] sm:$0xff] %v2409
        %2432 = vst [vmem:[%s297 + $0x20] sm:$0xff] %v2414
        %2433 = vst [vmem:[%s297 + $0x28] sm:$0xff] %v2417
        %2434 = vst [vmem:[%s297 + $0x30] sm:$0xff] %v2422
        %2435 = vst [vmem:[%s297 + $0x38] sm:$0xff] %v2425
        %v2436 = vadd.f32 %v2398, %v2401
        %v2437 = vadd.f32 %v2436, %v2406
        %v2438 = vadd.f32 %v2437, %v2409
        %v2439 = vadd.f32 %v2438, %v2414
        %v2440 = vadd.f32 %v2439, %v2417
        %v2441 = vadd.f32 %v2440, %v2422
        %v2442 = vadd.f32 %v2441, %v2425
        %v2443 = vrot.slane %v2442, 4
        %v2444 = vadd.f32 %v2442, %v2443
        %v2445 = vrot.slane %v2444, 2
        %v2446 = vadd.f32 %v2444, %v2445
        %v2447 = vrot.slane %v2446, 1
        %v2448 = vadd.f32 %v2446, %v2447
        %2449 = vst [vmem:[%s304] sm:$0x1] %v2448
        %v2450 = vmul.f32 %v2398, %v2398
        %v2451 = vmul.f32 %v2401, %v2401
        %v2452 = vmul.f32 %v2406, %v2406
        %v2453 = vmul.f32 %v2409, %v2409
        %v2454 = vmul.f32 %v2414, %v2414
        %v2455 = vmul.f32 %v2417, %v2417
        %v2456 = vmul.f32 %v2422, %v2422
        %v2457 = vmul.f32 %v2425, %v2425
        %v2458 = vadd.f32 %v2450, %v2451
        %v2459 = vadd.f32 %v2458, %v2452
        %v2460 = vadd.f32 %v2459, %v2453
        %v2461 = vadd.f32 %v2460, %v2454
        %v2462 = vadd.f32 %v2461, %v2455
        %v2463 = vadd.f32 %v2462, %v2456
        %v2464 = vadd.f32 %v2463, %v2457
        %v2465 = vrot.slane %v2464, 4
        %v2466 = vadd.f32 %v2464, %v2465
        %v2467 = vrot.slane %v2466, 2
        %v2468 = vadd.f32 %v2466, %v2467
        %v2469 = vrot.slane %v2468, 1
        %v2470 = vadd.f32 %v2468, %v2469
        %2471 = vst [vmem:[%s311] sm:$0x1] %v2470
        %p2472 = scmp.lt.s32.totalorder %s23, 1
        %s2473 = scalar_select %p2472, %s23, 1
        %p2474 = scmp.lt.s32.totalorder %s24, 3
        %s2475 = scalar_select %p2474, %s24, 3
        %s2476 = smul.addr %s2475, 8
        %s2477 = smul.addr %s2473, 32
        %s2478 = sadd.s32 %s2476, %s2477
        %s2479 = smul.addr %s2478, 8
        %s2480 = scalar_lea.vmem %s3, %s2479
        %p2481 = scmp.lt.s32.totalorder %s23, 1
        %s2482 = scalar_select %p2481, %s23, 1
        %p2483 = scmp.lt.s32.totalorder %s24, 3
        %s2484 = scalar_select %p2483, %s24, 3
        %s2485 = smul.addr %s2482, 4
        %s2486 = sadd.s32 %s2484, %s2485
        %s2487 = scalar_lea.vmem %s4, %s2486
        %p2488 = scmp.lt.s32.totalorder %s23, 1
        %s2489 = scalar_select %p2488, %s23, 1
        %p2490 = scmp.lt.s32.totalorder %s24, 3
        %s2491 = scalar_select %p2490, %s24, 3
        %s2492 = smul.addr %s2489, 4
        %s2493 = sadd.s32 %s2491, %s2492
        %s2494 = scalar_lea.vmem %s5, %s2493
        // Predicated region
        $region41: #{transformer3d_forward.10} parent=31 // pred_check
          %p2495 = pneg %p119
        $region42: #{transformer3d_forward.10} parent=31 // pred_check_branch
          %2497 = sbr.rel (%p2495) target = $region44
        $region43: #{transformer3d_forward.10} parent=31 // pred_region
          _
        $region44: #{transformer3d_forward.10} parent=31 // pred_fallthru
          _
        // Predicated region
        $region45: #{transformer3d_forward.10} parent=31 // pred_check
          %p2498 = pneg %p147
        $region46: #{transformer3d_forward.10} parent=31 // pred_check_branch
          %2500 = sbr.rel (%p2498) target = $region48
        $region47: #{transformer3d_forward.10} parent=31 // pred_region
          _
        $region48: #{transformer3d_forward.10} parent=31 // pred_fallthru
          _
        // Predicated region
        $region49: #{transformer3d_forward.10} parent=31 // pred_check
          %p2501 = pneg %p175
        $region50: #{transformer3d_forward.10} parent=31 // pred_check_branch
          %2503 = sbr.rel (%p2501) target = $region52
        $region51: #{transformer3d_forward.10} parent=31 // pred_region
          _
        $region52: #{transformer3d_forward.10} parent=31 // pred_fallthru
          _
      $region32: #{transformer3d_forward.10} parent=5 // pred_fallthru
        _
      %p2504 = scmp.le.s32.totalorder 2, %s14
      // Predicated region
      $region53: #{transformer3d_forward.10} parent=5 // pred_check
        %p2505 = pneg %p2504
      $region54: #{transformer3d_forward.10} parent=5 // pred_check_branch
        %2507 = sbr.rel (%p2505) target = $region56
      $region55: #{transformer3d_forward.10} parent=5 // pred_region
        %s2508 = ssub.s32 %s14, 2
        // Predicated region
        $region57: #{transformer3d_forward.10} parent=55 // pred_check
          %p2509 = pneg %p125
        $region58: #{transformer3d_forward.10} parent=55 // pred_check_branch
          %2511 = sbr.rel (%p2509) target = $region60
        $region59: #{transformer3d_forward.10} parent=55 // pred_region
          %p2512 = scmp.lt.s32.totalorder %s25, 1
          %s2513 = scalar_select %p2512, %s25, 1
          %p2514 = scmp.lt.s32.totalorder %s26, 3
          %s2515 = scalar_select %p2514, %s26, 3
          %s2516 = smul.addr %s2515, 8
          %s2517 = smul.addr %s2513, 32
          %s2518 = sadd.s32 %s2516, %s2517
          %s2519 = smul.addr %s2518, 8
          %s2520 = scalar_lea.vmem %s3, %s2519
        $region60: #{transformer3d_forward.10} parent=55 // pred_fallthru
          _
        // Predicated region
        $region61: #{transformer3d_forward.10} parent=55 // pred_check
          %p2521 = pneg %p153
        $region62: #{transformer3d_forward.10} parent=55 // pred_check_branch
          %2523 = sbr.rel (%p2521) target = $region64
        $region63: #{transformer3d_forward.10} parent=55 // pred_region
          %p2524 = scmp.lt.s32.totalorder %s25, 1
          %s2525 = scalar_select %p2524, %s25, 1
          %p2526 = scmp.lt.s32.totalorder %s26, 3
          %s2527 = scalar_select %p2526, %s26, 3
          %s2528 = smul.addr %s2525, 4
          %s2529 = sadd.s32 %s2527, %s2528
          %s2530 = scalar_lea.vmem %s4, %s2529
        $region64: #{transformer3d_forward.10} parent=55 // pred_fallthru
          _
        // Predicated region
        $region65: #{transformer3d_forward.10} parent=55 // pred_check
          %p2531 = pneg %p181
        $region66: #{transformer3d_forward.10} parent=55 // pred_check_branch
          %2533 = sbr.rel (%p2531) target = $region68
        $region67: #{transformer3d_forward.10} parent=55 // pred_region
          %p2534 = scmp.lt.s32.totalorder %s25, 1
          %s2535 = scalar_select %p2534, %s25, 1
          %p2536 = scmp.lt.s32.totalorder %s26, 3
          %s2537 = scalar_select %p2536, %s26, 3
          %s2538 = smul.addr %s2535, 4
          %s2539 = sadd.s32 %s2537, %s2538
          %s2540 = scalar_lea.vmem %s5, %s2539
        $region68: #{transformer3d_forward.10} parent=55 // pred_fallthru
          _
      $region56: #{transformer3d_forward.10} parent=5 // pred_fallthru
        _
    $region6: #{transformer3d_forward.10} parent=1 // loop_footer
      %s18 = sadd.s32 1, %s14
    $region7: #{transformer3d_forward.10} parent=1 // loop_footer_branch
      %13 = sbr.rel target = $region3
    $region8: #{transformer3d_forward.10} parent=1 // loop_exit
      _
    %2541 = vsyncpa [#allocation4], 1
    %s2542 = scalar_lea.sflag [#allocation4], 1
    %2543 = vsyncpa %s2542, 1
    %2544 = vsyncpa [#allocation6], 1

// kernel: transformer3d_forward.11
$region0: #{transformer3d_forward.11}
  #allocation0 [shape = 'u32[]', space=smem, size = 0x4, offset = 0x4, fixed_abs, tag = 'smem constant byte address 0x4 - core index']
  #allocation1 [shape = 'u32[144,128]{1,0:T(1,128)}', space=vmem, size = 0x12000, scoped, tag = 'internal scratch']
  #allocation2 [shape = 'f32[2,128]{1,0:T(2,128)}', space=vmem, size = 0x400, scoped, tag = 'scratch operand']
  %s0 = inlined_call_operand.vmem [shape: f32[2,32768], index: 0, kind: input, shape index: {}]
  %s1 = inlined_call_operand.vmem [shape: f32[1,32768], index: 1, kind: input, shape index: {}]
  %s2 = inlined_call_operand.vmem [shape: f32[1,32768], index: 2, kind: input, shape index: {}]
  %s3 = inlined_call_operand.vmem [shape: bf16[32768,128], index: 3, kind: input, shape index: {}]
  %s4 = inlined_call_operand.vmem [shape: f32[1,128], index: 4, kind: input, shape index: {}]
  %s5 = inlined_call_operand.hbm [shape: f32[2,128], index: 5, kind: output, shape index: {}]
  %s6 = sld [smem:[#allocation0]]
  $region61: #{transformer3d_forward.11} parent=0
    _
  %s8 = ssub.s32 1, %s6
  %s9 = scalar_select 0, %s8, %s6
  $region1: #{transformer3d_forward.11} parent=0
    #allocation3 [shape = 'u8[1024]{0}', space=vmem, size = 0x400, scoped, tag = 'output window, operand 0, single buffered']
    #allocation4 [shape = 's32[2]{0}', space=sflag, size = 0x8, scoped, tag = 'scoped memory for transformer3d_forward.11']
    %10 = vsyncpa [#allocation4], 0
    loop: start=0, step=1, limit=18
    $region2: #{transformer3d_forward.11} parent=1 // loop_pre_header
      _
    $region3: #{transformer3d_forward.11} parent=1 // loop_header
      %s12 = sphi 0, %s16
      %p13 = scmp.ge.s32.totalorder %s12, 18
      %s22 = sphi 0, %s24
      %s25 = sphi 0, %s22
      %s26 = sphi 0, %s25
      %s42 = sphi 0, %s26
      %s48 = sphi 0, %s50
      %s51 = sphi 0, %s48
      %s52 = sphi 0, %s51
      %s68 = sphi 0, %s52
      %s74 = sphi 0, %s76
      %s77 = sphi 0, %s74
      %s78 = sphi 0, %s77
      %s94 = sphi 0, %s78
      %s100 = sphi 0, %s102
      %s103 = sphi 0, %s100
      %s104 = sphi 0, %s103
      %s120 = sphi 0, %s104
      %s124 = sphi 0, %s124
      %s126 = sphi 0, %s124
      %s127 = sphi 0, %s126
      %s141 = sphi 0, %s127
      %s145 = sphi 0, %s145
      %s147 = sphi 0, %s145
      %s148 = sphi 0, %s147
      %s162 = sphi 0, %s148
    $region4: #{transformer3d_forward.11} parent=1 // loop_header_branch
      %15 = sbr.rel (%p13) target = $region8
    $region5: #{transformer3d_forward.11} parent=1 // loop_body
      %s17 = ssub.s32 %s12, 1
      %s18 = ssub.s32 %s12, 2
      %s19 = sadd.s32 %s12, 1
      %s20 = ssub.s32 %s12, %s19
      %p21 = scmp.eq.s32.totalorder %s20, 0
      %s23 = sadd.s32 %s22, 1
      %s24 = scalar_select %p21, %s22, %s23
      %p27 = pneg %p21
      %p28 = scmp.eq.s32.totalorder %s12, 15
      %p29 = por %p27, %p28
      %p30 = scmp.ne.s32.totalorder %s22, %s25
      %p31 = scmp.eq.s32.totalorder %s12, 0
      %p32 = por %p30, %p31
      %p33 = scmp.ne.s32.totalorder %s22, %s25
      %p34 = scmp.eq.s32.totalorder %s17, 15
      %p35 = por %p33, %p34
      %p36 = scmp.ne.s32.totalorder %s25, %s26
      %p37 = scmp.eq.s32.totalorder %s17, 0
      %p38 = por %p36, %p37
      %p39 = scmp.ne.s32.totalorder %s25, %s26
      %p40 = scmp.eq.s32.totalorder %s18, 15
      %p41 = por %p39, %p40
      %p43 = scmp.ne.s32.totalorder %s26, %s42
      %p44 = scmp.eq.s32.totalorder %s18, 0
      %p45 = por %p43, %p44
      %s46 = ssub.s32 %s12, %s19
      %p47 = scmp.eq.s32.totalorder %s46, 0
      %s49 = sadd.s32 %s48, 1
      %s50 = scalar_select %p47, %s48, %s49
      %p53 = pneg %p47
      %p54 = scmp.eq.s32.totalorder %s12, 15
      %p55 = por %p53, %p54
      %p56 = scmp.ne.s32.totalorder %s48, %s51
      %p57 = scmp.eq.s32.totalorder %s12, 0
      %p58 = por %p56, %p57
      %p59 = scmp.ne.s32.totalorder %s48, %s51
      %p60 = scmp.eq.s32.totalorder %s17, 15
      %p61 = por %p59, %p60
      %p62 = scmp.ne.s32.totalorder %s51, %s52
      %p63 = scmp.eq.s32.totalorder %s17, 0
      %p64 = por %p62, %p63
      %p65 = scmp.ne.s32.totalorder %s51, %s52
      %p66 = scmp.eq.s32.totalorder %s18, 15
      %p67 = por %p65, %p66
      %p69 = scmp.ne.s32.totalorder %s52, %s68
      %p70 = scmp.eq.s32.totalorder %s18, 0
      %p71 = por %p69, %p70
      %s72 = ssub.s32 %s12, %s19
      %p73 = scmp.eq.s32.totalorder %s72, 0
      %s75 = sadd.s32 %s74, 1
      %s76 = scalar_select %p73, %s74, %s75
      %p79 = pneg %p73
      %p80 = scmp.eq.s32.totalorder %s12, 15
      %p81 = por %p79, %p80
      %p82 = scmp.ne.s32.totalorder %s74, %s77
      %p83 = scmp.eq.s32.totalorder %s12, 0
      %p84 = por %p82, %p83
      %p85 = scmp.ne.s32.totalorder %s74, %s77
      %p86 = scmp.eq.s32.totalorder %s17, 15
      %p87 = por %p85, %p86
      %p88 = scmp.ne.s32.totalorder %s77, %s78
      %p89 = scmp.eq.s32.totalorder %s17, 0
      %p90 = por %p88, %p89
      %p91 = scmp.ne.s32.totalorder %s77, %s78
      %p92 = scmp.eq.s32.totalorder %s18, 15
      %p93 = por %p91, %p92
      %p95 = scmp.ne.s32.totalorder %s78, %s94
      %p96 = scmp.eq.s32.totalorder %s18, 0
      %p97 = por %p95, %p96
      %s98 = ssub.s32 %s12, %s19
      %p99 = scmp.eq.s32.totalorder %s98, 0
      %s101 = sadd.s32 %s100, 1
      %s102 = scalar_select %p99, %s100, %s101
      %p105 = pneg %p99
      %p106 = scmp.eq.s32.totalorder %s12, 15
      %p107 = por %p105, %p106
      %p108 = scmp.ne.s32.totalorder %s100, %s103
      %p109 = scmp.eq.s32.totalorder %s12, 0
      %p110 = por %p108, %p109
      %p111 = scmp.ne.s32.totalorder %s100, %s103
      %p112 = scmp.eq.s32.totalorder %s17, 15
      %p113 = por %p111, %p112
      %p114 = scmp.ne.s32.totalorder %s103, %s104
      %p115 = scmp.eq.s32.totalorder %s17, 0
      %p116 = por %p114, %p115
      %p117 = scmp.ne.s32.totalorder %s103, %s104
      %p118 = scmp.eq.s32.totalorder %s18, 15
      %p119 = por %p117, %p118
      %p121 = scmp.ne.s32.totalorder %s104, %s120
      %p122 = scmp.eq.s32.totalorder %s18, 0
      %p123 = por %p121, %p122
      %s125 = sadd.s32 %s124, 1
      %p128 = scmp.eq.s32.totalorder %s12, 15
      %p129 = scmp.ne.s32.totalorder %s124, %s126
      %p130 = scmp.eq.s32.totalorder %s12, 0
      %p131 = por %p129, %p130
      %p132 = scmp.ne.s32.totalorder %s124, %s126
      %p133 = scmp.eq.s32.totalorder %s17, 15
      %p134 = por %p132, %p133
      %p135 = scmp.ne.s32.totalorder %s126, %s127
      %p136 = scmp.eq.s32.totalorder %s17, 0
      %p137 = por %p135, %p136
      %p138 = scmp.ne.s32.totalorder %s126, %s127
      %p139 = scmp.eq.s32.totalorder %s18, 15
      %p140 = por %p138, %p139
      %p142 = scmp.ne.s32.totalorder %s127, %s141
      %p143 = scmp.eq.s32.totalorder %s18, 0
      %p144 = por %p142, %p143
      %s146 = sadd.s32 %s145, 1
      %p149 = scmp.eq.s32.totalorder %s12, 15
      %p150 = scmp.ne.s32.totalorder %s145, %s147
      %p151 = scmp.eq.s32.totalorder %s12, 0
      %p152 = por %p150, %p151
      %p153 = scmp.ne.s32.totalorder %s145, %s147
      %p154 = scmp.eq.s32.totalorder %s17, 15
      %p155 = por %p153, %p154
      %p156 = scmp.ne.s32.totalorder %s147, %s148
      %p157 = scmp.eq.s32.totalorder %s17, 0
      %p158 = por %p156, %p157
      %p159 = scmp.ne.s32.totalorder %s147, %s148
      %p160 = scmp.eq.s32.totalorder %s18, 15
      %p161 = por %p159, %p160
      %p163 = scmp.ne.s32.totalorder %s148, %s162
      %p164 = scmp.eq.s32.totalorder %s18, 0
      %p165 = por %p163, %p164
      %p166 = scmp.le.s32.totalorder 1, %s12
      %p167 = scmp.lt.s32.totalorder %s12, 17
      %p168 = pnand %p166, %p167
      %p169 = pneg %p168
      // Predicated region
      $region9: #{transformer3d_forward.11} parent=5 // pred_check
        _
      $region10: #{transformer3d_forward.11} parent=5 // pred_check_branch
        %171 = sbr.rel (%p168) target = $region12
      $region11: #{transformer3d_forward.11} parent=5 // pred_region
        %s172 = ssub.s32 %s12, 1
        // Predicated region
        $region13: #{transformer3d_forward.11} parent=11 // pred_check
          %p173 = pneg %p137
        $region14: #{transformer3d_forward.11} parent=11 // pred_check_branch
          %175 = sbr.rel (%p173) target = $region16
        $region15: #{transformer3d_forward.11} parent=11 // pred_region
          _
        $region16: #{transformer3d_forward.11} parent=11 // pred_fallthru
          _
      $region12: #{transformer3d_forward.11} parent=5 // pred_fallthru
        _
      %p176 = scmp.lt.s32.totalorder %s12, 16
      // Predicated region
      $region17: #{transformer3d_forward.11} parent=5 // pred_check
        %p177 = pneg %p176
      $region18: #{transformer3d_forward.11} parent=5 // pred_check_branch
        %179 = sbr.rel (%p177) target = $region20
      $region19: #{transformer3d_forward.11} parent=5 // pred_region
        // Predicated region
        $region21: #{transformer3d_forward.11} parent=19 // pred_check
          %p180 = pneg %p32
        $region22: #{transformer3d_forward.11} parent=19 // pred_check_branch
          %182 = sbr.rel (%p180) target = $region24
        $region23: #{transformer3d_forward.11} parent=19 // pred_region
          %s183 = smul.u32 16, %s12
          %p184 = scmp.lt.s32.totalorder %s183, 255
          %s185 = scalar_select %p184, %s183, 255
          %s186 = smul.addr %s185, 2
          %s187 = scalar_lea.vmem %s0, %s186
          %s188 = smul.u32 16, %s12
        $region24: #{transformer3d_forward.11} parent=19 // pred_fallthru
          _
        // Predicated region
        $region25: #{transformer3d_forward.11} parent=19 // pred_check
          %p189 = pneg %p58
        $region26: #{transformer3d_forward.11} parent=19 // pred_check_branch
          %191 = sbr.rel (%p189) target = $region28
        $region27: #{transformer3d_forward.11} parent=19 // pred_region
          %s192 = smul.u32 16, %s12
          %p193 = scmp.lt.s32.totalorder %s192, 255
          %s194 = scalar_select %p193, %s192, 255
          %s195 = scalar_lea.vmem %s1, %s194
          %s196 = smul.u32 16, %s12
        $region28: #{transformer3d_forward.11} parent=19 // pred_fallthru
          _
        // Predicated region
        $region29: #{transformer3d_forward.11} parent=19 // pred_check
          %p197 = pneg %p84
        $region30: #{transformer3d_forward.11} parent=19 // pred_check_branch
          %199 = sbr.rel (%p197) target = $region32
        $region31: #{transformer3d_forward.11} parent=19 // pred_region
          %s200 = smul.u32 16, %s12
          %p201 = scmp.lt.s32.totalorder %s200, 255
          %s202 = scalar_select %p201, %s200, 255
          %s203 = scalar_lea.vmem %s2, %s202
          %s204 = smul.u32 16, %s12
        $region32: #{transformer3d_forward.11} parent=19 // pred_fallthru
          _
        // Predicated region
        $region33: #{transformer3d_forward.11} parent=19 // pred_check
          %p205 = pneg %p110
        $region34: #{transformer3d_forward.11} parent=19 // pred_check_branch
          %207 = sbr.rel (%p205) target = $region36
        $region35: #{transformer3d_forward.11} parent=19 // pred_region
          %s208 = smul.u32 256, %s12
          %p209 = scmp.lt.s32.totalorder %s208, 4095
          %s210 = scalar_select %p209, %s208, 4095
          %s211 = smul.addr %s210, 4
          %s212 = scalar_lea.vmem %s3, %s211
          %s213 = smul.u32 256, %s12
        $region36: #{transformer3d_forward.11} parent=19 // pred_fallthru
          _
      $region20: #{transformer3d_forward.11} parent=5 // pred_fallthru
        _
      %p214 = scmp.le.s32.totalorder 1, %s12
      %p215 = scmp.lt.s32.totalorder %s12, 17
      %p216 = pnand %p214, %p215
      %p217 = pneg %p216
      // Predicated region
      $region37: #{transformer3d_forward.11} parent=5 // pred_check
        _
      $region38: #{transformer3d_forward.11} parent=5 // pred_check_branch
        %219 = sbr.rel (%p216) target = $region40
      $region39: #{transformer3d_forward.11} parent=5 // pred_region
        %s220 = ssub.s32 %s12, 1
        %s221 = smul.u32 16, %s17
        %p222 = scmp.lt.s32.totalorder %s221, 255
        %s223 = scalar_select %p222, %s221, 255
        %s224 = smul.addr %s223, 2
        %s225 = scalar_lea.vmem %s0, %s224
        %p226 = pneg %p38
        %p227 = pneg %p35
        %s228 = smul.u32 16, %s17
        %p229 = scmp.lt.s32.totalorder %s228, 255
        %s230 = scalar_select %p229, %s228, 255
        %s231 = scalar_lea.vmem %s1, %s230
        %p232 = pneg %p64
        %p233 = pneg %p61
        %s234 = smul.u32 16, %s17
        %p235 = scmp.lt.s32.totalorder %s234, 255
        %s236 = scalar_select %p235, %s234, 255
        %s237 = scalar_lea.vmem %s2, %s236
        %p238 = pneg %p90
        %p239 = pneg %p87
        %s240 = smul.u32 256, %s17
        %p241 = scmp.lt.s32.totalorder %s240, 4095
        %s242 = scalar_select %p241, %s240, 4095
        %s243 = smul.addr %s242, 4
        %s244 = scalar_lea.vmem %s3, %s243
        %p245 = pneg %p116
        %p246 = pneg %p113
        %p247 = pneg %p137
        %p248 = pneg %p134
        %p249 = pneg %p158
        %p250 = pneg %p155
        %s251 = smul.u32 16, %s17
        %p252 = scmp.lt.s32.totalorder %s251, 255
        %s253 = scalar_select %p252, %s251, 255
        %s254 = smul.addr %s253, 2
        %s255 = scalar_lea.vmem %s0, %s254
        %s256 = smul.u32 16, %s17
        %s257 = smul.u32 16, %s17
        %p258 = scmp.lt.s32.totalorder %s257, 255
        %s259 = scalar_select %p258, %s257, 255
        %s260 = scalar_lea.vmem %s1, %s259
        %s261 = smul.u32 16, %s17
        %s262 = smul.u32 16, %s17
        %p263 = scmp.lt.s32.totalorder %s262, 255
        %s264 = scalar_select %p263, %s262, 255
        %s265 = scalar_lea.vmem %s2, %s264
        %s266 = smul.u32 16, %s17
        %s267 = smul.u32 256, %s17
        %p268 = scmp.lt.s32.totalorder %s267, 4095
        %s269 = scalar_select %p268, %s267, 4095
        %s270 = smul.addr %s269, 4
        %s271 = scalar_lea.vmem %s3, %s270
        %s272 = smul.u32 256, %s17
        %p274 = scmp.eq.s32.totalorder %s17, 0
        // Predicated region
        $region41: #{transformer3d_forward.11} parent=39 // pred_check
          %p275 = pneg %p274
        $region42: #{transformer3d_forward.11} parent=39 // pred_check_branch
          %277 = sbr.rel (%p275) target = $region44
        $region43: #{transformer3d_forward.11} parent=39 // pred_region
          %278 = vst [vmem:[#allocation2] sm:$0x3] 0.0
        $region44: #{transformer3d_forward.11} parent=39 // pred_fallthru
          _
        %v279 = vld [vmem:[%s255] sm:$0xff]
        %v280 = vld [vmem:[%s255 + $0x8] sm:$0xff]
        %v281 = vld [vmem:[%s255 + $0x10] sm:$0xff]
        %v282 = vld [vmem:[%s255 + $0x18] sm:$0xff]
        %v283 = vld [vmem:[%s260] sm:$0xff]
        %v284 = vld [vmem:[%s260 + $0x8] sm:$0xff]
        %v287 = vlaneseq
        %v288 = vshrl.u32 %v287, 7
        %v289 = vsub.s32 0, %v288
        %v290 = vrot.slane %v283, %v289
        %v291 = vlaneseq
        %v292 = vshrl.u32 %v291, 7
        %v293 = vsub.s32 1, %v292
        %v294 = vrot.slane %v283, %v293
        %v295 = vlaneseq
        %v296 = vshrl.u32 %v295, 7
        %v297 = vsub.s32 2, %v296
        %v298 = vrot.slane %v283, %v297
        %v299 = vlaneseq
        %v300 = vshrl.u32 %v299, 7
        %v301 = vsub.s32 3, %v300
        %v302 = vrot.slane %v283, %v301
        %v303 = vlaneseq
        %v304 = vshrl.u32 %v303, 7
        %v305 = vsub.s32 4, %v304
        %v306 = vrot.slane %v283, %v305
        %v307 = vlaneseq
        %v308 = vshrl.u32 %v307, 7
        %v309 = vsub.s32 5, %v308
        %v310 = vrot.slane %v283, %v309
        %v311 = vlaneseq
        %v312 = vshrl.u32 %v311, 7
        %v313 = vsub.s32 6, %v312
        %v314 = vrot.slane %v283, %v313
        %v315 = vlaneseq
        %v316 = vshrl.u32 %v315, 7
        %v317 = vsub.s32 7, %v316
        %v318 = vrot.slane %v283, %v317
        %v319 = vlaneseq
        %v320 = vshrl.u32 %v319, 7
        %v321 = vsub.s32 0, %v320
        %v322 = vrot.slane %v284, %v321
        %v323 = vlaneseq
        %v324 = vshrl.u32 %v323, 7
        %v325 = vsub.s32 1, %v324
        %v326 = vrot.slane %v284, %v325
        %v327 = vlaneseq
        %v328 = vshrl.u32 %v327, 7
        %v329 = vsub.s32 2, %v328
        %v330 = vrot.slane %v284, %v329
        %v331 = vlaneseq
        %v332 = vshrl.u32 %v331, 7
        %v333 = vsub.s32 3, %v332
        %v334 = vrot.slane %v284, %v333
        %v335 = vlaneseq
        %v336 = vshrl.u32 %v335, 7
        %v337 = vsub.s32 4, %v336
        %v338 = vrot.slane %v284, %v337
        %v339 = vlaneseq
        %v340 = vshrl.u32 %v339, 7
        %v341 = vsub.s32 5, %v340
        %v342 = vrot.slane %v284, %v341
        %v343 = vlaneseq
        %v344 = vshrl.u32 %v343, 7
        %v345 = vsub.s32 6, %v344
        %v346 = vrot.slane %v284, %v345
        %v347 = vlaneseq
        %v348 = vshrl.u32 %v347, 7
        %v349 = vsub.s32 7, %v348
        %v350 = vrot.slane %v284, %v349
        %v351 = vcombine.low %v290, %v294
        %v352 = vcombine.low %v298, %v302
        %v354 = vunpack.c.l.s4 1983009808
        %v355 = vunpack.c.0.s8 %v354
        %v356 = vlaneseq
        %v357 = vshrl.u32 %v356, 7
        %v358 = vsub.s32 %v355, %v357
        %v359 = vrot.slane %v351, %v358
        %v361 = vunpack.c.l.s4 1983009808
        %v362 = vunpack.c.0.s8 %v361
        %v363 = vlaneseq
        %v364 = vshrl.u32 %v363, 7
        %v365 = vsub.s32 %v362, %v364
        %v366 = vrot.slane %v352, %v365
        %v367 = vcombine.low %v359, %v366
        %v368 = vcombine.low %v306, %v310
        %v369 = vcombine.low %v314, %v318
        %v371 = vunpack.c.l.s4 1983009808
        %v372 = vunpack.c.0.s8 %v371
        %v373 = vlaneseq
        %v374 = vshrl.u32 %v373, 7
        %v375 = vsub.s32 %v372, %v374
        %v376 = vrot.slane %v368, %v375
        %v378 = vunpack.c.l.s4 1983009808
        %v379 = vunpack.c.0.s8 %v378
        %v380 = vlaneseq
        %v381 = vshrl.u32 %v380, 7
        %v382 = vsub.s32 %v379, %v381
        %v383 = vrot.slane %v369, %v382
        %v384 = vcombine.low %v376, %v383
        %v385 = vcombine.low %v322, %v326
        %v386 = vcombine.low %v330, %v334
        %v388 = vunpack.c.l.s4 1983009808
        %v389 = vunpack.c.0.s8 %v388
        %v390 = vlaneseq
        %v391 = vshrl.u32 %v390, 7
        %v392 = vsub.s32 %v389, %v391
        %v393 = vrot.slane %v385, %v392
        %v395 = vunpack.c.l.s4 1983009808
        %v396 = vunpack.c.0.s8 %v395
        %v397 = vlaneseq
        %v398 = vshrl.u32 %v397, 7
        %v399 = vsub.s32 %v396, %v398
        %v400 = vrot.slane %v386, %v399
        %v401 = vcombine.low %v393, %v400
        %v402 = vcombine.low %v338, %v342
        %v403 = vcombine.low %v346, %v350
        %v405 = vunpack.c.l.s4 1983009808
        %v406 = vunpack.c.0.s8 %v405
        %v407 = vlaneseq
        %v408 = vshrl.u32 %v407, 7
        %v409 = vsub.s32 %v406, %v408
        %v410 = vrot.slane %v402, %v409
        %v412 = vunpack.c.l.s4 1983009808
        %v413 = vunpack.c.0.s8 %v412
        %v414 = vlaneseq
        %v415 = vshrl.u32 %v414, 7
        %v416 = vsub.s32 %v413, %v415
        %v417 = vrot.slane %v403, %v416
        %v418 = vcombine.low %v410, %v417
        %v423 = vmul.f32 %v279, %v367
        %v424 = vmul.f32 %v280, %v384
        %v425 = vmul.f32 %v281, %v401
        %v426 = vmul.f32 %v282, %v418
        %v427 = vld [vmem:[%s265] sm:$0xff]
        %v428 = vld [vmem:[%s265 + $0x8] sm:$0xff]
        %v431 = vlaneseq
        %v432 = vshrl.u32 %v431, 7
        %v433 = vsub.s32 0, %v432
        %v434 = vrot.slane %v427, %v433
        %v435 = vlaneseq
        %v436 = vshrl.u32 %v435, 7
        %v437 = vsub.s32 1, %v436
        %v438 = vrot.slane %v427, %v437
        %v439 = vlaneseq
        %v440 = vshrl.u32 %v439, 7
        %v441 = vsub.s32 2, %v440
        %v442 = vrot.slane %v427, %v441
        %v443 = vlaneseq
        %v444 = vshrl.u32 %v443, 7
        %v445 = vsub.s32 3, %v444
        %v446 = vrot.slane %v427, %v445
        %v447 = vlaneseq
        %v448 = vshrl.u32 %v447, 7
        %v449 = vsub.s32 4, %v448
        %v450 = vrot.slane %v427, %v449
        %v451 = vlaneseq
        %v452 = vshrl.u32 %v451, 7
        %v453 = vsub.s32 5, %v452
        %v454 = vrot.slane %v427, %v453
        %v455 = vlaneseq
        %v456 = vshrl.u32 %v455, 7
        %v457 = vsub.s32 6, %v456
        %v458 = vrot.slane %v427, %v457
        %v459 = vlaneseq
        %v460 = vshrl.u32 %v459, 7
        %v461 = vsub.s32 7, %v460
        %v462 = vrot.slane %v427, %v461
        %v463 = vlaneseq
        %v464 = vshrl.u32 %v463, 7
        %v465 = vsub.s32 0, %v464
        %v466 = vrot.slane %v428, %v465
        %v467 = vlaneseq
        %v468 = vshrl.u32 %v467, 7
        %v469 = vsub.s32 1, %v468
        %v470 = vrot.slane %v428, %v469
        %v471 = vlaneseq
        %v472 = vshrl.u32 %v471, 7
        %v473 = vsub.s32 2, %v472
        %v474 = vrot.slane %v428, %v473
        %v475 = vlaneseq
        %v476 = vshrl.u32 %v475, 7
        %v477 = vsub.s32 3, %v476
        %v478 = vrot.slane %v428, %v477
        %v479 = vlaneseq
        %v480 = vshrl.u32 %v479, 7
        %v481 = vsub.s32 4, %v480
        %v482 = vrot.slane %v428, %v481
        %v483 = vlaneseq
        %v484 = vshrl.u32 %v483, 7
        %v485 = vsub.s32 5, %v484
        %v486 = vrot.slane %v428, %v485
        %v487 = vlaneseq
        %v488 = vshrl.u32 %v487, 7
        %v489 = vsub.s32 6, %v488
        %v490 = vrot.slane %v428, %v489
        %v491 = vlaneseq
        %v492 = vshrl.u32 %v491, 7
        %v493 = vsub.s32 7, %v492
        %v494 = vrot.slane %v428, %v493
        %v495 = vcombine.low %v434, %v438
        %v496 = vcombine.low %v442, %v446
        %v498 = vunpack.c.l.s4 1983009808
        %v499 = vunpack.c.0.s8 %v498
        %v500 = vlaneseq
        %v501 = vshrl.u32 %v500, 7
        %v502 = vsub.s32 %v499, %v501
        %v503 = vrot.slane %v495, %v502
        %v505 = vunpack.c.l.s4 1983009808
        %v506 = vunpack.c.0.s8 %v505
        %v507 = vlaneseq
        %v508 = vshrl.u32 %v507, 7
        %v509 = vsub.s32 %v506, %v508
        %v510 = vrot.slane %v496, %v509
        %v511 = vcombine.low %v503, %v510
        %v512 = vcombine.low %v450, %v454
        %v513 = vcombine.low %v458, %v462
        %v515 = vunpack.c.l.s4 1983009808
        %v516 = vunpack.c.0.s8 %v515
        %v517 = vlaneseq
        %v518 = vshrl.u32 %v517, 7
        %v519 = vsub.s32 %v516, %v518
        %v520 = vrot.slane %v512, %v519
        %v522 = vunpack.c.l.s4 1983009808
        %v523 = vunpack.c.0.s8 %v522
        %v524 = vlaneseq
        %v525 = vshrl.u32 %v524, 7
        %v526 = vsub.s32 %v523, %v525
        %v527 = vrot.slane %v513, %v526
        %v528 = vcombine.low %v520, %v527
        %v529 = vcombine.low %v466, %v470
        %v530 = vcombine.low %v474, %v478
        %v532 = vunpack.c.l.s4 1983009808
        %v533 = vunpack.c.0.s8 %v532
        %v534 = vlaneseq
        %v535 = vshrl.u32 %v534, 7
        %v536 = vsub.s32 %v533, %v535
        %v537 = vrot.slane %v529, %v536
        %v539 = vunpack.c.l.s4 1983009808
        %v540 = vunpack.c.0.s8 %v539
        %v541 = vlaneseq
        %v542 = vshrl.u32 %v541, 7
        %v543 = vsub.s32 %v540, %v542
        %v544 = vrot.slane %v530, %v543
        %v545 = vcombine.low %v537, %v544
        %v546 = vcombine.low %v482, %v486
        %v547 = vcombine.low %v490, %v494
        %v549 = vunpack.c.l.s4 1983009808
        %v550 = vunpack.c.0.s8 %v549
        %v551 = vlaneseq
        %v552 = vshrl.u32 %v551, 7
        %v553 = vsub.s32 %v550, %v552
        %v554 = vrot.slane %v546, %v553
        %v556 = vunpack.c.l.s4 1983009808
        %v557 = vunpack.c.0.s8 %v556
        %v558 = vlaneseq
        %v559 = vshrl.u32 %v558, 7
        %v560 = vsub.s32 %v557, %v559
        %v561 = vrot.slane %v547, %v560
        %v562 = vcombine.low %v554, %v561
        %v567 = vadd.f32 %v423, %v511
        %v568 = vadd.f32 %v424, %v528
        %v569 = vadd.f32 %v425, %v545
        %v570 = vadd.f32 %v426, %v562
        %v571 = vmax.f32 %v567, 0.0
        %v572 = vmax.f32 %v568, 0.0
        %v573 = vmax.f32 %v569, 0.0
        %v574 = vmax.f32 %v570, 0.0
        %v575 = vld [vmem:[#allocation2] sm:$0x3]
        %v580 = vcombine.high %v571, %v571
        %v582 = vunpack.c.l.s4 1983009808
        %v583 = vunpack.c.0.s8 %v582
        %v584 = vlaneseq
        %v585 = vshrl.u32 %v584, 7
        %v586 = vsub.s32 %v583, %v585
        %v587 = vrot.slane %v571, %v586
        %v589 = vunpack.c.l.s4 1983009808
        %v590 = vunpack.c.0.s8 %v589
        %v591 = vlaneseq
        %v592 = vshrl.u32 %v591, 7
        %v593 = vsub.s32 %v590, %v592
        %v594 = vrot.slane %v580, %v593
        %v595 = vcombine.high %v587, %v587
        %v596 = vcombine.high %v594, %v594
        %v597 = vcombine.high %v572, %v572
        %v599 = vunpack.c.l.s4 1983009808
        %v600 = vunpack.c.0.s8 %v599
        %v601 = vlaneseq
        %v602 = vshrl.u32 %v601, 7
        %v603 = vsub.s32 %v600, %v602
        %v604 = vrot.slane %v572, %v603
        %v606 = vunpack.c.l.s4 1983009808
        %v607 = vunpack.c.0.s8 %v606
        %v608 = vlaneseq
        %v609 = vshrl.u32 %v608, 7
        %v610 = vsub.s32 %v607, %v609
        %v611 = vrot.slane %v597, %v610
        %v612 = vcombine.high %v604, %v604
        %v613 = vcombine.high %v611, %v611
        %v614 = vcombine.high %v573, %v573
        %v616 = vunpack.c.l.s4 1983009808
        %v617 = vunpack.c.0.s8 %v616
        %v618 = vlaneseq
        %v619 = vshrl.u32 %v618, 7
        %v620 = vsub.s32 %v617, %v619
        %v621 = vrot.slane %v573, %v620
        %v623 = vunpack.c.l.s4 1983009808
        %v624 = vunpack.c.0.s8 %v623
        %v625 = vlaneseq
        %v626 = vshrl.u32 %v625, 7
        %v627 = vsub.s32 %v624, %v626
        %v628 = vrot.slane %v614, %v627
        %v629 = vcombine.high %v621, %v621
        %v630 = vcombine.high %v628, %v628
        %v631 = vcombine.high %v574, %v574
        %v633 = vunpack.c.l.s4 1983009808
        %v634 = vunpack.c.0.s8 %v633
        %v635 = vlaneseq
        %v636 = vshrl.u32 %v635, 7
        %v637 = vsub.s32 %v634, %v636
        %v638 = vrot.slane %v574, %v637
        %v640 = vunpack.c.l.s4 1983009808
        %v641 = vunpack.c.0.s8 %v640
        %v642 = vlaneseq
        %v643 = vshrl.u32 %v642, 7
        %v644 = vsub.s32 %v641, %v643
        %v645 = vrot.slane %v631, %v644
        %v646 = vcombine.high %v638, %v638
        %v647 = vcombine.high %v645, %v645
        %v664 = vpack.c.bf16 %v587, %v587
        %v665 = vpack.c.bf16 %v595, %v595
        %v666 = vpack.c.bf16 %v594, %v594
        %v667 = vpack.c.bf16 %v596, %v596
        %v668 = vpack.c.bf16 %v604, %v604
        %v669 = vpack.c.bf16 %v612, %v612
        %v670 = vpack.c.bf16 %v611, %v611
        %v671 = vpack.c.bf16 %v613, %v613
        %v672 = vpack.c.bf16 %v621, %v621
        %v673 = vpack.c.bf16 %v629, %v629
        %v674 = vpack.c.bf16 %v628, %v628
        %v675 = vpack.c.bf16 %v630, %v630
        %v676 = vpack.c.bf16 %v638, %v638
        %v677 = vpack.c.bf16 %v646, %v646
        %v678 = vpack.c.bf16 %v645, %v645
        %v679 = vpack.c.bf16 %v647, %v647
        %v680 = vld [vmem:[%s271] sm:$0xf]
        %v681 = vld [vmem:[%s271 + $0x4] sm:$0xf]
        %v682 = vld [vmem:[%s271 + $0x8] sm:$0xf]
        %v683 = vld [vmem:[%s271 + $0xc] sm:$0xf]
        %v684 = vld [vmem:[%s271 + $0x10] sm:$0xf]
        %v685 = vld [vmem:[%s271 + $0x14] sm:$0xf]
        %v686 = vld [vmem:[%s271 + $0x18] sm:$0xf]
        %v687 = vld [vmem:[%s271 + $0x1c] sm:$0xf]
        %v688 = vld [vmem:[%s271 + $0x20] sm:$0xf]
        %v689 = vld [vmem:[%s271 + $0x24] sm:$0xf]
        %v690 = vld [vmem:[%s271 + $0x28] sm:$0xf]
        %v691 = vld [vmem:[%s271 + $0x2c] sm:$0xf]
        %v692 = vld [vmem:[%s271 + $0x30] sm:$0xf]
        %v693 = vld [vmem:[%s271 + $0x34] sm:$0xf]
        %v694 = vld [vmem:[%s271 + $0x38] sm:$0xf]
        %v695 = vld [vmem:[%s271 + $0x3c] sm:$0xf]
        %v696 = vld [vmem:[%s271 + $0x40] sm:$0xf]
        %v697 = vld [vmem:[%s271 + $0x44] sm:$0xf]
        %v698 = vld [vmem:[%s271 + $0x48] sm:$0xf]
        %v699 = vld [vmem:[%s271 + $0x4c] sm:$0xf]
        %v700 = vld [vmem:[%s271 + $0x50] sm:$0xf]
        %v701 = vld [vmem:[%s271 + $0x54] sm:$0xf]
        %v702 = vld [vmem:[%s271 + $0x58] sm:$0xf]
        %v703 = vld [vmem:[%s271 + $0x5c] sm:$0xf]
        %v704 = vld [vmem:[%s271 + $0x60] sm:$0xf]
        %v705 = vld [vmem:[%s271 + $0x64] sm:$0xf]
        %v706 = vld [vmem:[%s271 + $0x68] sm:$0xf]
        %v707 = vld [vmem:[%s271 + $0x6c] sm:$0xf]
        %v708 = vld [vmem:[%s271 + $0x70] sm:$0xf]
        %v709 = vld [vmem:[%s271 + $0x74] sm:$0xf]
        %v710 = vld [vmem:[%s271 + $0x78] sm:$0xf]
        %v711 = vld [vmem:[%s271 + $0x7c] sm:$0xf]
        %v712 = vld [vmem:[%s271 + $0x80] sm:$0xf]
        %v713 = vld [vmem:[%s271 + $0x84] sm:$0xf]
        %v714 = vld [vmem:[%s271 + $0x88] sm:$0xf]
        %v715 = vld [vmem:[%s271 + $0x8c] sm:$0xf]
        %v716 = vld [vmem:[%s271 + $0x90] sm:$0xf]
        %v717 = vld [vmem:[%s271 + $0x94] sm:$0xf]
        %v718 = vld [vmem:[%s271 + $0x98] sm:$0xf]
        %v719 = vld [vmem:[%s271 + $0x9c] sm:$0xf]
        %v720 = vld [vmem:[%s271 + $0xa0] sm:$0xf]
        %v721 = vld [vmem:[%s271 + $0xa4] sm:$0xf]
        %v722 = vld [vmem:[%s271 + $0xa8] sm:$0xf]
        %v723 = vld [vmem:[%s271 + $0xac] sm:$0xf]
        %v724 = vld [vmem:[%s271 + $0xb0] sm:$0xf]
        %v725 = vld [vmem:[%s271 + $0xb4] sm:$0xf]
        %v726 = vld [vmem:[%s271 + $0xb8] sm:$0xf]
        %v727 = vld [vmem:[%s271 + $0xbc] sm:$0xf]
        %v728 = vld [vmem:[%s271 + $0xc0] sm:$0xf]
        %v729 = vld [vmem:[%s271 + $0xc4] sm:$0xf]
        %v730 = vld [vmem:[%s271 + $0xc8] sm:$0xf]
        %v731 = vld [vmem:[%s271 + $0xcc] sm:$0xf]
        %v732 = vld [vmem:[%s271 + $0xd0] sm:$0xf]
        %v733 = vld [vmem:[%s271 + $0xd4] sm:$0xf]
        %v734 = vld [vmem:[%s271 + $0xd8] sm:$0xf]
        %v735 = vld [vmem:[%s271 + $0xdc] sm:$0xf]
        %v736 = vld [vmem:[%s271 + $0xe0] sm:$0xf]
        %v737 = vld [vmem:[%s271 + $0xe4] sm:$0xf]
        %v738 = vld [vmem:[%s271 + $0xe8] sm:$0xf]
        %v739 = vld [vmem:[%s271 + $0xec] sm:$0xf]
        %v740 = vld [vmem:[%s271 + $0xf0] sm:$0xf]
        %v741 = vld [vmem:[%s271 + $0xf4] sm:$0xf]
        %v742 = vld [vmem:[%s271 + $0xf8] sm:$0xf]
        %v743 = vld [vmem:[%s271 + $0xfc] sm:$0xf]
        %v744 = vld [vmem:[%s271 + $0x100] sm:$0xf]
        %v745 = vld [vmem:[%s271 + $0x104] sm:$0xf]
        %v746 = vld [vmem:[%s271 + $0x108] sm:$0xf]
        %v747 = vld [vmem:[%s271 + $0x10c] sm:$0xf]
        %v748 = vld [vmem:[%s271 + $0x110] sm:$0xf]
        %v749 = vld [vmem:[%s271 + $0x114] sm:$0xf]
        %v750 = vld [vmem:[%s271 + $0x118] sm:$0xf]
        %v751 = vld [vmem:[%s271 + $0x11c] sm:$0xf]
        %v752 = vld [vmem:[%s271 + $0x120] sm:$0xf]
        %v753 = vld [vmem:[%s271 + $0x124] sm:$0xf]
        %v754 = vld [vmem:[%s271 + $0x128] sm:$0xf]
        %v755 = vld [vmem:[%s271 + $0x12c] sm:$0xf]
        %v756 = vld [vmem:[%s271 + $0x130] sm:$0xf]
        %v757 = vld [vmem:[%s271 + $0x134] sm:$0xf]
        %v758 = vld [vmem:[%s271 + $0x138] sm:$0xf]
        %v759 = vld [vmem:[%s271 + $0x13c] sm:$0xf]
        %v760 = vld [vmem:[%s271 + $0x140] sm:$0xf]
        %v761 = vld [vmem:[%s271 + $0x144] sm:$0xf]
        %v762 = vld [vmem:[%s271 + $0x148] sm:$0xf]
        %v763 = vld [vmem:[%s271 + $0x14c] sm:$0xf]
        %v764 = vld [vmem:[%s271 + $0x150] sm:$0xf]
        %v765 = vld [vmem:[%s271 + $0x154] sm:$0xf]
        %v766 = vld [vmem:[%s271 + $0x158] sm:$0xf]
        %v767 = vld [vmem:[%s271 + $0x15c] sm:$0xf]
        %v768 = vld [vmem:[%s271 + $0x160] sm:$0xf]
        %v769 = vld [vmem:[%s271 + $0x164] sm:$0xf]
        %v770 = vld [vmem:[%s271 + $0x168] sm:$0xf]
        %v771 = vld [vmem:[%s271 + $0x16c] sm:$0xf]
        %v772 = vld [vmem:[%s271 + $0x170] sm:$0xf]
        %v773 = vld [vmem:[%s271 + $0x174] sm:$0xf]
        %v774 = vld [vmem:[%s271 + $0x178] sm:$0xf]
        %v775 = vld [vmem:[%s271 + $0x17c] sm:$0xf]
        %v776 = vld [vmem:[%s271 + $0x180] sm:$0xf]
        %v777 = vld [vmem:[%s271 + $0x184] sm:$0xf]
        %v778 = vld [vmem:[%s271 + $0x188] sm:$0xf]
        %v779 = vld [vmem:[%s271 + $0x18c] sm:$0xf]
        %v780 = vld [vmem:[%s271 + $0x190] sm:$0xf]
        %v781 = vld [vmem:[%s271 + $0x194] sm:$0xf]
        %v782 = vld [vmem:[%s271 + $0x198] sm:$0xf]
        %v783 = vld [vmem:[%s271 + $0x19c] sm:$0xf]
        %v784 = vld [vmem:[%s271 + $0x1a0] sm:$0xf]
        %v785 = vld [vmem:[%s271 + $0x1a4] sm:$0xf]
        %v786 = vld [vmem:[%s271 + $0x1a8] sm:$0xf]
        %v787 = vld [vmem:[%s271 + $0x1ac] sm:$0xf]
        %v788 = vld [vmem:[%s271 + $0x1b0] sm:$0xf]
        %v789 = vld [vmem:[%s271 + $0x1b4] sm:$0xf]
        %v790 = vld [vmem:[%s271 + $0x1b8] sm:$0xf]
        %v791 = vld [vmem:[%s271 + $0x1bc] sm:$0xf]
        %v792 = vld [vmem:[%s271 + $0x1c0] sm:$0xf]
        %v793 = vld [vmem:[%s271 + $0x1c4] sm:$0xf]
        %v794 = vld [vmem:[%s271 + $0x1c8] sm:$0xf]
        %v795 = vld [vmem:[%s271 + $0x1cc] sm:$0xf]
        %v796 = vld [vmem:[%s271 + $0x1d0] sm:$0xf]
        %v797 = vld [vmem:[%s271 + $0x1d4] sm:$0xf]
        %v798 = vld [vmem:[%s271 + $0x1d8] sm:$0xf]
        %v799 = vld [vmem:[%s271 + $0x1dc] sm:$0xf]
        %v800 = vld [vmem:[%s271 + $0x1e0] sm:$0xf]
        %v801 = vld [vmem:[%s271 + $0x1e4] sm:$0xf]
        %v802 = vld [vmem:[%s271 + $0x1e8] sm:$0xf]
        %v803 = vld [vmem:[%s271 + $0x1ec] sm:$0xf]
        %v804 = vld [vmem:[%s271 + $0x1f0] sm:$0xf]
        %v805 = vld [vmem:[%s271 + $0x1f4] sm:$0xf]
        %v806 = vld [vmem:[%s271 + $0x1f8] sm:$0xf]
        %v807 = vld [vmem:[%s271 + $0x1fc] sm:$0xf]
        %v808 = vld [vmem:[%s271 + $0x200] sm:$0xf]
        %v809 = vld [vmem:[%s271 + $0x204] sm:$0xf]
        %v810 = vld [vmem:[%s271 + $0x208] sm:$0xf]
        %v811 = vld [vmem:[%s271 + $0x20c] sm:$0xf]
        %v812 = vld [vmem:[%s271 + $0x210] sm:$0xf]
        %v813 = vld [vmem:[%s271 + $0x214] sm:$0xf]
        %v814 = vld [vmem:[%s271 + $0x218] sm:$0xf]
        %v815 = vld [vmem:[%s271 + $0x21c] sm:$0xf]
        %v816 = vld [vmem:[%s271 + $0x220] sm:$0xf]
        %v817 = vld [vmem:[%s271 + $0x224] sm:$0xf]
        %v818 = vld [vmem:[%s271 + $0x228] sm:$0xf]
        %v819 = vld [vmem:[%s271 + $0x22c] sm:$0xf]
        %v820 = vld [vmem:[%s271 + $0x230] sm:$0xf]
        %v821 = vld [vmem:[%s271 + $0x234] sm:$0xf]
        %v822 = vld [vmem:[%s271 + $0x238] sm:$0xf]
        %v823 = vld [vmem:[%s271 + $0x23c] sm:$0xf]
        %v824 = vld [vmem:[%s271 + $0x240] sm:$0xf]
        %v825 = vld [vmem:[%s271 + $0x244] sm:$0xf]
        %v826 = vld [vmem:[%s271 + $0x248] sm:$0xf]
        %v827 = vld [vmem:[%s271 + $0x24c] sm:$0xf]
        %v828 = vld [vmem:[%s271 + $0x250] sm:$0xf]
        %v829 = vld [vmem:[%s271 + $0x254] sm:$0xf]
        %v830 = vld [vmem:[%s271 + $0x258] sm:$0xf]
        %v831 = vld [vmem:[%s271 + $0x25c] sm:$0xf]
        %v832 = vld [vmem:[%s271 + $0x260] sm:$0xf]
        %v833 = vld [vmem:[%s271 + $0x264] sm:$0xf]
        %v834 = vld [vmem:[%s271 + $0x268] sm:$0xf]
        %v835 = vld [vmem:[%s271 + $0x26c] sm:$0xf]
        %v836 = vld [vmem:[%s271 + $0x270] sm:$0xf]
        %v837 = vld [vmem:[%s271 + $0x274] sm:$0xf]
        %v838 = vld [vmem:[%s271 + $0x278] sm:$0xf]
        %v839 = vld [vmem:[%s271 + $0x27c] sm:$0xf]
        %v840 = vld [vmem:[%s271 + $0x280] sm:$0xf]
        %v841 = vld [vmem:[%s271 + $0x284] sm:$0xf]
        %v842 = vld [vmem:[%s271 + $0x288] sm:$0xf]
        %v843 = vld [vmem:[%s271 + $0x28c] sm:$0xf]
        %v844 = vld [vmem:[%s271 + $0x290] sm:$0xf]
        %v845 = vld [vmem:[%s271 + $0x294] sm:$0xf]
        %v846 = vld [vmem:[%s271 + $0x298] sm:$0xf]
        %v847 = vld [vmem:[%s271 + $0x29c] sm:$0xf]
        %v848 = vld [vmem:[%s271 + $0x2a0] sm:$0xf]
        %v849 = vld [vmem:[%s271 + $0x2a4] sm:$0xf]
        %v850 = vld [vmem:[%s271 + $0x2a8] sm:$0xf]
        %v851 = vld [vmem:[%s271 + $0x2ac] sm:$0xf]
        %v852 = vld [vmem:[%s271 + $0x2b0] sm:$0xf]
        %v853 = vld [vmem:[%s271 + $0x2b4] sm:$0xf]
        %v854 = vld [vmem:[%s271 + $0x2b8] sm:$0xf]
        %v855 = vld [vmem:[%s271 + $0x2bc] sm:$0xf]
        %v856 = vld [vmem:[%s271 + $0x2c0] sm:$0xf]
        %v857 = vld [vmem:[%s271 + $0x2c4] sm:$0xf]
        %v858 = vld [vmem:[%s271 + $0x2c8] sm:$0xf]
        %v859 = vld [vmem:[%s271 + $0x2cc] sm:$0xf]
        %v860 = vld [vmem:[%s271 + $0x2d0] sm:$0xf]
        %v861 = vld [vmem:[%s271 + $0x2d4] sm:$0xf]
        %v862 = vld [vmem:[%s271 + $0x2d8] sm:$0xf]
        %v863 = vld [vmem:[%s271 + $0x2dc] sm:$0xf]
        %v864 = vld [vmem:[%s271 + $0x2e0] sm:$0xf]
        %v865 = vld [vmem:[%s271 + $0x2e4] sm:$0xf]
        %v866 = vld [vmem:[%s271 + $0x2e8] sm:$0xf]
        %v867 = vld [vmem:[%s271 + $0x2ec] sm:$0xf]
        %v868 = vld [vmem:[%s271 + $0x2f0] sm:$0xf]
        %v869 = vld [vmem:[%s271 + $0x2f4] sm:$0xf]
        %v870 = vld [vmem:[%s271 + $0x2f8] sm:$0xf]
        %v871 = vld [vmem:[%s271 + $0x2fc] sm:$0xf]
        %v872 = vld [vmem:[%s271 + $0x300] sm:$0xf]
        %v873 = vld [vmem:[%s271 + $0x304] sm:$0xf]
        %v874 = vld [vmem:[%s271 + $0x308] sm:$0xf]
        %v875 = vld [vmem:[%s271 + $0x30c] sm:$0xf]
        %v876 = vld [vmem:[%s271 + $0x310] sm:$0xf]
        %v877 = vld [vmem:[%s271 + $0x314] sm:$0xf]
        %v878 = vld [vmem:[%s271 + $0x318] sm:$0xf]
        %v879 = vld [vmem:[%s271 + $0x31c] sm:$0xf]
        %v880 = vld [vmem:[%s271 + $0x320] sm:$0xf]
        %v881 = vld [vmem:[%s271 + $0x324] sm:$0xf]
        %v882 = vld [vmem:[%s271 + $0x328] sm:$0xf]
        %v883 = vld [vmem:[%s271 + $0x32c] sm:$0xf]
        %v884 = vld [vmem:[%s271 + $0x330] sm:$0xf]
        %v885 = vld [vmem:[%s271 + $0x334] sm:$0xf]
        %v886 = vld [vmem:[%s271 + $0x338] sm:$0xf]
        %v887 = vld [vmem:[%s271 + $0x33c] sm:$0xf]
        %v888 = vld [vmem:[%s271 + $0x340] sm:$0xf]
        %v889 = vld [vmem:[%s271 + $0x344] sm:$0xf]
        %v890 = vld [vmem:[%s271 + $0x348] sm:$0xf]
        %v891 = vld [vmem:[%s271 + $0x34c] sm:$0xf]
        %v892 = vld [vmem:[%s271 + $0x350] sm:$0xf]
        %v893 = vld [vmem:[%s271 + $0x354] sm:$0xf]
        %v894 = vld [vmem:[%s271 + $0x358] sm:$0xf]
        %v895 = vld [vmem:[%s271 + $0x35c] sm:$0xf]
        %v896 = vld [vmem:[%s271 + $0x360] sm:$0xf]
        %v897 = vld [vmem:[%s271 + $0x364] sm:$0xf]
        %v898 = vld [vmem:[%s271 + $0x368] sm:$0xf]
        %v899 = vld [vmem:[%s271 + $0x36c] sm:$0xf]
        %v900 = vld [vmem:[%s271 + $0x370] sm:$0xf]
        %v901 = vld [vmem:[%s271 + $0x374] sm:$0xf]
        %v902 = vld [vmem:[%s271 + $0x378] sm:$0xf]
        %v903 = vld [vmem:[%s271 + $0x37c] sm:$0xf]
        %v904 = vld [vmem:[%s271 + $0x380] sm:$0xf]
        %v905 = vld [vmem:[%s271 + $0x384] sm:$0xf]
        %v906 = vld [vmem:[%s271 + $0x388] sm:$0xf]
        %v907 = vld [vmem:[%s271 + $0x38c] sm:$0xf]
        %v908 = vld [vmem:[%s271 + $0x390] sm:$0xf]
        %v909 = vld [vmem:[%s271 + $0x394] sm:$0xf]
        %v910 = vld [vmem:[%s271 + $0x398] sm:$0xf]
        %v911 = vld [vmem:[%s271 + $0x39c] sm:$0xf]
        %v912 = vld [vmem:[%s271 + $0x3a0] sm:$0xf]
        %v913 = vld [vmem:[%s271 + $0x3a4] sm:$0xf]
        %v914 = vld [vmem:[%s271 + $0x3a8] sm:$0xf]
        %v915 = vld [vmem:[%s271 + $0x3ac] sm:$0xf]
        %v916 = vld [vmem:[%s271 + $0x3b0] sm:$0xf]
        %v917 = vld [vmem:[%s271 + $0x3b4] sm:$0xf]
        %v918 = vld [vmem:[%s271 + $0x3b8] sm:$0xf]
        %v919 = vld [vmem:[%s271 + $0x3bc] sm:$0xf]
        %v920 = vld [vmem:[%s271 + $0x3c0] sm:$0xf]
        %v921 = vld [vmem:[%s271 + $0x3c4] sm:$0xf]
        %v922 = vld [vmem:[%s271 + $0x3c8] sm:$0xf]
        %v923 = vld [vmem:[%s271 + $0x3cc] sm:$0xf]
        %v924 = vld [vmem:[%s271 + $0x3d0] sm:$0xf]
        %v925 = vld [vmem:[%s271 + $0x3d4] sm:$0xf]
        %v926 = vld [vmem:[%s271 + $0x3d8] sm:$0xf]
        %v927 = vld [vmem:[%s271 + $0x3dc] sm:$0xf]
        %v928 = vld [vmem:[%s271 + $0x3e0] sm:$0xf]
        %v929 = vld [vmem:[%s271 + $0x3e4] sm:$0xf]
        %v930 = vld [vmem:[%s271 + $0x3e8] sm:$0xf]
        %v931 = vld [vmem:[%s271 + $0x3ec] sm:$0xf]
        %v932 = vld [vmem:[%s271 + $0x3f0] sm:$0xf]
        %v933 = vld [vmem:[%s271 + $0x3f4] sm:$0xf]
        %v934 = vld [vmem:[%s271 + $0x3f8] sm:$0xf]
        %v935 = vld [vmem:[%s271 + $0x3fc] sm:$0xf]
        %v1192 = vunpack.c.l.b16 %v680
        %v1193 = vunpack.c.l.b16 %v681
        %v1194 = vunpack.c.l.b16 %v682
        %v1195 = vunpack.c.l.b16 %v683
        %v1196 = vunpack.c.l.b16 %v684
        %v1197 = vunpack.c.l.b16 %v685
        %v1198 = vunpack.c.l.b16 %v686
        %v1199 = vunpack.c.l.b16 %v687
        %v1200 = vunpack.c.l.b16 %v688
        %v1201 = vunpack.c.l.b16 %v689
        %v1202 = vunpack.c.l.b16 %v690
        %v1203 = vunpack.c.l.b16 %v691
        %v1204 = vunpack.c.l.b16 %v692
        %v1205 = vunpack.c.l.b16 %v693
        %v1206 = vunpack.c.l.b16 %v694
        %v1207 = vunpack.c.l.b16 %v695
        %v1208 = vunpack.c.l.b16 %v696
        %v1209 = vunpack.c.l.b16 %v697
        %v1210 = vunpack.c.l.b16 %v698
        %v1211 = vunpack.c.l.b16 %v699
        %v1212 = vunpack.c.l.b16 %v700
        %v1213 = vunpack.c.l.b16 %v701
        %v1214 = vunpack.c.l.b16 %v702
        %v1215 = vunpack.c.l.b16 %v703
        %v1216 = vunpack.c.l.b16 %v704
        %v1217 = vunpack.c.l.b16 %v705
        %v1218 = vunpack.c.l.b16 %v706
        %v1219 = vunpack.c.l.b16 %v707
        %v1220 = vunpack.c.l.b16 %v708
        %v1221 = vunpack.c.l.b16 %v709
        %v1222 = vunpack.c.l.b16 %v710
        %v1223 = vunpack.c.l.b16 %v711
        %v1224 = vunpack.c.l.b16 %v712
        %v1225 = vunpack.c.l.b16 %v713
        %v1226 = vunpack.c.l.b16 %v714
        %v1227 = vunpack.c.l.b16 %v715
        %v1228 = vunpack.c.l.b16 %v716
        %v1229 = vunpack.c.l.b16 %v717
        %v1230 = vunpack.c.l.b16 %v718
        %v1231 = vunpack.c.l.b16 %v719
        %v1232 = vunpack.c.l.b16 %v720
        %v1233 = vunpack.c.l.b16 %v721
        %v1234 = vunpack.c.l.b16 %v722
        %v1235 = vunpack.c.l.b16 %v723
        %v1236 = vunpack.c.l.b16 %v724
        %v1237 = vunpack.c.l.b16 %v725
        %v1238 = vunpack.c.l.b16 %v726
        %v1239 = vunpack.c.l.b16 %v727
        %v1240 = vunpack.c.l.b16 %v728
        %v1241 = vunpack.c.l.b16 %v729
        %v1242 = vunpack.c.l.b16 %v730
        %v1243 = vunpack.c.l.b16 %v731
        %v1244 = vunpack.c.l.b16 %v732
        %v1245 = vunpack.c.l.b16 %v733
        %v1246 = vunpack.c.l.b16 %v734
        %v1247 = vunpack.c.l.b16 %v735
        %v1248 = vunpack.c.l.b16 %v736
        %v1249 = vunpack.c.l.b16 %v737
        %v1250 = vunpack.c.l.b16 %v738
        %v1251 = vunpack.c.l.b16 %v739
        %v1252 = vunpack.c.l.b16 %v740
        %v1253 = vunpack.c.l.b16 %v741
        %v1254 = vunpack.c.l.b16 %v742
        %v1255 = vunpack.c.l.b16 %v743
        %v1256 = vunpack.c.l.b16 %v744
        %v1257 = vunpack.c.l.b16 %v745
        %v1258 = vunpack.c.l.b16 %v746
        %v1259 = vunpack.c.l.b16 %v747
        %v1260 = vunpack.c.l.b16 %v748
        %v1261 = vunpack.c.l.b16 %v749
        %v1262 = vunpack.c.l.b16 %v750
        %v1263 = vunpack.c.l.b16 %v751
        %v1264 = vunpack.c.l.b16 %v752
        %v1265 = vunpack.c.l.b16 %v753
        %v1266 = vunpack.c.l.b16 %v754
        %v1267 = vunpack.c.l.b16 %v755
        %v1268 = vunpack.c.l.b16 %v756
        %v1269 = vunpack.c.l.b16 %v757
        %v1270 = vunpack.c.l.b16 %v758
        %v1271 = vunpack.c.l.b16 %v759
        %v1272 = vunpack.c.l.b16 %v760
        %v1273 = vunpack.c.l.b16 %v761
        %v1274 = vunpack.c.l.b16 %v762
        %v1275 = vunpack.c.l.b16 %v763
        %v1276 = vunpack.c.l.b16 %v764
        %v1277 = vunpack.c.l.b16 %v765
        %v1278 = vunpack.c.l.b16 %v766
        %v1279 = vunpack.c.l.b16 %v767
        %v1280 = vunpack.c.l.b16 %v768
        %v1281 = vunpack.c.l.b16 %v769
        %v1282 = vunpack.c.l.b16 %v770
        %v1283 = vunpack.c.l.b16 %v771
        %v1284 = vunpack.c.l.b16 %v772
        %v1285 = vunpack.c.l.b16 %v773
        %v1286 = vunpack.c.l.b16 %v774
        %v1287 = vunpack.c.l.b16 %v775
        %v1288 = vunpack.c.l.b16 %v776
        %v1289 = vunpack.c.l.b16 %v777
        %v1290 = vunpack.c.l.b16 %v778
        %v1291 = vunpack.c.l.b16 %v779
        %v1292 = vunpack.c.l.b16 %v780
        %v1293 = vunpack.c.l.b16 %v781
        %v1294 = vunpack.c.l.b16 %v782
        %v1295 = vunpack.c.l.b16 %v783
        %v1296 = vunpack.c.l.b16 %v784
        %v1297 = vunpack.c.l.b16 %v785
        %v1298 = vunpack.c.l.b16 %v786
        %v1299 = vunpack.c.l.b16 %v787
        %v1300 = vunpack.c.l.b16 %v788
        %v1301 = vunpack.c.l.b16 %v789
        %v1302 = vunpack.c.l.b16 %v790
        %v1303 = vunpack.c.l.b16 %v791
        %v1304 = vunpack.c.l.b16 %v792
        %v1305 = vunpack.c.l.b16 %v793
        %v1306 = vunpack.c.l.b16 %v794
        %v1307 = vunpack.c.l.b16 %v795
        %v1308 = vunpack.c.l.b16 %v796
        %v1309 = vunpack.c.l.b16 %v797
        %v1310 = vunpack.c.l.b16 %v798
        %v1311 = vunpack.c.l.b16 %v799
        %v1312 = vunpack.c.l.b16 %v800
        %v1313 = vunpack.c.l.b16 %v801
        %v1314 = vunpack.c.l.b16 %v802
        %v1315 = vunpack.c.l.b16 %v803
        %v1316 = vunpack.c.l.b16 %v804
        %v1317 = vunpack.c.l.b16 %v805
        %v1318 = vunpack.c.l.b16 %v806
        %v1319 = vunpack.c.l.b16 %v807
        %v1320 = vunpack.c.l.b16 %v808
        %v1321 = vunpack.c.l.b16 %v809
        %v1322 = vunpack.c.l.b16 %v810
        %v1323 = vunpack.c.l.b16 %v811
        %v1324 = vunpack.c.l.b16 %v812
        %v1325 = vunpack.c.l.b16 %v813
        %v1326 = vunpack.c.l.b16 %v814
        %v1327 = vunpack.c.l.b16 %v815
        %v1328 = vunpack.c.l.b16 %v816
        %v1329 = vunpack.c.l.b16 %v817
        %v1330 = vunpack.c.l.b16 %v818
        %v1331 = vunpack.c.l.b16 %v819
        %v1332 = vunpack.c.l.b16 %v820
        %v1333 = vunpack.c.l.b16 %v821
        %v1334 = vunpack.c.l.b16 %v822
        %v1335 = vunpack.c.l.b16 %v823
        %v1336 = vunpack.c.l.b16 %v824
        %v1337 = vunpack.c.l.b16 %v825
        %v1338 = vunpack.c.l.b16 %v826
        %v1339 = vunpack.c.l.b16 %v827
        %v1340 = vunpack.c.l.b16 %v828
        %v1341 = vunpack.c.l.b16 %v829
        %v1342 = vunpack.c.l.b16 %v830
        %v1343 = vunpack.c.l.b16 %v831
        %v1344 = vunpack.c.l.b16 %v832
        %v1345 = vunpack.c.l.b16 %v833
        %v1346 = vunpack.c.l.b16 %v834
        %v1347 = vunpack.c.l.b16 %v835
        %v1348 = vunpack.c.l.b16 %v836
        %v1349 = vunpack.c.l.b16 %v837
        %v1350 = vunpack.c.l.b16 %v838
        %v1351 = vunpack.c.l.b16 %v839
        %v1352 = vunpack.c.l.b16 %v840
        %v1353 = vunpack.c.l.b16 %v841
        %v1354 = vunpack.c.l.b16 %v842
        %v1355 = vunpack.c.l.b16 %v843
        %v1356 = vunpack.c.l.b16 %v844
        %v1357 = vunpack.c.l.b16 %v845
        %v1358 = vunpack.c.l.b16 %v846
        %v1359 = vunpack.c.l.b16 %v847
        %v1360 = vunpack.c.l.b16 %v848
        %v1361 = vunpack.c.l.b16 %v849
        %v1362 = vunpack.c.l.b16 %v850
        %v1363 = vunpack.c.l.b16 %v851
        %v1364 = vunpack.c.l.b16 %v852
        %v1365 = vunpack.c.l.b16 %v853
        %v1366 = vunpack.c.l.b16 %v854
        %v1367 = vunpack.c.l.b16 %v855
        %v1368 = vunpack.c.l.b16 %v856
        %v1369 = vunpack.c.l.b16 %v857
        %v1370 = vunpack.c.l.b16 %v858
        %v1371 = vunpack.c.l.b16 %v859
        %v1372 = vunpack.c.l.b16 %v860
        %v1373 = vunpack.c.l.b16 %v861
        %v1374 = vunpack.c.l.b16 %v862
        %v1375 = vunpack.c.l.b16 %v863
        %v1376 = vunpack.c.l.b16 %v864
        %v1377 = vunpack.c.l.b16 %v865
        %v1378 = vunpack.c.l.b16 %v866
        %v1379 = vunpack.c.l.b16 %v867
        %v1380 = vunpack.c.l.b16 %v868
        %v1381 = vunpack.c.l.b16 %v869
        %v1382 = vunpack.c.l.b16 %v870
        %v1383 = vunpack.c.l.b16 %v871
        %v1384 = vunpack.c.l.b16 %v872
        %v1385 = vunpack.c.l.b16 %v873
        %v1386 = vunpack.c.l.b16 %v874
        %v1387 = vunpack.c.l.b16 %v875
        %v1388 = vunpack.c.l.b16 %v876
        %v1389 = vunpack.c.l.b16 %v877
        %v1390 = vunpack.c.l.b16 %v878
        %v1391 = vunpack.c.l.b16 %v879
        %v1392 = vunpack.c.l.b16 %v880
        %v1393 = vunpack.c.l.b16 %v881
        %v1394 = vunpack.c.l.b16 %v882
        %v1395 = vunpack.c.l.b16 %v883
        %v1396 = vunpack.c.l.b16 %v884
        %v1397 = vunpack.c.l.b16 %v885
        %v1398 = vunpack.c.l.b16 %v886
        %v1399 = vunpack.c.l.b16 %v887
        %v1400 = vunpack.c.l.b16 %v888
        %v1401 = vunpack.c.l.b16 %v889
        %v1402 = vunpack.c.l.b16 %v890
        %v1403 = vunpack.c.l.b16 %v891
        %v1404 = vunpack.c.l.b16 %v892
        %v1405 = vunpack.c.l.b16 %v893
        %v1406 = vunpack.c.l.b16 %v894
        %v1407 = vunpack.c.l.b16 %v895
        %v1408 = vunpack.c.l.b16 %v896
        %v1409 = vunpack.c.l.b16 %v897
        %v1410 = vunpack.c.l.b16 %v898
        %v1411 = vunpack.c.l.b16 %v899
        %v1412 = vunpack.c.l.b16 %v900
        %v1413 = vunpack.c.l.b16 %v901
        %v1414 = vunpack.c.l.b16 %v902
        %v1415 = vunpack.c.l.b16 %v903
        %v1416 = vunpack.c.l.b16 %v904
        %v1417 = vunpack.c.l.b16 %v905
        %v1418 = vunpack.c.l.b16 %v906
        %v1419 = vunpack.c.l.b16 %v907
        %v1420 = vunpack.c.l.b16 %v908
        %v1421 = vunpack.c.l.b16 %v909
        %v1422 = vunpack.c.l.b16 %v910
        %v1423 = vunpack.c.l.b16 %v911
        %v1424 = vunpack.c.l.b16 %v912
        %v1425 = vunpack.c.l.b16 %v913
        %v1426 = vunpack.c.l.b16 %v914
        %v1427 = vunpack.c.l.b16 %v915
        %v1428 = vunpack.c.l.b16 %v916
        %v1429 = vunpack.c.l.b16 %v917
        %v1430 = vunpack.c.l.b16 %v918
        %v1431 = vunpack.c.l.b16 %v919
        %v1432 = vunpack.c.l.b16 %v920
        %v1433 = vunpack.c.l.b16 %v921
        %v1434 = vunpack.c.l.b16 %v922
        %v1435 = vunpack.c.l.b16 %v923
        %v1436 = vunpack.c.l.b16 %v924
        %v1437 = vunpack.c.l.b16 %v925
        %v1438 = vunpack.c.l.b16 %v926
        %v1439 = vunpack.c.l.b16 %v927
        %v1440 = vunpack.c.l.b16 %v928
        %v1441 = vunpack.c.l.b16 %v929
        %v1442 = vunpack.c.l.b16 %v930
        %v1443 = vunpack.c.l.b16 %v931
        %v1444 = vunpack.c.l.b16 %v932
        %v1445 = vunpack.c.l.b16 %v933
        %v1446 = vunpack.c.l.b16 %v934
        %v1447 = vunpack.c.l.b16 %v935
        %v1448 = vpack.c.b16 %v1193, %v1192
        %v1449 = vpack.c.b16 %v1195, %v1194
        %v1450 = vpack.c.b16 %v1197, %v1196
        %v1451 = vpack.c.b16 %v1199, %v1198
        %v1452 = vpack.c.b16 %v1201, %v1200
        %v1453 = vpack.c.b16 %v1203, %v1202
        %v1454 = vpack.c.b16 %v1205, %v1204
        %v1455 = vpack.c.b16 %v1207, %v1206
        %v1456 = vpack.c.b16 %v1209, %v1208
        %v1457 = vpack.c.b16 %v1211, %v1210
        %v1458 = vpack.c.b16 %v1213, %v1212
        %v1459 = vpack.c.b16 %v1215, %v1214
        %v1460 = vpack.c.b16 %v1217, %v1216
        %v1461 = vpack.c.b16 %v1219, %v1218
        %v1462 = vpack.c.b16 %v1221, %v1220
        %v1463 = vpack.c.b16 %v1223, %v1222
        %v1464 = vpack.c.b16 %v1225, %v1224
        %v1465 = vpack.c.b16 %v1227, %v1226
        %v1466 = vpack.c.b16 %v1229, %v1228
        %v1467 = vpack.c.b16 %v1231, %v1230
        %v1468 = vpack.c.b16 %v1233, %v1232
        %v1469 = vpack.c.b16 %v1235, %v1234
        %v1470 = vpack.c.b16 %v1237, %v1236
        %v1471 = vpack.c.b16 %v1239, %v1238
        %v1472 = vpack.c.b16 %v1241, %v1240
        %v1473 = vpack.c.b16 %v1243, %v1242
        %v1474 = vpack.c.b16 %v1245, %v1244
        %v1475 = vpack.c.b16 %v1247, %v1246
        %v1476 = vpack.c.b16 %v1249, %v1248
        %v1477 = vpack.c.b16 %v1251, %v1250
        %v1478 = vpack.c.b16 %v1253, %v1252
        %v1479 = vpack.c.b16 %v1255, %v1254
        %v1480 = vpack.c.b16 %v1257, %v1256
        %v1481 = vpack.c.b16 %v1259, %v1258
        %v1482 = vpack.c.b16 %v1261, %v1260
        %v1483 = vpack.c.b16 %v1263, %v1262
        %v1484 = vpack.c.b16 %v1265, %v1264
        %v1485 = vpack.c.b16 %v1267, %v1266
        %v1486 = vpack.c.b16 %v1269, %v1268
        %v1487 = vpack.c.b16 %v1271, %v1270
        %v1488 = vpack.c.b16 %v1273, %v1272
        %v1489 = vpack.c.b16 %v1275, %v1274
        %v1490 = vpack.c.b16 %v1277, %v1276
        %v1491 = vpack.c.b16 %v1279, %v1278
        %v1492 = vpack.c.b16 %v1281, %v1280
        %v1493 = vpack.c.b16 %v1283, %v1282
        %v1494 = vpack.c.b16 %v1285, %v1284
        %v1495 = vpack.c.b16 %v1287, %v1286
        %v1496 = vpack.c.b16 %v1289, %v1288
        %v1497 = vpack.c.b16 %v1291, %v1290
        %v1498 = vpack.c.b16 %v1293, %v1292
        %v1499 = vpack.c.b16 %v1295, %v1294
        %v1500 = vpack.c.b16 %v1297, %v1296
        %v1501 = vpack.c.b16 %v1299, %v1298
        %v1502 = vpack.c.b16 %v1301, %v1300
        %v1503 = vpack.c.b16 %v1303, %v1302
        %v1504 = vpack.c.b16 %v1305, %v1304
        %v1505 = vpack.c.b16 %v1307, %v1306
        %v1506 = vpack.c.b16 %v1309, %v1308
        %v1507 = vpack.c.b16 %v1311, %v1310
        %v1508 = vpack.c.b16 %v1313, %v1312
        %v1509 = vpack.c.b16 %v1315, %v1314
        %v1510 = vpack.c.b16 %v1317, %v1316
        %v1511 = vpack.c.b16 %v1319, %v1318
        %v1512 = vpack.c.b16 %v1321, %v1320
        %v1513 = vpack.c.b16 %v1323, %v1322
        %v1514 = vpack.c.b16 %v1325, %v1324
        %v1515 = vpack.c.b16 %v1327, %v1326
        %v1516 = vpack.c.b16 %v1329, %v1328
        %v1517 = vpack.c.b16 %v1331, %v1330
        %v1518 = vpack.c.b16 %v1333, %v1332
        %v1519 = vpack.c.b16 %v1335, %v1334
        %v1520 = vpack.c.b16 %v1337, %v1336
        %v1521 = vpack.c.b16 %v1339, %v1338
        %v1522 = vpack.c.b16 %v1341, %v1340
        %v1523 = vpack.c.b16 %v1343, %v1342
        %v1524 = vpack.c.b16 %v1345, %v1344
        %v1525 = vpack.c.b16 %v1347, %v1346
        %v1526 = vpack.c.b16 %v1349, %v1348
        %v1527 = vpack.c.b16 %v1351, %v1350
        %v1528 = vpack.c.b16 %v1353, %v1352
        %v1529 = vpack.c.b16 %v1355, %v1354
        %v1530 = vpack.c.b16 %v1357, %v1356
        %v1531 = vpack.c.b16 %v1359, %v1358
        %v1532 = vpack.c.b16 %v1361, %v1360
        %v1533 = vpack.c.b16 %v1363, %v1362
        %v1534 = vpack.c.b16 %v1365, %v1364
        %v1535 = vpack.c.b16 %v1367, %v1366
        %v1536 = vpack.c.b16 %v1369, %v1368
        %v1537 = vpack.c.b16 %v1371, %v1370
        %v1538 = vpack.c.b16 %v1373, %v1372
        %v1539 = vpack.c.b16 %v1375, %v1374
        %v1540 = vpack.c.b16 %v1377, %v1376
        %v1541 = vpack.c.b16 %v1379, %v1378
        %v1542 = vpack.c.b16 %v1381, %v1380
        %v1543 = vpack.c.b16 %v1383, %v1382
        %v1544 = vpack.c.b16 %v1385, %v1384
        %v1545 = vpack.c.b16 %v1387, %v1386
        %v1546 = vpack.c.b16 %v1389, %v1388
        %v1547 = vpack.c.b16 %v1391, %v1390
        %v1548 = vpack.c.b16 %v1393, %v1392
        %v1549 = vpack.c.b16 %v1395, %v1394
        %v1550 = vpack.c.b16 %v1397, %v1396
        %v1551 = vpack.c.b16 %v1399, %v1398
        %v1552 = vpack.c.b16 %v1401, %v1400
        %v1553 = vpack.c.b16 %v1403, %v1402
        %v1554 = vpack.c.b16 %v1405, %v1404
        %v1555 = vpack.c.b16 %v1407, %v1406
        %v1556 = vpack.c.b16 %v1409, %v1408
        %v1557 = vpack.c.b16 %v1411, %v1410
        %v1558 = vpack.c.b16 %v1413, %v1412
        %v1559 = vpack.c.b16 %v1415, %v1414
        %v1560 = vpack.c.b16 %v1417, %v1416
        %v1561 = vpack.c.b16 %v1419, %v1418
        %v1562 = vpack.c.b16 %v1421, %v1420
        %v1563 = vpack.c.b16 %v1423, %v1422
        %v1564 = vpack.c.b16 %v1425, %v1424
        %v1565 = vpack.c.b16 %v1427, %v1426
        %v1566 = vpack.c.b16 %v1429, %v1428
        %v1567 = vpack.c.b16 %v1431, %v1430
        %v1568 = vpack.c.b16 %v1433, %v1432
        %v1569 = vpack.c.b16 %v1435, %v1434
        %v1570 = vpack.c.b16 %v1437, %v1436
        %v1571 = vpack.c.b16 %v1439, %v1438
        %v1572 = vpack.c.b16 %v1441, %v1440
        %v1573 = vpack.c.b16 %v1443, %v1442
        %v1574 = vpack.c.b16 %v1445, %v1444
        %v1575 = vpack.c.b16 %v1447, %v1446
        %1704 = vmatprep.subr.bf16.mxu0 0
        %1705 = vmatpush1.bf16.msra.mxu0 %v1448
        %1706 = vmatprep.subr.bf16.mxu0 0
        %1707 = vmatpush1.bf16.msra.mxu0 %v1449
        %1708 = vmatprep.subr.bf16.mxu0 0
        %1709 = vmatpush1.bf16.msra.mxu0 %v1450
        %1710 = vmatprep.subr.bf16.mxu0 0
        %1711 = vmatpush1.bf16.msra.mxu0 %v1451
        %1712 = vmatprep.subr.bf16.mxu0 0
        %1713 = vmatpush1.bf16.msra.mxu0 %v1452
        %1714 = vmatprep.subr.bf16.mxu0 0
        %1715 = vmatpush1.bf16.msra.mxu0 %v1453
        %1716 = vmatprep.subr.bf16.mxu0 0
        %1717 = vmatpush1.bf16.msra.mxu0 %v1454
        %1718 = vmatprep.subr.bf16.mxu0 0
        %1719 = vmatpush1.bf16.msra.mxu0 %v1455
        %1720 = vmatprep.subr.bf16.mxu0 0
        %1721 = vmatpush1.bf16.msra.mxu0 %v1456
        %1722 = vmatprep.subr.bf16.mxu0 0
        %1723 = vmatpush1.bf16.msra.mxu0 %v1457
        %1724 = vmatprep.subr.bf16.mxu0 0
        %1725 = vmatpush1.bf16.msra.mxu0 %v1458
        %1726 = vmatprep.subr.bf16.mxu0 0
        %1727 = vmatpush1.bf16.msra.mxu0 %v1459
        %1728 = vmatprep.subr.bf16.mxu0 0
        %1729 = vmatpush1.bf16.msra.mxu0 %v1460
        %1730 = vmatprep.subr.bf16.mxu0 0
        %1731 = vmatpush1.bf16.msra.mxu0 %v1461
        %1732 = vmatprep.subr.bf16.mxu0 0
        %1733 = vmatpush1.bf16.msra.mxu0 %v1462
        %1734 = vmatprep.subr.bf16.mxu0 0
        %1735 = vmatpush1.bf16.msra.mxu0 %v1463
        %1736 = vmatprep.mubr.bf16.mxu0 %v665
        %1737 = vmatmul.mubr.bf16.gmra.mrb[0].mxu0 %v664
        %v1738 = vpop.f32.mrb[0].mxu0
        %v1739 = vadd.f32 0.0, %v1738
        %v1740 = vpop.f32.mrb[0].mxu0
        %v1741 = vpop.f32.mrb[0].mxu0
        %v1742 = vpop.f32.mrb[0].mxu0
        %1743 = vdwg.mxu0
        %1744 = vmatprep.subr.bf16.mxu0 0
        %1745 = vmatpush1.bf16.msra.mxu0 %v1464
        %1746 = vmatprep.subr.bf16.mxu0 0
        %1747 = vmatpush1.bf16.msra.mxu0 %v1465
        %1748 = vmatprep.subr.bf16.mxu0 0
        %1749 = vmatpush1.bf16.msra.mxu0 %v1466
        %1750 = vmatprep.subr.bf16.mxu0 0
        %1751 = vmatpush1.bf16.msra.mxu0 %v1467
        %1752 = vmatprep.subr.bf16.mxu0 0
        %1753 = vmatpush1.bf16.msra.mxu0 %v1468
        %1754 = vmatprep.subr.bf16.mxu0 0
        %1755 = vmatpush1.bf16.msra.mxu0 %v1469
        %1756 = vmatprep.subr.bf16.mxu0 0
        %1757 = vmatpush1.bf16.msra.mxu0 %v1470
        %1758 = vmatprep.subr.bf16.mxu0 0
        %1759 = vmatpush1.bf16.msra.mxu0 %v1471
        %1760 = vmatprep.subr.bf16.mxu0 0
        %1761 = vmatpush1.bf16.msra.mxu0 %v1472
        %1762 = vmatprep.subr.bf16.mxu0 0
        %1763 = vmatpush1.bf16.msra.mxu0 %v1473
        %1764 = vmatprep.subr.bf16.mxu0 0
        %1765 = vmatpush1.bf16.msra.mxu0 %v1474
        %1766 = vmatprep.subr.bf16.mxu0 0
        %1767 = vmatpush1.bf16.msra.mxu0 %v1475
        %1768 = vmatprep.subr.bf16.mxu0 0
        %1769 = vmatpush1.bf16.msra.mxu0 %v1476
        %1770 = vmatprep.subr.bf16.mxu0 0
        %1771 = vmatpush1.bf16.msra.mxu0 %v1477
        %1772 = vmatprep.subr.bf16.mxu0 0
        %1773 = vmatpush1.bf16.msra.mxu0 %v1478
        %1774 = vmatprep.subr.bf16.mxu0 0
        %1775 = vmatpush1.bf16.msra.mxu0 %v1479
        %1776 = vmatprep.mubr.bf16.mxu0 %v667
        %1777 = vmatmul.mubr.bf16.gmra.mrb[0].mxu0 %v666
        %v1778 = vpop.f32.mrb[0].mxu0
        %v1779 = vadd.f32 %v1739, %v1778
        %v1780 = vpop.f32.mrb[0].mxu0
        %v1781 = vpop.f32.mrb[0].mxu0
        %v1782 = vpop.f32.mrb[0].mxu0
        %1783 = vdwg.mxu0
        %1784 = vmatprep.subr.bf16.mxu0 0
        %1785 = vmatpush1.bf16.msra.mxu0 %v1480
        %1786 = vmatprep.subr.bf16.mxu0 0
        %1787 = vmatpush1.bf16.msra.mxu0 %v1481
        %1788 = vmatprep.subr.bf16.mxu0 0
        %1789 = vmatpush1.bf16.msra.mxu0 %v1482
        %1790 = vmatprep.subr.bf16.mxu0 0
        %1791 = vmatpush1.bf16.msra.mxu0 %v1483
        %1792 = vmatprep.subr.bf16.mxu0 0
        %1793 = vmatpush1.bf16.msra.mxu0 %v1484
        %1794 = vmatprep.subr.bf16.mxu0 0
        %1795 = vmatpush1.bf16.msra.mxu0 %v1485
        %1796 = vmatprep.subr.bf16.mxu0 0
        %1797 = vmatpush1.bf16.msra.mxu0 %v1486
        %1798 = vmatprep.subr.bf16.mxu0 0
        %1799 = vmatpush1.bf16.msra.mxu0 %v1487
        %1800 = vmatprep.subr.bf16.mxu0 0
        %1801 = vmatpush1.bf16.msra.mxu0 %v1488
        %1802 = vmatprep.subr.bf16.mxu0 0
        %1803 = vmatpush1.bf16.msra.mxu0 %v1489
        %1804 = vmatprep.subr.bf16.mxu0 0
        %1805 = vmatpush1.bf16.msra.mxu0 %v1490
        %1806 = vmatprep.subr.bf16.mxu0 0
        %1807 = vmatpush1.bf16.msra.mxu0 %v1491
        %1808 = vmatprep.subr.bf16.mxu0 0
        %1809 = vmatpush1.bf16.msra.mxu0 %v1492
        %1810 = vmatprep.subr.bf16.mxu0 0
        %1811 = vmatpush1.bf16.msra.mxu0 %v1493
        %1812 = vmatprep.subr.bf16.mxu0 0
        %1813 = vmatpush1.bf16.msra.mxu0 %v1494
        %1814 = vmatprep.subr.bf16.mxu0 0
        %1815 = vmatpush1.bf16.msra.mxu0 %v1495
        %1816 = vmatprep.mubr.bf16.mxu0 %v669
        %1817 = vmatmul.mubr.bf16.gmra.mrb[0].mxu0 %v668
        %v1818 = vpop.f32.mrb[0].mxu0
        %v1819 = vadd.f32 %v1779, %v1818
        %v1820 = vpop.f32.mrb[0].mxu0
        %v1821 = vpop.f32.mrb[0].mxu0
        %v1822 = vpop.f32.mrb[0].mxu0
        %1823 = vdwg.mxu0
        %1824 = vmatprep.subr.bf16.mxu0 0
        %1825 = vmatpush1.bf16.msra.mxu0 %v1496
        %1826 = vmatprep.subr.bf16.mxu0 0
        %1827 = vmatpush1.bf16.msra.mxu0 %v1497
        %1828 = vmatprep.subr.bf16.mxu0 0
        %1829 = vmatpush1.bf16.msra.mxu0 %v1498
        %1830 = vmatprep.subr.bf16.mxu0 0
        %1831 = vmatpush1.bf16.msra.mxu0 %v1499
        %1832 = vmatprep.subr.bf16.mxu0 0
        %1833 = vmatpush1.bf16.msra.mxu0 %v1500
        %1834 = vmatprep.subr.bf16.mxu0 0
        %1835 = vmatpush1.bf16.msra.mxu0 %v1501
        %1836 = vmatprep.subr.bf16.mxu0 0
        %1837 = vmatpush1.bf16.msra.mxu0 %v1502
        %1838 = vmatprep.subr.bf16.mxu0 0
        %1839 = vmatpush1.bf16.msra.mxu0 %v1503
        %1840 = vmatprep.subr.bf16.mxu0 0
        %1841 = vmatpush1.bf16.msra.mxu0 %v1504
        %1842 = vmatprep.subr.bf16.mxu0 0
        %1843 = vmatpush1.bf16.msra.mxu0 %v1505
        %1844 = vmatprep.subr.bf16.mxu0 0
        %1845 = vmatpush1.bf16.msra.mxu0 %v1506
        %1846 = vmatprep.subr.bf16.mxu0 0
        %1847 = vmatpush1.bf16.msra.mxu0 %v1507
        %1848 = vmatprep.subr.bf16.mxu0 0
        %1849 = vmatpush1.bf16.msra.mxu0 %v1508
        %1850 = vmatprep.subr.bf16.mxu0 0
        %1851 = vmatpush1.bf16.msra.mxu0 %v1509
        %1852 = vmatprep.subr.bf16.mxu0 0
        %1853 = vmatpush1.bf16.msra.mxu0 %v1510
        %1854 = vmatprep.subr.bf16.mxu0 0
        %1855 = vmatpush1.bf16.msra.mxu0 %v1511
        %1856 = vmatprep.mubr.bf16.mxu0 %v671
        %1857 = vmatmul.mubr.bf16.gmra.mrb[0].mxu0 %v670
        %v1858 = vpop.f32.mrb[0].mxu0
        %v1859 = vadd.f32 %v1819, %v1858
        %v1860 = vpop.f32.mrb[0].mxu0
        %v1861 = vpop.f32.mrb[0].mxu0
        %v1862 = vpop.f32.mrb[0].mxu0
        %1863 = vdwg.mxu0
        %1864 = vmatprep.subr.bf16.mxu0 0
        %1865 = vmatpush1.bf16.msra.mxu0 %v1512
        %1866 = vmatprep.subr.bf16.mxu0 0
        %1867 = vmatpush1.bf16.msra.mxu0 %v1513
        %1868 = vmatprep.subr.bf16.mxu0 0
        %1869 = vmatpush1.bf16.msra.mxu0 %v1514
        %1870 = vmatprep.subr.bf16.mxu0 0
        %1871 = vmatpush1.bf16.msra.mxu0 %v1515
        %1872 = vmatprep.subr.bf16.mxu0 0
        %1873 = vmatpush1.bf16.msra.mxu0 %v1516
        %1874 = vmatprep.subr.bf16.mxu0 0
        %1875 = vmatpush1.bf16.msra.mxu0 %v1517
        %1876 = vmatprep.subr.bf16.mxu0 0
        %1877 = vmatpush1.bf16.msra.mxu0 %v1518
        %1878 = vmatprep.subr.bf16.mxu0 0
        %1879 = vmatpush1.bf16.msra.mxu0 %v1519
        %1880 = vmatprep.subr.bf16.mxu0 0
        %1881 = vmatpush1.bf16.msra.mxu0 %v1520
        %1882 = vmatprep.subr.bf16.mxu0 0
        %1883 = vmatpush1.bf16.msra.mxu0 %v1521
        %1884 = vmatprep.subr.bf16.mxu0 0
        %1885 = vmatpush1.bf16.msra.mxu0 %v1522
        %1886 = vmatprep.subr.bf16.mxu0 0
        %1887 = vmatpush1.bf16.msra.mxu0 %v1523
        %1888 = vmatprep.subr.bf16.mxu0 0
        %1889 = vmatpush1.bf16.msra.mxu0 %v1524
        %1890 = vmatprep.subr.bf16.mxu0 0
        %1891 = vmatpush1.bf16.msra.mxu0 %v1525
        %1892 = vmatprep.subr.bf16.mxu0 0
        %1893 = vmatpush1.bf16.msra.mxu0 %v1526
        %1894 = vmatprep.subr.bf16.mxu0 0
        %1895 = vmatpush1.bf16.msra.mxu0 %v1527
        %1896 = vmatprep.mubr.bf16.mxu0 %v673
        %1897 = vmatmul.mubr.bf16.gmra.mrb[0].mxu0 %v672
        %v1898 = vpop.f32.mrb[0].mxu0
        %v1899 = vadd.f32 %v1859, %v1898
        %v1900 = vpop.f32.mrb[0].mxu0
        %v1901 = vpop.f32.mrb[0].mxu0
        %v1902 = vpop.f32.mrb[0].mxu0
        %1903 = vdwg.mxu0
        %1904 = vmatprep.subr.bf16.mxu0 0
        %1905 = vmatpush1.bf16.msra.mxu0 %v1528
        %1906 = vmatprep.subr.bf16.mxu0 0
        %1907 = vmatpush1.bf16.msra.mxu0 %v1529
        %1908 = vmatprep.subr.bf16.mxu0 0
        %1909 = vmatpush1.bf16.msra.mxu0 %v1530
        %1910 = vmatprep.subr.bf16.mxu0 0
        %1911 = vmatpush1.bf16.msra.mxu0 %v1531
        %1912 = vmatprep.subr.bf16.mxu0 0
        %1913 = vmatpush1.bf16.msra.mxu0 %v1532
        %1914 = vmatprep.subr.bf16.mxu0 0
        %1915 = vmatpush1.bf16.msra.mxu0 %v1533
        %1916 = vmatprep.subr.bf16.mxu0 0
        %1917 = vmatpush1.bf16.msra.mxu0 %v1534
        %1918 = vmatprep.subr.bf16.mxu0 0
        %1919 = vmatpush1.bf16.msra.mxu0 %v1535
        %1920 = vmatprep.subr.bf16.mxu0 0
        %1921 = vmatpush1.bf16.msra.mxu0 %v1536
        %1922 = vmatprep.subr.bf16.mxu0 0
        %1923 = vmatpush1.bf16.msra.mxu0 %v1537
        %1924 = vmatprep.subr.bf16.mxu0 0
        %1925 = vmatpush1.bf16.msra.mxu0 %v1538
        %1926 = vmatprep.subr.bf16.mxu0 0
        %1927 = vmatpush1.bf16.msra.mxu0 %v1539
        %1928 = vmatprep.subr.bf16.mxu0 0
        %1929 = vmatpush1.bf16.msra.mxu0 %v1540
        %1930 = vmatprep.subr.bf16.mxu0 0
        %1931 = vmatpush1.bf16.msra.mxu0 %v1541
        %1932 = vmatprep.subr.bf16.mxu0 0
        %1933 = vmatpush1.bf16.msra.mxu0 %v1542
        %1934 = vmatprep.subr.bf16.mxu0 0
        %1935 = vmatpush1.bf16.msra.mxu0 %v1543
        %1936 = vmatprep.mubr.bf16.mxu0 %v675
        %1937 = vmatmul.mubr.bf16.gmra.mrb[0].mxu0 %v674
        %v1938 = vpop.f32.mrb[0].mxu0
        %v1939 = vadd.f32 %v1899, %v1938
        %v1940 = vpop.f32.mrb[0].mxu0
        %v1941 = vpop.f32.mrb[0].mxu0
        %v1942 = vpop.f32.mrb[0].mxu0
        %1943 = vdwg.mxu0
        %1944 = vmatprep.subr.bf16.mxu0 0
        %1945 = vmatpush1.bf16.msra.mxu0 %v1544
        %1946 = vmatprep.subr.bf16.mxu0 0
        %1947 = vmatpush1.bf16.msra.mxu0 %v1545
        %1948 = vmatprep.subr.bf16.mxu0 0
        %1949 = vmatpush1.bf16.msra.mxu0 %v1546
        %1950 = vmatprep.subr.bf16.mxu0 0
        %1951 = vmatpush1.bf16.msra.mxu0 %v1547
        %1952 = vmatprep.subr.bf16.mxu0 0
        %1953 = vmatpush1.bf16.msra.mxu0 %v1548
        %1954 = vmatprep.subr.bf16.mxu0 0
        %1955 = vmatpush1.bf16.msra.mxu0 %v1549
        %1956 = vmatprep.subr.bf16.mxu0 0
        %1957 = vmatpush1.bf16.msra.mxu0 %v1550
        %1958 = vmatprep.subr.bf16.mxu0 0
        %1959 = vmatpush1.bf16.msra.mxu0 %v1551
        %1960 = vmatprep.subr.bf16.mxu0 0
        %1961 = vmatpush1.bf16.msra.mxu0 %v1552
        %1962 = vmatprep.subr.bf16.mxu0 0
        %1963 = vmatpush1.bf16.msra.mxu0 %v1553
        %1964 = vmatprep.subr.bf16.mxu0 0
        %1965 = vmatpush1.bf16.msra.mxu0 %v1554
        %1966 = vmatprep.subr.bf16.mxu0 0
        %1967 = vmatpush1.bf16.msra.mxu0 %v1555
        %1968 = vmatprep.subr.bf16.mxu0 0
        %1969 = vmatpush1.bf16.msra.mxu0 %v1556
        %1970 = vmatprep.subr.bf16.mxu0 0
        %1971 = vmatpush1.bf16.msra.mxu0 %v1557
        %1972 = vmatprep.subr.bf16.mxu0 0
        %1973 = vmatpush1.bf16.msra.mxu0 %v1558
        %1974 = vmatprep.subr.bf16.mxu0 0
        %1975 = vmatpush1.bf16.msra.mxu0 %v1559
        %1976 = vmatprep.mubr.bf16.mxu0 %v677
        %1977 = vmatmul.mubr.bf16.gmra.mrb[0].mxu0 %v676
        %v1978 = vpop.f32.mrb[0].mxu0
        %v1979 = vadd.f32 %v1939, %v1978
        %v1980 = vpop.f32.mrb[0].mxu0
        %v1981 = vpop.f32.mrb[0].mxu0
        %v1982 = vpop.f32.mrb[0].mxu0
        %1983 = vdwg.mxu0
        %1984 = vmatprep.subr.bf16.mxu0 0
        %1985 = vmatpush1.bf16.msra.mxu0 %v1560
        %1986 = vmatprep.subr.bf16.mxu0 0
        %1987 = vmatpush1.bf16.msra.mxu0 %v1561
        %1988 = vmatprep.subr.bf16.mxu0 0
        %1989 = vmatpush1.bf16.msra.mxu0 %v1562
        %1990 = vmatprep.subr.bf16.mxu0 0
        %1991 = vmatpush1.bf16.msra.mxu0 %v1563
        %1992 = vmatprep.subr.bf16.mxu0 0
        %1993 = vmatpush1.bf16.msra.mxu0 %v1564
        %1994 = vmatprep.subr.bf16.mxu0 0
        %1995 = vmatpush1.bf16.msra.mxu0 %v1565
        %1996 = vmatprep.subr.bf16.mxu0 0
        %1997 = vmatpush1.bf16.msra.mxu0 %v1566
        %1998 = vmatprep.subr.bf16.mxu0 0
        %1999 = vmatpush1.bf16.msra.mxu0 %v1567
        %2000 = vmatprep.subr.bf16.mxu0 0
        %2001 = vmatpush1.bf16.msra.mxu0 %v1568
        %2002 = vmatprep.subr.bf16.mxu0 0
        %2003 = vmatpush1.bf16.msra.mxu0 %v1569
        %2004 = vmatprep.subr.bf16.mxu0 0
        %2005 = vmatpush1.bf16.msra.mxu0 %v1570
        %2006 = vmatprep.subr.bf16.mxu0 0
        %2007 = vmatpush1.bf16.msra.mxu0 %v1571
        %2008 = vmatprep.subr.bf16.mxu0 0
        %2009 = vmatpush1.bf16.msra.mxu0 %v1572
        %2010 = vmatprep.subr.bf16.mxu0 0
        %2011 = vmatpush1.bf16.msra.mxu0 %v1573
        %2012 = vmatprep.subr.bf16.mxu0 0
        %2013 = vmatpush1.bf16.msra.mxu0 %v1574
        %2014 = vmatprep.subr.bf16.mxu0 0
        %2015 = vmatpush1.bf16.msra.mxu0 %v1575
        %2016 = vmatprep.mubr.bf16.mxu0 %v679
        %2017 = vmatmul.mubr.bf16.gmra.mrb[0].mxu0 %v678
        %v2018 = vpop.f32.mrb[0].mxu0
        %v2019 = vadd.f32 %v1979, %v2018
        %v2020 = vpop.f32.mrb[0].mxu0
        %v2021 = vpop.f32.mrb[0].mxu0
        %v2022 = vpop.f32.mrb[0].mxu0
        %2023 = vdwg.mxu0
        %v2024 = vadd.f32 %v575, %v2019
        %2025 = vst [vmem:[#allocation2] sm:$0x3] %v2024
        %p2026 = scmp.eq.s32.totalorder %s17, 15
        // Predicated region
        $region45: #{transformer3d_forward.11} parent=39 // pred_check
          %p2027 = pneg %p2026
        $region46: #{transformer3d_forward.11} parent=39 // pred_check_branch
          %2029 = sbr.rel (%p2027) target = $region48
        $region47: #{transformer3d_forward.11} parent=39 // pred_region
          %v2030 = vld [vmem:[#allocation2] sm:$0x3]
          %v2031 = vld [vmem:[%s4] sm:$0x1]
          %v2033 = vlaneseq
          %v2034 = vshrl.u32 %v2033, 7
          %v2035 = vsub.s32 0, %v2034
          %v2036 = vrot.slane %v2031, %v2035
          %v2038 = vadd.f32 %v2030, %v2036
          %2039 = vst [vmem:[#allocation3] sm:$0x3] %v2038
        $region48: #{transformer3d_forward.11} parent=39 // pred_fallthru
          _
        // Predicated region
        $region49: #{transformer3d_forward.11} parent=39 // pred_check
          %p2040 = pneg %p155
        $region50: #{transformer3d_forward.11} parent=39 // pred_check_branch
          %2042 = sbr.rel (%p2040) target = $region52
        $region51: #{transformer3d_forward.11} parent=39 // pred_region
          %s2044 = ssub.s32 32, 32
          %2045 = vsyncadd [#allocation4], %s2044
          %s2047 = sshll.u32 [#allocation3], 4
          %s2048 = int_to_ptr.vmem [resolvable:$true] %s2047
          %2050 = dma.vmem_to_hbm [thread:$0]  %s2048, 32, %s5, [#allocation4]
        $region52: #{transformer3d_forward.11} parent=39 // pred_fallthru
          _
        // Predicated region
        $region53: #{transformer3d_forward.11} parent=39 // pred_check
          %p2051 = pneg %p155
        $region54: #{transformer3d_forward.11} parent=39 // pred_check_branch
          %2053 = sbr.rel (%p2051) target = $region56
        $region55: #{transformer3d_forward.11} parent=39 // pred_region
          %2054 = dma.done [#allocation4], 32
        $region56: #{transformer3d_forward.11} parent=39 // pred_fallthru
          _
      $region40: #{transformer3d_forward.11} parent=5 // pred_fallthru
        _
      %p2055 = scmp.le.s32.totalorder 2, %s12
      // Predicated region
      $region57: #{transformer3d_forward.11} parent=5 // pred_check
        %p2056 = pneg %p2055
      $region58: #{transformer3d_forward.11} parent=5 // pred_check_branch
        %2058 = sbr.rel (%p2056) target = $region60
      $region59: #{transformer3d_forward.11} parent=5 // pred_region
        %s2059 = ssub.s32 %s12, 2
      $region60: #{transformer3d_forward.11} parent=5 // pred_fallthru
        _
    $region6: #{transformer3d_forward.11} parent=1 // loop_footer
      %s16 = sadd.s32 1, %s12
    $region7: #{transformer3d_forward.11} parent=1 // loop_footer_branch
      %11 = sbr.rel target = $region3
    $region8: #{transformer3d_forward.11} parent=1 // loop_exit
      _
    %2060 = vsyncpa [#allocation4], 1
    %s2061 = scalar_lea.sflag [#allocation4], 1
    %2062 = vsyncpa %s2061, 1

</llo_original>
